<compile_context>
chip_gen: v6e
topology: v6e:2x2x1
jax: 0.10.0
libtpu: 0.0.40
codegen_flags: <defaults>
</compile_context>

<pallas_src>
import functools

import jax
import jax.numpy as jnp
from jax.experimental import pallas as pl
from jax.experimental.pallas import tpu as pltpu


# -----------------------------------------------------------------------------
# Fused forward kernel (BT images per grid step).
# -----------------------------------------------------------------------------
def _net_kernel(BT, x1_ref, w1_ref, b1_ref, w2_ref, b2_ref, w3_ref, b3_ref,
                w4_ref, b4_ref, wf1_ref, bf1_ref, wf2_ref, bf2_ref,
                out_ref, x2p_ref, x3p_ref, x4p_ref):
    f32 = jnp.float32
    bf16 = jnp.bfloat16

    def relu(v):
        return jnp.maximum(v, 0.0)

    # ---- conv1: 7x7 stride-2 conv == one (BT*256,147)x(147,32) matmul over the
    #      pre-built im2col input (patch matrix built once in the wrapper). ----
    p1 = x1_ref[...].reshape(BT * 256, 147)
    a1 = relu(jnp.dot(p1, w1_ref[...], preferred_element_type=f32) + b1_ref[...])
    a1 = a1.astype(bf16).reshape(BT, 16, 16, 32)

    # ---- conv2 padded-input scratch: zero ONLY the 1-wide halo ring each step
    #      (correct on every core under megacore), overwrite the interior. -----
    x2p_ref[:, 0:1, :, :] = jnp.zeros((BT, 1, 18, 32), bf16)
    x2p_ref[:, 17:18, :, :] = jnp.zeros((BT, 1, 18, 32), bf16)
    x2p_ref[:, :, 0:1, :] = jnp.zeros((BT, 18, 1, 32), bf16)
    x2p_ref[:, :, 17:18, :] = jnp.zeros((BT, 18, 1, 32), bf16)
    x2p_ref[:, 1:17, 1:17, :] = a1

    # ---- conv2: 3x3 pad 1 as a single K-stacked (BT*256,288)x(288,64) dot. ---
    taps2 = [x2p_ref[:, ky:ky + 16, kx:kx + 16, :]
             for ky in range(3) for kx in range(3)]
    p2 = jnp.concatenate(taps2, axis=-1).reshape(BT * 256, 288)
    y2 = relu(jnp.dot(p2, w2_ref[...], preferred_element_type=f32) + b2_ref[...])
    y2 = y2.reshape(BT, 16, 16, 64)

    # ---- maxpool 2x2 (vectorized) fused into conv3's padded input scratch. ---
    #      Dropout(p=0.2): identity in inference/eval mode.
    x3p_ref[:, 0:1, :, :] = jnp.zeros((BT, 1, 10, 64), bf16)
    x3p_ref[:, 9:10, :, :] = jnp.zeros((BT, 1, 10, 64), bf16)
    x3p_ref[:, :, 0:1, :] = jnp.zeros((BT, 10, 1, 64), bf16)
    x3p_ref[:, :, 9:10, :] = jnp.zeros((BT, 10, 1, 64), bf16)
    rows2 = [jnp.maximum(y2[:, 2 * i], y2[:, 2 * i + 1]) for i in range(8)]
    th2 = jnp.stack(rows2, axis=1)                                # (BT,8,16,64)
    for j in range(8):
        colj = jnp.max(th2[:, :, 2 * j:2 * j + 2, :], axis=2)     # (BT,8,64)
        x3p_ref[:, 1:9, 1 + j, :] = colj.astype(bf16)

    # ---- conv3: 3x3 pad 1 as a single (BT*64,576)x(576,128) dot. -------------
    taps3 = [x3p_ref[:, ky:ky + 8, kx:kx + 8, :]
             for ky in range(3) for kx in range(3)]
    p3 = jnp.concatenate(taps3, axis=-1).reshape(BT * 64, 576)
    a3 = relu(jnp.dot(p3, w3_ref[...], preferred_element_type=f32) + b3_ref[...])
    a3 = a3.astype(bf16).reshape(BT, 8, 8, 128)

    # ---- conv4: 3x3 pad 1 as a single (BT*64,1152)x(1152,256) dot. -----------
    x4p_ref[:, 0:1, :, :] = jnp.zeros((BT, 1, 10, 128), bf16)
    x4p_ref[:, 9:10, :, :] = jnp.zeros((BT, 1, 10, 128), bf16)
    x4p_ref[:, :, 0:1, :] = jnp.zeros((BT, 10, 1, 128), bf16)
    x4p_ref[:, :, 9:10, :] = jnp.zeros((BT, 10, 1, 128), bf16)
    x4p_ref[:, 1:9, 1:9, :] = a3

    taps4 = [x4p_ref[:, ky:ky + 8, kx:kx + 8, :]
             for ky in range(3) for kx in range(3)]
    p4 = jnp.concatenate(taps4, axis=-1).reshape(BT * 64, 1152)
    y4 = relu(jnp.dot(p4, w4_ref[...], preferred_element_type=f32) + b4_ref[...])
    y4 = y4.reshape(BT, 8, 8, 256)

    # ---- maxpool 2x2 + Flatten folded into fc1: the 16 pooled (BT,256) pieces
    #      are lane-concatenated (128-aligned) into one (BT,4096) row and fc1 is
    #      a single matmul.  Dropout(p=0.2): identity in eval mode. ------------
    pieces = []
    for i in range(4):
        r = jnp.maximum(y4[:, 2 * i], y4[:, 2 * i + 1])           # (BT,8,256)
        for j in range(4):
            pieces.append(jnp.max(r[:, 2 * j:2 * j + 2, :], axis=1))  # (BT,256)
    flat = jnp.concatenate(pieces, axis=-1).astype(bf16)          # (BT,4096)
    h1 = relu(jnp.dot(flat, wf1_ref[...], preferred_element_type=f32)
              + bf1_ref[...])                                     # (BT,128)

    # ---- fc2 + softmax (classes padded to 128 lanes; padding bias = -1e30). --
    logits = jnp.dot(h1.astype(bf16), wf2_ref[...],
                     preferred_element_type=f32) + bf2_ref[...]   # (BT,128)
    m = jnp.max(logits, axis=-1, keepdims=True)
    e = jnp.exp(logits - m)
    probs = e / jnp.sum(e, axis=-1, keepdims=True)
    out_ref[...] = probs.reshape(1, BT, 128)


# -----------------------------------------------------------------------------
# Parameters (deterministic He-style init, PyTorch layouts) and one-time
# repacking into kernel-friendly layouts (bf16 K-stacked weights, f32 biases).
# -----------------------------------------------------------------------------
def init_params(key):
    keys = jax.random.split(key, 6)

    def conv_wb(k, cout, cin, kh, kw):
        scale = (2.0 / (cin * kh * kw)) ** 0.5
        return (jax.random.normal(k, (cout, cin, kh, kw), jnp.float32) * scale,
                jnp.zeros((cout,), jnp.float32))

    def lin_wb(k, nout, nin):
        scale = (2.0 / nin) ** 0.5
        return (jax.random.normal(k, (nout, nin), jnp.float32) * scale,
                jnp.zeros((nout,), jnp.float32))

    p = {}
    p["w1"], p["b1"] = conv_wb(keys[0], 32, 3, 7, 7)
    p["w2"], p["b2"] = conv_wb(keys[1], 64, 32, 3, 3)
    p["w3"], p["b3"] = conv_wb(keys[2], 128, 64, 3, 3)
    p["w4"], p["b4"] = conv_wb(keys[3], 256, 128, 3, 3)
    p["fc1_w"], p["fc1_b"] = lin_wb(keys[4], 128, 256 * 4 * 4)
    p["fc2_w"], p["fc2_b"] = lin_wb(keys[5], 10, 128)
    return p


def prepare_params(p):
    bf16 = jnp.bfloat16

    def conv_w(w):  # (co, ci, kh, kw) -> (kh*kw*ci, co), row = (ky*kw+kx)*ci+ci
        co, ci, kh, kw = w.shape
        return jnp.transpose(w, (2, 3, 1, 0)).reshape(kh * kw * ci, co).astype(bf16)

    # fc1 consumes the pooled activation in (h, w, c) order; fold PyTorch's
    # (C,H,W) flatten order into the weight -> (4096, 128).
    wf1 = p["fc1_w"].reshape(128, 256, 4, 4)                      # (n, c, h, w)
    wf1 = jnp.transpose(wf1, (2, 3, 1, 0)).reshape(4096, 128)     # (h,w,c) x n

    # fc2 padded to 128 output lanes; padded classes get bias -1e30 -> prob 0.
    wf2 = jnp.zeros((128, 128), jnp.float32).at[:, :10].set(p["fc2_w"].T)
    bf2 = jnp.full((128,), -1e30, jnp.float32).at[:10].set(p["fc2_b"])

    return {
        "w1": conv_w(p["w1"]), "b1": p["b1"].reshape(1, 32),
        "w2": conv_w(p["w2"]), "b2": p["b2"].reshape(1, 64),
        "w3": conv_w(p["w3"]), "b3": p["b3"].reshape(1, 128),
        "w4": conv_w(p["w4"]), "b4": p["b4"].reshape(1, 256),
        "wf1": wf1.astype(bf16), "bf1": p["fc1_b"].reshape(1, 128),
        "wf2": wf2.astype(bf16), "bf2": bf2.reshape(1, 128),
    }


def _pick_bt(batch, max_bt=8):
    """Largest divisor of `batch` <= max_bt, keeping >=2 grid steps (v7x 2 TCs)."""
    cands = [d for d in range(1, max_bt + 1) if batch % d == 0]
    if batch >= 2:
        two_step = [d for d in cands if batch // d >= 2]
        if two_step:
            cands = two_step
    return max(cands)


# -----------------------------------------------------------------------------
# Forward pass: one-shot input im2col (conv1) + single fused pallas_call.
# -----------------------------------------------------------------------------
def net_forward(pp, x_nchw, max_bt=8):
    B = x_nchw.shape[0]
    BT = _pick_bt(B, max_bt)
    G = B // BT

    # NCHW -> NHWC, pad 3, 7x7/stride-2 im2col -> (B, 16, 16, 147) bf16.
    x = jnp.transpose(x_nchw, (0, 2, 3, 1))
    x = jnp.pad(x, ((0, 0), (3, 3), (3, 3), (0, 0)))              # (B,38,38,3)
    taps = [x[:, ky:ky + 32:2, kx:kx + 32:2, :]
            for ky in range(7) for kx in range(7)]
    xcol = jnp.concatenate(taps, axis=-1).astype(jnp.bfloat16)    # (B,16,16,147)

    def full(arr):
        n = arr.ndim
        return pl.BlockSpec(arr.shape, lambda g, _n=n: (0,) * _n)

    flops_per_img = 2 * (256 * 147 * 32 + 256 * 288 * 64 + 64 * 576 * 128
                         + 64 * 1152 * 256 + 4096 * 128 + 128 * 128)
    weight_bytes = sum(int(v.size) * v.dtype.itemsize for v in pp.values())

    out = pl.pallas_call(
        functools.partial(_net_kernel, BT),
        out_shape=jax.ShapeDtypeStruct((G, BT, 128), jnp.float32),
        grid_spec=pltpu.PrefetchScalarGridSpec(
            num_scalar_prefetch=0,
            grid=(G,),
            in_specs=[
                pl.BlockSpec((BT, 16, 16, 147), lambda g: (g, 0, 0, 0)),
                full(pp["w1"]), full(pp["b1"]),
                full(pp["w2"]), full(pp["b2"]),
                full(pp["w3"]), full(pp["b3"]),
                full(pp["w4"]), full(pp["b4"]),
                full(pp["wf1"]), full(pp["bf1"]),
                full(pp["wf2"]), full(pp["bf2"]),
            ],
            out_specs=pl.BlockSpec((1, BT, 128), lambda g: (g, 0, 0)),
            scratch_shapes=[
                pltpu.VMEM((BT, 18, 18, 32), jnp.bfloat16),   # conv2 padded in
                pltpu.VMEM((BT, 10, 10, 64), jnp.bfloat16),   # conv3 padded in
                pltpu.VMEM((BT, 10, 10, 128), jnp.bfloat16),  # conv4 padded in
            ],
        ),
        compiler_params=pltpu.CompilerParams(
            dimension_semantics=("parallel",),
            vmem_limit_bytes=32 * 1024 * 1024,
        ),
        cost_estimate=pl.CostEstimate(
            flops=int(flops_per_img) * int(B),
            transcendentals=128 * int(B),
            bytes_accessed=int(xcol.size) * 2 + weight_bytes + int(B) * 128 * 4,
        ),
    )(xcol, pp["w1"], pp["b1"], pp["w2"], pp["b2"], pp["w3"], pp["b3"],
      pp["w4"], pp["b4"], pp["wf1"], pp["bf1"], pp["wf2"], pp["bf2"])

    return out.reshape(B, 128)[:, :10]


if __name__ == "__main__":
    key = jax.random.PRNGKey(0)
    pkey, xkey = jax.random.split(key)
    params = prepare_params(init_params(pkey))
    # Input implied by the module: 3x32x32 images; small batch of 2.
    x = jax.random.normal(xkey, (2, 3, 32, 32), jnp.float32)

    fwd = jax.jit(functools.partial(net_forward, params))
    out = jax.block_until_ready(fwd(x))

    assert out.shape == (2, 10), out.shape
    assert bool(jnp.all(jnp.isfinite(out)))
    # Softmax rows must sum to 1 (bf16 MXU operands, f32 softmax math).
    assert bool(jnp.all(jnp.abs(jnp.sum(out, axis=-1) - 1.0) < 1e-3))
    print("KERNEL_OK")
</pallas_src>

<mosaic_0001>
module attributes {stable_mosaic.version = 11 : i64} {
  func.func @_net_kernel(%arg0: i32, %arg1: memref<1x16x16x147xbf16, #tpu.memory_space<vmem>>, %arg2: memref<147x32xbf16, #tpu.memory_space<vmem>>, %arg3: memref<1x32xf32, #tpu.memory_space<vmem>>, %arg4: memref<288x64xbf16, #tpu.memory_space<vmem>>, %arg5: memref<1x64xf32, #tpu.memory_space<vmem>>, %arg6: memref<576x128xbf16, #tpu.memory_space<vmem>>, %arg7: memref<1x128xf32, #tpu.memory_space<vmem>>, %arg8: memref<1152x256xbf16, #tpu.memory_space<vmem>>, %arg9: memref<1x256xf32, #tpu.memory_space<vmem>>, %arg10: memref<4096x128xbf16, #tpu.memory_space<vmem>>, %arg11: memref<1x128xf32, #tpu.memory_space<vmem>>, %arg12: memref<128x128xbf16, #tpu.memory_space<vmem>>, %arg13: memref<1x128xf32, #tpu.memory_space<vmem>>, %arg14: memref<1x1x128xf32, #tpu.memory_space<vmem>>, %arg15: memref<1x18x18x32xbf16, #tpu.memory_space<vmem>>, %arg16: memref<1x10x10x64xbf16, #tpu.memory_space<vmem>>, %arg17: memref<1x10x10x128xbf16, #tpu.memory_space<vmem>>) attributes {dimension_semantics = [#tpu.dimension_semantics<parallel>], iteration_bounds = array<i64: 2>, scalar_prefetch = 0 : i64, scratch_operands = 3 : i64, tpu.core_type = #tpu.core_type<tc>, window_params = [{transform_indices = @transform_0, window_bounds = array<i64: 1, 16, 16, 147>}, {pipeline_mode = #tpu.pipeline_mode<synchronous>, transform_indices = @transform_1, window_bounds = array<i64: 147, 32>}, {pipeline_mode = #tpu.pipeline_mode<synchronous>, transform_indices = @transform_2, window_bounds = array<i64: 1, 32>}, {pipeline_mode = #tpu.pipeline_mode<synchronous>, transform_indices = @transform_3, window_bounds = array<i64: 288, 64>}, {pipeline_mode = #tpu.pipeline_mode<synchronous>, transform_indices = @transform_4, window_bounds = array<i64: 1, 64>}, {pipeline_mode = #tpu.pipeline_mode<synchronous>, transform_indices = @transform_5, window_bounds = array<i64: 576, 128>}, {pipeline_mode = #tpu.pipeline_mode<synchronous>, transform_indices = @transform_6, window_bounds = array<i64: 1, 128>}, {pipeline_mode = #tpu.pipeline_mode<synchronous>, transform_indices = @transform_7, window_bounds = array<i64: 1152, 256>}, {pipeline_mode = #tpu.pipeline_mode<synchronous>, transform_indices = @transform_8, window_bounds = array<i64: 1, 256>}, {pipeline_mode = #tpu.pipeline_mode<synchronous>, transform_indices = @transform_9, window_bounds = array<i64: 4096, 128>}, {pipeline_mode = #tpu.pipeline_mode<synchronous>, transform_indices = @transform_10, window_bounds = array<i64: 1, 128>}, {pipeline_mode = #tpu.pipeline_mode<synchronous>, transform_indices = @transform_11, window_bounds = array<i64: 128, 128>}, {pipeline_mode = #tpu.pipeline_mode<synchronous>, transform_indices = @transform_12, window_bounds = array<i64: 1, 128>}, {transform_indices = @transform_13, window_bounds = array<i64: 1, 1, 128>}]} {
    %c0 = arith.constant 0 : index
    %c0_0 = arith.constant 0 : index
    %c0_1 = arith.constant 0 : index
    %c0_2 = arith.constant 0 : index
    %0 = vector.load %arg1[%c0, %c0_0, %c0_1, %c0_2] : memref<1x16x16x147xbf16, #tpu.memory_space<vmem>>, vector<1x16x16x147xbf16>
    %1 = vector.shape_cast %0 : vector<1x16x16x147xbf16> to vector<256x147xbf16>
    %c0_3 = arith.constant 0 : index
    %c0_4 = arith.constant 0 : index
    %2 = vector.load %arg2[%c0_3, %c0_4] : memref<147x32xbf16, #tpu.memory_space<vmem>>, vector<147x32xbf16>
    %cst = arith.constant dense<0.000000e+00> : vector<256x32xf32>
    %3 = tpu.matmul %1, %2, %cst {dimension_numbers = #tpu.dot_dimension_numbers<[1], [0], [0], [1], [0, 0, 1, 1], [], []>} : vector<256x147xbf16>, vector<147x32xbf16>, vector<256x32xf32> -> vector<256x32xf32>
    %c0_5 = arith.constant 0 : index
    %c0_6 = arith.constant 0 : index
    %4 = vector.load %arg3[%c0_5, %c0_6] : memref<1x32xf32, #tpu.memory_space<vmem>>, vector<1x32xf32>
    %5 = vector.broadcast %4 : vector<1x32xf32> to vector<256x32xf32>
    %6 = arith.addf %3, %5 : vector<256x32xf32>
    %cst_7 = arith.constant 0.000000e+00 : f32
    %7 = vector.broadcast %cst_7 : f32 to vector<256x32xf32>
    %8 = arith.maximumf %6, %7 : vector<256x32xf32>
    %9 = arith.truncf %8 : vector<256x32xf32> to vector<256x32xbf16>
    %10 = vector.shape_cast %9 : vector<256x32xbf16> to vector<1x16x16x32xbf16>
    %cst_8 = arith.constant 0.000000e+00 : bf16
    %11 = vector.broadcast %cst_8 : bf16 to vector<1x1x18x32xbf16>
    %c0_9 = arith.constant 0 : index
    %c0_10 = arith.constant 0 : index
    %c0_11 = arith.constant 0 : index
    %c0_12 = arith.constant 0 : index
    %12 = vector.load %arg15[%c0_9, %c0_10, %c0_11, %c0_12] : memref<1x18x18x32xbf16, #tpu.memory_space<vmem>>, vector<1x1x18x32xbf16>
    tpu.vector_store %arg15[%c0_9, %c0_10, %c0_11, %c0_12], %11 {strides = array<i32>} : memref<1x18x18x32xbf16, #tpu.memory_space<vmem>>, vector<1x1x18x32xbf16>,
    %cst_13 = arith.constant 0.000000e+00 : bf16
    %13 = vector.broadcast %cst_13 : bf16 to vector<1x1x18x32xbf16>
    %c0_14 = arith.constant 0 : index
    %c17 = arith.constant 17 : index
    %c0_15 = arith.constant 0 : index
    %c0_16 = arith.constant 0 : index
    %14 = vector.load %arg15[%c0_14, %c17, %c0_15, %c0_16] : memref<1x18x18x32xbf16, #tpu.memory_space<vmem>>, vector<1x1x18x32xbf16>
    tpu.vector_store %arg15[%c0_14, %c17, %c0_15, %c0_16], %13 {strides = array<i32>} : memref<1x18x18x32xbf16, #tpu.memory_space<vmem>>, vector<1x1x18x32xbf16>,
    %cst_17 = arith.constant 0.000000e+00 : bf16
    %15 = vector.broadcast %cst_17 : bf16 to vector<1x18x1x32xbf16>
    %c0_18 = arith.constant 0 : index
    %c0_19 = arith.constant 0 : index
    %c0_20 = arith.constant 0 : index
    %c0_21 = arith.constant 0 : index
    %16 = vector.load %arg15[%c0_18, %c0_19, %c0_20, %c0_21] : memref<1x18x18x32xbf16, #tpu.memory_space<vmem>>, vector<1x18x1x32xbf16>
    tpu.vector_store %arg15[%c0_18, %c0_19, %c0_20, %c0_21], %15 {strides = array<i32>} : memref<1x18x18x32xbf16, #tpu.memory_space<vmem>>, vector<1x18x1x32xbf16>,
    %cst_22 = arith.constant 0.000000e+00 : bf16
    %17 = vector.broadcast %cst_22 : bf16 to vector<1x18x1x32xbf16>
    %c0_23 = arith.constant 0 : index
    %c0_24 = arith.constant 0 : index
    %c17_25 = arith.constant 17 : index
    %c0_26 = arith.constant 0 : index
    %18 = vector.load %arg15[%c0_23, %c0_24, %c17_25, %c0_26] : memref<1x18x18x32xbf16, #tpu.memory_space<vmem>>, vector<1x18x1x32xbf16>
    tpu.vector_store %arg15[%c0_23, %c0_24, %c17_25, %c0_26], %17 {strides = array<i32>} : memref<1x18x18x32xbf16, #tpu.memory_space<vmem>>, vector<1x18x1x32xbf16>,
    %c0_27 = arith.constant 0 : index
    %c1 = arith.constant 1 : index
    %c1_28 = arith.constant 1 : index
    %c0_29 = arith.constant 0 : index
    %19 = vector.load %arg15[%c0_27, %c1, %c1_28, %c0_29] : memref<1x18x18x32xbf16, #tpu.memory_space<vmem>>, vector<1x16x16x32xbf16>
    tpu.vector_store %arg15[%c0_27, %c1, %c1_28, %c0_29], %10 {strides = array<i32>} : memref<1x18x18x32xbf16, #tpu.memory_space<vmem>>, vector<1x16x16x32xbf16>,
    %c0_30 = arith.constant 0 : index
    %c0_31 = arith.constant 0 : index
    %c0_32 = arith.constant 0 : index
    %c0_33 = arith.constant 0 : index
    %20 = vector.load %arg15[%c0_30, %c0_31, %c0_32, %c0_33] : memref<1x18x18x32xbf16, #tpu.memory_space<vmem>>, vector<1x16x16x32xbf16>
    %c0_34 = arith.constant 0 : index
    %c0_35 = arith.constant 0 : index
    %c1_36 = arith.constant 1 : index
    %c0_37 = arith.constant 0 : index
    %21 = vector.load %arg15[%c0_34, %c0_35, %c1_36, %c0_37] : memref<1x18x18x32xbf16, #tpu.memory_space<vmem>>, vector<1x16x16x32xbf16>
    %c0_38 = arith.constant 0 : index
    %c0_39 = arith.constant 0 : index
    %c2 = arith.constant 2 : index
    %c0_40 = arith.constant 0 : index
    %22 = vector.load %arg15[%c0_38, %c0_39, %c2, %c0_40] : memref<1x18x18x32xbf16, #tpu.memory_space<vmem>>, vector<1x16x16x32xbf16>
    %c0_41 = arith.constant 0 : index
    %c1_42 = arith.constant 1 : index
    %c0_43 = arith.constant 0 : index
    %c0_44 = arith.constant 0 : index
    %23 = vector.load %arg15[%c0_41, %c1_42, %c0_43, %c0_44] : memref<1x18x18x32xbf16, #tpu.memory_space<vmem>>, vector<1x16x16x32xbf16>
    %c0_45 = arith.constant 0 : index
    %c1_46 = arith.constant 1 : index
    %c1_47 = arith.constant 1 : index
    %c0_48 = arith.constant 0 : index
    %24 = vector.load %arg15[%c0_45, %c1_46, %c1_47, %c0_48] : memref<1x18x18x32xbf16, #tpu.memory_space<vmem>>, vector<1x16x16x32xbf16>
    %c0_49 = arith.constant 0 : index
    %c1_50 = arith.constant 1 : index
    %c2_51 = arith.constant 2 : index
    %c0_52 = arith.constant 0 : index
    %25 = vector.load %arg15[%c0_49, %c1_50, %c2_51, %c0_52] : memref<1x18x18x32xbf16, #tpu.memory_space<vmem>>, vector<1x16x16x32xbf16>
    %c0_53 = arith.constant 0 : index
    %c2_54 = arith.constant 2 : index
    %c0_55 = arith.constant 0 : index
    %c0_56 = arith.constant 0 : index
    %26 = vector.load %arg15[%c0_53, %c2_54, %c0_55, %c0_56] : memref<1x18x18x32xbf16, #tpu.memory_space<vmem>>, vector<1x16x16x32xbf16>
    %c0_57 = arith.constant 0 : index
    %c2_58 = arith.constant 2 : index
    %c1_59 = arith.constant 1 : index
    %c0_60 = arith.constant 0 : index
    %27 = vector.load %arg15[%c0_57, %c2_58, %c1_59, %c0_60] : memref<1x18x18x32xbf16, #tpu.memory_space<vmem>>, vector<1x16x16x32xbf16>
    %c0_61 = arith.constant 0 : index
    %c2_62 = arith.constant 2 : index
    %c2_63 = arith.constant 2 : index
    %c0_64 = arith.constant 0 : index
    %28 = vector.load %arg15[%c0_61, %c2_62, %c2_63, %c0_64] : memref<1x18x18x32xbf16, #tpu.memory_space<vmem>>, vector<1x16x16x32xbf16>
    %29 = tpu.concatenate %20, %21, %22, %23, %24, %25, %26, %27, %28 in 3 : vector<1x16x16x32xbf16>, vector<1x16x16x32xbf16>, vector<1x16x16x32xbf16>, vector<1x16x16x32xbf16>, vector<1x16x16x32xbf16>, vector<1x16x16x32xbf16>, vector<1x16x16x32xbf16>, vector<1x16x16x32xbf16>, vector<1x16x16x32xbf16> -> vector<1x16x16x288xbf16>
    %30 = vector.shape_cast %29 : vector<1x16x16x288xbf16> to vector<256x288xbf16>
    %c0_65 = arith.constant 0 : index
    %c0_66 = arith.constant 0 : index
    %31 = vector.load %arg4[%c0_65, %c0_66] : memref<288x64xbf16, #tpu.memory_space<vmem>>, vector<288x64xbf16>
    %cst_67 = arith.constant dense<0.000000e+00> : vector<256x64xf32>
    %32 = tpu.matmul %30, %31, %cst_67 {dimension_numbers = #tpu.dot_dimension_numbers<[1], [0], [0], [1], [0, 0, 1, 1], [], []>} : vector<256x288xbf16>, vector<288x64xbf16>, vector<256x64xf32> -> vector<256x64xf32>
    %c0_68 = arith.constant 0 : index
    %c0_69 = arith.constant 0 : index
    %33 = vector.load %arg5[%c0_68, %c0_69] : memref<1x64xf32, #tpu.memory_space<vmem>>, vector<1x64xf32>
    %34 = vector.broadcast %33 : vector<1x64xf32> to vector<256x64xf32>
    %35 = arith.addf %32, %34 : vector<256x64xf32>
    %cst_70 = arith.constant 0.000000e+00 : f32
    %36 = vector.broadcast %cst_70 : f32 to vector<256x64xf32>
    %37 = arith.maximumf %35, %36 : vector<256x64xf32>
    %38 = vector.shape_cast %37 : vector<256x64xf32> to vector<1x16x16x64xf32>
    %cst_71 = arith.constant 0.000000e+00 : bf16
    %39 = vector.broadcast %cst_71 : bf16 to vector<1x1x10x64xbf16>
    %c0_72 = arith.constant 0 : index
    %c0_73 = arith.constant 0 : index
    %c0_74 = arith.constant 0 : index
    %c0_75 = arith.constant 0 : index
    %40 = vector.load %arg16[%c0_72, %c0_73, %c0_74, %c0_75] : memref<1x10x10x64xbf16, #tpu.memory_space<vmem>>, vector<1x1x10x64xbf16>
    tpu.vector_store %arg16[%c0_72, %c0_73, %c0_74, %c0_75], %39 {strides = array<i32>} : memref<1x10x10x64xbf16, #tpu.memory_space<vmem>>, vector<1x1x10x64xbf16>,
    %cst_76 = arith.constant 0.000000e+00 : bf16
    %41 = vector.broadcast %cst_76 : bf16 to vector<1x1x10x64xbf16>
    %c0_77 = arith.constant 0 : index
    %c9 = arith.constant 9 : index
    %c0_78 = arith.constant 0 : index
    %c0_79 = arith.constant 0 : index
    %42 = vector.load %arg16[%c0_77, %c9, %c0_78, %c0_79] : memref<1x10x10x64xbf16, #tpu.memory_space<vmem>>, vector<1x1x10x64xbf16>
    tpu.vector_store %arg16[%c0_77, %c9, %c0_78, %c0_79], %41 {strides = array<i32>} : memref<1x10x10x64xbf16, #tpu.memory_space<vmem>>, vector<1x1x10x64xbf16>,
    %cst_80 = arith.constant 0.000000e+00 : bf16
    %43 = vector.broadcast %cst_80 : bf16 to vector<1x10x1x64xbf16>
    %c0_81 = arith.constant 0 : index
    %c0_82 = arith.constant 0 : index
    %c0_83 = arith.constant 0 : index
    %c0_84 = arith.constant 0 : index
    %44 = vector.load %arg16[%c0_81, %c0_82, %c0_83, %c0_84] : memref<1x10x10x64xbf16, #tpu.memory_space<vmem>>, vector<1x10x1x64xbf16>
    tpu.vector_store %arg16[%c0_81, %c0_82, %c0_83, %c0_84], %43 {strides = array<i32>} : memref<1x10x10x64xbf16, #tpu.memory_space<vmem>>, vector<1x10x1x64xbf16>,
    %cst_85 = arith.constant 0.000000e+00 : bf16
    %45 = vector.broadcast %cst_85 : bf16 to vector<1x10x1x64xbf16>
    %c0_86 = arith.constant 0 : index
    %c0_87 = arith.constant 0 : index
    %c9_88 = arith.constant 9 : index
    %c0_89 = arith.constant 0 : index
    %46 = vector.load %arg16[%c0_86, %c0_87, %c9_88, %c0_89] : memref<1x10x10x64xbf16, #tpu.memory_space<vmem>>, vector<1x10x1x64xbf16>
    tpu.vector_store %arg16[%c0_86, %c0_87, %c9_88, %c0_89], %45 {strides = array<i32>} : memref<1x10x10x64xbf16, #tpu.memory_space<vmem>>, vector<1x10x1x64xbf16>,
    %47 = vector.extract_strided_slice %38 {offsets = [0, 0, 0, 0], sizes = [1, 1, 16, 64], strides = [1, 1, 1, 1]} : vector<1x16x16x64xf32> to vector<1x1x16x64xf32>
    %48 = vector.shape_cast %47 : vector<1x1x16x64xf32> to vector<1x16x64xf32>
    %49 = vector.extract_strided_slice %38 {offsets = [0, 1, 0, 0], sizes = [1, 1, 16, 64], strides = [1, 1, 1, 1]} : vector<1x16x16x64xf32> to vector<1x1x16x64xf32>
    %50 = vector.shape_cast %49 : vector<1x1x16x64xf32> to vector<1x16x64xf32>
    %51 = arith.maximumf %48, %50 : vector<1x16x64xf32>
    %52 = vector.extract_strided_slice %38 {offsets = [0, 2, 0, 0], sizes = [1, 1, 16, 64], strides = [1, 1, 1, 1]} : vector<1x16x16x64xf32> to vector<1x1x16x64xf32>
    %53 = vector.shape_cast %52 : vector<1x1x16x64xf32> to vector<1x16x64xf32>
    %54 = vector.extract_strided_slice %38 {offsets = [0, 3, 0, 0], sizes = [1, 1, 16, 64], strides = [1, 1, 1, 1]} : vector<1x16x16x64xf32> to vector<1x1x16x64xf32>
    %55 = vector.shape_cast %54 : vector<1x1x16x64xf32> to vector<1x16x64xf32>
    %56 = arith.maximumf %53, %55 : vector<1x16x64xf32>
    %57 = vector.extract_strided_slice %38 {offsets = [0, 4, 0, 0], sizes = [1, 1, 16, 64], strides = [1, 1, 1, 1]} : vector<1x16x16x64xf32> to vector<1x1x16x64xf32>
    %58 = vector.shape_cast %57 : vector<1x1x16x64xf32> to vector<1x16x64xf32>
    %59 = vector.extract_strided_slice %38 {offsets = [0, 5, 0, 0], sizes = [1, 1, 16, 64], strides = [1, 1, 1, 1]} : vector<1x16x16x64xf32> to vector<1x1x16x64xf32>
    %60 = vector.shape_cast %59 : vector<1x1x16x64xf32> to vector<1x16x64xf32>
    %61 = arith.maximumf %58, %60 : vector<1x16x64xf32>
    %62 = vector.extract_strided_slice %38 {offsets = [0, 6, 0, 0], sizes = [1, 1, 16, 64], strides = [1, 1, 1, 1]} : vector<1x16x16x64xf32> to vector<1x1x16x64xf32>
    %63 = vector.shape_cast %62 : vector<1x1x16x64xf32> to vector<1x16x64xf32>
    %64 = vector.extract_strided_slice %38 {offsets = [0, 7, 0, 0], sizes = [1, 1, 16, 64], strides = [1, 1, 1, 1]} : vector<1x16x16x64xf32> to vector<1x1x16x64xf32>
    %65 = vector.shape_cast %64 : vector<1x1x16x64xf32> to vector<1x16x64xf32>
    %66 = arith.maximumf %63, %65 : vector<1x16x64xf32>
    %67 = vector.extract_strided_slice %38 {offsets = [0, 8, 0, 0], sizes = [1, 1, 16, 64], strides = [1, 1, 1, 1]} : vector<1x16x16x64xf32> to vector<1x1x16x64xf32>
    %68 = vector.shape_cast %67 : vector<1x1x16x64xf32> to vector<1x16x64xf32>
    %69 = vector.extract_strided_slice %38 {offsets = [0, 9, 0, 0], sizes = [1, 1, 16, 64], strides = [1, 1, 1, 1]} : vector<1x16x16x64xf32> to vector<1x1x16x64xf32>
    %70 = vector.shape_cast %69 : vector<1x1x16x64xf32> to vector<1x16x64xf32>
    %71 = arith.maximumf %68, %70 : vector<1x16x64xf32>
    %72 = vector.extract_strided_slice %38 {offsets = [0, 10, 0, 0], sizes = [1, 1, 16, 64], strides = [1, 1, 1, 1]} : vector<1x16x16x64xf32> to vector<1x1x16x64xf32>
    %73 = vector.shape_cast %72 : vector<1x1x16x64xf32> to vector<1x16x64xf32>
    %74 = vector.extract_strided_slice %38 {offsets = [0, 11, 0, 0], sizes = [1, 1, 16, 64], strides = [1, 1, 1, 1]} : vector<1x16x16x64xf32> to vector<1x1x16x64xf32>
    %75 = vector.shape_cast %74 : vector<1x1x16x64xf32> to vector<1x16x64xf32>
    %76 = arith.maximumf %73, %75 : vector<1x16x64xf32>
    %77 = vector.extract_strided_slice %38 {offsets = [0, 12, 0, 0], sizes = [1, 1, 16, 64], strides = [1, 1, 1, 1]} : vector<1x16x16x64xf32> to vector<1x1x16x64xf32>
    %78 = vector.shape_cast %77 : vector<1x1x16x64xf32> to vector<1x16x64xf32>
    %79 = vector.extract_strided_slice %38 {offsets = [0, 13, 0, 0], sizes = [1, 1, 16, 64], strides = [1, 1, 1, 1]} : vector<1x16x16x64xf32> to vector<1x1x16x64xf32>
    %80 = vector.shape_cast %79 : vector<1x1x16x64xf32> to vector<1x16x64xf32>
    %81 = arith.maximumf %78, %80 : vector<1x16x64xf32>
    %82 = vector.extract_strided_slice %38 {offsets = [0, 14, 0, 0], sizes = [1, 1, 16, 64], strides = [1, 1, 1, 1]} : vector<1x16x16x64xf32> to vector<1x1x16x64xf32>
    %83 = vector.shape_cast %82 : vector<1x1x16x64xf32> to vector<1x16x64xf32>
    %84 = vector.extract_strided_slice %38 {offsets = [0, 15, 0, 0], sizes = [1, 1, 16, 64], strides = [1, 1, 1, 1]} : vector<1x16x16x64xf32> to vector<1x1x16x64xf32>
    %85 = vector.shape_cast %84 : vector<1x1x16x64xf32> to vector<1x16x64xf32>
    %86 = arith.maximumf %83, %85 : vector<1x16x64xf32>
    %87 = vector.shape_cast %51 : vector<1x16x64xf32> to vector<1x1x16x64xf32>
    %88 = vector.shape_cast %56 : vector<1x16x64xf32> to vector<1x1x16x64xf32>
    %89 = vector.shape_cast %61 : vector<1x16x64xf32> to vector<1x1x16x64xf32>
    %90 = vector.shape_cast %66 : vector<1x16x64xf32> to vector<1x1x16x64xf32>
    %91 = vector.shape_cast %71 : vector<1x16x64xf32> to vector<1x1x16x64xf32>
    %92 = vector.shape_cast %76 : vector<1x16x64xf32> to vector<1x1x16x64xf32>
    %93 = vector.shape_cast %81 : vector<1x16x64xf32> to vector<1x1x16x64xf32>
    %94 = vector.shape_cast %86 : vector<1x16x64xf32> to vector<1x1x16x64xf32>
    %95 = tpu.concatenate %87, %88, %89, %90, %91, %92, %93, %94 in 1 : vector<1x1x16x64xf32>, vector<1x1x16x64xf32>, vector<1x1x16x64xf32>, vector<1x1x16x64xf32>, vector<1x1x16x64xf32>, vector<1x1x16x64xf32>, vector<1x1x16x64xf32>, vector<1x1x16x64xf32> -> vector<1x8x16x64xf32>
    %96 = vector.extract_strided_slice %95 {offsets = [0, 0, 0, 0], sizes = [1, 8, 2, 64], strides = [1, 1, 1, 1]} : vector<1x8x16x64xf32> to vector<1x8x2x64xf32>
    %cst_90 = arith.constant dense<0xFF800000> : vector<1x8x64xf32>
    %97 = vector.multi_reduction <maximumf>, %96, %cst_90 [2] : vector<1x8x2x64xf32> to vector<1x8x64xf32>
    %98 = arith.truncf %97 : vector<1x8x64xf32> to vector<1x8x64xbf16>
    %c0_91 = arith.constant 0 : index
    %c1_92 = arith.constant 1 : index
    %c1_93 = arith.constant 1 : index
    %c0_94 = arith.constant 0 : index
    %99 = vector.load %arg16[%c0_91, %c1_92, %c1_93, %c0_94] : memref<1x10x10x64xbf16, #tpu.memory_space<vmem>>, vector<1x8x1x64xbf16>
    %100 = vector.shape_cast %99 : vector<1x8x1x64xbf16> to vector<1x8x64xbf16>
    %101 = vector.shape_cast %98 : vector<1x8x64xbf16> to vector<1x8x1x64xbf16>
    tpu.vector_store %arg16[%c0_91, %c1_92, %c1_93, %c0_94], %101 {strides = array<i32>} : memref<1x10x10x64xbf16, #tpu.memory_space<vmem>>, vector<1x8x1x64xbf16>,
    %102 = vector.extract_strided_slice %95 {offsets = [0, 0, 2, 0], sizes = [1, 8, 2, 64], strides = [1, 1, 1, 1]} : vector<1x8x16x64xf32> to vector<1x8x2x64xf32>
    %cst_95 = arith.constant dense<0xFF800000> : vector<1x8x64xf32>
    %103 = vector.multi_reduction <maximumf>, %102, %cst_95 [2] : vector<1x8x2x64xf32> to vector<1x8x64xf32>
    %104 = arith.truncf %103 : vector<1x8x64xf32> to vector<1x8x64xbf16>
    %c0_96 = arith.constant 0 : index
    %c1_97 = arith.constant 1 : index
    %c2_98 = arith.constant 2 : index
    %c0_99 = arith.constant 0 : index
    %105 = vector.load %arg16[%c0_96, %c1_97, %c2_98, %c0_99] : memref<1x10x10x64xbf16, #tpu.memory_space<vmem>>, vector<1x8x1x64xbf16>
    %106 = vector.shape_cast %105 : vector<1x8x1x64xbf16> to vector<1x8x64xbf16>
    %107 = vector.shape_cast %104 : vector<1x8x64xbf16> to vector<1x8x1x64xbf16>
    tpu.vector_store %arg16[%c0_96, %c1_97, %c2_98, %c0_99], %107 {strides = array<i32>} : memref<1x10x10x64xbf16, #tpu.memory_space<vmem>>, vector<1x8x1x64xbf16>,
    %108 = vector.extract_strided_slice %95 {offsets = [0, 0, 4, 0], sizes = [1, 8, 2, 64], strides = [1, 1, 1, 1]} : vector<1x8x16x64xf32> to vector<1x8x2x64xf32>
    %cst_100 = arith.constant dense<0xFF800000> : vector<1x8x64xf32>
    %109 = vector.multi_reduction <maximumf>, %108, %cst_100 [2] : vector<1x8x2x64xf32> to vector<1x8x64xf32>
    %110 = arith.truncf %109 : vector<1x8x64xf32> to vector<1x8x64xbf16>
    %c0_101 = arith.constant 0 : index
    %c1_102 = arith.constant 1 : index
    %c3 = arith.constant 3 : index
    %c0_103 = arith.constant 0 : index
    %111 = vector.load %arg16[%c0_101, %c1_102, %c3, %c0_103] : memref<1x10x10x64xbf16, #tpu.memory_space<vmem>>, vector<1x8x1x64xbf16>
    %112 = vector.shape_cast %111 : vector<1x8x1x64xbf16> to vector<1x8x64xbf16>
    %113 = vector.shape_cast %110 : vector<1x8x64xbf16> to vector<1x8x1x64xbf16>
    tpu.vector_store %arg16[%c0_101, %c1_102, %c3, %c0_103], %113 {strides = array<i32>} : memref<1x10x10x64xbf16, #tpu.memory_space<vmem>>, vector<1x8x1x64xbf16>,
    %114 = vector.extract_strided_slice %95 {offsets = [0, 0, 6, 0], sizes = [1, 8, 2, 64], strides = [1, 1, 1, 1]} : vector<1x8x16x64xf32> to vector<1x8x2x64xf32>
    %cst_104 = arith.constant dense<0xFF800000> : vector<1x8x64xf32>
    %115 = vector.multi_reduction <maximumf>, %114, %cst_104 [2] : vector<1x8x2x64xf32> to vector<1x8x64xf32>
    %116 = arith.truncf %115 : vector<1x8x64xf32> to vector<1x8x64xbf16>
    %c0_105 = arith.constant 0 : index
    %c1_106 = arith.constant 1 : index
    %c4 = arith.constant 4 : index
    %c0_107 = arith.constant 0 : index
    %117 = vector.load %arg16[%c0_105, %c1_106, %c4, %c0_107] : memref<1x10x10x64xbf16, #tpu.memory_space<vmem>>, vector<1x8x1x64xbf16>
    %118 = vector.shape_cast %117 : vector<1x8x1x64xbf16> to vector<1x8x64xbf16>
    %119 = vector.shape_cast %116 : vector<1x8x64xbf16> to vector<1x8x1x64xbf16>
    tpu.vector_store %arg16[%c0_105, %c1_106, %c4, %c0_107], %119 {strides = array<i32>} : memref<1x10x10x64xbf16, #tpu.memory_space<vmem>>, vector<1x8x1x64xbf16>,
    %120 = vector.extract_strided_slice %95 {offsets = [0, 0, 8, 0], sizes = [1, 8, 2, 64], strides = [1, 1, 1, 1]} : vector<1x8x16x64xf32> to vector<1x8x2x64xf32>
    %cst_108 = arith.constant dense<0xFF800000> : vector<1x8x64xf32>
    %121 = vector.multi_reduction <maximumf>, %120, %cst_108 [2] : vector<1x8x2x64xf32> to vector<1x8x64xf32>
    %122 = arith.truncf %121 : vector<1x8x64xf32> to vector<1x8x64xbf16>
    %c0_109 = arith.constant 0 : index
    %c1_110 = arith.constant 1 : index
    %c5 = arith.constant 5 : index
    %c0_111 = arith.constant 0 : index
    %123 = vector.load %arg16[%c0_109, %c1_110, %c5, %c0_111] : memref<1x10x10x64xbf16, #tpu.memory_space<vmem>>, vector<1x8x1x64xbf16>
    %124 = vector.shape_cast %123 : vector<1x8x1x64xbf16> to vector<1x8x64xbf16>
    %125 = vector.shape_cast %122 : vector<1x8x64xbf16> to vector<1x8x1x64xbf16>
    tpu.vector_store %arg16[%c0_109, %c1_110, %c5, %c0_111], %125 {strides = array<i32>} : memref<1x10x10x64xbf16, #tpu.memory_space<vmem>>, vector<1x8x1x64xbf16>,
    %126 = vector.extract_strided_slice %95 {offsets = [0, 0, 10, 0], sizes = [1, 8, 2, 64], strides = [1, 1, 1, 1]} : vector<1x8x16x64xf32> to vector<1x8x2x64xf32>
    %cst_112 = arith.constant dense<0xFF800000> : vector<1x8x64xf32>
    %127 = vector.multi_reduction <maximumf>, %126, %cst_112 [2] : vector<1x8x2x64xf32> to vector<1x8x64xf32>
    %128 = arith.truncf %127 : vector<1x8x64xf32> to vector<1x8x64xbf16>
    %c0_113 = arith.constant 0 : index
    %c1_114 = arith.constant 1 : index
    %c6 = arith.constant 6 : index
    %c0_115 = arith.constant 0 : index
    %129 = vector.load %arg16[%c0_113, %c1_114, %c6, %c0_115] : memref<1x10x10x64xbf16, #tpu.memory_space<vmem>>, vector<1x8x1x64xbf16>
    %130 = vector.shape_cast %129 : vector<1x8x1x64xbf16> to vector<1x8x64xbf16>
    %131 = vector.shape_cast %128 : vector<1x8x64xbf16> to vector<1x8x1x64xbf16>
    tpu.vector_store %arg16[%c0_113, %c1_114, %c6, %c0_115], %131 {strides = array<i32>} : memref<1x10x10x64xbf16, #tpu.memory_space<vmem>>, vector<1x8x1x64xbf16>,
    %132 = vector.extract_strided_slice %95 {offsets = [0, 0, 12, 0], sizes = [1, 8, 2, 64], strides = [1, 1, 1, 1]} : vector<1x8x16x64xf32> to vector<1x8x2x64xf32>
    %cst_116 = arith.constant dense<0xFF800000> : vector<1x8x64xf32>
    %133 = vector.multi_reduction <maximumf>, %132, %cst_116 [2] : vector<1x8x2x64xf32> to vector<1x8x64xf32>
    %134 = arith.truncf %133 : vector<1x8x64xf32> to vector<1x8x64xbf16>
    %c0_117 = arith.constant 0 : index
    %c1_118 = arith.constant 1 : index
    %c7 = arith.constant 7 : index
    %c0_119 = arith.constant 0 : index
    %135 = vector.load %arg16[%c0_117, %c1_118, %c7, %c0_119] : memref<1x10x10x64xbf16, #tpu.memory_space<vmem>>, vector<1x8x1x64xbf16>
    %136 = vector.shape_cast %135 : vector<1x8x1x64xbf16> to vector<1x8x64xbf16>
    %137 = vector.shape_cast %134 : vector<1x8x64xbf16> to vector<1x8x1x64xbf16>
    tpu.vector_store %arg16[%c0_117, %c1_118, %c7, %c0_119], %137 {strides = array<i32>} : memref<1x10x10x64xbf16, #tpu.memory_space<vmem>>, vector<1x8x1x64xbf16>,
    %138 = vector.extract_strided_slice %95 {offsets = [0, 0, 14, 0], sizes = [1, 8, 2, 64], strides = [1, 1, 1, 1]} : vector<1x8x16x64xf32> to vector<1x8x2x64xf32>
    %cst_120 = arith.constant dense<0xFF800000> : vector<1x8x64xf32>
    %139 = vector.multi_reduction <maximumf>, %138, %cst_120 [2] : vector<1x8x2x64xf32> to vector<1x8x64xf32>
    %140 = arith.truncf %139 : vector<1x8x64xf32> to vector<1x8x64xbf16>
    %c0_121 = arith.constant 0 : index
    %c1_122 = arith.constant 1 : index
    %c8 = arith.constant 8 : index
    %c0_123 = arith.constant 0 : index
    %141 = vector.load %arg16[%c0_121, %c1_122, %c8, %c0_123] : memref<1x10x10x64xbf16, #tpu.memory_space<vmem>>, vector<1x8x1x64xbf16>
    %142 = vector.shape_cast %141 : vector<1x8x1x64xbf16> to vector<1x8x64xbf16>
    %143 = vector.shape_cast %140 : vector<1x8x64xbf16> to vector<1x8x1x64xbf16>
    tpu.vector_store %arg16[%c0_121, %c1_122, %c8, %c0_123], %143 {strides = array<i32>} : memref<1x10x10x64xbf16, #tpu.memory_space<vmem>>, vector<1x8x1x64xbf16>,
    %c0_124 = arith.constant 0 : index
    %c0_125 = arith.constant 0 : index
    %c0_126 = arith.constant 0 : index
    %c0_127 = arith.constant 0 : index
    %144 = vector.load %arg16[%c0_124, %c0_125, %c0_126, %c0_127] : memref<1x10x10x64xbf16, #tpu.memory_space<vmem>>, vector<1x8x8x64xbf16>
    %c0_128 = arith.constant 0 : index
    %c0_129 = arith.constant 0 : index
    %c1_130 = arith.constant 1 : index
    %c0_131 = arith.constant 0 : index
    %145 = vector.load %arg16[%c0_128, %c0_129, %c1_130, %c0_131] : memref<1x10x10x64xbf16, #tpu.memory_space<vmem>>, vector<1x8x8x64xbf16>
    %c0_132 = arith.constant 0 : index
    %c0_133 = arith.constant 0 : index
    %c2_134 = arith.constant 2 : index
    %c0_135 = arith.constant 0 : index
    %146 = vector.load %arg16[%c0_132, %c0_133, %c2_134, %c0_135] : memref<1x10x10x64xbf16, #tpu.memory_space<vmem>>, vector<1x8x8x64xbf16>
    %c0_136 = arith.constant 0 : index
    %c1_137 = arith.constant 1 : index
    %c0_138 = arith.constant 0 : index
    %c0_139 = arith.constant 0 : index
    %147 = vector.load %arg16[%c0_136, %c1_137, %c0_138, %c0_139] : memref<1x10x10x64xbf16, #tpu.memory_space<vmem>>, vector<1x8x8x64xbf16>
    %c0_140 = arith.constant 0 : index
    %c1_141 = arith.constant 1 : index
    %c1_142 = arith.constant 1 : index
    %c0_143 = arith.constant 0 : index
    %148 = vector.load %arg16[%c0_140, %c1_141, %c1_142, %c0_143] : memref<1x10x10x64xbf16, #tpu.memory_space<vmem>>, vector<1x8x8x64xbf16>
    %c0_144 = arith.constant 0 : index
    %c1_145 = arith.constant 1 : index
    %c2_146 = arith.constant 2 : index
    %c0_147 = arith.constant 0 : index
    %149 = vector.load %arg16[%c0_144, %c1_145, %c2_146, %c0_147] : memref<1x10x10x64xbf16, #tpu.memory_space<vmem>>, vector<1x8x8x64xbf16>
    %c0_148 = arith.constant 0 : index
    %c2_149 = arith.constant 2 : index
    %c0_150 = arith.constant 0 : index
    %c0_151 = arith.constant 0 : index
    %150 = vector.load %arg16[%c0_148, %c2_149, %c0_150, %c0_151] : memref<1x10x10x64xbf16, #tpu.memory_space<vmem>>, vector<1x8x8x64xbf16>
    %c0_152 = arith.constant 0 : index
    %c2_153 = arith.constant 2 : index
    %c1_154 = arith.constant 1 : index
    %c0_155 = arith.constant 0 : index
    %151 = vector.load %arg16[%c0_152, %c2_153, %c1_154, %c0_155] : memref<1x10x10x64xbf16, #tpu.memory_space<vmem>>, vector<1x8x8x64xbf16>
    %c0_156 = arith.constant 0 : index
    %c2_157 = arith.constant 2 : index
    %c2_158 = arith.constant 2 : index
    %c0_159 = arith.constant 0 : index
    %152 = vector.load %arg16[%c0_156, %c2_157, %c2_158, %c0_159] : memref<1x10x10x64xbf16, #tpu.memory_space<vmem>>, vector<1x8x8x64xbf16>
    %153 = tpu.concatenate %144, %145, %146, %147, %148, %149, %150, %151, %152 in 3 : vector<1x8x8x64xbf16>, vector<1x8x8x64xbf16>, vector<1x8x8x64xbf16>, vector<1x8x8x64xbf16>, vector<1x8x8x64xbf16>, vector<1x8x8x64xbf16>, vector<1x8x8x64xbf16>, vector<1x8x8x64xbf16>, vector<1x8x8x64xbf16> -> vector<1x8x8x576xbf16>
    %154 = vector.shape_cast %153 : vector<1x8x8x576xbf16> to vector<64x576xbf16>
    %c0_160 = arith.constant 0 : index
    %c0_161 = arith.constant 0 : index
    %155 = vector.load %arg6[%c0_160, %c0_161] : memref<576x128xbf16, #tpu.memory_space<vmem>>, vector<576x128xbf16>
    %cst_162 = arith.constant dense<0.000000e+00> : vector<64x128xf32>
    %156 = tpu.matmul %154, %155, %cst_162 {dimension_numbers = #tpu.dot_dimension_numbers<[1], [0], [0], [1], [0, 0, 1, 1], [], []>} : vector<64x576xbf16>, vector<576x128xbf16>, vector<64x128xf32> -> vector<64x128xf32>
    %c0_163 = arith.constant 0 : index
    %c0_164 = arith.constant 0 : index
    %157 = vector.load %arg7[%c0_163, %c0_164] : memref<1x128xf32, #tpu.memory_space<vmem>>, vector<1x128xf32>
    %158 = vector.broadcast %157 : vector<1x128xf32> to vector<64x128xf32>
    %159 = arith.addf %156, %158 : vector<64x128xf32>
    %cst_165 = arith.constant 0.000000e+00 : f32
    %160 = vector.broadcast %cst_165 : f32 to vector<64x128xf32>
    %161 = arith.maximumf %159, %160 : vector<64x128xf32>
    %162 = arith.truncf %161 : vector<64x128xf32> to vector<64x128xbf16>
    %163 = vector.shape_cast %162 : vector<64x128xbf16> to vector<1x8x8x128xbf16>
    %cst_166 = arith.constant 0.000000e+00 : bf16
    %164 = vector.broadcast %cst_166 : bf16 to vector<1x1x10x128xbf16>
    %c0_167 = arith.constant 0 : index
    %c0_168 = arith.constant 0 : index
    %c0_169 = arith.constant 0 : index
    %c0_170 = arith.constant 0 : index
    %165 = vector.load %arg17[%c0_167, %c0_168, %c0_169, %c0_170] : memref<1x10x10x128xbf16, #tpu.memory_space<vmem>>, vector<1x1x10x128xbf16>
    tpu.vector_store %arg17[%c0_167, %c0_168, %c0_169, %c0_170], %164 {strides = array<i32>} : memref<1x10x10x128xbf16, #tpu.memory_space<vmem>>, vector<1x1x10x128xbf16>,
    %cst_171 = arith.constant 0.000000e+00 : bf16
    %166 = vector.broadcast %cst_171 : bf16 to vector<1x1x10x128xbf16>
    %c0_172 = arith.constant 0 : index
    %c9_173 = arith.constant 9 : index
    %c0_174 = arith.constant 0 : index
    %c0_175 = arith.constant 0 : index
    %167 = vector.load %arg17[%c0_172, %c9_173, %c0_174, %c0_175] : memref<1x10x10x128xbf16, #tpu.memory_space<vmem>>, vector<1x1x10x128xbf16>
    tpu.vector_store %arg17[%c0_172, %c9_173, %c0_174, %c0_175], %166 {strides = array<i32>} : memref<1x10x10x128xbf16, #tpu.memory_space<vmem>>, vector<1x1x10x128xbf16>,
    %cst_176 = arith.constant 0.000000e+00 : bf16
    %168 = vector.broadcast %cst_176 : bf16 to vector<1x10x1x128xbf16>
    %c0_177 = arith.constant 0 : index
    %c0_178 = arith.constant 0 : index
    %c0_179 = arith.constant 0 : index
    %c0_180 = arith.constant 0 : index
    %169 = vector.load %arg17[%c0_177, %c0_178, %c0_179, %c0_180] : memref<1x10x10x128xbf16, #tpu.memory_space<vmem>>, vector<1x10x1x128xbf16>
    tpu.vector_store %arg17[%c0_177, %c0_178, %c0_179, %c0_180], %168 {strides = array<i32>} : memref<1x10x10x128xbf16, #tpu.memory_space<vmem>>, vector<1x10x1x128xbf16>,
    %cst_181 = arith.constant 0.000000e+00 : bf16
    %170 = vector.broadcast %cst_181 : bf16 to vector<1x10x1x128xbf16>
    %c0_182 = arith.constant 0 : index
    %c0_183 = arith.constant 0 : index
    %c9_184 = arith.constant 9 : index
    %c0_185 = arith.constant 0 : index
    %171 = vector.load %arg17[%c0_182, %c0_183, %c9_184, %c0_185] : memref<1x10x10x128xbf16, #tpu.memory_space<vmem>>, vector<1x10x1x128xbf16>
    tpu.vector_store %arg17[%c0_182, %c0_183, %c9_184, %c0_185], %170 {strides = array<i32>} : memref<1x10x10x128xbf16, #tpu.memory_space<vmem>>, vector<1x10x1x128xbf16>,
    %c0_186 = arith.constant 0 : index
    %c1_187 = arith.constant 1 : index
    %c1_188 = arith.constant 1 : index
    %c0_189 = arith.constant 0 : index
    %172 = vector.load %arg17[%c0_186, %c1_187, %c1_188, %c0_189] : memref<1x10x10x128xbf16, #tpu.memory_space<vmem>>, vector<1x8x8x128xbf16>
    tpu.vector_store %arg17[%c0_186, %c1_187, %c1_188, %c0_189], %163 {strides = array<i32>} : memref<1x10x10x128xbf16, #tpu.memory_space<vmem>>, vector<1x8x8x128xbf16>,
    %c0_190 = arith.constant 0 : index
    %c0_191 = arith.constant 0 : index
    %c0_192 = arith.constant 0 : index
    %c0_193 = arith.constant 0 : index
    %173 = vector.load %arg17[%c0_190, %c0_191, %c0_192, %c0_193] : memref<1x10x10x128xbf16, #tpu.memory_space<vmem>>, vector<1x8x8x128xbf16>
    %c0_194 = arith.constant 0 : index
    %c0_195 = arith.constant 0 : index
    %c1_196 = arith.constant 1 : index
    %c0_197 = arith.constant 0 : index
    %174 = vector.load %arg17[%c0_194, %c0_195, %c1_196, %c0_197] : memref<1x10x10x128xbf16, #tpu.memory_space<vmem>>, vector<1x8x8x128xbf16>
    %c0_198 = arith.constant 0 : index
    %c0_199 = arith.constant 0 : index
    %c2_200 = arith.constant 2 : index
    %c0_201 = arith.constant 0 : index
    %175 = vector.load %arg17[%c0_198, %c0_199, %c2_200, %c0_201] : memref<1x10x10x128xbf16, #tpu.memory_space<vmem>>, vector<1x8x8x128xbf16>
    %c0_202 = arith.constant 0 : index
    %c1_203 = arith.constant 1 : index
    %c0_204 = arith.constant 0 : index
    %c0_205 = arith.constant 0 : index
    %176 = vector.load %arg17[%c0_202, %c1_203, %c0_204, %c0_205] : memref<1x10x10x128xbf16, #tpu.memory_space<vmem>>, vector<1x8x8x128xbf16>
    %c0_206 = arith.constant 0 : index
    %c1_207 = arith.constant 1 : index
    %c1_208 = arith.constant 1 : index
    %c0_209 = arith.constant 0 : index
    %177 = vector.load %arg17[%c0_206, %c1_207, %c1_208, %c0_209] : memref<1x10x10x128xbf16, #tpu.memory_space<vmem>>, vector<1x8x8x128xbf16>
    %c0_210 = arith.constant 0 : index
    %c1_211 = arith.constant 1 : index
    %c2_212 = arith.constant 2 : index
    %c0_213 = arith.constant 0 : index
    %178 = vector.load %arg17[%c0_210, %c1_211, %c2_212, %c0_213] : memref<1x10x10x128xbf16, #tpu.memory_space<vmem>>, vector<1x8x8x128xbf16>
    %c0_214 = arith.constant 0 : index
    %c2_215 = arith.constant 2 : index
    %c0_216 = arith.constant 0 : index
    %c0_217 = arith.constant 0 : index
    %179 = vector.load %arg17[%c0_214, %c2_215, %c0_216, %c0_217] : memref<1x10x10x128xbf16, #tpu.memory_space<vmem>>, vector<1x8x8x128xbf16>
    %c0_218 = arith.constant 0 : index
    %c2_219 = arith.constant 2 : index
    %c1_220 = arith.constant 1 : index
    %c0_221 = arith.constant 0 : index
    %180 = vector.load %arg17[%c0_218, %c2_219, %c1_220, %c0_221] : memref<1x10x10x128xbf16, #tpu.memory_space<vmem>>, vector<1x8x8x128xbf16>
    %c0_222 = arith.constant 0 : index
    %c2_223 = arith.constant 2 : index
    %c2_224 = arith.constant 2 : index
    %c0_225 = arith.constant 0 : index
    %181 = vector.load %arg17[%c0_222, %c2_223, %c2_224, %c0_225] : memref<1x10x10x128xbf16, #tpu.memory_space<vmem>>, vector<1x8x8x128xbf16>
    %182 = tpu.concatenate %173, %174, %175, %176, %177, %178, %179, %180, %181 in 3 : vector<1x8x8x128xbf16>, vector<1x8x8x128xbf16>, vector<1x8x8x128xbf16>, vector<1x8x8x128xbf16>, vector<1x8x8x128xbf16>, vector<1x8x8x128xbf16>, vector<1x8x8x128xbf16>, vector<1x8x8x128xbf16>, vector<1x8x8x128xbf16> -> vector<1x8x8x1152xbf16>
    %183 = vector.shape_cast %182 : vector<1x8x8x1152xbf16> to vector<64x1152xbf16>
    %c0_226 = arith.constant 0 : index
    %c0_227 = arith.constant 0 : index
    %184 = vector.load %arg8[%c0_226, %c0_227] : memref<1152x256xbf16, #tpu.memory_space<vmem>>, vector<1152x256xbf16>
    %cst_228 = arith.constant dense<0.000000e+00> : vector<64x256xf32>
    %185 = tpu.matmul %183, %184, %cst_228 {dimension_numbers = #tpu.dot_dimension_numbers<[1], [0], [0], [1], [0, 0, 1, 1], [], []>} : vector<64x1152xbf16>, vector<1152x256xbf16>, vector<64x256xf32> -> vector<64x256xf32>
    %c0_229 = arith.constant 0 : index
    %c0_230 = arith.constant 0 : index
    %186 = vector.load %arg9[%c0_229, %c0_230] : memref<1x256xf32, #tpu.memory_space<vmem>>, vector<1x256xf32>
    %187 = vector.broadcast %186 : vector<1x256xf32> to vector<64x256xf32>
    %188 = arith.addf %185, %187 : vector<64x256xf32>
    %cst_231 = arith.constant 0.000000e+00 : f32
    %189 = vector.broadcast %cst_231 : f32 to vector<64x256xf32>
    %190 = arith.maximumf %188, %189 : vector<64x256xf32>
    %191 = vector.shape_cast %190 : vector<64x256xf32> to vector<1x8x8x256xf32>
    %192 = vector.extract_strided_slice %191 {offsets = [0, 0, 0, 0], sizes = [1, 1, 8, 256], strides = [1, 1, 1, 1]} : vector<1x8x8x256xf32> to vector<1x1x8x256xf32>
    %193 = vector.shape_cast %192 : vector<1x1x8x256xf32> to vector<1x8x256xf32>
    %194 = vector.extract_strided_slice %191 {offsets = [0, 1, 0, 0], sizes = [1, 1, 8, 256], strides = [1, 1, 1, 1]} : vector<1x8x8x256xf32> to vector<1x1x8x256xf32>
    %195 = vector.shape_cast %194 : vector<1x1x8x256xf32> to vector<1x8x256xf32>
    %196 = arith.maximumf %193, %195 : vector<1x8x256xf32>
    %197 = vector.extract_strided_slice %196 {offsets = [0, 0, 0], sizes = [1, 2, 256], strides = [1, 1, 1]} : vector<1x8x256xf32> to vector<1x2x256xf32>
    %cst_232 = arith.constant dense<0xFF800000> : vector<1x256xf32>
    %198 = vector.multi_reduction <maximumf>, %197, %cst_232 [1] : vector<1x2x256xf32> to vector<1x256xf32>
    %199 = vector.extract_strided_slice %196 {offsets = [0, 2, 0], sizes = [1, 2, 256], strides = [1, 1, 1]} : vector<1x8x256xf32> to vector<1x2x256xf32>
    %cst_233 = arith.constant dense<0xFF800000> : vector<1x256xf32>
    %200 = vector.multi_reduction <maximumf>, %199, %cst_233 [1] : vector<1x2x256xf32> to vector<1x256xf32>
    %201 = vector.extract_strided_slice %196 {offsets = [0, 4, 0], sizes = [1, 2, 256], strides = [1, 1, 1]} : vector<1x8x256xf32> to vector<1x2x256xf32>
    %cst_234 = arith.constant dense<0xFF800000> : vector<1x256xf32>
    %202 = vector.multi_reduction <maximumf>, %201, %cst_234 [1] : vector<1x2x256xf32> to vector<1x256xf32>
    %203 = vector.extract_strided_slice %196 {offsets = [0, 6, 0], sizes = [1, 2, 256], strides = [1, 1, 1]} : vector<1x8x256xf32> to vector<1x2x256xf32>
    %cst_235 = arith.constant dense<0xFF800000> : vector<1x256xf32>
    %204 = vector.multi_reduction <maximumf>, %203, %cst_235 [1] : vector<1x2x256xf32> to vector<1x256xf32>
    %205 = vector.extract_strided_slice %191 {offsets = [0, 2, 0, 0], sizes = [1, 1, 8, 256], strides = [1, 1, 1, 1]} : vector<1x8x8x256xf32> to vector<1x1x8x256xf32>
    %206 = vector.shape_cast %205 : vector<1x1x8x256xf32> to vector<1x8x256xf32>
    %207 = vector.extract_strided_slice %191 {offsets = [0, 3, 0, 0], sizes = [1, 1, 8, 256], strides = [1, 1, 1, 1]} : vector<1x8x8x256xf32> to vector<1x1x8x256xf32>
    %208 = vector.shape_cast %207 : vector<1x1x8x256xf32> to vector<1x8x256xf32>
    %209 = arith.maximumf %206, %208 : vector<1x8x256xf32>
    %210 = vector.extract_strided_slice %209 {offsets = [0, 0, 0], sizes = [1, 2, 256], strides = [1, 1, 1]} : vector<1x8x256xf32> to vector<1x2x256xf32>
    %cst_236 = arith.constant dense<0xFF800000> : vector<1x256xf32>
    %211 = vector.multi_reduction <maximumf>, %210, %cst_236 [1] : vector<1x2x256xf32> to vector<1x256xf32>
    %212 = vector.extract_strided_slice %209 {offsets = [0, 2, 0], sizes = [1, 2, 256], strides = [1, 1, 1]} : vector<1x8x256xf32> to vector<1x2x256xf32>
    %cst_237 = arith.constant dense<0xFF800000> : vector<1x256xf32>
    %213 = vector.multi_reduction <maximumf>, %212, %cst_237 [1] : vector<1x2x256xf32> to vector<1x256xf32>
    %214 = vector.extract_strided_slice %209 {offsets = [0, 4, 0], sizes = [1, 2, 256], strides = [1, 1, 1]} : vector<1x8x256xf32> to vector<1x2x256xf32>
    %cst_238 = arith.constant dense<0xFF800000> : vector<1x256xf32>
    %215 = vector.multi_reduction <maximumf>, %214, %cst_238 [1] : vector<1x2x256xf32> to vector<1x256xf32>
    %216 = vector.extract_strided_slice %209 {offsets = [0, 6, 0], sizes = [1, 2, 256], strides = [1, 1, 1]} : vector<1x8x256xf32> to vector<1x2x256xf32>
    %cst_239 = arith.constant dense<0xFF800000> : vector<1x256xf32>
    %217 = vector.multi_reduction <maximumf>, %216, %cst_239 [1] : vector<1x2x256xf32> to vector<1x256xf32>
    %218 = vector.extract_strided_slice %191 {offsets = [0, 4, 0, 0], sizes = [1, 1, 8, 256], strides = [1, 1, 1, 1]} : vector<1x8x8x256xf32> to vector<1x1x8x256xf32>
    %219 = vector.shape_cast %218 : vector<1x1x8x256xf32> to vector<1x8x256xf32>
    %220 = vector.extract_strided_slice %191 {offsets = [0, 5, 0, 0], sizes = [1, 1, 8, 256], strides = [1, 1, 1, 1]} : vector<1x8x8x256xf32> to vector<1x1x8x256xf32>
    %221 = vector.shape_cast %220 : vector<1x1x8x256xf32> to vector<1x8x256xf32>
    %222 = arith.maximumf %219, %221 : vector<1x8x256xf32>
    %223 = vector.extract_strided_slice %222 {offsets = [0, 0, 0], sizes = [1, 2, 256], strides = [1, 1, 1]} : vector<1x8x256xf32> to vector<1x2x256xf32>
    %cst_240 = arith.constant dense<0xFF800000> : vector<1x256xf32>
    %224 = vector.multi_reduction <maximumf>, %223, %cst_240 [1] : vector<1x2x256xf32> to vector<1x256xf32>
    %225 = vector.extract_strided_slice %222 {offsets = [0, 2, 0], sizes = [1, 2, 256], strides = [1, 1, 1]} : vector<1x8x256xf32> to vector<1x2x256xf32>
    %cst_241 = arith.constant dense<0xFF800000> : vector<1x256xf32>
    %226 = vector.multi_reduction <maximumf>, %225, %cst_241 [1] : vector<1x2x256xf32> to vector<1x256xf32>
    %227 = vector.extract_strided_slice %222 {offsets = [0, 4, 0], sizes = [1, 2, 256], strides = [1, 1, 1]} : vector<1x8x256xf32> to vector<1x2x256xf32>
    %cst_242 = arith.constant dense<0xFF800000> : vector<1x256xf32>
    %228 = vector.multi_reduction <maximumf>, %227, %cst_242 [1] : vector<1x2x256xf32> to vector<1x256xf32>
    %229 = vector.extract_strided_slice %222 {offsets = [0, 6, 0], sizes = [1, 2, 256], strides = [1, 1, 1]} : vector<1x8x256xf32> to vector<1x2x256xf32>
    %cst_243 = arith.constant dense<0xFF800000> : vector<1x256xf32>
    %230 = vector.multi_reduction <maximumf>, %229, %cst_243 [1] : vector<1x2x256xf32> to vector<1x256xf32>
    %231 = vector.extract_strided_slice %191 {offsets = [0, 6, 0, 0], sizes = [1, 1, 8, 256], strides = [1, 1, 1, 1]} : vector<1x8x8x256xf32> to vector<1x1x8x256xf32>
    %232 = vector.shape_cast %231 : vector<1x1x8x256xf32> to vector<1x8x256xf32>
    %233 = vector.extract_strided_slice %191 {offsets = [0, 7, 0, 0], sizes = [1, 1, 8, 256], strides = [1, 1, 1, 1]} : vector<1x8x8x256xf32> to vector<1x1x8x256xf32>
    %234 = vector.shape_cast %233 : vector<1x1x8x256xf32> to vector<1x8x256xf32>
    %235 = arith.maximumf %232, %234 : vector<1x8x256xf32>
    %236 = vector.extract_strided_slice %235 {offsets = [0, 0, 0], sizes = [1, 2, 256], strides = [1, 1, 1]} : vector<1x8x256xf32> to vector<1x2x256xf32>
    %cst_244 = arith.constant dense<0xFF800000> : vector<1x256xf32>
    %237 = vector.multi_reduction <maximumf>, %236, %cst_244 [1] : vector<1x2x256xf32> to vector<1x256xf32>
    %238 = vector.extract_strided_slice %235 {offsets = [0, 2, 0], sizes = [1, 2, 256], strides = [1, 1, 1]} : vector<1x8x256xf32> to vector<1x2x256xf32>
    %cst_245 = arith.constant dense<0xFF800000> : vector<1x256xf32>
    %239 = vector.multi_reduction <maximumf>, %238, %cst_245 [1] : vector<1x2x256xf32> to vector<1x256xf32>
    %240 = vector.extract_strided_slice %235 {offsets = [0, 4, 0], sizes = [1, 2, 256], strides = [1, 1, 1]} : vector<1x8x256xf32> to vector<1x2x256xf32>
    %cst_246 = arith.constant dense<0xFF800000> : vector<1x256xf32>
    %241 = vector.multi_reduction <maximumf>, %240, %cst_246 [1] : vector<1x2x256xf32> to vector<1x256xf32>
    %242 = vector.extract_strided_slice %235 {offsets = [0, 6, 0], sizes = [1, 2, 256], strides = [1, 1, 1]} : vector<1x8x256xf32> to vector<1x2x256xf32>
    %cst_247 = arith.constant dense<0xFF800000> : vector<1x256xf32>
    %243 = vector.multi_reduction <maximumf>, %242, %cst_247 [1] : vector<1x2x256xf32> to vector<1x256xf32>
    %244 = tpu.concatenate %198, %200, %202, %204, %211, %213, %215, %217, %224, %226, %228, %230, %237, %239, %241, %243 in 1 : vector<1x256xf32>, vector<1x256xf32>, vector<1x256xf32>, vector<1x256xf32>, vector<1x256xf32>, vector<1x256xf32>, vector<1x256xf32>, vector<1x256xf32>, vector<1x256xf32>, vector<1x256xf32>, vector<1x256xf32>, vector<1x256xf32>, vector<1x256xf32>, vector<1x256xf32>, vector<1x256xf32>, vector<1x256xf32> -> vector<1x4096xf32>
    %245 = arith.truncf %244 : vector<1x4096xf32> to vector<1x4096xbf16>
    %c0_248 = arith.constant 0 : index
    %c0_249 = arith.constant 0 : index
    %246 = vector.load %arg10[%c0_248, %c0_249] : memref<4096x128xbf16, #tpu.memory_space<vmem>>, vector<4096x128xbf16>
    %cst_250 = arith.constant dense<0.000000e+00> : vector<1x128xf32>
    %247 = tpu.matmul %245, %246, %cst_250 {dimension_numbers = #tpu.dot_dimension_numbers<[1], [0], [0], [1], [0, 0, 1, 1], [], []>} : vector<1x4096xbf16>, vector<4096x128xbf16>, vector<1x128xf32> -> vector<1x128xf32>
    %c0_251 = arith.constant 0 : index
    %c0_252 = arith.constant 0 : index
    %248 = vector.load %arg11[%c0_251, %c0_252] : memref<1x128xf32, #tpu.memory_space<vmem>>, vector<1x128xf32>
    %249 = arith.addf %247, %248 : vector<1x128xf32>
    %cst_253 = arith.constant 0.000000e+00 : f32
    %250 = vector.broadcast %cst_253 : f32 to vector<1x128xf32>
    %251 = arith.maximumf %249, %250 : vector<1x128xf32>
    %252 = arith.truncf %251 : vector<1x128xf32> to vector<1x128xbf16>
    %c0_254 = arith.constant 0 : index
    %c0_255 = arith.constant 0 : index
    %253 = vector.load %arg12[%c0_254, %c0_255] : memref<128x128xbf16, #tpu.memory_space<vmem>>, vector<128x128xbf16>
    %cst_256 = arith.constant dense<0.000000e+00> : vector<1x128xf32>
    %254 = tpu.matmul %252, %253, %cst_256 {dimension_numbers = #tpu.dot_dimension_numbers<[1], [0], [0], [1], [0, 0, 1, 1], [], []>} : vector<1x128xbf16>, vector<128x128xbf16>, vector<1x128xf32> -> vector<1x128xf32>
    %c0_257 = arith.constant 0 : index
    %c0_258 = arith.constant 0 : index
    %255 = vector.load %arg13[%c0_257, %c0_258] : memref<1x128xf32, #tpu.memory_space<vmem>>, vector<1x128xf32>
    %256 = arith.addf %254, %255 : vector<1x128xf32>
    %cst_259 = arith.constant dense<0xFF800000> : vector<1xf32>
    %257 = vector.multi_reduction <maximumf>, %256, %cst_259 [1] : vector<1x128xf32> to vector<1xf32>
    %258 = vector.shape_cast %257 : vector<1xf32> to vector<1x1xf32>
    %259 = vector.broadcast %258 : vector<1x1xf32> to vector<1x128xf32>
    %260 = arith.subf %256, %259 : vector<1x128xf32>
    %261 = math.exp %260 : vector<1x128xf32>
    %cst_260 = arith.constant dense<0.000000e+00> : vector<1xf32>
    %262 = vector.multi_reduction <add>, %261, %cst_260 [1] : vector<1x128xf32> to vector<1xf32>
    %263 = vector.shape_cast %262 : vector<1xf32> to vector<1x1xf32>
    %264 = vector.broadcast %263 : vector<1x1xf32> to vector<1x128xf32>
    %265 = arith.divf %261, %264 : vector<1x128xf32>
    %266 = vector.shape_cast %265 : vector<1x128xf32> to vector<1x1x128xf32>
    %c0_261 = arith.constant 0 : index
    %c0_262 = arith.constant 0 : index
    %c0_263 = arith.constant 0 : index
    %267 = vector.load %arg14[%c0_261, %c0_262, %c0_263] : memref<1x1x128xf32, #tpu.memory_space<vmem>>, vector<1x1x128xf32>
    tpu.vector_store %arg14[%c0_261, %c0_262, %c0_263], %266 {strides = array<i32>} : memref<1x1x128xf32, #tpu.memory_space<vmem>>, vector<1x1x128xf32>,
    return
  }
  func.func @transform_0(%arg0: i32) -> (i32, i32, i32, i32) {
    %c0_i32 = arith.constant 0 : i32
    %c0_i32_0 = arith.constant 0 : i32
    %c0_i32_1 = arith.constant 0 : i32
    %c0_i32_2 = arith.constant 0 : i32
    return %arg0, %c0_i32, %c0_i32_0, %c0_i32_1 : i32, i32, i32, i32
  }
  func.func @transform_1(%arg0: i32) -> (i32, i32) {
    %c0_i32 = arith.constant 0 : i32
    %c0_i32_0 = arith.constant 0 : i32
    %c0_i32_1 = arith.constant 0 : i32
    return %c0_i32, %c0_i32_0 : i32, i32
  }
  func.func @transform_2(%arg0: i32) -> (i32, i32) {
    %c0_i32 = arith.constant 0 : i32
    %c0_i32_0 = arith.constant 0 : i32
    %c0_i32_1 = arith.constant 0 : i32
    return %c0_i32, %c0_i32_0 : i32, i32
  }
  func.func @transform_3(%arg0: i32) -> (i32, i32) {
    %c0_i32 = arith.constant 0 : i32
    %c0_i32_0 = arith.constant 0 : i32
    %c0_i32_1 = arith.constant 0 : i32
    return %c0_i32, %c0_i32_0 : i32, i32
  }
  func.func @transform_4(%arg0: i32) -> (i32, i32) {
    %c0_i32 = arith.constant 0 : i32
    %c0_i32_0 = arith.constant 0 : i32
    %c0_i32_1 = arith.constant 0 : i32
    return %c0_i32, %c0_i32_0 : i32, i32
  }
  func.func @transform_5(%arg0: i32) -> (i32, i32) {
    %c0_i32 = arith.constant 0 : i32
    %c0_i32_0 = arith.constant 0 : i32
    %c0_i32_1 = arith.constant 0 : i32
    return %c0_i32, %c0_i32_0 : i32, i32
  }
  func.func @transform_6(%arg0: i32) -> (i32, i32) {
    %c0_i32 = arith.constant 0 : i32
    %c0_i32_0 = arith.constant 0 : i32
    %c0_i32_1 = arith.constant 0 : i32
    return %c0_i32, %c0_i32_0 : i32, i32
  }
  func.func @transform_7(%arg0: i32) -> (i32, i32) {
    %c0_i32 = arith.constant 0 : i32
    %c0_i32_0 = arith.constant 0 : i32
    %c0_i32_1 = arith.constant 0 : i32
    return %c0_i32, %c0_i32_0 : i32, i32
  }
  func.func @transform_8(%arg0: i32) -> (i32, i32) {
    %c0_i32 = arith.constant 0 : i32
    %c0_i32_0 = arith.constant 0 : i32
    %c0_i32_1 = arith.constant 0 : i32
    return %c0_i32, %c0_i32_0 : i32, i32
  }
  func.func @transform_9(%arg0: i32) -> (i32, i32) {
    %c0_i32 = arith.constant 0 : i32
    %c0_i32_0 = arith.constant 0 : i32
    %c0_i32_1 = arith.constant 0 : i32
    return %c0_i32, %c0_i32_0 : i32, i32
  }
  func.func @transform_10(%arg0: i32) -> (i32, i32) {
    %c0_i32 = arith.constant 0 : i32
    %c0_i32_0 = arith.constant 0 : i32
    %c0_i32_1 = arith.constant 0 : i32
    return %c0_i32, %c0_i32_0 : i32, i32
  }
  func.func @transform_11(%arg0: i32) -> (i32, i32) {
    %c0_i32 = arith.constant 0 : i32
    %c0_i32_0 = arith.constant 0 : i32
    %c0_i32_1 = arith.constant 0 : i32
    return %c0_i32, %c0_i32_0 : i32, i32
  }
  func.func @transform_12(%arg0: i32) -> (i32, i32) {
    %c0_i32 = arith.constant 0 : i32
    %c0_i32_0 = arith.constant 0 : i32
    %c0_i32_1 = arith.constant 0 : i32
    return %c0_i32, %c0_i32_0 : i32, i32
  }
  func.func @transform_13(%arg0: i32) -> (i32, i32, i32) {
    %c0_i32 = arith.constant 0 : i32
    %c0_i32_0 = arith.constant 0 : i32
    %c0_i32_1 = arith.constant 0 : i32
    return %arg0, %c0_i32, %c0_i32_0 : i32, i32, i32
  }
}

</mosaic_0001>

<llo_original>
// kernel: net_forward.1
$region0: #{net_forward.1}
  #allocation0 [shape = 'u32[]', space=smem, size = 0x4, offset = 0x4, fixed_abs, tag = 'smem constant byte address 0x4 - core index']
  #allocation1 [shape = 'u32[144,128]{1,0:T(1,128)}', space=vmem, size = 0x12000, scoped, tag = 'internal scratch']
  #allocation2 [shape = 'bf16[1,18,18,32]{3,2,1,0:T(8,128)(2,1)}', space=vmem, size = 0x1b000, scoped, tag = 'scratch operand']
  #allocation3 [shape = 'bf16[1,10,10,64]{3,2,1,0:T(8,128)(2,1)}', space=vmem, size = 0xa000, scoped, tag = 'scratch operand']
  #allocation4 [shape = 'bf16[1,10,10,128]{3,2,1,0:T(8,128)(2,1)}', space=vmem, size = 0xa000, scoped, tag = 'scratch operand']
  %s0 = inlined_call_operand.vmem [shape: bf16[2,16,16,147], index: 0, kind: input, shape index: {}]
  %s1 = inlined_call_operand.vmem [shape: bf16[147,32], index: 1, kind: input, shape index: {}]
  %s2 = inlined_call_operand.vmem [shape: f32[1,32], index: 2, kind: input, shape index: {}]
  %s3 = inlined_call_operand.vmem [shape: bf16[288,64], index: 3, kind: input, shape index: {}]
  %s4 = inlined_call_operand.vmem [shape: f32[1,64], index: 4, kind: input, shape index: {}]
  %s5 = inlined_call_operand.vmem [shape: bf16[576,128], index: 5, kind: input, shape index: {}]
  %s6 = inlined_call_operand.vmem [shape: f32[1,128], index: 6, kind: input, shape index: {}, may-alias: {6,10}]
  %s7 = inlined_call_operand.vmem [shape: bf16[1152,256], index: 7, kind: input, shape index: {}]
  %s8 = inlined_call_operand.vmem [shape: f32[1,256], index: 8, kind: input, shape index: {}]
  %s9 = inlined_call_operand.vmem [shape: bf16[4096,128], index: 9, kind: input, shape index: {}]
  %s10 = inlined_call_operand.vmem [shape: f32[1,128], index: 10, kind: input, shape index: {}, may-alias: {6,10}]
  %s11 = inlined_call_operand.vmem [shape: bf16[128,128], index: 11, kind: input, shape index: {}]
  %s12 = inlined_call_operand.vmem [shape: f32[1,128], index: 12, kind: input, shape index: {}]
  %s13 = inlined_call_operand.hbm [shape: f32[2,1,128], index: 13, kind: output, shape index: {}]
  %s14 = sld [smem:[#allocation0]]
  $region85: #{net_forward.1} parent=0
    _
  %s16 = ssub.s32 1, %s14
  %s17 = scalar_select 0, %s16, %s14
  $region1: #{net_forward.1} parent=0
    #allocation5 [shape = 'u8[1024]{0}', space=vmem, size = 0x400, scoped, tag = 'output window, operand 0']
    #allocation6 [shape = 's32[2]{0}', space=sflag, size = 0x8, scoped, tag = 'scoped memory for net_forward.1']
    %18 = vsyncpa [#allocation6], 0
    %s19 = scalar_lea.sflag [#allocation6], 1
    %20 = vsyncpa %s19, 0
    loop: start=0, step=1, limit=4
    $region2: #{net_forward.1} parent=1 // loop_pre_header
      _
    $region3: #{net_forward.1} parent=1 // loop_header
      %s22 = sphi 0, %s26
      %p23 = scmp.ge.s32.totalorder %s22, 4
      %s32 = sphi 0, %s34
      %s35 = sphi 0, %s32
      %s36 = sphi 0, %s35
      %s52 = sphi 0, %s36
      %s56 = sphi 0, %s56
      %s58 = sphi 0, %s56
      %s59 = sphi 0, %s58
      %s73 = sphi 0, %s59
      %s77 = sphi 0, %s77
      %s79 = sphi 0, %s77
      %s80 = sphi 0, %s79
      %s94 = sphi 0, %s80
      %s98 = sphi 0, %s98
      %s100 = sphi 0, %s98
      %s101 = sphi 0, %s100
      %s115 = sphi 0, %s101
      %s119 = sphi 0, %s119
      %s121 = sphi 0, %s119
      %s122 = sphi 0, %s121
      %s136 = sphi 0, %s122
      %s140 = sphi 0, %s140
      %s142 = sphi 0, %s140
      %s143 = sphi 0, %s142
      %s157 = sphi 0, %s143
      %s161 = sphi 0, %s161
      %s163 = sphi 0, %s161
      %s164 = sphi 0, %s163
      %s178 = sphi 0, %s164
      %s182 = sphi 0, %s182
      %s184 = sphi 0, %s182
      %s185 = sphi 0, %s184
      %s199 = sphi 0, %s185
      %s203 = sphi 0, %s203
      %s205 = sphi 0, %s203
      %s206 = sphi 0, %s205
      %s220 = sphi 0, %s206
      %s224 = sphi 0, %s224
      %s226 = sphi 0, %s224
      %s227 = sphi 0, %s226
      %s241 = sphi 0, %s227
      %s245 = sphi 0, %s245
      %s247 = sphi 0, %s245
      %s248 = sphi 0, %s247
      %s262 = sphi 0, %s248
      %s266 = sphi 0, %s266
      %s268 = sphi 0, %s266
      %s269 = sphi 0, %s268
      %s283 = sphi 0, %s269
      %s287 = sphi 0, %s287
      %s289 = sphi 0, %s287
      %s290 = sphi 0, %s289
      %s304 = sphi 0, %s290
      %s310 = sphi 0, %s312
      %s313 = sphi 0, %s310
      %s314 = sphi 0, %s313
      %s330 = sphi 0, %s314
    $region4: #{net_forward.1} parent=1 // loop_header_branch
      %25 = sbr.rel (%p23) target = $region8
    $region5: #{net_forward.1} parent=1 // loop_body
      %s27 = ssub.s32 %s22, 1
      %s28 = ssub.s32 %s22, 2
      %s29 = sadd.s32 %s22, 1
      %s30 = ssub.s32 %s22, %s29
      %p31 = scmp.eq.s32.totalorder %s30, 0
      %s33 = sadd.s32 %s32, 1
      %s34 = scalar_select %p31, %s32, %s33
      %p37 = pneg %p31
      %p38 = scmp.eq.s32.totalorder %s22, 1
      %p39 = por %p37, %p38
      %p40 = scmp.ne.s32.totalorder %s32, %s35
      %p41 = scmp.eq.s32.totalorder %s22, 0
      %p42 = por %p40, %p41
      %p43 = scmp.ne.s32.totalorder %s32, %s35
      %p44 = scmp.eq.s32.totalorder %s27, 1
      %p45 = por %p43, %p44
      %p46 = scmp.ne.s32.totalorder %s35, %s36
      %p47 = scmp.eq.s32.totalorder %s27, 0
      %p48 = por %p46, %p47
      %p49 = scmp.ne.s32.totalorder %s35, %s36
      %p50 = scmp.eq.s32.totalorder %s28, 1
      %p51 = por %p49, %p50
      %p53 = scmp.ne.s32.totalorder %s36, %s52
      %p54 = scmp.eq.s32.totalorder %s28, 0
      %p55 = por %p53, %p54
      %s57 = sadd.s32 %s56, 1
      %p60 = scmp.eq.s32.totalorder %s22, 1
      %p61 = scmp.ne.s32.totalorder %s56, %s58
      %p62 = scmp.eq.s32.totalorder %s22, 0
      %p63 = por %p61, %p62
      %p64 = scmp.ne.s32.totalorder %s56, %s58
      %p65 = scmp.eq.s32.totalorder %s27, 1
      %p66 = por %p64, %p65
      %p67 = scmp.ne.s32.totalorder %s58, %s59
      %p68 = scmp.eq.s32.totalorder %s27, 0
      %p69 = por %p67, %p68
      %p70 = scmp.ne.s32.totalorder %s58, %s59
      %p71 = scmp.eq.s32.totalorder %s28, 1
      %p72 = por %p70, %p71
      %p74 = scmp.ne.s32.totalorder %s59, %s73
      %p75 = scmp.eq.s32.totalorder %s28, 0
      %p76 = por %p74, %p75
      %s78 = sadd.s32 %s77, 1
      %p81 = scmp.eq.s32.totalorder %s22, 1
      %p82 = scmp.ne.s32.totalorder %s77, %s79
      %p83 = scmp.eq.s32.totalorder %s22, 0
      %p84 = por %p82, %p83
      %p85 = scmp.ne.s32.totalorder %s77, %s79
      %p86 = scmp.eq.s32.totalorder %s27, 1
      %p87 = por %p85, %p86
      %p88 = scmp.ne.s32.totalorder %s79, %s80
      %p89 = scmp.eq.s32.totalorder %s27, 0
      %p90 = por %p88, %p89
      %p91 = scmp.ne.s32.totalorder %s79, %s80
      %p92 = scmp.eq.s32.totalorder %s28, 1
      %p93 = por %p91, %p92
      %p95 = scmp.ne.s32.totalorder %s80, %s94
      %p96 = scmp.eq.s32.totalorder %s28, 0
      %p97 = por %p95, %p96
      %s99 = sadd.s32 %s98, 1
      %p102 = scmp.eq.s32.totalorder %s22, 1
      %p103 = scmp.ne.s32.totalorder %s98, %s100
      %p104 = scmp.eq.s32.totalorder %s22, 0
      %p105 = por %p103, %p104
      %p106 = scmp.ne.s32.totalorder %s98, %s100
      %p107 = scmp.eq.s32.totalorder %s27, 1
      %p108 = por %p106, %p107
      %p109 = scmp.ne.s32.totalorder %s100, %s101
      %p110 = scmp.eq.s32.totalorder %s27, 0
      %p111 = por %p109, %p110
      %p112 = scmp.ne.s32.totalorder %s100, %s101
      %p113 = scmp.eq.s32.totalorder %s28, 1
      %p114 = por %p112, %p113
      %p116 = scmp.ne.s32.totalorder %s101, %s115
      %p117 = scmp.eq.s32.totalorder %s28, 0
      %p118 = por %p116, %p117
      %s120 = sadd.s32 %s119, 1
      %p123 = scmp.eq.s32.totalorder %s22, 1
      %p124 = scmp.ne.s32.totalorder %s119, %s121
      %p125 = scmp.eq.s32.totalorder %s22, 0
      %p126 = por %p124, %p125
      %p127 = scmp.ne.s32.totalorder %s119, %s121
      %p128 = scmp.eq.s32.totalorder %s27, 1
      %p129 = por %p127, %p128
      %p130 = scmp.ne.s32.totalorder %s121, %s122
      %p131 = scmp.eq.s32.totalorder %s27, 0
      %p132 = por %p130, %p131
      %p133 = scmp.ne.s32.totalorder %s121, %s122
      %p134 = scmp.eq.s32.totalorder %s28, 1
      %p135 = por %p133, %p134
      %p137 = scmp.ne.s32.totalorder %s122, %s136
      %p138 = scmp.eq.s32.totalorder %s28, 0
      %p139 = por %p137, %p138
      %s141 = sadd.s32 %s140, 1
      %p144 = scmp.eq.s32.totalorder %s22, 1
      %p145 = scmp.ne.s32.totalorder %s140, %s142
      %p146 = scmp.eq.s32.totalorder %s22, 0
      %p147 = por %p145, %p146
      %p148 = scmp.ne.s32.totalorder %s140, %s142
      %p149 = scmp.eq.s32.totalorder %s27, 1
      %p150 = por %p148, %p149
      %p151 = scmp.ne.s32.totalorder %s142, %s143
      %p152 = scmp.eq.s32.totalorder %s27, 0
      %p153 = por %p151, %p152
      %p154 = scmp.ne.s32.totalorder %s142, %s143
      %p155 = scmp.eq.s32.totalorder %s28, 1
      %p156 = por %p154, %p155
      %p158 = scmp.ne.s32.totalorder %s143, %s157
      %p159 = scmp.eq.s32.totalorder %s28, 0
      %p160 = por %p158, %p159
      %s162 = sadd.s32 %s161, 1
      %p165 = scmp.eq.s32.totalorder %s22, 1
      %p166 = scmp.ne.s32.totalorder %s161, %s163
      %p167 = scmp.eq.s32.totalorder %s22, 0
      %p168 = por %p166, %p167
      %p169 = scmp.ne.s32.totalorder %s161, %s163
      %p170 = scmp.eq.s32.totalorder %s27, 1
      %p171 = por %p169, %p170
      %p172 = scmp.ne.s32.totalorder %s163, %s164
      %p173 = scmp.eq.s32.totalorder %s27, 0
      %p174 = por %p172, %p173
      %p175 = scmp.ne.s32.totalorder %s163, %s164
      %p176 = scmp.eq.s32.totalorder %s28, 1
      %p177 = por %p175, %p176
      %p179 = scmp.ne.s32.totalorder %s164, %s178
      %p180 = scmp.eq.s32.totalorder %s28, 0
      %p181 = por %p179, %p180
      %s183 = sadd.s32 %s182, 1
      %p186 = scmp.eq.s32.totalorder %s22, 1
      %p187 = scmp.ne.s32.totalorder %s182, %s184
      %p188 = scmp.eq.s32.totalorder %s22, 0
      %p189 = por %p187, %p188
      %p190 = scmp.ne.s32.totalorder %s182, %s184
      %p191 = scmp.eq.s32.totalorder %s27, 1
      %p192 = por %p190, %p191
      %p193 = scmp.ne.s32.totalorder %s184, %s185
      %p194 = scmp.eq.s32.totalorder %s27, 0
      %p195 = por %p193, %p194
      %p196 = scmp.ne.s32.totalorder %s184, %s185
      %p197 = scmp.eq.s32.totalorder %s28, 1
      %p198 = por %p196, %p197
      %p200 = scmp.ne.s32.totalorder %s185, %s199
      %p201 = scmp.eq.s32.totalorder %s28, 0
      %p202 = por %p200, %p201
      %s204 = sadd.s32 %s203, 1
      %p207 = scmp.eq.s32.totalorder %s22, 1
      %p208 = scmp.ne.s32.totalorder %s203, %s205
      %p209 = scmp.eq.s32.totalorder %s22, 0
      %p210 = por %p208, %p209
      %p211 = scmp.ne.s32.totalorder %s203, %s205
      %p212 = scmp.eq.s32.totalorder %s27, 1
      %p213 = por %p211, %p212
      %p214 = scmp.ne.s32.totalorder %s205, %s206
      %p215 = scmp.eq.s32.totalorder %s27, 0
      %p216 = por %p214, %p215
      %p217 = scmp.ne.s32.totalorder %s205, %s206
      %p218 = scmp.eq.s32.totalorder %s28, 1
      %p219 = por %p217, %p218
      %p221 = scmp.ne.s32.totalorder %s206, %s220
      %p222 = scmp.eq.s32.totalorder %s28, 0
      %p223 = por %p221, %p222
      %s225 = sadd.s32 %s224, 1
      %p228 = scmp.eq.s32.totalorder %s22, 1
      %p229 = scmp.ne.s32.totalorder %s224, %s226
      %p230 = scmp.eq.s32.totalorder %s22, 0
      %p231 = por %p229, %p230
      %p232 = scmp.ne.s32.totalorder %s224, %s226
      %p233 = scmp.eq.s32.totalorder %s27, 1
      %p234 = por %p232, %p233
      %p235 = scmp.ne.s32.totalorder %s226, %s227
      %p236 = scmp.eq.s32.totalorder %s27, 0
      %p237 = por %p235, %p236
      %p238 = scmp.ne.s32.totalorder %s226, %s227
      %p239 = scmp.eq.s32.totalorder %s28, 1
      %p240 = por %p238, %p239
      %p242 = scmp.ne.s32.totalorder %s227, %s241
      %p243 = scmp.eq.s32.totalorder %s28, 0
      %p244 = por %p242, %p243
      %s246 = sadd.s32 %s245, 1
      %p249 = scmp.eq.s32.totalorder %s22, 1
      %p250 = scmp.ne.s32.totalorder %s245, %s247
      %p251 = scmp.eq.s32.totalorder %s22, 0
      %p252 = por %p250, %p251
      %p253 = scmp.ne.s32.totalorder %s245, %s247
      %p254 = scmp.eq.s32.totalorder %s27, 1
      %p255 = por %p253, %p254
      %p256 = scmp.ne.s32.totalorder %s247, %s248
      %p257 = scmp.eq.s32.totalorder %s27, 0
      %p258 = por %p256, %p257
      %p259 = scmp.ne.s32.totalorder %s247, %s248
      %p260 = scmp.eq.s32.totalorder %s28, 1
      %p261 = por %p259, %p260
      %p263 = scmp.ne.s32.totalorder %s248, %s262
      %p264 = scmp.eq.s32.totalorder %s28, 0
      %p265 = por %p263, %p264
      %s267 = sadd.s32 %s266, 1
      %p270 = scmp.eq.s32.totalorder %s22, 1
      %p271 = scmp.ne.s32.totalorder %s266, %s268
      %p272 = scmp.eq.s32.totalorder %s22, 0
      %p273 = por %p271, %p272
      %p274 = scmp.ne.s32.totalorder %s266, %s268
      %p275 = scmp.eq.s32.totalorder %s27, 1
      %p276 = por %p274, %p275
      %p277 = scmp.ne.s32.totalorder %s268, %s269
      %p278 = scmp.eq.s32.totalorder %s27, 0
      %p279 = por %p277, %p278
      %p280 = scmp.ne.s32.totalorder %s268, %s269
      %p281 = scmp.eq.s32.totalorder %s28, 1
      %p282 = por %p280, %p281
      %p284 = scmp.ne.s32.totalorder %s269, %s283
      %p285 = scmp.eq.s32.totalorder %s28, 0
      %p286 = por %p284, %p285
      %s288 = sadd.s32 %s287, 1
      %p291 = scmp.eq.s32.totalorder %s22, 1
      %p292 = scmp.ne.s32.totalorder %s287, %s289
      %p293 = scmp.eq.s32.totalorder %s22, 0
      %p294 = por %p292, %p293
      %p295 = scmp.ne.s32.totalorder %s287, %s289
      %p296 = scmp.eq.s32.totalorder %s27, 1
      %p297 = por %p295, %p296
      %p298 = scmp.ne.s32.totalorder %s289, %s290
      %p299 = scmp.eq.s32.totalorder %s27, 0
      %p300 = por %p298, %p299
      %p301 = scmp.ne.s32.totalorder %s289, %s290
      %p302 = scmp.eq.s32.totalorder %s28, 1
      %p303 = por %p301, %p302
      %p305 = scmp.ne.s32.totalorder %s290, %s304
      %p306 = scmp.eq.s32.totalorder %s28, 0
      %p307 = por %p305, %p306
      %s308 = ssub.s32 %s22, %s29
      %p309 = scmp.eq.s32.totalorder %s308, 0
      %s311 = sadd.s32 %s310, 1
      %s312 = scalar_select %p309, %s310, %s311
      %p315 = pneg %p309
      %p316 = scmp.eq.s32.totalorder %s22, 1
      %p317 = por %p315, %p316
      %p318 = scmp.ne.s32.totalorder %s310, %s313
      %p319 = scmp.eq.s32.totalorder %s22, 0
      %p320 = por %p318, %p319
      %p321 = scmp.ne.s32.totalorder %s310, %s313
      %p322 = scmp.eq.s32.totalorder %s27, 1
      %p323 = por %p321, %p322
      %p324 = scmp.ne.s32.totalorder %s313, %s314
      %p325 = scmp.eq.s32.totalorder %s27, 0
      %p326 = por %p324, %p325
      %p327 = scmp.ne.s32.totalorder %s313, %s314
      %p328 = scmp.eq.s32.totalorder %s28, 1
      %p329 = por %p327, %p328
      %p331 = scmp.ne.s32.totalorder %s314, %s330
      %p332 = scmp.eq.s32.totalorder %s28, 0
      %p333 = por %p331, %p332
      %p334 = scmp.le.s32.totalorder 1, %s22
      %p335 = scmp.lt.s32.totalorder %s22, 3
      %p336 = pnand %p334, %p335
      %p337 = pneg %p336
      // Predicated region
      $region9: #{net_forward.1} parent=5 // pred_check
        _
      $region10: #{net_forward.1} parent=5 // pred_check_branch
        %339 = sbr.rel (%p336) target = $region12
      $region11: #{net_forward.1} parent=5 // pred_region
        %s340 = ssub.s32 %s22, 1
        // Predicated region
        $region13: #{net_forward.1} parent=11 // pred_check
          %p341 = pneg %p69
        $region14: #{net_forward.1} parent=11 // pred_check_branch
          %343 = sbr.rel (%p341) target = $region16
        $region15: #{net_forward.1} parent=11 // pred_region
          _
        $region16: #{net_forward.1} parent=11 // pred_fallthru
          _
        // Predicated region
        $region17: #{net_forward.1} parent=11 // pred_check
          %p344 = pneg %p90
        $region18: #{net_forward.1} parent=11 // pred_check_branch
          %346 = sbr.rel (%p344) target = $region20
        $region19: #{net_forward.1} parent=11 // pred_region
          _
        $region20: #{net_forward.1} parent=11 // pred_fallthru
          _
        // Predicated region
        $region21: #{net_forward.1} parent=11 // pred_check
          %p347 = pneg %p111
        $region22: #{net_forward.1} parent=11 // pred_check_branch
          %349 = sbr.rel (%p347) target = $region24
        $region23: #{net_forward.1} parent=11 // pred_region
          _
        $region24: #{net_forward.1} parent=11 // pred_fallthru
          _
        // Predicated region
        $region25: #{net_forward.1} parent=11 // pred_check
          %p350 = pneg %p132
        $region26: #{net_forward.1} parent=11 // pred_check_branch
          %352 = sbr.rel (%p350) target = $region28
        $region27: #{net_forward.1} parent=11 // pred_region
          _
        $region28: #{net_forward.1} parent=11 // pred_fallthru
          _
        // Predicated region
        $region29: #{net_forward.1} parent=11 // pred_check
          %p353 = pneg %p153
        $region30: #{net_forward.1} parent=11 // pred_check_branch
          %355 = sbr.rel (%p353) target = $region32
        $region31: #{net_forward.1} parent=11 // pred_region
          _
        $region32: #{net_forward.1} parent=11 // pred_fallthru
          _
        // Predicated region
        $region33: #{net_forward.1} parent=11 // pred_check
          %p356 = pneg %p174
        $region34: #{net_forward.1} parent=11 // pred_check_branch
          %358 = sbr.rel (%p356) target = $region36
        $region35: #{net_forward.1} parent=11 // pred_region
          _
        $region36: #{net_forward.1} parent=11 // pred_fallthru
          _
        // Predicated region
        $region37: #{net_forward.1} parent=11 // pred_check
          %p359 = pneg %p195
        $region38: #{net_forward.1} parent=11 // pred_check_branch
          %361 = sbr.rel (%p359) target = $region40
        $region39: #{net_forward.1} parent=11 // pred_region
          _
        $region40: #{net_forward.1} parent=11 // pred_fallthru
          _
        // Predicated region
        $region41: #{net_forward.1} parent=11 // pred_check
          %p362 = pneg %p216
        $region42: #{net_forward.1} parent=11 // pred_check_branch
          %364 = sbr.rel (%p362) target = $region44
        $region43: #{net_forward.1} parent=11 // pred_region
          _
        $region44: #{net_forward.1} parent=11 // pred_fallthru
          _
        // Predicated region
        $region45: #{net_forward.1} parent=11 // pred_check
          %p365 = pneg %p237
        $region46: #{net_forward.1} parent=11 // pred_check_branch
          %367 = sbr.rel (%p365) target = $region48
        $region47: #{net_forward.1} parent=11 // pred_region
          _
        $region48: #{net_forward.1} parent=11 // pred_fallthru
          _
        // Predicated region
        $region49: #{net_forward.1} parent=11 // pred_check
          %p368 = pneg %p258
        $region50: #{net_forward.1} parent=11 // pred_check_branch
          %370 = sbr.rel (%p368) target = $region52
        $region51: #{net_forward.1} parent=11 // pred_region
          _
        $region52: #{net_forward.1} parent=11 // pred_fallthru
          _
        // Predicated region
        $region53: #{net_forward.1} parent=11 // pred_check
          %p371 = pneg %p279
        $region54: #{net_forward.1} parent=11 // pred_check_branch
          %373 = sbr.rel (%p371) target = $region56
        $region55: #{net_forward.1} parent=11 // pred_region
          _
        $region56: #{net_forward.1} parent=11 // pred_fallthru
          _
        // Predicated region
        $region57: #{net_forward.1} parent=11 // pred_check
          %p374 = pneg %p300
        $region58: #{net_forward.1} parent=11 // pred_check_branch
          %376 = sbr.rel (%p374) target = $region60
        $region59: #{net_forward.1} parent=11 // pred_region
          _
        $region60: #{net_forward.1} parent=11 // pred_fallthru
          _
      $region12: #{net_forward.1} parent=5 // pred_fallthru
        _
      %p377 = scmp.lt.s32.totalorder %s22, 2
      // Predicated region
      $region61: #{net_forward.1} parent=5 // pred_check
        %p378 = pneg %p377
      $region62: #{net_forward.1} parent=5 // pred_check_branch
        %380 = sbr.rel (%p378) target = $region64
      $region63: #{net_forward.1} parent=5 // pred_region
        // Predicated region
        $region65: #{net_forward.1} parent=63 // pred_check
          %p381 = pneg %p42
        $region66: #{net_forward.1} parent=63 // pred_check_branch
          %383 = sbr.rel (%p381) target = $region68
        $region67: #{net_forward.1} parent=63 // pred_region
          %p384 = scmp.lt.s32.totalorder %s22, 1
          %s385 = scalar_select %p384, %s22, 1
          %s386 = smul.addr %s385, 64
          %s387 = smul.addr %s386, 4
          %s388 = scalar_lea.vmem %s0, %s387
        $region68: #{net_forward.1} parent=63 // pred_fallthru
          _
      $region64: #{net_forward.1} parent=5 // pred_fallthru
        _
      %p389 = scmp.le.s32.totalorder 1, %s22
      %p390 = scmp.lt.s32.totalorder %s22, 3
      %p391 = pnand %p389, %p390
      %p392 = pneg %p391
      // Predicated region
      $region69: #{net_forward.1} parent=5 // pred_check
        _
      $region70: #{net_forward.1} parent=5 // pred_check_branch
        %394 = sbr.rel (%p391) target = $region72
      $region71: #{net_forward.1} parent=5 // pred_region
        %s395 = ssub.s32 %s22, 1
        %p396 = scmp.lt.s32.totalorder %s27, 1
        %s397 = scalar_select %p396, %s27, 1
        %s398 = smul.addr %s397, 64
        %s399 = smul.addr %s398, 4
        %s400 = scalar_lea.vmem %s0, %s399
        %p401 = pneg %p48
        %p402 = pneg %p45
        %p403 = pneg %p69
        %p404 = pneg %p66
        %p405 = pneg %p90
        %p406 = pneg %p87
        %p407 = pneg %p111
        %p408 = pneg %p108
        %p409 = pneg %p132
        %p410 = pneg %p129
        %p411 = pneg %p153
        %p412 = pneg %p150
        %p413 = pneg %p174
        %p414 = pneg %p171
        %p415 = pneg %p195
        %p416 = pneg %p192
        %p417 = pneg %p216
        %p418 = pneg %p213
        %p419 = pneg %p237
        %p420 = pneg %p234
        %p421 = pneg %p258
        %p422 = pneg %p255
        %p423 = pneg %p279
        %p424 = pneg %p276
        %p425 = pneg %p300
        %p426 = pneg %p297
        %p427 = pneg %p326
        %p428 = pneg %p323
        %s429 = sand.u32 %s313, 1
        %s430 = scalar_lea.sflag [#allocation6], %s429
        %s431 = sand.u32 %s313, 1
        %s432 = scalar_lea.vmem [#allocation5], %s431
        %p433 = scmp.lt.s32.totalorder %s27, 1
        %s434 = scalar_select %p433, %s27, 1
        %s435 = smul.addr %s434, 64
        %s436 = smul.addr %s435, 4
        %s437 = scalar_lea.vmem %s0, %s436
        %v439 = vld [vmem:[%s437] sm:$0xff]
        %v440 = vld [vmem:[%s437 + $0x8] sm:$0xff]
        %v441 = vld [vmem:[%s437 + $0x10] sm:$0xff]
        %v442 = vld [vmem:[%s437 + $0x18] sm:$0xff]
        %v443 = vld [vmem:[%s437 + $0x20] sm:$0xff]
        %v444 = vld [vmem:[%s437 + $0x28] sm:$0xff]
        %v445 = vld [vmem:[%s437 + $0x30] sm:$0xff]
        %v446 = vld [vmem:[%s437 + $0x38] sm:$0xff]
        %v447 = vld [vmem:[%s437 + $0x40] sm:$0xff]
        %v448 = vld [vmem:[%s437 + $0x48] sm:$0xff]
        %v449 = vld [vmem:[%s437 + $0x50] sm:$0xff]
        %v450 = vld [vmem:[%s437 + $0x58] sm:$0xff]
        %v451 = vld [vmem:[%s437 + $0x60] sm:$0xff]
        %v452 = vld [vmem:[%s437 + $0x68] sm:$0xff]
        %v453 = vld [vmem:[%s437 + $0x70] sm:$0xff]
        %v454 = vld [vmem:[%s437 + $0x78] sm:$0xff]
        %v455 = vld [vmem:[%s437 + $0x80] sm:$0xff]
        %v456 = vld [vmem:[%s437 + $0x88] sm:$0xff]
        %v457 = vld [vmem:[%s437 + $0x90] sm:$0xff]
        %v458 = vld [vmem:[%s437 + $0x98] sm:$0xff]
        %v459 = vld [vmem:[%s437 + $0xa0] sm:$0xff]
        %v460 = vld [vmem:[%s437 + $0xa8] sm:$0xff]
        %v461 = vld [vmem:[%s437 + $0xb0] sm:$0xff]
        %v462 = vld [vmem:[%s437 + $0xb8] sm:$0xff]
        %v463 = vld [vmem:[%s437 + $0xc0] sm:$0xff]
        %v464 = vld [vmem:[%s437 + $0xc8] sm:$0xff]
        %v465 = vld [vmem:[%s437 + $0xd0] sm:$0xff]
        %v466 = vld [vmem:[%s437 + $0xd8] sm:$0xff]
        %v467 = vld [vmem:[%s437 + $0xe0] sm:$0xff]
        %v468 = vld [vmem:[%s437 + $0xe8] sm:$0xff]
        %v469 = vld [vmem:[%s437 + $0xf0] sm:$0xff]
        %v470 = vld [vmem:[%s437 + $0xf8] sm:$0xff]
        %v471 = vld [vmem:[%s1] sm:$0xf]
        %v472 = vld [vmem:[%s1 + $0x4] sm:$0xf]
        %v473 = vld [vmem:[%s1 + $0x8] sm:$0xf]
        %v474 = vld [vmem:[%s1 + $0xc] sm:$0xf]
        %v475 = vld [vmem:[%s1 + $0x10] sm:$0xf]
        %v476 = vld [vmem:[%s1 + $0x14] sm:$0xf]
        %v477 = vld [vmem:[%s1 + $0x18] sm:$0xf]
        %v478 = vld [vmem:[%s1 + $0x1c] sm:$0xf]
        %v479 = vld [vmem:[%s1 + $0x20] sm:$0xf]
        %v480 = vld [vmem:[%s1 + $0x24] sm:$0xf]
        %v481 = vld [vmem:[%s1 + $0x28] sm:$0xf]
        %v482 = vld [vmem:[%s1 + $0x2c] sm:$0xf]
        %v483 = vld [vmem:[%s1 + $0x30] sm:$0xf]
        %v484 = vld [vmem:[%s1 + $0x34] sm:$0xf]
        %v485 = vld [vmem:[%s1 + $0x38] sm:$0xf]
        %v486 = vld [vmem:[%s1 + $0x3c] sm:$0xf]
        %v487 = vld [vmem:[%s1 + $0x40] sm:$0xf]
        %v488 = vld [vmem:[%s1 + $0x44] sm:$0xf]
        %v489 = vld [vmem:[%s1 + $0x48] sm:$0x3]
        %v490 = vld [vmem:[%s2] sm:$0x1]
        %v492 = vlaneseq
        %v493 = vshrl.u32 %v492, 7
        %v494 = vsub.s32 0, %v493
        %v495 = vrot.slane %v490, %v494
        %v529 = vunpack.c.l.b16 %v439
        %v530 = vunpack.c.h.b16 %v439
        %v531 = vunpack.c.l.b16 %v440
        %v532 = vunpack.c.h.b16 %v440
        %v533 = vunpack.c.l.b16 %v441
        %v534 = vunpack.c.h.b16 %v441
        %v535 = vunpack.c.l.b16 %v442
        %v536 = vunpack.c.h.b16 %v442
        %v537 = vunpack.c.l.b16 %v443
        %v538 = vunpack.c.h.b16 %v443
        %v539 = vunpack.c.l.b16 %v444
        %v540 = vunpack.c.h.b16 %v444
        %v541 = vunpack.c.l.b16 %v445
        %v542 = vunpack.c.h.b16 %v445
        %v543 = vunpack.c.l.b16 %v446
        %v544 = vunpack.c.h.b16 %v446
        %v545 = vunpack.c.l.b16 %v447
        %v546 = vunpack.c.h.b16 %v447
        %v547 = vunpack.c.l.b16 %v448
        %v548 = vunpack.c.h.b16 %v448
        %v549 = vunpack.c.l.b16 %v449
        %v550 = vunpack.c.h.b16 %v449
        %v551 = vunpack.c.l.b16 %v450
        %v552 = vunpack.c.h.b16 %v450
        %v553 = vunpack.c.l.b16 %v451
        %v554 = vunpack.c.h.b16 %v451
        %v555 = vunpack.c.l.b16 %v452
        %v556 = vunpack.c.h.b16 %v452
        %v557 = vunpack.c.l.b16 %v453
        %v558 = vunpack.c.h.b16 %v453
        %v559 = vunpack.c.l.b16 %v454
        %v560 = vunpack.c.h.b16 %v454
        %v561 = vunpack.c.l.b16 %v455
        %v562 = vunpack.c.h.b16 %v455
        %v563 = vunpack.c.l.b16 %v456
        %v564 = vunpack.c.h.b16 %v456
        %v565 = vunpack.c.l.b16 %v457
        %v566 = vunpack.c.h.b16 %v457
        %v567 = vunpack.c.l.b16 %v458
        %v568 = vunpack.c.h.b16 %v458
        %v569 = vunpack.c.l.b16 %v459
        %v570 = vunpack.c.h.b16 %v459
        %v571 = vunpack.c.l.b16 %v460
        %v572 = vunpack.c.h.b16 %v460
        %v573 = vunpack.c.l.b16 %v461
        %v574 = vunpack.c.h.b16 %v461
        %v575 = vunpack.c.l.b16 %v462
        %v576 = vunpack.c.h.b16 %v462
        %v577 = vunpack.c.l.b16 %v463
        %v578 = vunpack.c.h.b16 %v463
        %v579 = vunpack.c.l.b16 %v464
        %v580 = vunpack.c.h.b16 %v464
        %v581 = vunpack.c.l.b16 %v465
        %v582 = vunpack.c.h.b16 %v465
        %v583 = vunpack.c.l.b16 %v466
        %v584 = vunpack.c.h.b16 %v466
        %v585 = vunpack.c.l.b16 %v467
        %v586 = vunpack.c.h.b16 %v467
        %v587 = vunpack.c.l.b16 %v468
        %v588 = vunpack.c.h.b16 %v468
        %v589 = vunpack.c.l.b16 %v469
        %v590 = vunpack.c.h.b16 %v469
        %v591 = vunpack.c.l.b16 %v470
        %v592 = vunpack.c.h.b16 %v470
        %v593 = vpack.c.b16 %v531, %v529
        %v594 = vpack.c.b16 %v532, %v530
        %v595 = vpack.c.b16 %v535, %v533
        %v596 = vpack.c.b16 %v536, %v534
        %v597 = vpack.c.b16 %v539, %v537
        %v598 = vpack.c.b16 %v540, %v538
        %v599 = vpack.c.b16 %v543, %v541
        %v600 = vpack.c.b16 %v544, %v542
        %v601 = vpack.c.b16 %v547, %v545
        %v602 = vpack.c.b16 %v548, %v546
        %v603 = vpack.c.b16 %v551, %v549
        %v604 = vpack.c.b16 %v552, %v550
        %v605 = vpack.c.b16 %v555, %v553
        %v606 = vpack.c.b16 %v556, %v554
        %v607 = vpack.c.b16 %v559, %v557
        %v608 = vpack.c.b16 %v560, %v558
        %v609 = vpack.c.b16 %v563, %v561
        %v610 = vpack.c.b16 %v564, %v562
        %v611 = vpack.c.b16 %v567, %v565
        %v612 = vpack.c.b16 %v568, %v566
        %v613 = vpack.c.b16 %v571, %v569
        %v614 = vpack.c.b16 %v572, %v570
        %v615 = vpack.c.b16 %v575, %v573
        %v616 = vpack.c.b16 %v576, %v574
        %v617 = vpack.c.b16 %v579, %v577
        %v618 = vpack.c.b16 %v580, %v578
        %v619 = vpack.c.b16 %v583, %v581
        %v620 = vpack.c.b16 %v584, %v582
        %v621 = vpack.c.b16 %v587, %v585
        %v622 = vpack.c.b16 %v588, %v586
        %v623 = vpack.c.b16 %v591, %v589
        %v624 = vpack.c.b16 %v592, %v590
        %v660 = vunpack.c.l.b16 %v471
        %v661 = vunpack.c.l.b16 %v472
        %v662 = vunpack.c.l.b16 %v473
        %v663 = vunpack.c.l.b16 %v474
        %v664 = vunpack.c.l.b16 %v475
        %v665 = vunpack.c.l.b16 %v476
        %v666 = vunpack.c.l.b16 %v477
        %v667 = vunpack.c.l.b16 %v478
        %v668 = vunpack.c.l.b16 %v479
        %v669 = vunpack.c.l.b16 %v480
        %v670 = vunpack.c.l.b16 %v481
        %v671 = vunpack.c.l.b16 %v482
        %v672 = vunpack.c.l.b16 %v483
        %v673 = vunpack.c.l.b16 %v484
        %v674 = vunpack.c.l.b16 %v485
        %v675 = vunpack.c.l.b16 %v486
        %v676 = vunpack.c.l.b16 %v487
        %v677 = vunpack.c.l.b16 %v488
        %v678 = vunpack.c.l.b16 %v489
        %v679 = vpack.c.b16 %v661, %v660
        %v680 = vpack.c.b16 %v663, %v662
        %v681 = vpack.c.b16 %v665, %v664
        %v682 = vpack.c.b16 %v667, %v666
        %v683 = vpack.c.b16 %v669, %v668
        %v684 = vpack.c.b16 %v671, %v670
        %v685 = vpack.c.b16 %v673, %v672
        %v686 = vpack.c.b16 %v675, %v674
        %v687 = vpack.c.b16 %v677, %v676
        %v688 = vpack.c.b16 %v678, %v678
        %vm698 = vcmask 154624
        %v700 = vsel %vm698, %v594, 0
        %v703 = vsel %vm698, %v596, 0
        %v706 = vsel %vm698, %v598, 0
        %v709 = vsel %vm698, %v600, 0
        %v712 = vsel %vm698, %v602, 0
        %v715 = vsel %vm698, %v604, 0
        %v718 = vsel %vm698, %v606, 0
        %v721 = vsel %vm698, %v608, 0
        %v724 = vsel %vm698, %v610, 0
        %v727 = vsel %vm698, %v612, 0
        %v730 = vsel %vm698, %v614, 0
        %v733 = vsel %vm698, %v616, 0
        %v736 = vsel %vm698, %v618, 0
        %v739 = vsel %vm698, %v620, 0
        %v742 = vsel %vm698, %v622, 0
        %v745 = vsel %vm698, %v624, 0
        %vm747 = vcmask 1040384
        %vm748 = vcmask 1041408
        %v749 = vsel %vm747, 4294967295, 65535
        %v750 = vsel %vm748, %v749, 0
        %v752 = vand.u32 %v688, %v750
        %754 = vmatprep.subr.bf16.mxu0 0
        %755 = vmatpush1.bf16.msra.mxu0 %v686
        %756 = vmatprep.subr.bf16.mxu0 0
        %757 = vmatpush1.bf16.msra.mxu0 %v685
        %758 = vmatprep.subr.bf16.mxu0 0
        %759 = vmatpush1.bf16.msra.mxu0 %v684
        %760 = vmatprep.subr.bf16.mxu0 0
        %761 = vmatpush1.bf16.msra.mxu0 %v683
        %762 = vmatprep.subr.bf16.mxu0 0
        %763 = vmatpush1.bf16.msra.mxu0 %v682
        %764 = vmatprep.subr.bf16.mxu0 0
        %765 = vmatpush1.bf16.msra.mxu0 %v681
        %766 = vmatprep.subr.bf16.mxu0 0
        %767 = vmatpush1.bf16.msra.mxu0 %v680
        %768 = vmatprep.subr.bf16.mxu0 0
        %769 = vmatpush1.bf16.msra.mxu0 %v679
        %770 = vmatprep.subr.bf16.mxu0 0
        %771 = vmatpush2.bf16.msra.mxu0 0
        %772 = vmatprep.subr.bf16.mxu0 0
        %773 = vmatpush2.bf16.msra.mxu0 0
        %774 = vmatprep.subr.bf16.mxu0 0
        %775 = vmatpush2.bf16.msra.mxu0 0
        %776 = vmatprep.subr.bf16.mxu0 0
        %777 = vmatpush2.bf16.msra.mxu0 0
        %778 = vmatprep.subr.bf16.mxu0 0
        %779 = vmatpush2.bf16.msra.mxu0 0
        %780 = vmatprep.subr.bf16.mxu0 0
        %781 = vmatpush2.bf16.msra.mxu0 0
        %782 = vmatprep.subr.bf16.mxu0 0
        %783 = vmatpush2.bf16.msra.mxu0 %v752
        %784 = vmatprep.subr.bf16.mxu0 0
        %785 = vmatpush2.bf16.msra.mxu0 %v687
        %786 = vmatprep.mubr.bf16.mxu0 %v700
        %787 = vmatmul.mubr.bf16.gmra.mxu0 %v593
        %v788 = vpop.f32.mrf.mxu0
        %v789 = vadd.f32 %v495, %v788
        %v790 = vpop.f32.mrf.mxu0
        %v791 = vpop.f32.mrf.mxu0
        %v792 = vadd.f32 %v495, %v791
        %v793 = vpop.f32.mrf.mxu0
        %794 = vmatprep.mubr.bf16.mxu0 %v703
        %795 = vmatmul.mubr.bf16.gmra.mxu0 %v595
        %v796 = vpop.f32.mrf.mxu0
        %v797 = vadd.f32 %v495, %v796
        %v798 = vpop.f32.mrf.mxu0
        %v799 = vpop.f32.mrf.mxu0
        %v800 = vadd.f32 %v495, %v799
        %v801 = vpop.f32.mrf.mxu0
        %802 = vmatprep.mubr.bf16.mxu0 %v706
        %803 = vmatmul.mubr.bf16.gmra.mxu0 %v597
        %v804 = vpop.f32.mrf.mxu0
        %v805 = vadd.f32 %v495, %v804
        %v806 = vpop.f32.mrf.mxu0
        %v807 = vpop.f32.mrf.mxu0
        %v808 = vadd.f32 %v495, %v807
        %v809 = vpop.f32.mrf.mxu0
        %810 = vmatprep.mubr.bf16.mxu0 %v709
        %811 = vmatmul.mubr.bf16.gmra.mxu0 %v599
        %v812 = vpop.f32.mrf.mxu0
        %v813 = vadd.f32 %v495, %v812
        %v814 = vpop.f32.mrf.mxu0
        %v815 = vpop.f32.mrf.mxu0
        %v816 = vadd.f32 %v495, %v815
        %v817 = vpop.f32.mrf.mxu0
        %818 = vmatprep.mubr.bf16.mxu0 %v712
        %819 = vmatmul.mubr.bf16.gmra.mxu0 %v601
        %v820 = vpop.f32.mrf.mxu0
        %v821 = vadd.f32 %v495, %v820
        %v822 = vpop.f32.mrf.mxu0
        %v823 = vpop.f32.mrf.mxu0
        %v824 = vadd.f32 %v495, %v823
        %v825 = vpop.f32.mrf.mxu0
        %826 = vmatprep.mubr.bf16.mxu0 %v715
        %827 = vmatmul.mubr.bf16.gmra.mxu0 %v603
        %v828 = vpop.f32.mrf.mxu0
        %v829 = vadd.f32 %v495, %v828
        %v830 = vpop.f32.mrf.mxu0
        %v831 = vpop.f32.mrf.mxu0
        %v832 = vadd.f32 %v495, %v831
        %v833 = vpop.f32.mrf.mxu0
        %834 = vmatprep.mubr.bf16.mxu0 %v718
        %835 = vmatmul.mubr.bf16.gmra.mxu0 %v605
        %v836 = vpop.f32.mrf.mxu0
        %v837 = vadd.f32 %v495, %v836
        %v838 = vpop.f32.mrf.mxu0
        %v839 = vpop.f32.mrf.mxu0
        %v840 = vadd.f32 %v495, %v839
        %v841 = vpop.f32.mrf.mxu0
        %842 = vmatprep.mubr.bf16.mxu0 %v721
        %843 = vmatmul.mubr.bf16.gmra.mxu0 %v607
        %v844 = vpop.f32.mrf.mxu0
        %v845 = vadd.f32 %v495, %v844
        %v846 = vpop.f32.mrf.mxu0
        %v847 = vpop.f32.mrf.mxu0
        %v848 = vadd.f32 %v495, %v847
        %v849 = vpop.f32.mrf.mxu0
        %850 = vmatprep.mubr.bf16.mxu0 %v724
        %851 = vmatmul.mubr.bf16.gmra.mxu0 %v609
        %v852 = vpop.f32.mrf.mxu0
        %v853 = vadd.f32 %v495, %v852
        %v854 = vpop.f32.mrf.mxu0
        %v855 = vpop.f32.mrf.mxu0
        %v856 = vadd.f32 %v495, %v855
        %v857 = vpop.f32.mrf.mxu0
        %858 = vmatprep.mubr.bf16.mxu0 %v727
        %859 = vmatmul.mubr.bf16.gmra.mxu0 %v611
        %v860 = vpop.f32.mrf.mxu0
        %v861 = vadd.f32 %v495, %v860
        %v862 = vpop.f32.mrf.mxu0
        %v863 = vpop.f32.mrf.mxu0
        %v864 = vadd.f32 %v495, %v863
        %v865 = vpop.f32.mrf.mxu0
        %866 = vmatprep.mubr.bf16.mxu0 %v730
        %867 = vmatmul.mubr.bf16.gmra.mxu0 %v613
        %v868 = vpop.f32.mrf.mxu0
        %v869 = vadd.f32 %v495, %v868
        %v870 = vpop.f32.mrf.mxu0
        %v871 = vpop.f32.mrf.mxu0
        %v872 = vadd.f32 %v495, %v871
        %v873 = vpop.f32.mrf.mxu0
        %874 = vmatprep.mubr.bf16.mxu0 %v733
        %875 = vmatmul.mubr.bf16.gmra.mxu0 %v615
        %v876 = vpop.f32.mrf.mxu0
        %v877 = vadd.f32 %v495, %v876
        %v878 = vpop.f32.mrf.mxu0
        %v879 = vpop.f32.mrf.mxu0
        %v880 = vadd.f32 %v495, %v879
        %v881 = vpop.f32.mrf.mxu0
        %882 = vmatprep.mubr.bf16.mxu0 %v736
        %883 = vmatmul.mubr.bf16.gmra.mxu0 %v617
        %v884 = vpop.f32.mrf.mxu0
        %v885 = vadd.f32 %v495, %v884
        %v886 = vpop.f32.mrf.mxu0
        %v887 = vpop.f32.mrf.mxu0
        %v888 = vadd.f32 %v495, %v887
        %v889 = vpop.f32.mrf.mxu0
        %890 = vmatprep.mubr.bf16.mxu0 %v739
        %891 = vmatmul.mubr.bf16.gmra.mxu0 %v619
        %v892 = vpop.f32.mrf.mxu0
        %v893 = vadd.f32 %v495, %v892
        %v894 = vpop.f32.mrf.mxu0
        %v895 = vpop.f32.mrf.mxu0
        %v896 = vadd.f32 %v495, %v895
        %v897 = vpop.f32.mrf.mxu0
        %898 = vmatprep.mubr.bf16.mxu0 %v742
        %899 = vmatmul.mubr.bf16.gmra.mxu0 %v621
        %v900 = vpop.f32.mrf.mxu0
        %v901 = vadd.f32 %v495, %v900
        %v902 = vpop.f32.mrf.mxu0
        %v903 = vpop.f32.mrf.mxu0
        %v904 = vadd.f32 %v495, %v903
        %v905 = vpop.f32.mrf.mxu0
        %906 = vmatprep.mubr.bf16.mxu0 %v745
        %907 = vmatmul.mubr.bf16.gmra.mxu0 %v623
        %v908 = vpop.f32.mrf.mxu0
        %v909 = vadd.f32 %v495, %v908
        %v910 = vpop.f32.mrf.mxu0
        %v911 = vpop.f32.mrf.mxu0
        %v912 = vadd.f32 %v495, %v911
        %v913 = vpop.f32.mrf.mxu0
        %914 = vdwg.mxu0
        %v915 = vmax.f32 %v789, 0.0
        %v916 = vmax.f32 %v792, 0.0
        %v917 = vmax.f32 %v797, 0.0
        %v918 = vmax.f32 %v800, 0.0
        %v919 = vmax.f32 %v805, 0.0
        %v920 = vmax.f32 %v808, 0.0
        %v921 = vmax.f32 %v813, 0.0
        %v922 = vmax.f32 %v816, 0.0
        %v923 = vmax.f32 %v821, 0.0
        %v924 = vmax.f32 %v824, 0.0
        %v925 = vmax.f32 %v829, 0.0
        %v926 = vmax.f32 %v832, 0.0
        %v927 = vmax.f32 %v837, 0.0
        %v928 = vmax.f32 %v840, 0.0
        %v929 = vmax.f32 %v845, 0.0
        %v930 = vmax.f32 %v848, 0.0
        %v931 = vmax.f32 %v853, 0.0
        %v932 = vmax.f32 %v856, 0.0
        %v933 = vmax.f32 %v861, 0.0
        %v934 = vmax.f32 %v864, 0.0
        %v935 = vmax.f32 %v869, 0.0
        %v936 = vmax.f32 %v872, 0.0
        %v937 = vmax.f32 %v877, 0.0
        %v938 = vmax.f32 %v880, 0.0
        %v939 = vmax.f32 %v885, 0.0
        %v940 = vmax.f32 %v888, 0.0
        %v941 = vmax.f32 %v893, 0.0
        %v942 = vmax.f32 %v896, 0.0
        %v943 = vmax.f32 %v901, 0.0
        %v944 = vmax.f32 %v904, 0.0
        %v945 = vmax.f32 %v909, 0.0
        %v946 = vmax.f32 %v912, 0.0
        %v947 = vpack.c.bf16 %v916, %v915
        %v948 = vpack.c.bf16 %v918, %v917
        %v949 = vpack.c.bf16 %v920, %v919
        %v950 = vpack.c.bf16 %v922, %v921
        %v951 = vpack.c.bf16 %v924, %v923
        %v952 = vpack.c.bf16 %v926, %v925
        %v953 = vpack.c.bf16 %v928, %v927
        %v954 = vpack.c.bf16 %v930, %v929
        %v955 = vpack.c.bf16 %v932, %v931
        %v956 = vpack.c.bf16 %v934, %v933
        %v957 = vpack.c.bf16 %v936, %v935
        %v958 = vpack.c.bf16 %v938, %v937
        %v959 = vpack.c.bf16 %v940, %v939
        %v960 = vpack.c.bf16 %v942, %v941
        %v961 = vpack.c.bf16 %v944, %v943
        %v962 = vpack.c.bf16 %v946, %v945
        %vm963 = vcmask 257024
        %964 = vst.msk [vmem:[#allocation2] sm:$0xf] %vm963, 0
        %965 = vst.msk [vmem:[#allocation2 + $0x4] sm:$0xf] %vm963, 0
        %vm966 = vcmask 253952
        %967 = vst.msk [vmem:[#allocation2 + $0x8] sm:$0x1] %vm966, 0
        %s968 = scalar_lea.vmem [#allocation2], 204
        %969 = vst.msk [vmem:[%s968] sm:$0xf] %vm963, 0
        %970 = vst.msk [vmem:[%s968 + $0x4] sm:$0xf] %vm963, 0
        %971 = vst.msk [vmem:[%s968 + $0x8] sm:$0x1] %vm966, 0
        %vm972 = vcmask 253952
        %vm973 = vsmask.f32 256
        %vm974 = vmand %vm972, %vm973
        %v975 = vld [vmem:[#allocation2] sm:$0x1]
        %v976 = vsel %vm974, 0, %v975
        %977 = vst [vmem:[#allocation2] sm:$0x1] %v976
        %v978 = vld [vmem:[#allocation2 + $0xc] sm:$0x1]
        %v979 = vsel %vm974, 0, %v978
        %980 = vst [vmem:[#allocation2 + $0xc] sm:$0x1] %v979
        %v981 = vld [vmem:[#allocation2 + $0x18] sm:$0x1]
        %v982 = vsel %vm974, 0, %v981
        %983 = vst [vmem:[#allocation2 + $0x18] sm:$0x1] %v982
        %v984 = vld [vmem:[#allocation2 + $0x24] sm:$0x1]
        %v985 = vsel %vm974, 0, %v984
        %986 = vst [vmem:[#allocation2 + $0x24] sm:$0x1] %v985
        %v987 = vld [vmem:[#allocation2 + $0x30] sm:$0x1]
        %v988 = vsel %vm974, 0, %v987
        %989 = vst [vmem:[#allocation2 + $0x30] sm:$0x1] %v988
        %v990 = vld [vmem:[#allocation2 + $0x3c] sm:$0x1]
        %v991 = vsel %vm974, 0, %v990
        %992 = vst [vmem:[#allocation2 + $0x3c] sm:$0x1] %v991
        %v993 = vld [vmem:[#allocation2 + $0x48] sm:$0x1]
        %v994 = vsel %vm974, 0, %v993
        %995 = vst [vmem:[#allocation2 + $0x48] sm:$0x1] %v994
        %v996 = vld [vmem:[#allocation2 + $0x54] sm:$0x1]
        %v997 = vsel %vm974, 0, %v996
        %998 = vst [vmem:[#allocation2 + $0x54] sm:$0x1] %v997
        %v999 = vld [vmem:[#allocation2 + $0x60] sm:$0x1]
        %v1000 = vsel %vm974, 0, %v999
        %1001 = vst [vmem:[#allocation2 + $0x60] sm:$0x1] %v1000
        %v1002 = vld [vmem:[#allocation2 + $0x6c] sm:$0x1]
        %v1003 = vsel %vm974, 0, %v1002
        %1004 = vst [vmem:[#allocation2 + $0x6c] sm:$0x1] %v1003
        %v1005 = vld [vmem:[#allocation2 + $0x78] sm:$0x1]
        %v1006 = vsel %vm974, 0, %v1005
        %1007 = vst [vmem:[#allocation2 + $0x78] sm:$0x1] %v1006
        %v1008 = vld [vmem:[#allocation2 + $0x84] sm:$0x1]
        %v1009 = vsel %vm974, 0, %v1008
        %1010 = vst [vmem:[#allocation2 + $0x84] sm:$0x1] %v1009
        %v1011 = vld [vmem:[#allocation2 + $0x90] sm:$0x1]
        %v1012 = vsel %vm974, 0, %v1011
        %1013 = vst [vmem:[#allocation2 + $0x90] sm:$0x1] %v1012
        %v1014 = vld [vmem:[#allocation2 + $0x9c] sm:$0x1]
        %v1015 = vsel %vm974, 0, %v1014
        %1016 = vst [vmem:[#allocation2 + $0x9c] sm:$0x1] %v1015
        %v1017 = vld [vmem:[#allocation2 + $0xa8] sm:$0x1]
        %v1018 = vsel %vm974, 0, %v1017
        %1019 = vst [vmem:[#allocation2 + $0xa8] sm:$0x1] %v1018
        %v1020 = vld [vmem:[#allocation2 + $0xb4] sm:$0x1]
        %v1021 = vsel %vm974, 0, %v1020
        %1022 = vst [vmem:[#allocation2 + $0xb4] sm:$0x1] %v1021
        %v1023 = vld [vmem:[#allocation2 + $0xc0] sm:$0x1]
        %v1024 = vsel %vm974, 0, %v1023
        %1025 = vst [vmem:[#allocation2 + $0xc0] sm:$0x1] %v1024
        %v1026 = vld [vmem:[#allocation2 + $0xcc] sm:$0x1]
        %v1027 = vsel %vm974, 0, %v1026
        %1028 = vst [vmem:[#allocation2 + $0xcc] sm:$0x1] %v1027
        %vm1029 = vsmask.f32 7938
        %vm1030 = vmand %vm972, %vm1029
        %v1031 = vld [vmem:[#allocation2 + $0x8] sm:$0x1]
        %v1032 = vsel %vm1030, 0, %v1031
        %1033 = vst [vmem:[#allocation2 + $0x8] sm:$0x1] %v1032
        %v1034 = vld [vmem:[#allocation2 + $0x14] sm:$0x1]
        %v1035 = vsel %vm1030, 0, %v1034
        %1036 = vst [vmem:[#allocation2 + $0x14] sm:$0x1] %v1035
        %v1037 = vld [vmem:[#allocation2 + $0x20] sm:$0x1]
        %v1038 = vsel %vm1030, 0, %v1037
        %1039 = vst [vmem:[#allocation2 + $0x20] sm:$0x1] %v1038
        %v1040 = vld [vmem:[#allocation2 + $0x2c] sm:$0x1]
        %v1041 = vsel %vm1030, 0, %v1040
        %1042 = vst [vmem:[#allocation2 + $0x2c] sm:$0x1] %v1041
        %v1043 = vld [vmem:[#allocation2 + $0x38] sm:$0x1]
        %v1044 = vsel %vm1030, 0, %v1043
        %1045 = vst [vmem:[#allocation2 + $0x38] sm:$0x1] %v1044
        %v1046 = vld [vmem:[#allocation2 + $0x44] sm:$0x1]
        %v1047 = vsel %vm1030, 0, %v1046
        %1048 = vst [vmem:[#allocation2 + $0x44] sm:$0x1] %v1047
        %v1049 = vld [vmem:[#allocation2 + $0x50] sm:$0x1]
        %v1050 = vsel %vm1030, 0, %v1049
        %1051 = vst [vmem:[#allocation2 + $0x50] sm:$0x1] %v1050
        %v1052 = vld [vmem:[#allocation2 + $0x5c] sm:$0x1]
        %v1053 = vsel %vm1030, 0, %v1052
        %1054 = vst [vmem:[#allocation2 + $0x5c] sm:$0x1] %v1053
        %v1055 = vld [vmem:[#allocation2 + $0x68] sm:$0x1]
        %v1056 = vsel %vm1030, 0, %v1055
        %1057 = vst [vmem:[#allocation2 + $0x68] sm:$0x1] %v1056
        %v1058 = vld [vmem:[#allocation2 + $0x74] sm:$0x1]
        %v1059 = vsel %vm1030, 0, %v1058
        %1060 = vst [vmem:[#allocation2 + $0x74] sm:$0x1] %v1059
        %v1061 = vld [vmem:[#allocation2 + $0x80] sm:$0x1]
        %v1062 = vsel %vm1030, 0, %v1061
        %1063 = vst [vmem:[#allocation2 + $0x80] sm:$0x1] %v1062
        %v1064 = vld [vmem:[#allocation2 + $0x8c] sm:$0x1]
        %v1065 = vsel %vm1030, 0, %v1064
        %1066 = vst [vmem:[#allocation2 + $0x8c] sm:$0x1] %v1065
        %v1067 = vld [vmem:[#allocation2 + $0x98] sm:$0x1]
        %v1068 = vsel %vm1030, 0, %v1067
        %1069 = vst [vmem:[#allocation2 + $0x98] sm:$0x1] %v1068
        %v1070 = vld [vmem:[#allocation2 + $0xa4] sm:$0x1]
        %v1071 = vsel %vm1030, 0, %v1070
        %1072 = vst [vmem:[#allocation2 + $0xa4] sm:$0x1] %v1071
        %v1073 = vld [vmem:[#allocation2 + $0xb0] sm:$0x1]
        %v1074 = vsel %vm1030, 0, %v1073
        %1075 = vst [vmem:[#allocation2 + $0xb0] sm:$0x1] %v1074
        %v1076 = vld [vmem:[#allocation2 + $0xbc] sm:$0x1]
        %v1077 = vsel %vm1030, 0, %v1076
        %1078 = vst [vmem:[#allocation2 + $0xbc] sm:$0x1] %v1077
        %v1079 = vld [vmem:[#allocation2 + $0xc8] sm:$0x1]
        %v1080 = vsel %vm1030, 0, %v1079
        %1081 = vst [vmem:[#allocation2 + $0xc8] sm:$0x1] %v1080
        %v1082 = vld [vmem:[#allocation2 + $0xd4] sm:$0x1]
        %v1083 = vsel %vm1030, 0, %v1082
        %1084 = vst [vmem:[#allocation2 + $0xd4] sm:$0x1] %v1083
        %v1101 = vunpack.c.l.b16 %v947
        %v1102 = vunpack.c.h.b16 %v947
        %v1103 = vunpack.c.l.b16 %v948
        %v1104 = vunpack.c.h.b16 %v948
        %v1105 = vunpack.c.l.b16 %v949
        %v1106 = vunpack.c.h.b16 %v949
        %v1107 = vunpack.c.l.b16 %v950
        %v1108 = vunpack.c.h.b16 %v950
        %v1109 = vunpack.c.l.b16 %v951
        %v1110 = vunpack.c.h.b16 %v951
        %v1111 = vunpack.c.l.b16 %v952
        %v1112 = vunpack.c.h.b16 %v952
        %v1113 = vunpack.c.l.b16 %v953
        %v1114 = vunpack.c.h.b16 %v953
        %v1115 = vunpack.c.l.b16 %v954
        %v1116 = vunpack.c.h.b16 %v954
        %v1117 = vunpack.c.l.b16 %v955
        %v1118 = vunpack.c.h.b16 %v955
        %v1119 = vunpack.c.l.b16 %v956
        %v1120 = vunpack.c.h.b16 %v956
        %v1121 = vunpack.c.l.b16 %v957
        %v1122 = vunpack.c.h.b16 %v957
        %v1123 = vunpack.c.l.b16 %v958
        %v1124 = vunpack.c.h.b16 %v958
        %v1125 = vunpack.c.l.b16 %v959
        %v1126 = vunpack.c.h.b16 %v959
        %v1127 = vunpack.c.l.b16 %v960
        %v1128 = vunpack.c.h.b16 %v960
        %v1129 = vunpack.c.l.b16 %v961
        %v1130 = vunpack.c.h.b16 %v961
        %v1131 = vunpack.c.l.b16 %v962
        %v1132 = vunpack.c.h.b16 %v962
        %v1133 = vpack.c.b16 %v1101, %v1101
        %v1134 = vpack.c.b16 %v1102, %v1102
        %v1135 = vpack.c.b16 %v1103, %v1103
        %v1136 = vpack.c.b16 %v1104, %v1104
        %v1137 = vpack.c.b16 %v1105, %v1105
        %v1138 = vpack.c.b16 %v1106, %v1106
        %v1139 = vpack.c.b16 %v1107, %v1107
        %v1140 = vpack.c.b16 %v1108, %v1108
        %v1141 = vpack.c.b16 %v1109, %v1109
        %v1142 = vpack.c.b16 %v1110, %v1110
        %v1143 = vpack.c.b16 %v1111, %v1111
        %v1144 = vpack.c.b16 %v1112, %v1112
        %v1145 = vpack.c.b16 %v1113, %v1113
        %v1146 = vpack.c.b16 %v1114, %v1114
        %v1147 = vpack.c.b16 %v1115, %v1115
        %v1148 = vpack.c.b16 %v1116, %v1116
        %v1149 = vpack.c.b16 %v1117, %v1117
        %v1150 = vpack.c.b16 %v1118, %v1118
        %v1151 = vpack.c.b16 %v1119, %v1119
        %v1152 = vpack.c.b16 %v1120, %v1120
        %v1153 = vpack.c.b16 %v1121, %v1121
        %v1154 = vpack.c.b16 %v1122, %v1122
        %v1155 = vpack.c.b16 %v1123, %v1123
        %v1156 = vpack.c.b16 %v1124, %v1124
        %v1157 = vpack.c.b16 %v1125, %v1125
        %v1158 = vpack.c.b16 %v1126, %v1126
        %v1159 = vpack.c.b16 %v1127, %v1127
        %v1160 = vpack.c.b16 %v1128, %v1128
        %v1161 = vpack.c.b16 %v1129, %v1129
        %v1162 = vpack.c.b16 %v1130, %v1130
        %v1163 = vpack.c.b16 %v1131, %v1131
        %v1164 = vpack.c.b16 %v1132, %v1132
        %vm1165 = vsmask.f32 4368
        %vm1166 = vmor %vm973, %vm1165
        %v1168 = vshrl.u32 %v1133, 16
        %v1170 = vrot.slane %v1168, 7
        %v1171 = vshll.u32 %v1133, 16
        %v1173 = vor.u32 %v1170, %v1171
        %v1174 = vrot.slane %v1170, 4
        %v1176 = vshrl.u32 %v1134, 16
        %v1178 = vrot.slane %v1176, 7
        %v1179 = vshll.u32 %v1134, 16
        %v1181 = vor.u32 %v1178, %v1179
        %v1182 = vsel %vm1166, %v1174, %v1181
        %v1183 = vrot.slane %v1178, 4
        %v1185 = vshrl.u32 %v1135, 16
        %v1187 = vrot.slane %v1185, 7
        %v1188 = vshll.u32 %v1135, 16
        %v1190 = vor.u32 %v1187, %v1188
        %v1191 = vrot.slane %v1187, 4
        %v1193 = vshrl.u32 %v1136, 16
        %v1195 = vrot.slane %v1193, 7
        %v1196 = vshll.u32 %v1136, 16
        %v1198 = vor.u32 %v1195, %v1196
        %v1199 = vsel %vm1166, %v1191, %v1198
        %v1200 = vrot.slane %v1195, 4
        %v1202 = vshrl.u32 %v1137, 16
        %v1204 = vrot.slane %v1202, 7
        %v1205 = vshll.u32 %v1137, 16
        %v1207 = vor.u32 %v1204, %v1205
        %v1208 = vrot.slane %v1204, 4
        %v1210 = vshrl.u32 %v1138, 16
        %v1212 = vrot.slane %v1210, 7
        %v1213 = vshll.u32 %v1138, 16
        %v1215 = vor.u32 %v1212, %v1213
        %v1216 = vsel %vm1166, %v1208, %v1215
        %v1217 = vrot.slane %v1212, 4
        %v1219 = vshrl.u32 %v1139, 16
        %v1221 = vrot.slane %v1219, 7
        %v1222 = vshll.u32 %v1139, 16
        %v1224 = vor.u32 %v1221, %v1222
        %v1225 = vrot.slane %v1221, 4
        %v1227 = vshrl.u32 %v1140, 16
        %v1229 = vrot.slane %v1227, 7
        %v1230 = vshll.u32 %v1140, 16
        %v1232 = vor.u32 %v1229, %v1230
        %v1233 = vsel %vm1166, %v1225, %v1232
        %v1234 = vrot.slane %v1229, 4
        %v1236 = vshrl.u32 %v1141, 16
        %v1238 = vrot.slane %v1236, 7
        %v1239 = vshll.u32 %v1141, 16
        %v1241 = vor.u32 %v1238, %v1239
        %v1242 = vrot.slane %v1238, 4
        %v1244 = vshrl.u32 %v1142, 16
        %v1246 = vrot.slane %v1244, 7
        %v1247 = vshll.u32 %v1142, 16
        %v1249 = vor.u32 %v1246, %v1247
        %v1250 = vsel %vm1166, %v1242, %v1249
        %v1251 = vrot.slane %v1246, 4
        %v1253 = vshrl.u32 %v1143, 16
        %v1255 = vrot.slane %v1253, 7
        %v1256 = vshll.u32 %v1143, 16
        %v1258 = vor.u32 %v1255, %v1256
        %v1259 = vrot.slane %v1255, 4
        %v1261 = vshrl.u32 %v1144, 16
        %v1263 = vrot.slane %v1261, 7
        %v1264 = vshll.u32 %v1144, 16
        %v1266 = vor.u32 %v1263, %v1264
        %v1267 = vsel %vm1166, %v1259, %v1266
        %v1268 = vrot.slane %v1263, 4
        %v1270 = vshrl.u32 %v1145, 16
        %v1272 = vrot.slane %v1270, 7
        %v1273 = vshll.u32 %v1145, 16
        %v1275 = vor.u32 %v1272, %v1273
        %v1276 = vrot.slane %v1272, 4
        %v1278 = vshrl.u32 %v1146, 16
        %v1280 = vrot.slane %v1278, 7
        %v1281 = vshll.u32 %v1146, 16
        %v1283 = vor.u32 %v1280, %v1281
        %v1284 = vsel %vm1166, %v1276, %v1283
        %v1285 = vrot.slane %v1280, 4
        %v1287 = vshrl.u32 %v1147, 16
        %v1289 = vrot.slane %v1287, 7
        %v1290 = vshll.u32 %v1147, 16
        %v1292 = vor.u32 %v1289, %v1290
        %v1293 = vrot.slane %v1289, 4
        %v1295 = vshrl.u32 %v1148, 16
        %v1297 = vrot.slane %v1295, 7
        %v1298 = vshll.u32 %v1148, 16
        %v1300 = vor.u32 %v1297, %v1298
        %v1301 = vsel %vm1166, %v1293, %v1300
        %v1302 = vrot.slane %v1297, 4
        %v1304 = vshrl.u32 %v1149, 16
        %v1306 = vrot.slane %v1304, 7
        %v1307 = vshll.u32 %v1149, 16
        %v1309 = vor.u32 %v1306, %v1307
        %v1310 = vrot.slane %v1306, 4
        %v1312 = vshrl.u32 %v1150, 16
        %v1314 = vrot.slane %v1312, 7
        %v1315 = vshll.u32 %v1150, 16
        %v1317 = vor.u32 %v1314, %v1315
        %v1318 = vsel %vm1166, %v1310, %v1317
        %v1319 = vrot.slane %v1314, 4
        %v1321 = vshrl.u32 %v1151, 16
        %v1323 = vrot.slane %v1321, 7
        %v1324 = vshll.u32 %v1151, 16
        %v1326 = vor.u32 %v1323, %v1324
        %v1327 = vrot.slane %v1323, 4
        %v1329 = vshrl.u32 %v1152, 16
        %v1331 = vrot.slane %v1329, 7
        %v1332 = vshll.u32 %v1152, 16
        %v1334 = vor.u32 %v1331, %v1332
        %v1335 = vsel %vm1166, %v1327, %v1334
        %v1336 = vrot.slane %v1331, 4
        %v1338 = vshrl.u32 %v1153, 16
        %v1340 = vrot.slane %v1338, 7
        %v1341 = vshll.u32 %v1153, 16
        %v1343 = vor.u32 %v1340, %v1341
        %v1344 = vrot.slane %v1340, 4
        %v1346 = vshrl.u32 %v1154, 16
        %v1348 = vrot.slane %v1346, 7
        %v1349 = vshll.u32 %v1154, 16
        %v1351 = vor.u32 %v1348, %v1349
        %v1352 = vsel %vm1166, %v1344, %v1351
        %v1353 = vrot.slane %v1348, 4
        %v1355 = vshrl.u32 %v1155, 16
        %v1357 = vrot.slane %v1355, 7
        %v1358 = vshll.u32 %v1155, 16
        %v1360 = vor.u32 %v1357, %v1358
        %v1361 = vrot.slane %v1357, 4
        %v1363 = vshrl.u32 %v1156, 16
        %v1365 = vrot.slane %v1363, 7
        %v1366 = vshll.u32 %v1156, 16
        %v1368 = vor.u32 %v1365, %v1366
        %v1369 = vsel %vm1166, %v1361, %v1368
        %v1370 = vrot.slane %v1365, 4
        %v1372 = vshrl.u32 %v1157, 16
        %v1374 = vrot.slane %v1372, 7
        %v1375 = vshll.u32 %v1157, 16
        %v1377 = vor.u32 %v1374, %v1375
        %v1378 = vrot.slane %v1374, 4
        %v1380 = vshrl.u32 %v1158, 16
        %v1382 = vrot.slane %v1380, 7
        %v1383 = vshll.u32 %v1158, 16
        %v1385 = vor.u32 %v1382, %v1383
        %v1386 = vsel %vm1166, %v1378, %v1385
        %v1387 = vrot.slane %v1382, 4
        %v1389 = vshrl.u32 %v1159, 16
        %v1391 = vrot.slane %v1389, 7
        %v1392 = vshll.u32 %v1159, 16
        %v1394 = vor.u32 %v1391, %v1392
        %v1395 = vrot.slane %v1391, 4
        %v1397 = vshrl.u32 %v1160, 16
        %v1399 = vrot.slane %v1397, 7
        %v1400 = vshll.u32 %v1160, 16
        %v1402 = vor.u32 %v1399, %v1400
        %v1403 = vsel %vm1166, %v1395, %v1402
        %v1404 = vrot.slane %v1399, 4
        %v1406 = vshrl.u32 %v1161, 16
        %v1408 = vrot.slane %v1406, 7
        %v1409 = vshll.u32 %v1161, 16
        %v1411 = vor.u32 %v1408, %v1409
        %v1412 = vrot.slane %v1408, 4
        %v1414 = vshrl.u32 %v1162, 16
        %v1416 = vrot.slane %v1414, 7
        %v1417 = vshll.u32 %v1162, 16
        %v1419 = vor.u32 %v1416, %v1417
        %v1420 = vsel %vm1166, %v1412, %v1419
        %v1421 = vrot.slane %v1416, 4
        %v1423 = vshrl.u32 %v1163, 16
        %v1425 = vrot.slane %v1423, 7
        %v1426 = vshll.u32 %v1163, 16
        %v1428 = vor.u32 %v1425, %v1426
        %v1429 = vrot.slane %v1425, 4
        %v1431 = vshrl.u32 %v1164, 16
        %v1433 = vrot.slane %v1431, 7
        %v1434 = vshll.u32 %v1164, 16
        %v1436 = vor.u32 %v1433, %v1434
        %v1437 = vsel %vm1166, %v1429, %v1436
        %v1438 = vrot.slane %v1433, 4
        %s1487 = scalar_lea.vmem [#allocation2], 12
        %vm1488 = vcmask 257024
        %vm1489 = vmand %vm1488, %vm1029
        %v1490 = vld [vmem:[%s1487] sm:$0xf]
        %v1491 = vsel %vm1489, %v1173, %v1490
        %1492 = vst [vmem:[%s1487] sm:$0xf] %v1491
        %1493 = vst.msk [vmem:[%s1487 + $0x4] sm:$0xf] %vm963, %v1182
        %v1494 = vld [vmem:[%s1487 + $0x8] sm:$0x1]
        %v1495 = vsel %vm974, %v1183, %v1494
        %1496 = vst [vmem:[%s1487 + $0x8] sm:$0x1] %v1495
        %v1497 = vld [vmem:[%s1487 + $0xc] sm:$0xf]
        %v1498 = vsel %vm1489, %v1190, %v1497
        %1499 = vst [vmem:[%s1487 + $0xc] sm:$0xf] %v1498
        %1500 = vst.msk [vmem:[%s1487 + $0x10] sm:$0xf] %vm963, %v1199
        %v1501 = vld [vmem:[%s1487 + $0x14] sm:$0x1]
        %v1502 = vsel %vm974, %v1200, %v1501
        %1503 = vst [vmem:[%s1487 + $0x14] sm:$0x1] %v1502
        %v1504 = vld [vmem:[%s1487 + $0x18] sm:$0xf]
        %v1505 = vsel %vm1489, %v1207, %v1504
        %1506 = vst [vmem:[%s1487 + $0x18] sm:$0xf] %v1505
        %1507 = vst.msk [vmem:[%s1487 + $0x1c] sm:$0xf] %vm963, %v1216
        %v1508 = vld [vmem:[%s1487 + $0x20] sm:$0x1]
        %v1509 = vsel %vm974, %v1217, %v1508
        %1510 = vst [vmem:[%s1487 + $0x20] sm:$0x1] %v1509
        %v1511 = vld [vmem:[%s1487 + $0x24] sm:$0xf]
        %v1512 = vsel %vm1489, %v1224, %v1511
        %1513 = vst [vmem:[%s1487 + $0x24] sm:$0xf] %v1512
        %1514 = vst.msk [vmem:[%s1487 + $0x28] sm:$0xf] %vm963, %v1233
        %v1515 = vld [vmem:[%s1487 + $0x2c] sm:$0x1]
        %v1516 = vsel %vm974, %v1234, %v1515
        %1517 = vst [vmem:[%s1487 + $0x2c] sm:$0x1] %v1516
        %v1518 = vld [vmem:[%s1487 + $0x30] sm:$0xf]
        %v1519 = vsel %vm1489, %v1241, %v1518
        %1520 = vst [vmem:[%s1487 + $0x30] sm:$0xf] %v1519
        %1521 = vst.msk [vmem:[%s1487 + $0x34] sm:$0xf] %vm963, %v1250
        %v1522 = vld [vmem:[%s1487 + $0x38] sm:$0x1]
        %v1523 = vsel %vm974, %v1251, %v1522
        %1524 = vst [vmem:[%s1487 + $0x38] sm:$0x1] %v1523
        %v1525 = vld [vmem:[%s1487 + $0x3c] sm:$0xf]
        %v1526 = vsel %vm1489, %v1258, %v1525
        %1527 = vst [vmem:[%s1487 + $0x3c] sm:$0xf] %v1526
        %1528 = vst.msk [vmem:[%s1487 + $0x40] sm:$0xf] %vm963, %v1267
        %v1529 = vld [vmem:[%s1487 + $0x44] sm:$0x1]
        %v1530 = vsel %vm974, %v1268, %v1529
        %1531 = vst [vmem:[%s1487 + $0x44] sm:$0x1] %v1530
        %v1532 = vld [vmem:[%s1487 + $0x48] sm:$0xf]
        %v1533 = vsel %vm1489, %v1275, %v1532
        %1534 = vst [vmem:[%s1487 + $0x48] sm:$0xf] %v1533
        %1535 = vst.msk [vmem:[%s1487 + $0x4c] sm:$0xf] %vm963, %v1284
        %v1536 = vld [vmem:[%s1487 + $0x50] sm:$0x1]
        %v1537 = vsel %vm974, %v1285, %v1536
        %1538 = vst [vmem:[%s1487 + $0x50] sm:$0x1] %v1537
        %v1539 = vld [vmem:[%s1487 + $0x54] sm:$0xf]
        %v1540 = vsel %vm1489, %v1292, %v1539
        %1541 = vst [vmem:[%s1487 + $0x54] sm:$0xf] %v1540
        %1542 = vst.msk [vmem:[%s1487 + $0x58] sm:$0xf] %vm963, %v1301
        %v1543 = vld [vmem:[%s1487 + $0x5c] sm:$0x1]
        %v1544 = vsel %vm974, %v1302, %v1543
        %1545 = vst [vmem:[%s1487 + $0x5c] sm:$0x1] %v1544
        %v1546 = vld [vmem:[%s1487 + $0x60] sm:$0xf]
        %v1547 = vsel %vm1489, %v1309, %v1546
        %1548 = vst [vmem:[%s1487 + $0x60] sm:$0xf] %v1547
        %1549 = vst.msk [vmem:[%s1487 + $0x64] sm:$0xf] %vm963, %v1318
        %v1550 = vld [vmem:[%s1487 + $0x68] sm:$0x1]
        %v1551 = vsel %vm974, %v1319, %v1550
        %1552 = vst [vmem:[%s1487 + $0x68] sm:$0x1] %v1551
        %v1553 = vld [vmem:[%s1487 + $0x6c] sm:$0xf]
        %v1554 = vsel %vm1489, %v1326, %v1553
        %1555 = vst [vmem:[%s1487 + $0x6c] sm:$0xf] %v1554
        %1556 = vst.msk [vmem:[%s1487 + $0x70] sm:$0xf] %vm963, %v1335
        %v1557 = vld [vmem:[%s1487 + $0x74] sm:$0x1]
        %v1558 = vsel %vm974, %v1336, %v1557
        %1559 = vst [vmem:[%s1487 + $0x74] sm:$0x1] %v1558
        %v1560 = vld [vmem:[%s1487 + $0x78] sm:$0xf]
        %v1561 = vsel %vm1489, %v1343, %v1560
        %1562 = vst [vmem:[%s1487 + $0x78] sm:$0xf] %v1561
        %1563 = vst.msk [vmem:[%s1487 + $0x7c] sm:$0xf] %vm963, %v1352
        %v1564 = vld [vmem:[%s1487 + $0x80] sm:$0x1]
        %v1565 = vsel %vm974, %v1353, %v1564
        %1566 = vst [vmem:[%s1487 + $0x80] sm:$0x1] %v1565
        %v1567 = vld [vmem:[%s1487 + $0x84] sm:$0xf]
        %v1568 = vsel %vm1489, %v1360, %v1567
        %1569 = vst [vmem:[%s1487 + $0x84] sm:$0xf] %v1568
        %1570 = vst.msk [vmem:[%s1487 + $0x88] sm:$0xf] %vm963, %v1369
        %v1571 = vld [vmem:[%s1487 + $0x8c] sm:$0x1]
        %v1572 = vsel %vm974, %v1370, %v1571
        %1573 = vst [vmem:[%s1487 + $0x8c] sm:$0x1] %v1572
        %v1574 = vld [vmem:[%s1487 + $0x90] sm:$0xf]
        %v1575 = vsel %vm1489, %v1377, %v1574
        %1576 = vst [vmem:[%s1487 + $0x90] sm:$0xf] %v1575
        %1577 = vst.msk [vmem:[%s1487 + $0x94] sm:$0xf] %vm963, %v1386
        %v1578 = vld [vmem:[%s1487 + $0x98] sm:$0x1]
        %v1579 = vsel %vm974, %v1387, %v1578
        %1580 = vst [vmem:[%s1487 + $0x98] sm:$0x1] %v1579
        %v1581 = vld [vmem:[%s1487 + $0x9c] sm:$0xf]
        %v1582 = vsel %vm1489, %v1394, %v1581
        %1583 = vst [vmem:[%s1487 + $0x9c] sm:$0xf] %v1582
        %1584 = vst.msk [vmem:[%s1487 + $0xa0] sm:$0xf] %vm963, %v1403
        %v1585 = vld [vmem:[%s1487 + $0xa4] sm:$0x1]
        %v1586 = vsel %vm974, %v1404, %v1585
        %1587 = vst [vmem:[%s1487 + $0xa4] sm:$0x1] %v1586
        %v1588 = vld [vmem:[%s1487 + $0xa8] sm:$0xf]
        %v1589 = vsel %vm1489, %v1411, %v1588
        %1590 = vst [vmem:[%s1487 + $0xa8] sm:$0xf] %v1589
        %1591 = vst.msk [vmem:[%s1487 + $0xac] sm:$0xf] %vm963, %v1420
        %v1592 = vld [vmem:[%s1487 + $0xb0] sm:$0x1]
        %v1593 = vsel %vm974, %v1421, %v1592
        %1594 = vst [vmem:[%s1487 + $0xb0] sm:$0x1] %v1593
        %v1595 = vld [vmem:[%s1487 + $0xb4] sm:$0xf]
        %v1596 = vsel %vm1489, %v1428, %v1595
        %1597 = vst [vmem:[%s1487 + $0xb4] sm:$0xf] %v1596
        %1598 = vst.msk [vmem:[%s1487 + $0xb8] sm:$0xf] %vm963, %v1437
        %v1599 = vld [vmem:[%s1487 + $0xbc] sm:$0x1]
        %v1600 = vsel %vm974, %v1438, %v1599
        %1601 = vst [vmem:[%s1487 + $0xbc] sm:$0x1] %v1600
        %v1602 = vld [vmem:[#allocation2] sm:$0xf]
        %v1603 = vld [vmem:[#allocation2 + $0x4] sm:$0xf]
        %v1604 = vld [vmem:[#allocation2 + $0xc] sm:$0xf]
        %v1605 = vld [vmem:[#allocation2 + $0x10] sm:$0xf]
        %v1606 = vld [vmem:[#allocation2 + $0x18] sm:$0xf]
        %v1607 = vld [vmem:[#allocation2 + $0x1c] sm:$0xf]
        %v1608 = vld [vmem:[#allocation2 + $0x24] sm:$0xf]
        %v1609 = vld [vmem:[#allocation2 + $0x28] sm:$0xf]
        %v1610 = vld [vmem:[#allocation2 + $0x30] sm:$0xf]
        %v1611 = vld [vmem:[#allocation2 + $0x34] sm:$0xf]
        %v1612 = vld [vmem:[#allocation2 + $0x3c] sm:$0xf]
        %v1613 = vld [vmem:[#allocation2 + $0x40] sm:$0xf]
        %v1614 = vld [vmem:[#allocation2 + $0x48] sm:$0xf]
        %v1615 = vld [vmem:[#allocation2 + $0x4c] sm:$0xf]
        %v1616 = vld [vmem:[#allocation2 + $0x54] sm:$0xf]
        %v1617 = vld [vmem:[#allocation2 + $0x58] sm:$0xf]
        %v1618 = vld [vmem:[#allocation2 + $0x60] sm:$0xf]
        %v1619 = vld [vmem:[#allocation2 + $0x64] sm:$0xf]
        %v1620 = vld [vmem:[#allocation2 + $0x6c] sm:$0xf]
        %v1621 = vld [vmem:[#allocation2 + $0x70] sm:$0xf]
        %v1622 = vld [vmem:[#allocation2 + $0x78] sm:$0xf]
        %v1623 = vld [vmem:[#allocation2 + $0x7c] sm:$0xf]
        %v1624 = vld [vmem:[#allocation2 + $0x84] sm:$0xf]
        %v1625 = vld [vmem:[#allocation2 + $0x88] sm:$0xf]
        %v1626 = vld [vmem:[#allocation2 + $0x90] sm:$0xf]
        %v1627 = vld [vmem:[#allocation2 + $0x94] sm:$0xf]
        %v1628 = vld [vmem:[#allocation2 + $0x9c] sm:$0xf]
        %v1629 = vld [vmem:[#allocation2 + $0xa0] sm:$0xf]
        %v1630 = vld [vmem:[#allocation2 + $0xa8] sm:$0xf]
        %v1631 = vld [vmem:[#allocation2 + $0xac] sm:$0xf]
        %v1632 = vld [vmem:[#allocation2 + $0xb4] sm:$0xf]
        %v1633 = vld [vmem:[#allocation2 + $0xb8] sm:$0xf]
        %v1634 = vld [vmem:[#allocation2 + $0x8] sm:$0x1]
        %v1635 = vld [vmem:[#allocation2 + $0x14] sm:$0x1]
        %v1636 = vld [vmem:[#allocation2 + $0x20] sm:$0x1]
        %v1637 = vld [vmem:[#allocation2 + $0x2c] sm:$0x1]
        %v1638 = vld [vmem:[#allocation2 + $0x38] sm:$0x1]
        %v1639 = vld [vmem:[#allocation2 + $0x44] sm:$0x1]
        %v1640 = vld [vmem:[#allocation2 + $0x50] sm:$0x1]
        %v1641 = vld [vmem:[#allocation2 + $0x5c] sm:$0x1]
        %v1642 = vld [vmem:[#allocation2 + $0x68] sm:$0x1]
        %v1643 = vld [vmem:[#allocation2 + $0x74] sm:$0x1]
        %v1644 = vld [vmem:[#allocation2 + $0x80] sm:$0x1]
        %v1645 = vld [vmem:[#allocation2 + $0x8c] sm:$0x1]
        %v1646 = vld [vmem:[#allocation2 + $0x98] sm:$0x1]
        %v1647 = vld [vmem:[#allocation2 + $0xa4] sm:$0x1]
        %v1648 = vld [vmem:[#allocation2 + $0xb0] sm:$0x1]
        %v1649 = vld [vmem:[#allocation2 + $0xbc] sm:$0x1]
        %v1650 = vld [vmem:[#allocation2] sm:$0xe]
        %v1651 = vld [vmem:[#allocation2 + $0xc] sm:$0xe]
        %v1652 = vld [vmem:[#allocation2 + $0x18] sm:$0xe]
        %v1653 = vld [vmem:[#allocation2 + $0x24] sm:$0xe]
        %v1654 = vld [vmem:[#allocation2 + $0x30] sm:$0xe]
        %v1655 = vld [vmem:[#allocation2 + $0x3c] sm:$0xe]
        %v1656 = vld [vmem:[#allocation2 + $0x48] sm:$0xe]
        %v1657 = vld [vmem:[#allocation2 + $0x54] sm:$0xe]
        %v1658 = vld [vmem:[#allocation2 + $0x60] sm:$0xe]
        %v1659 = vld [vmem:[#allocation2 + $0x6c] sm:$0xe]
        %v1660 = vld [vmem:[#allocation2 + $0x78] sm:$0xe]
        %v1661 = vld [vmem:[#allocation2 + $0x84] sm:$0xe]
        %v1662 = vld [vmem:[#allocation2 + $0x90] sm:$0xe]
        %v1663 = vld [vmem:[#allocation2 + $0x9c] sm:$0xe]
        %v1664 = vld [vmem:[#allocation2 + $0xa8] sm:$0xe]
        %v1665 = vld [vmem:[#allocation2 + $0xb4] sm:$0xe]
        %v1666 = vld [vmem:[%s1487] sm:$0xf]
        %v1667 = vld [vmem:[%s1487 + $0x4] sm:$0xf]
        %v1668 = vld [vmem:[%s1487 + $0xc] sm:$0xf]
        %v1669 = vld [vmem:[%s1487 + $0x10] sm:$0xf]
        %v1670 = vld [vmem:[%s1487 + $0x18] sm:$0xf]
        %v1671 = vld [vmem:[%s1487 + $0x1c] sm:$0xf]
        %v1672 = vld [vmem:[%s1487 + $0x24] sm:$0xf]
        %v1673 = vld [vmem:[%s1487 + $0x28] sm:$0xf]
        %v1674 = vld [vmem:[%s1487 + $0x30] sm:$0xf]
        %v1675 = vld [vmem:[%s1487 + $0x34] sm:$0xf]
        %v1676 = vld [vmem:[%s1487 + $0x3c] sm:$0xf]
        %v1677 = vld [vmem:[%s1487 + $0x40] sm:$0xf]
        %v1678 = vld [vmem:[%s1487 + $0x48] sm:$0xf]
        %v1679 = vld [vmem:[%s1487 + $0x4c] sm:$0xf]
        %v1680 = vld [vmem:[%s1487 + $0x54] sm:$0xf]
        %v1681 = vld [vmem:[%s1487 + $0x58] sm:$0xf]
        %v1682 = vld [vmem:[%s1487 + $0x60] sm:$0xf]
        %v1683 = vld [vmem:[%s1487 + $0x64] sm:$0xf]
        %v1684 = vld [vmem:[%s1487 + $0x6c] sm:$0xf]
        %v1685 = vld [vmem:[%s1487 + $0x70] sm:$0xf]
        %v1686 = vld [vmem:[%s1487 + $0x78] sm:$0xf]
        %v1687 = vld [vmem:[%s1487 + $0x7c] sm:$0xf]
        %v1688 = vld [vmem:[%s1487 + $0x84] sm:$0xf]
        %v1689 = vld [vmem:[%s1487 + $0x88] sm:$0xf]
        %v1690 = vld [vmem:[%s1487 + $0x90] sm:$0xf]
        %v1691 = vld [vmem:[%s1487 + $0x94] sm:$0xf]
        %v1692 = vld [vmem:[%s1487 + $0x9c] sm:$0xf]
        %v1693 = vld [vmem:[%s1487 + $0xa0] sm:$0xf]
        %v1694 = vld [vmem:[%s1487 + $0xa8] sm:$0xf]
        %v1695 = vld [vmem:[%s1487 + $0xac] sm:$0xf]
        %v1696 = vld [vmem:[%s1487 + $0xb4] sm:$0xf]
        %v1697 = vld [vmem:[%s1487 + $0xb8] sm:$0xf]
        %v1698 = vld [vmem:[%s1487 + $0x8] sm:$0x1]
        %v1699 = vld [vmem:[%s1487 + $0x14] sm:$0x1]
        %v1700 = vld [vmem:[%s1487 + $0x20] sm:$0x1]
        %v1701 = vld [vmem:[%s1487 + $0x2c] sm:$0x1]
        %v1702 = vld [vmem:[%s1487 + $0x38] sm:$0x1]
        %v1703 = vld [vmem:[%s1487 + $0x44] sm:$0x1]
        %v1704 = vld [vmem:[%s1487 + $0x50] sm:$0x1]
        %v1705 = vld [vmem:[%s1487 + $0x5c] sm:$0x1]
        %v1706 = vld [vmem:[%s1487 + $0x68] sm:$0x1]
        %v1707 = vld [vmem:[%s1487 + $0x74] sm:$0x1]
        %v1708 = vld [vmem:[%s1487 + $0x80] sm:$0x1]
        %v1709 = vld [vmem:[%s1487 + $0x8c] sm:$0x1]
        %v1710 = vld [vmem:[%s1487 + $0x98] sm:$0x1]
        %v1711 = vld [vmem:[%s1487 + $0xa4] sm:$0x1]
        %v1712 = vld [vmem:[%s1487 + $0xb0] sm:$0x1]
        %v1713 = vld [vmem:[%s1487 + $0xbc] sm:$0x1]
        %v1714 = vld [vmem:[%s1487] sm:$0xe]
        %v1715 = vld [vmem:[%s1487 + $0xc] sm:$0xe]
        %v1716 = vld [vmem:[%s1487 + $0x18] sm:$0xe]
        %v1717 = vld [vmem:[%s1487 + $0x24] sm:$0xe]
        %v1718 = vld [vmem:[%s1487 + $0x30] sm:$0xe]
        %v1719 = vld [vmem:[%s1487 + $0x3c] sm:$0xe]
        %v1720 = vld [vmem:[%s1487 + $0x48] sm:$0xe]
        %v1721 = vld [vmem:[%s1487 + $0x54] sm:$0xe]
        %v1722 = vld [vmem:[%s1487 + $0x60] sm:$0xe]
        %v1723 = vld [vmem:[%s1487 + $0x6c] sm:$0xe]
        %v1724 = vld [vmem:[%s1487 + $0x78] sm:$0xe]
        %v1725 = vld [vmem:[%s1487 + $0x84] sm:$0xe]
        %v1726 = vld [vmem:[%s1487 + $0x90] sm:$0xe]
        %v1727 = vld [vmem:[%s1487 + $0x9c] sm:$0xe]
        %v1728 = vld [vmem:[%s1487 + $0xa8] sm:$0xe]
        %v1729 = vld [vmem:[%s1487 + $0xb4] sm:$0xe]
        %s1730 = scalar_lea.vmem [#allocation2], 24
        %v1731 = vld [vmem:[%s1730] sm:$0xf]
        %v1732 = vld [vmem:[%s1730 + $0x4] sm:$0xf]
        %v1733 = vld [vmem:[%s1730 + $0xc] sm:$0xf]
        %v1734 = vld [vmem:[%s1730 + $0x10] sm:$0xf]
        %v1735 = vld [vmem:[%s1730 + $0x18] sm:$0xf]
        %v1736 = vld [vmem:[%s1730 + $0x1c] sm:$0xf]
        %v1737 = vld [vmem:[%s1730 + $0x24] sm:$0xf]
        %v1738 = vld [vmem:[%s1730 + $0x28] sm:$0xf]
        %v1739 = vld [vmem:[%s1730 + $0x30] sm:$0xf]
        %v1740 = vld [vmem:[%s1730 + $0x34] sm:$0xf]
        %v1741 = vld [vmem:[%s1730 + $0x3c] sm:$0xf]
        %v1742 = vld [vmem:[%s1730 + $0x40] sm:$0xf]
        %v1743 = vld [vmem:[%s1730 + $0x48] sm:$0xf]
        %v1744 = vld [vmem:[%s1730 + $0x4c] sm:$0xf]
        %v1745 = vld [vmem:[%s1730 + $0x54] sm:$0xf]
        %v1746 = vld [vmem:[%s1730 + $0x58] sm:$0xf]
        %v1747 = vld [vmem:[%s1730 + $0x60] sm:$0xf]
        %v1748 = vld [vmem:[%s1730 + $0x64] sm:$0xf]
        %v1749 = vld [vmem:[%s1730 + $0x6c] sm:$0xf]
        %v1750 = vld [vmem:[%s1730 + $0x70] sm:$0xf]
        %v1751 = vld [vmem:[%s1730 + $0x78] sm:$0xf]
        %v1752 = vld [vmem:[%s1730 + $0x7c] sm:$0xf]
        %v1753 = vld [vmem:[%s1730 + $0x84] sm:$0xf]
        %v1754 = vld [vmem:[%s1730 + $0x88] sm:$0xf]
        %v1755 = vld [vmem:[%s1730 + $0x90] sm:$0xf]
        %v1756 = vld [vmem:[%s1730 + $0x94] sm:$0xf]
        %v1757 = vld [vmem:[%s1730 + $0x9c] sm:$0xf]
        %v1758 = vld [vmem:[%s1730 + $0xa0] sm:$0xf]
        %v1759 = vld [vmem:[%s1730 + $0xa8] sm:$0xf]
        %v1760 = vld [vmem:[%s1730 + $0xac] sm:$0xf]
        %v1761 = vld [vmem:[%s1730 + $0xb4] sm:$0xf]
        %v1762 = vld [vmem:[%s1730 + $0xb8] sm:$0xf]
        %v1763 = vld [vmem:[%s1730 + $0x8] sm:$0x1]
        %v1764 = vld [vmem:[%s1730 + $0x14] sm:$0x1]
        %v1765 = vld [vmem:[%s1730 + $0x20] sm:$0x1]
        %v1766 = vld [vmem:[%s1730 + $0x2c] sm:$0x1]
        %v1767 = vld [vmem:[%s1730 + $0x38] sm:$0x1]
        %v1768 = vld [vmem:[%s1730 + $0x44] sm:$0x1]
        %v1769 = vld [vmem:[%s1730 + $0x50] sm:$0x1]
        %v1770 = vld [vmem:[%s1730 + $0x5c] sm:$0x1]
        %v1771 = vld [vmem:[%s1730 + $0x68] sm:$0x1]
        %v1772 = vld [vmem:[%s1730 + $0x74] sm:$0x1]
        %v1773 = vld [vmem:[%s1730 + $0x80] sm:$0x1]
        %v1774 = vld [vmem:[%s1730 + $0x8c] sm:$0x1]
        %v1775 = vld [vmem:[%s1730 + $0x98] sm:$0x1]
        %v1776 = vld [vmem:[%s1730 + $0xa4] sm:$0x1]
        %v1777 = vld [vmem:[%s1730 + $0xb0] sm:$0x1]
        %v1778 = vld [vmem:[%s1730 + $0xbc] sm:$0x1]
        %v1779 = vld [vmem:[%s1730] sm:$0xe]
        %v1780 = vld [vmem:[%s1730 + $0xc] sm:$0xe]
        %v1781 = vld [vmem:[%s1730 + $0x18] sm:$0xe]
        %v1782 = vld [vmem:[%s1730 + $0x24] sm:$0xe]
        %v1783 = vld [vmem:[%s1730 + $0x30] sm:$0xe]
        %v1784 = vld [vmem:[%s1730 + $0x3c] sm:$0xe]
        %v1785 = vld [vmem:[%s1730 + $0x48] sm:$0xe]
        %v1786 = vld [vmem:[%s1730 + $0x54] sm:$0xe]
        %v1787 = vld [vmem:[%s1730 + $0x60] sm:$0xe]
        %v1788 = vld [vmem:[%s1730 + $0x6c] sm:$0xe]
        %v1789 = vld [vmem:[%s1730 + $0x78] sm:$0xe]
        %v1790 = vld [vmem:[%s1730 + $0x84] sm:$0xe]
        %v1791 = vld [vmem:[%s1730 + $0x90] sm:$0xe]
        %v1792 = vld [vmem:[%s1730 + $0x9c] sm:$0xe]
        %v1793 = vld [vmem:[%s1730 + $0xa8] sm:$0xe]
        %v1794 = vld [vmem:[%s1730 + $0xb4] sm:$0xe]
        %v1827 = vunpack.c.l.b16 %v1602
        %v1828 = vunpack.c.l.b16 %v1603
        %v1829 = vunpack.c.l.b16 %v1604
        %v1830 = vunpack.c.l.b16 %v1605
        %v1831 = vunpack.c.l.b16 %v1606
        %v1832 = vunpack.c.l.b16 %v1607
        %v1833 = vunpack.c.l.b16 %v1608
        %v1834 = vunpack.c.l.b16 %v1609
        %v1835 = vunpack.c.l.b16 %v1610
        %v1836 = vunpack.c.l.b16 %v1611
        %v1837 = vunpack.c.l.b16 %v1612
        %v1838 = vunpack.c.l.b16 %v1613
        %v1839 = vunpack.c.l.b16 %v1614
        %v1840 = vunpack.c.l.b16 %v1615
        %v1841 = vunpack.c.l.b16 %v1616
        %v1842 = vunpack.c.l.b16 %v1617
        %v1843 = vunpack.c.l.b16 %v1618
        %v1844 = vunpack.c.l.b16 %v1619
        %v1845 = vunpack.c.l.b16 %v1620
        %v1846 = vunpack.c.l.b16 %v1621
        %v1847 = vunpack.c.l.b16 %v1622
        %v1848 = vunpack.c.l.b16 %v1623
        %v1849 = vunpack.c.l.b16 %v1624
        %v1850 = vunpack.c.l.b16 %v1625
        %v1851 = vunpack.c.l.b16 %v1626
        %v1852 = vunpack.c.l.b16 %v1627
        %v1853 = vunpack.c.l.b16 %v1628
        %v1854 = vunpack.c.l.b16 %v1629
        %v1855 = vunpack.c.l.b16 %v1630
        %v1856 = vunpack.c.l.b16 %v1631
        %v1857 = vunpack.c.l.b16 %v1632
        %v1858 = vunpack.c.l.b16 %v1633
        %v1859 = vpack.c.b16 %v1828, %v1827
        %v1860 = vpack.c.b16 %v1830, %v1829
        %v1861 = vpack.c.b16 %v1832, %v1831
        %v1862 = vpack.c.b16 %v1834, %v1833
        %v1863 = vpack.c.b16 %v1836, %v1835
        %v1864 = vpack.c.b16 %v1838, %v1837
        %v1865 = vpack.c.b16 %v1840, %v1839
        %v1866 = vpack.c.b16 %v1842, %v1841
        %v1867 = vpack.c.b16 %v1844, %v1843
        %v1868 = vpack.c.b16 %v1846, %v1845
        %v1869 = vpack.c.b16 %v1848, %v1847
        %v1870 = vpack.c.b16 %v1850, %v1849
        %v1871 = vpack.c.b16 %v1852, %v1851
        %v1872 = vpack.c.b16 %v1854, %v1853
        %v1873 = vpack.c.b16 %v1856, %v1855
        %v1874 = vpack.c.b16 %v1858, %v1857
        %v1891 = vunpack.c.l.b16 %v1634
        %v1892 = vunpack.c.l.b16 %v1635
        %v1893 = vunpack.c.l.b16 %v1636
        %v1894 = vunpack.c.l.b16 %v1637
        %v1895 = vunpack.c.l.b16 %v1638
        %v1896 = vunpack.c.l.b16 %v1639
        %v1897 = vunpack.c.l.b16 %v1640
        %v1898 = vunpack.c.l.b16 %v1641
        %v1899 = vunpack.c.l.b16 %v1642
        %v1900 = vunpack.c.l.b16 %v1643
        %v1901 = vunpack.c.l.b16 %v1644
        %v1902 = vunpack.c.l.b16 %v1645
        %v1903 = vunpack.c.l.b16 %v1646
        %v1904 = vunpack.c.l.b16 %v1647
        %v1905 = vunpack.c.l.b16 %v1648
        %v1906 = vunpack.c.l.b16 %v1649
        %v1907 = vpack.c.b16 %v1891, %v1891
        %v1908 = vpack.c.b16 %v1892, %v1892
        %v1909 = vpack.c.b16 %v1893, %v1893
        %v1910 = vpack.c.b16 %v1894, %v1894
        %v1911 = vpack.c.b16 %v1895, %v1895
        %v1912 = vpack.c.b16 %v1896, %v1896
        %v1913 = vpack.c.b16 %v1897, %v1897
        %v1914 = vpack.c.b16 %v1898, %v1898
        %v1915 = vpack.c.b16 %v1899, %v1899
        %v1916 = vpack.c.b16 %v1900, %v1900
        %v1917 = vpack.c.b16 %v1901, %v1901
        %v1918 = vpack.c.b16 %v1902, %v1902
        %v1919 = vpack.c.b16 %v1903, %v1903
        %v1920 = vpack.c.b16 %v1904, %v1904
        %v1921 = vpack.c.b16 %v1905, %v1905
        %v1922 = vpack.c.b16 %v1906, %v1906
        %vm1923 = vsmask.f32 7424
        %v1925 = vshrl.u32 %v1859, 16
        %v1927 = vshll.u32 %v1859, 16
        %v1929 = vrot.slane %v1927, 1
        %v1930 = vor.u32 %v1925, %v1929
        %v1932 = vshll.u32 %v1907, 16
        %v1934 = vrot.slane %v1932, 1
        %v1935 = vsel %vm1923, %v1930, %v1934
        %v1937 = vshrl.u32 %v1860, 16
        %v1939 = vshll.u32 %v1860, 16
        %v1941 = vrot.slane %v1939, 1
        %v1942 = vor.u32 %v1937, %v1941
        %v1944 = vshll.u32 %v1908, 16
        %v1946 = vrot.slane %v1944, 1
        %v1947 = vsel %vm1923, %v1942, %v1946
        %v1949 = vshrl.u32 %v1861, 16
        %v1951 = vshll.u32 %v1861, 16
        %v1953 = vrot.slane %v1951, 1
        %v1954 = vor.u32 %v1949, %v1953
        %v1956 = vshll.u32 %v1909, 16
        %v1958 = vrot.slane %v1956, 1
        %v1959 = vsel %vm1923, %v1954, %v1958
        %v1961 = vshrl.u32 %v1862, 16
        %v1963 = vshll.u32 %v1862, 16
        %v1965 = vrot.slane %v1963, 1
        %v1966 = vor.u32 %v1961, %v1965
        %v1968 = vshll.u32 %v1910, 16
        %v1970 = vrot.slane %v1968, 1
        %v1971 = vsel %vm1923, %v1966, %v1970
        %v1973 = vshrl.u32 %v1863, 16
        %v1975 = vshll.u32 %v1863, 16
        %v1977 = vrot.slane %v1975, 1
        %v1978 = vor.u32 %v1973, %v1977
        %v1980 = vshll.u32 %v1911, 16
        %v1982 = vrot.slane %v1980, 1
        %v1983 = vsel %vm1923, %v1978, %v1982
        %v1985 = vshrl.u32 %v1864, 16
        %v1987 = vshll.u32 %v1864, 16
        %v1989 = vrot.slane %v1987, 1
        %v1990 = vor.u32 %v1985, %v1989
        %v1992 = vshll.u32 %v1912, 16
        %v1994 = vrot.slane %v1992, 1
        %v1995 = vsel %vm1923, %v1990, %v1994
        %v1997 = vshrl.u32 %v1865, 16
        %v1999 = vshll.u32 %v1865, 16
        %v2001 = vrot.slane %v1999, 1
        %v2002 = vor.u32 %v1997, %v2001
        %v2004 = vshll.u32 %v1913, 16
        %v2006 = vrot.slane %v2004, 1
        %v2007 = vsel %vm1923, %v2002, %v2006
        %v2009 = vshrl.u32 %v1866, 16
        %v2011 = vshll.u32 %v1866, 16
        %v2013 = vrot.slane %v2011, 1
        %v2014 = vor.u32 %v2009, %v2013
        %v2016 = vshll.u32 %v1914, 16
        %v2018 = vrot.slane %v2016, 1
        %v2019 = vsel %vm1923, %v2014, %v2018
        %v2021 = vshrl.u32 %v1867, 16
        %v2023 = vshll.u32 %v1867, 16
        %v2025 = vrot.slane %v2023, 1
        %v2026 = vor.u32 %v2021, %v2025
        %v2028 = vshll.u32 %v1915, 16
        %v2030 = vrot.slane %v2028, 1
        %v2031 = vsel %vm1923, %v2026, %v2030
        %v2033 = vshrl.u32 %v1868, 16
        %v2035 = vshll.u32 %v1868, 16
        %v2037 = vrot.slane %v2035, 1
        %v2038 = vor.u32 %v2033, %v2037
        %v2040 = vshll.u32 %v1916, 16
        %v2042 = vrot.slane %v2040, 1
        %v2043 = vsel %vm1923, %v2038, %v2042
        %v2045 = vshrl.u32 %v1869, 16
        %v2047 = vshll.u32 %v1869, 16
        %v2049 = vrot.slane %v2047, 1
        %v2050 = vor.u32 %v2045, %v2049
        %v2052 = vshll.u32 %v1917, 16
        %v2054 = vrot.slane %v2052, 1
        %v2055 = vsel %vm1923, %v2050, %v2054
        %v2057 = vshrl.u32 %v1870, 16
        %v2059 = vshll.u32 %v1870, 16
        %v2061 = vrot.slane %v2059, 1
        %v2062 = vor.u32 %v2057, %v2061
        %v2064 = vshll.u32 %v1918, 16
        %v2066 = vrot.slane %v2064, 1
        %v2067 = vsel %vm1923, %v2062, %v2066
        %v2069 = vshrl.u32 %v1871, 16
        %v2071 = vshll.u32 %v1871, 16
        %v2073 = vrot.slane %v2071, 1
        %v2074 = vor.u32 %v2069, %v2073
        %v2076 = vshll.u32 %v1919, 16
        %v2078 = vrot.slane %v2076, 1
        %v2079 = vsel %vm1923, %v2074, %v2078
        %v2081 = vshrl.u32 %v1872, 16
        %v2083 = vshll.u32 %v1872, 16
        %v2085 = vrot.slane %v2083, 1
        %v2086 = vor.u32 %v2081, %v2085
        %v2088 = vshll.u32 %v1920, 16
        %v2090 = vrot.slane %v2088, 1
        %v2091 = vsel %vm1923, %v2086, %v2090
        %v2093 = vshrl.u32 %v1873, 16
        %v2095 = vshll.u32 %v1873, 16
        %v2097 = vrot.slane %v2095, 1
        %v2098 = vor.u32 %v2093, %v2097
        %v2100 = vshll.u32 %v1921, 16
        %v2102 = vrot.slane %v2100, 1
        %v2103 = vsel %vm1923, %v2098, %v2102
        %v2105 = vshrl.u32 %v1874, 16
        %v2107 = vshll.u32 %v1874, 16
        %v2109 = vrot.slane %v2107, 1
        %v2110 = vor.u32 %v2105, %v2109
        %v2112 = vshll.u32 %v1922, 16
        %v2114 = vrot.slane %v2112, 1
        %v2115 = vsel %vm1923, %v2110, %v2114
        %2116 = vrot.lane.b32.xlu0 %v1935, 32
        %v2117 = vpop.permute.xlu0 %2116
        %2118 = vrot.lane.b32.xlu0 %v1947, 32
        %v2119 = vpop.permute.xlu0 %2118
        %2120 = vrot.lane.b32.xlu0 %v1959, 32
        %v2121 = vpop.permute.xlu0 %2120
        %2122 = vrot.lane.b32.xlu0 %v1971, 32
        %v2123 = vpop.permute.xlu0 %2122
        %2124 = vrot.lane.b32.xlu0 %v1983, 32
        %v2125 = vpop.permute.xlu0 %2124
        %2126 = vrot.lane.b32.xlu0 %v1995, 32
        %v2127 = vpop.permute.xlu0 %2126
        %2128 = vrot.lane.b32.xlu0 %v2007, 32
        %v2129 = vpop.permute.xlu0 %2128
        %2130 = vrot.lane.b32.xlu0 %v2019, 32
        %v2131 = vpop.permute.xlu0 %2130
        %2132 = vrot.lane.b32.xlu0 %v2031, 32
        %v2133 = vpop.permute.xlu0 %2132
        %2134 = vrot.lane.b32.xlu0 %v2043, 32
        %v2135 = vpop.permute.xlu0 %2134
        %2136 = vrot.lane.b32.xlu0 %v2055, 32
        %v2137 = vpop.permute.xlu0 %2136
        %2138 = vrot.lane.b32.xlu0 %v2067, 32
        %v2139 = vpop.permute.xlu0 %2138
        %2140 = vrot.lane.b32.xlu0 %v2079, 32
        %v2141 = vpop.permute.xlu0 %2140
        %2142 = vrot.lane.b32.xlu0 %v2091, 32
        %v2143 = vpop.permute.xlu0 %2142
        %2144 = vrot.lane.b32.xlu0 %v2103, 32
        %v2145 = vpop.permute.xlu0 %2144
        %2146 = vrot.lane.b32.xlu0 %v2115, 32
        %v2147 = vpop.permute.xlu0 %2146
        %v2164 = vunpack.c.l.b16 %v1650
        %v2165 = vunpack.c.l.b16 %v1651
        %v2166 = vunpack.c.l.b16 %v1652
        %v2167 = vunpack.c.l.b16 %v1653
        %v2168 = vunpack.c.l.b16 %v1654
        %v2169 = vunpack.c.l.b16 %v1655
        %v2170 = vunpack.c.l.b16 %v1656
        %v2171 = vunpack.c.l.b16 %v1657
        %v2172 = vunpack.c.l.b16 %v1658
        %v2173 = vunpack.c.l.b16 %v1659
        %v2174 = vunpack.c.l.b16 %v1660
        %v2175 = vunpack.c.l.b16 %v1661
        %v2176 = vunpack.c.l.b16 %v1662
        %v2177 = vunpack.c.l.b16 %v1663
        %v2178 = vunpack.c.l.b16 %v1664
        %v2179 = vunpack.c.l.b16 %v1665
        %v2180 = vpack.c.b16 %v1828, %v2164
        %v2181 = vpack.c.b16 %v1830, %v2165
        %v2182 = vpack.c.b16 %v1832, %v2166
        %v2183 = vpack.c.b16 %v1834, %v2167
        %v2184 = vpack.c.b16 %v1836, %v2168
        %v2185 = vpack.c.b16 %v1838, %v2169
        %v2186 = vpack.c.b16 %v1840, %v2170
        %v2187 = vpack.c.b16 %v1842, %v2171
        %v2188 = vpack.c.b16 %v1844, %v2172
        %v2189 = vpack.c.b16 %v1846, %v2173
        %v2190 = vpack.c.b16 %v1848, %v2174
        %v2191 = vpack.c.b16 %v1850, %v2175
        %v2192 = vpack.c.b16 %v1852, %v2176
        %v2193 = vpack.c.b16 %v1854, %v2177
        %v2194 = vpack.c.b16 %v1856, %v2178
        %v2195 = vpack.c.b16 %v1858, %v2179
        %vm2196 = vcmask 1046528
        %v2197 = vrot.slane %v2180, 1
        %v2198 = vrot.slane %v1907, 1
        %v2199 = vsel %vm2196, %v2197, %v2198
        %v2200 = vrot.slane %v2181, 1
        %v2201 = vrot.slane %v1908, 1
        %v2202 = vsel %vm2196, %v2200, %v2201
        %v2203 = vrot.slane %v2182, 1
        %v2204 = vrot.slane %v1909, 1
        %v2205 = vsel %vm2196, %v2203, %v2204
        %v2206 = vrot.slane %v2183, 1
        %v2207 = vrot.slane %v1910, 1
        %v2208 = vsel %vm2196, %v2206, %v2207
        %v2209 = vrot.slane %v2184, 1
        %v2210 = vrot.slane %v1911, 1
        %v2211 = vsel %vm2196, %v2209, %v2210
        %v2212 = vrot.slane %v2185, 1
        %v2213 = vrot.slane %v1912, 1
        %v2214 = vsel %vm2196, %v2212, %v2213
        %v2215 = vrot.slane %v2186, 1
        %v2216 = vrot.slane %v1913, 1
        %v2217 = vsel %vm2196, %v2215, %v2216
        %v2218 = vrot.slane %v2187, 1
        %v2219 = vrot.slane %v1914, 1
        %v2220 = vsel %vm2196, %v2218, %v2219
        %v2221 = vrot.slane %v2188, 1
        %v2222 = vrot.slane %v1915, 1
        %v2223 = vsel %vm2196, %v2221, %v2222
        %v2224 = vrot.slane %v2189, 1
        %v2225 = vrot.slane %v1916, 1
        %v2226 = vsel %vm2196, %v2224, %v2225
        %v2227 = vrot.slane %v2190, 1
        %v2228 = vrot.slane %v1917, 1
        %v2229 = vsel %vm2196, %v2227, %v2228
        %v2230 = vrot.slane %v2191, 1
        %v2231 = vrot.slane %v1918, 1
        %v2232 = vsel %vm2196, %v2230, %v2231
        %v2233 = vrot.slane %v2192, 1
        %v2234 = vrot.slane %v1919, 1
        %v2235 = vsel %vm2196, %v2233, %v2234
        %v2236 = vrot.slane %v2193, 1
        %v2237 = vrot.slane %v1920, 1
        %v2238 = vsel %vm2196, %v2236, %v2237
        %v2239 = vrot.slane %v2194, 1
        %v2240 = vrot.slane %v1921, 1
        %v2241 = vsel %vm2196, %v2239, %v2240
        %v2242 = vrot.slane %v2195, 1
        %v2243 = vrot.slane %v1922, 1
        %v2244 = vsel %vm2196, %v2242, %v2243
        %2245 = vrot.lane.b32.xlu0 %v2199, 64
        %v2246 = vpop.permute.xlu0 %2245
        %2247 = vrot.lane.b32.xlu0 %v2202, 64
        %v2248 = vpop.permute.xlu0 %2247
        %2249 = vrot.lane.b32.xlu0 %v2205, 64
        %v2250 = vpop.permute.xlu0 %2249
        %2251 = vrot.lane.b32.xlu0 %v2208, 64
        %v2252 = vpop.permute.xlu0 %2251
        %2253 = vrot.lane.b32.xlu0 %v2211, 64
        %v2254 = vpop.permute.xlu0 %2253
        %2255 = vrot.lane.b32.xlu0 %v2214, 64
        %v2256 = vpop.permute.xlu0 %2255
        %2257 = vrot.lane.b32.xlu0 %v2217, 64
        %v2258 = vpop.permute.xlu0 %2257
        %2259 = vrot.lane.b32.xlu0 %v2220, 64
        %v2260 = vpop.permute.xlu0 %2259
        %2261 = vrot.lane.b32.xlu0 %v2223, 64
        %v2262 = vpop.permute.xlu0 %2261
        %2263 = vrot.lane.b32.xlu0 %v2226, 64
        %v2264 = vpop.permute.xlu0 %2263
        %2265 = vrot.lane.b32.xlu0 %v2229, 64
        %v2266 = vpop.permute.xlu0 %2265
        %2267 = vrot.lane.b32.xlu0 %v2232, 64
        %v2268 = vpop.permute.xlu0 %2267
        %2269 = vrot.lane.b32.xlu0 %v2235, 64
        %v2270 = vpop.permute.xlu0 %2269
        %2271 = vrot.lane.b32.xlu0 %v2238, 64
        %v2272 = vpop.permute.xlu0 %2271
        %2273 = vrot.lane.b32.xlu0 %v2241, 64
        %v2274 = vpop.permute.xlu0 %2273
        %2275 = vrot.lane.b32.xlu0 %v2244, 64
        %v2276 = vpop.permute.xlu0 %2275
        %v2309 = vunpack.c.l.b16 %v1666
        %v2310 = vunpack.c.l.b16 %v1667
        %v2311 = vunpack.c.l.b16 %v1668
        %v2312 = vunpack.c.l.b16 %v1669
        %v2313 = vunpack.c.l.b16 %v1670
        %v2314 = vunpack.c.l.b16 %v1671
        %v2315 = vunpack.c.l.b16 %v1672
        %v2316 = vunpack.c.l.b16 %v1673
        %v2317 = vunpack.c.l.b16 %v1674
        %v2318 = vunpack.c.l.b16 %v1675
        %v2319 = vunpack.c.l.b16 %v1676
        %v2320 = vunpack.c.l.b16 %v1677
        %v2321 = vunpack.c.l.b16 %v1678
        %v2322 = vunpack.c.l.b16 %v1679
        %v2323 = vunpack.c.l.b16 %v1680
        %v2324 = vunpack.c.l.b16 %v1681
        %v2325 = vunpack.c.l.b16 %v1682
        %v2326 = vunpack.c.l.b16 %v1683
        %v2327 = vunpack.c.l.b16 %v1684
        %v2328 = vunpack.c.l.b16 %v1685
        %v2329 = vunpack.c.l.b16 %v1686
        %v2330 = vunpack.c.l.b16 %v1687
        %v2331 = vunpack.c.l.b16 %v1688
        %v2332 = vunpack.c.l.b16 %v1689
        %v2333 = vunpack.c.l.b16 %v1690
        %v2334 = vunpack.c.l.b16 %v1691
        %v2335 = vunpack.c.l.b16 %v1692
        %v2336 = vunpack.c.l.b16 %v1693
        %v2337 = vunpack.c.l.b16 %v1694
        %v2338 = vunpack.c.l.b16 %v1695
        %v2339 = vunpack.c.l.b16 %v1696
        %v2340 = vunpack.c.l.b16 %v1697
        %v2341 = vpack.c.b16 %v2310, %v2309
        %v2342 = vpack.c.b16 %v2312, %v2311
        %v2343 = vpack.c.b16 %v2314, %v2313
        %v2344 = vpack.c.b16 %v2316, %v2315
        %v2345 = vpack.c.b16 %v2318, %v2317
        %v2346 = vpack.c.b16 %v2320, %v2319
        %v2347 = vpack.c.b16 %v2322, %v2321
        %v2348 = vpack.c.b16 %v2324, %v2323
        %v2349 = vpack.c.b16 %v2326, %v2325
        %v2350 = vpack.c.b16 %v2328, %v2327
        %v2351 = vpack.c.b16 %v2330, %v2329
        %v2352 = vpack.c.b16 %v2332, %v2331
        %v2353 = vpack.c.b16 %v2334, %v2333
        %v2354 = vpack.c.b16 %v2336, %v2335
        %v2355 = vpack.c.b16 %v2338, %v2337
        %v2356 = vpack.c.b16 %v2340, %v2339
        %2357 = vrot.lane.b32.xlu0 %v2341, 96
        %v2358 = vpop.permute.xlu0 %2357
        %2359 = vrot.lane.b32.xlu0 %v2342, 96
        %v2360 = vpop.permute.xlu0 %2359
        %2361 = vrot.lane.b32.xlu0 %v2343, 96
        %v2362 = vpop.permute.xlu0 %2361
        %2363 = vrot.lane.b32.xlu0 %v2344, 96
        %v2364 = vpop.permute.xlu0 %2363
        %2365 = vrot.lane.b32.xlu0 %v2345, 96
        %v2366 = vpop.permute.xlu0 %2365
        %2367 = vrot.lane.b32.xlu0 %v2346, 96
        %v2368 = vpop.permute.xlu0 %2367
        %2369 = vrot.lane.b32.xlu0 %v2347, 96
        %v2370 = vpop.permute.xlu0 %2369
        %2371 = vrot.lane.b32.xlu0 %v2348, 96
        %v2372 = vpop.permute.xlu0 %2371
        %2373 = vrot.lane.b32.xlu0 %v2349, 96
        %v2374 = vpop.permute.xlu0 %2373
        %2375 = vrot.lane.b32.xlu0 %v2350, 96
        %v2376 = vpop.permute.xlu0 %2375
        %2377 = vrot.lane.b32.xlu0 %v2351, 96
        %v2378 = vpop.permute.xlu0 %2377
        %2379 = vrot.lane.b32.xlu0 %v2352, 96
        %v2380 = vpop.permute.xlu0 %2379
        %2381 = vrot.lane.b32.xlu0 %v2353, 96
        %v2382 = vpop.permute.xlu0 %2381
        %2383 = vrot.lane.b32.xlu0 %v2354, 96
        %v2384 = vpop.permute.xlu0 %2383
        %2385 = vrot.lane.b32.xlu0 %v2355, 96
        %v2386 = vpop.permute.xlu0 %2385
        %2387 = vrot.lane.b32.xlu0 %v2356, 96
        %v2388 = vpop.permute.xlu0 %2387
        %v2405 = vunpack.c.l.b16 %v1698
        %v2406 = vunpack.c.l.b16 %v1699
        %v2407 = vunpack.c.l.b16 %v1700
        %v2408 = vunpack.c.l.b16 %v1701
        %v2409 = vunpack.c.l.b16 %v1702
        %v2410 = vunpack.c.l.b16 %v1703
        %v2411 = vunpack.c.l.b16 %v1704
        %v2412 = vunpack.c.l.b16 %v1705
        %v2413 = vunpack.c.l.b16 %v1706
        %v2414 = vunpack.c.l.b16 %v1707
        %v2415 = vunpack.c.l.b16 %v1708
        %v2416 = vunpack.c.l.b16 %v1709
        %v2417 = vunpack.c.l.b16 %v1710
        %v2418 = vunpack.c.l.b16 %v1711
        %v2419 = vunpack.c.l.b16 %v1712
        %v2420 = vunpack.c.l.b16 %v1713
        %v2421 = vpack.c.b16 %v2405, %v2405
        %v2422 = vpack.c.b16 %v2406, %v2406
        %v2423 = vpack.c.b16 %v2407, %v2407
        %v2424 = vpack.c.b16 %v2408, %v2408
        %v2425 = vpack.c.b16 %v2409, %v2409
        %v2426 = vpack.c.b16 %v2410, %v2410
        %v2427 = vpack.c.b16 %v2411, %v2411
        %v2428 = vpack.c.b16 %v2412, %v2412
        %v2429 = vpack.c.b16 %v2413, %v2413
        %v2430 = vpack.c.b16 %v2414, %v2414
        %v2431 = vpack.c.b16 %v2415, %v2415
        %v2432 = vpack.c.b16 %v2416, %v2416
        %v2433 = vpack.c.b16 %v2417, %v2417
        %v2434 = vpack.c.b16 %v2418, %v2418
        %v2435 = vpack.c.b16 %v2419, %v2419
        %v2436 = vpack.c.b16 %v2420, %v2420
        %v2438 = vshrl.u32 %v2341, 16
        %v2440 = vshll.u32 %v2341, 16
        %v2442 = vrot.slane %v2440, 1
        %v2443 = vor.u32 %v2438, %v2442
        %v2445 = vshll.u32 %v2421, 16
        %v2447 = vrot.slane %v2445, 1
        %v2448 = vsel %vm1923, %v2443, %v2447
        %v2450 = vshrl.u32 %v2342, 16
        %v2452 = vshll.u32 %v2342, 16
        %v2454 = vrot.slane %v2452, 1
        %v2455 = vor.u32 %v2450, %v2454
        %v2457 = vshll.u32 %v2422, 16
        %v2459 = vrot.slane %v2457, 1
        %v2460 = vsel %vm1923, %v2455, %v2459
        %v2462 = vshrl.u32 %v2343, 16
        %v2464 = vshll.u32 %v2343, 16
        %v2466 = vrot.slane %v2464, 1
        %v2467 = vor.u32 %v2462, %v2466
        %v2469 = vshll.u32 %v2423, 16
        %v2471 = vrot.slane %v2469, 1
        %v2472 = vsel %vm1923, %v2467, %v2471
        %v2474 = vshrl.u32 %v2344, 16
        %v2476 = vshll.u32 %v2344, 16
        %v2478 = vrot.slane %v2476, 1
        %v2479 = vor.u32 %v2474, %v2478
        %v2481 = vshll.u32 %v2424, 16
        %v2483 = vrot.slane %v2481, 1
        %v2484 = vsel %vm1923, %v2479, %v2483
        %v2486 = vshrl.u32 %v2345, 16
        %v2488 = vshll.u32 %v2345, 16
        %v2490 = vrot.slane %v2488, 1
        %v2491 = vor.u32 %v2486, %v2490
        %v2493 = vshll.u32 %v2425, 16
        %v2495 = vrot.slane %v2493, 1
        %v2496 = vsel %vm1923, %v2491, %v2495
        %v2498 = vshrl.u32 %v2346, 16
        %v2500 = vshll.u32 %v2346, 16
        %v2502 = vrot.slane %v2500, 1
        %v2503 = vor.u32 %v2498, %v2502
        %v2505 = vshll.u32 %v2426, 16
        %v2507 = vrot.slane %v2505, 1
        %v2508 = vsel %vm1923, %v2503, %v2507
        %v2510 = vshrl.u32 %v2347, 16
        %v2512 = vshll.u32 %v2347, 16
        %v2514 = vrot.slane %v2512, 1
        %v2515 = vor.u32 %v2510, %v2514
        %v2517 = vshll.u32 %v2427, 16
        %v2519 = vrot.slane %v2517, 1
        %v2520 = vsel %vm1923, %v2515, %v2519
        %v2522 = vshrl.u32 %v2348, 16
        %v2524 = vshll.u32 %v2348, 16
        %v2526 = vrot.slane %v2524, 1
        %v2527 = vor.u32 %v2522, %v2526
        %v2529 = vshll.u32 %v2428, 16
        %v2531 = vrot.slane %v2529, 1
        %v2532 = vsel %vm1923, %v2527, %v2531
        %v2534 = vshrl.u32 %v2349, 16
        %v2536 = vshll.u32 %v2349, 16
        %v2538 = vrot.slane %v2536, 1
        %v2539 = vor.u32 %v2534, %v2538
        %v2541 = vshll.u32 %v2429, 16
        %v2543 = vrot.slane %v2541, 1
        %v2544 = vsel %vm1923, %v2539, %v2543
        %v2546 = vshrl.u32 %v2350, 16
        %v2548 = vshll.u32 %v2350, 16
        %v2550 = vrot.slane %v2548, 1
        %v2551 = vor.u32 %v2546, %v2550
        %v2553 = vshll.u32 %v2430, 16
        %v2555 = vrot.slane %v2553, 1
        %v2556 = vsel %vm1923, %v2551, %v2555
        %v2558 = vshrl.u32 %v2351, 16
        %v2560 = vshll.u32 %v2351, 16
        %v2562 = vrot.slane %v2560, 1
        %v2563 = vor.u32 %v2558, %v2562
        %v2565 = vshll.u32 %v2431, 16
        %v2567 = vrot.slane %v2565, 1
        %v2568 = vsel %vm1923, %v2563, %v2567
        %v2570 = vshrl.u32 %v2352, 16
        %v2572 = vshll.u32 %v2352, 16
        %v2574 = vrot.slane %v2572, 1
        %v2575 = vor.u32 %v2570, %v2574
        %v2577 = vshll.u32 %v2432, 16
        %v2579 = vrot.slane %v2577, 1
        %v2580 = vsel %vm1923, %v2575, %v2579
        %v2582 = vshrl.u32 %v2353, 16
        %v2584 = vshll.u32 %v2353, 16
        %v2586 = vrot.slane %v2584, 1
        %v2587 = vor.u32 %v2582, %v2586
        %v2589 = vshll.u32 %v2433, 16
        %v2591 = vrot.slane %v2589, 1
        %v2592 = vsel %vm1923, %v2587, %v2591
        %v2594 = vshrl.u32 %v2354, 16
        %v2596 = vshll.u32 %v2354, 16
        %v2598 = vrot.slane %v2596, 1
        %v2599 = vor.u32 %v2594, %v2598
        %v2601 = vshll.u32 %v2434, 16
        %v2603 = vrot.slane %v2601, 1
        %v2604 = vsel %vm1923, %v2599, %v2603
        %v2606 = vshrl.u32 %v2355, 16
        %v2608 = vshll.u32 %v2355, 16
        %v2610 = vrot.slane %v2608, 1
        %v2611 = vor.u32 %v2606, %v2610
        %v2613 = vshll.u32 %v2435, 16
        %v2615 = vrot.slane %v2613, 1
        %v2616 = vsel %vm1923, %v2611, %v2615
        %v2618 = vshrl.u32 %v2356, 16
        %v2620 = vshll.u32 %v2356, 16
        %v2622 = vrot.slane %v2620, 1
        %v2623 = vor.u32 %v2618, %v2622
        %v2625 = vshll.u32 %v2436, 16
        %v2627 = vrot.slane %v2625, 1
        %v2628 = vsel %vm1923, %v2623, %v2627
        %v2645 = vunpack.c.l.b16 %v1714
        %v2646 = vunpack.c.l.b16 %v1715
        %v2647 = vunpack.c.l.b16 %v1716
        %v2648 = vunpack.c.l.b16 %v1717
        %v2649 = vunpack.c.l.b16 %v1718
        %v2650 = vunpack.c.l.b16 %v1719
        %v2651 = vunpack.c.l.b16 %v1720
        %v2652 = vunpack.c.l.b16 %v1721
        %v2653 = vunpack.c.l.b16 %v1722
        %v2654 = vunpack.c.l.b16 %v1723
        %v2655 = vunpack.c.l.b16 %v1724
        %v2656 = vunpack.c.l.b16 %v1725
        %v2657 = vunpack.c.l.b16 %v1726
        %v2658 = vunpack.c.l.b16 %v1727
        %v2659 = vunpack.c.l.b16 %v1728
        %v2660 = vunpack.c.l.b16 %v1729
        %v2661 = vpack.c.b16 %v2310, %v2645
        %v2662 = vpack.c.b16 %v2312, %v2646
        %v2663 = vpack.c.b16 %v2314, %v2647
        %v2664 = vpack.c.b16 %v2316, %v2648
        %v2665 = vpack.c.b16 %v2318, %v2649
        %v2666 = vpack.c.b16 %v2320, %v2650
        %v2667 = vpack.c.b16 %v2322, %v2651
        %v2668 = vpack.c.b16 %v2324, %v2652
        %v2669 = vpack.c.b16 %v2326, %v2653
        %v2670 = vpack.c.b16 %v2328, %v2654
        %v2671 = vpack.c.b16 %v2330, %v2655
        %v2672 = vpack.c.b16 %v2332, %v2656
        %v2673 = vpack.c.b16 %v2334, %v2657
        %v2674 = vpack.c.b16 %v2336, %v2658
        %v2675 = vpack.c.b16 %v2338, %v2659
        %v2676 = vpack.c.b16 %v2340, %v2660
        %v2677 = vrot.slane %v2661, 1
        %v2678 = vrot.slane %v2421, 1
        %v2679 = vsel %vm2196, %v2677, %v2678
        %v2680 = vrot.slane %v2662, 1
        %v2681 = vrot.slane %v2422, 1
        %v2682 = vsel %vm2196, %v2680, %v2681
        %v2683 = vrot.slane %v2663, 1
        %v2684 = vrot.slane %v2423, 1
        %v2685 = vsel %vm2196, %v2683, %v2684
        %v2686 = vrot.slane %v2664, 1
        %v2687 = vrot.slane %v2424, 1
        %v2688 = vsel %vm2196, %v2686, %v2687
        %v2689 = vrot.slane %v2665, 1
        %v2690 = vrot.slane %v2425, 1
        %v2691 = vsel %vm2196, %v2689, %v2690
        %v2692 = vrot.slane %v2666, 1
        %v2693 = vrot.slane %v2426, 1
        %v2694 = vsel %vm2196, %v2692, %v2693
        %v2695 = vrot.slane %v2667, 1
        %v2696 = vrot.slane %v2427, 1
        %v2697 = vsel %vm2196, %v2695, %v2696
        %v2698 = vrot.slane %v2668, 1
        %v2699 = vrot.slane %v2428, 1
        %v2700 = vsel %vm2196, %v2698, %v2699
        %v2701 = vrot.slane %v2669, 1
        %v2702 = vrot.slane %v2429, 1
        %v2703 = vsel %vm2196, %v2701, %v2702
        %v2704 = vrot.slane %v2670, 1
        %v2705 = vrot.slane %v2430, 1
        %v2706 = vsel %vm2196, %v2704, %v2705
        %v2707 = vrot.slane %v2671, 1
        %v2708 = vrot.slane %v2431, 1
        %v2709 = vsel %vm2196, %v2707, %v2708
        %v2710 = vrot.slane %v2672, 1
        %v2711 = vrot.slane %v2432, 1
        %v2712 = vsel %vm2196, %v2710, %v2711
        %v2713 = vrot.slane %v2673, 1
        %v2714 = vrot.slane %v2433, 1
        %v2715 = vsel %vm2196, %v2713, %v2714
        %v2716 = vrot.slane %v2674, 1
        %v2717 = vrot.slane %v2434, 1
        %v2718 = vsel %vm2196, %v2716, %v2717
        %v2719 = vrot.slane %v2675, 1
        %v2720 = vrot.slane %v2435, 1
        %v2721 = vsel %vm2196, %v2719, %v2720
        %v2722 = vrot.slane %v2676, 1
        %v2723 = vrot.slane %v2436, 1
        %v2724 = vsel %vm2196, %v2722, %v2723
        %2725 = vrot.lane.b32.xlu0 %v2679, 32
        %v2726 = vpop.permute.xlu0 %2725
        %2727 = vrot.lane.b32.xlu0 %v2682, 32
        %v2728 = vpop.permute.xlu0 %2727
        %2729 = vrot.lane.b32.xlu0 %v2685, 32
        %v2730 = vpop.permute.xlu0 %2729
        %2731 = vrot.lane.b32.xlu0 %v2688, 32
        %v2732 = vpop.permute.xlu0 %2731
        %2733 = vrot.lane.b32.xlu0 %v2691, 32
        %v2734 = vpop.permute.xlu0 %2733
        %2735 = vrot.lane.b32.xlu0 %v2694, 32
        %v2736 = vpop.permute.xlu0 %2735
        %2737 = vrot.lane.b32.xlu0 %v2697, 32
        %v2738 = vpop.permute.xlu0 %2737
        %2739 = vrot.lane.b32.xlu0 %v2700, 32
        %v2740 = vpop.permute.xlu0 %2739
        %2741 = vrot.lane.b32.xlu0 %v2703, 32
        %v2742 = vpop.permute.xlu0 %2741
        %2743 = vrot.lane.b32.xlu0 %v2706, 32
        %v2744 = vpop.permute.xlu0 %2743
        %2745 = vrot.lane.b32.xlu0 %v2709, 32
        %v2746 = vpop.permute.xlu0 %2745
        %2747 = vrot.lane.b32.xlu0 %v2712, 32
        %v2748 = vpop.permute.xlu0 %2747
        %2749 = vrot.lane.b32.xlu0 %v2715, 32
        %v2750 = vpop.permute.xlu0 %2749
        %2751 = vrot.lane.b32.xlu0 %v2718, 32
        %v2752 = vpop.permute.xlu0 %2751
        %2753 = vrot.lane.b32.xlu0 %v2721, 32
        %v2754 = vpop.permute.xlu0 %2753
        %2755 = vrot.lane.b32.xlu0 %v2724, 32
        %v2756 = vpop.permute.xlu0 %2755
        %v2789 = vunpack.c.l.b16 %v1731
        %v2790 = vunpack.c.l.b16 %v1732
        %v2791 = vunpack.c.l.b16 %v1733
        %v2792 = vunpack.c.l.b16 %v1734
        %v2793 = vunpack.c.l.b16 %v1735
        %v2794 = vunpack.c.l.b16 %v1736
        %v2795 = vunpack.c.l.b16 %v1737
        %v2796 = vunpack.c.l.b16 %v1738
        %v2797 = vunpack.c.l.b16 %v1739
        %v2798 = vunpack.c.l.b16 %v1740
        %v2799 = vunpack.c.l.b16 %v1741
        %v2800 = vunpack.c.l.b16 %v1742
        %v2801 = vunpack.c.l.b16 %v1743
        %v2802 = vunpack.c.l.b16 %v1744
        %v2803 = vunpack.c.l.b16 %v1745
        %v2804 = vunpack.c.l.b16 %v1746
        %v2805 = vunpack.c.l.b16 %v1747
        %v2806 = vunpack.c.l.b16 %v1748
        %v2807 = vunpack.c.l.b16 %v1749
        %v2808 = vunpack.c.l.b16 %v1750
        %v2809 = vunpack.c.l.b16 %v1751
        %v2810 = vunpack.c.l.b16 %v1752
        %v2811 = vunpack.c.l.b16 %v1753
        %v2812 = vunpack.c.l.b16 %v1754
        %v2813 = vunpack.c.l.b16 %v1755
        %v2814 = vunpack.c.l.b16 %v1756
        %v2815 = vunpack.c.l.b16 %v1757
        %v2816 = vunpack.c.l.b16 %v1758
        %v2817 = vunpack.c.l.b16 %v1759
        %v2818 = vunpack.c.l.b16 %v1760
        %v2819 = vunpack.c.l.b16 %v1761
        %v2820 = vunpack.c.l.b16 %v1762
        %v2821 = vpack.c.b16 %v2790, %v2789
        %v2822 = vpack.c.b16 %v2792, %v2791
        %v2823 = vpack.c.b16 %v2794, %v2793
        %v2824 = vpack.c.b16 %v2796, %v2795
        %v2825 = vpack.c.b16 %v2798, %v2797
        %v2826 = vpack.c.b16 %v2800, %v2799
        %v2827 = vpack.c.b16 %v2802, %v2801
        %v2828 = vpack.c.b16 %v2804, %v2803
        %v2829 = vpack.c.b16 %v2806, %v2805
        %v2830 = vpack.c.b16 %v2808, %v2807
        %v2831 = vpack.c.b16 %v2810, %v2809
        %v2832 = vpack.c.b16 %v2812, %v2811
        %v2833 = vpack.c.b16 %v2814, %v2813
        %v2834 = vpack.c.b16 %v2816, %v2815
        %v2835 = vpack.c.b16 %v2818, %v2817
        %v2836 = vpack.c.b16 %v2820, %v2819
        %2837 = vrot.lane.b32.xlu0 %v2821, 64
        %v2838 = vpop.permute.xlu0 %2837
        %2839 = vrot.lane.b32.xlu0 %v2822, 64
        %v2840 = vpop.permute.xlu0 %2839
        %2841 = vrot.lane.b32.xlu0 %v2823, 64
        %v2842 = vpop.permute.xlu0 %2841
        %2843 = vrot.lane.b32.xlu0 %v2824, 64
        %v2844 = vpop.permute.xlu0 %2843
        %2845 = vrot.lane.b32.xlu0 %v2825, 64
        %v2846 = vpop.permute.xlu0 %2845
        %2847 = vrot.lane.b32.xlu0 %v2826, 64
        %v2848 = vpop.permute.xlu0 %2847
        %2849 = vrot.lane.b32.xlu0 %v2827, 64
        %v2850 = vpop.permute.xlu0 %2849
        %2851 = vrot.lane.b32.xlu0 %v2828, 64
        %v2852 = vpop.permute.xlu0 %2851
        %2853 = vrot.lane.b32.xlu0 %v2829, 64
        %v2854 = vpop.permute.xlu0 %2853
        %2855 = vrot.lane.b32.xlu0 %v2830, 64
        %v2856 = vpop.permute.xlu0 %2855
        %2857 = vrot.lane.b32.xlu0 %v2831, 64
        %v2858 = vpop.permute.xlu0 %2857
        %2859 = vrot.lane.b32.xlu0 %v2832, 64
        %v2860 = vpop.permute.xlu0 %2859
        %2861 = vrot.lane.b32.xlu0 %v2833, 64
        %v2862 = vpop.permute.xlu0 %2861
        %2863 = vrot.lane.b32.xlu0 %v2834, 64
        %v2864 = vpop.permute.xlu0 %2863
        %2865 = vrot.lane.b32.xlu0 %v2835, 64
        %v2866 = vpop.permute.xlu0 %2865
        %2867 = vrot.lane.b32.xlu0 %v2836, 64
        %v2868 = vpop.permute.xlu0 %2867
        %v2885 = vunpack.c.l.b16 %v1763
        %v2886 = vunpack.c.l.b16 %v1764
        %v2887 = vunpack.c.l.b16 %v1765
        %v2888 = vunpack.c.l.b16 %v1766
        %v2889 = vunpack.c.l.b16 %v1767
        %v2890 = vunpack.c.l.b16 %v1768
        %v2891 = vunpack.c.l.b16 %v1769
        %v2892 = vunpack.c.l.b16 %v1770
        %v2893 = vunpack.c.l.b16 %v1771
        %v2894 = vunpack.c.l.b16 %v1772
        %v2895 = vunpack.c.l.b16 %v1773
        %v2896 = vunpack.c.l.b16 %v1774
        %v2897 = vunpack.c.l.b16 %v1775
        %v2898 = vunpack.c.l.b16 %v1776
        %v2899 = vunpack.c.l.b16 %v1777
        %v2900 = vunpack.c.l.b16 %v1778
        %v2901 = vpack.c.b16 %v2885, %v2885
        %v2902 = vpack.c.b16 %v2886, %v2886
        %v2903 = vpack.c.b16 %v2887, %v2887
        %v2904 = vpack.c.b16 %v2888, %v2888
        %v2905 = vpack.c.b16 %v2889, %v2889
        %v2906 = vpack.c.b16 %v2890, %v2890
        %v2907 = vpack.c.b16 %v2891, %v2891
        %v2908 = vpack.c.b16 %v2892, %v2892
        %v2909 = vpack.c.b16 %v2893, %v2893
        %v2910 = vpack.c.b16 %v2894, %v2894
        %v2911 = vpack.c.b16 %v2895, %v2895
        %v2912 = vpack.c.b16 %v2896, %v2896
        %v2913 = vpack.c.b16 %v2897, %v2897
        %v2914 = vpack.c.b16 %v2898, %v2898
        %v2915 = vpack.c.b16 %v2899, %v2899
        %v2916 = vpack.c.b16 %v2900, %v2900
        %v2918 = vshrl.u32 %v2821, 16
        %v2920 = vshll.u32 %v2821, 16
        %v2922 = vrot.slane %v2920, 1
        %v2923 = vor.u32 %v2918, %v2922
        %v2925 = vshll.u32 %v2901, 16
        %v2927 = vrot.slane %v2925, 1
        %v2928 = vsel %vm1923, %v2923, %v2927
        %v2930 = vshrl.u32 %v2822, 16
        %v2932 = vshll.u32 %v2822, 16
        %v2934 = vrot.slane %v2932, 1
        %v2935 = vor.u32 %v2930, %v2934
        %v2937 = vshll.u32 %v2902, 16
        %v2939 = vrot.slane %v2937, 1
        %v2940 = vsel %vm1923, %v2935, %v2939
        %v2942 = vshrl.u32 %v2823, 16
        %v2944 = vshll.u32 %v2823, 16
        %v2946 = vrot.slane %v2944, 1
        %v2947 = vor.u32 %v2942, %v2946
        %v2949 = vshll.u32 %v2903, 16
        %v2951 = vrot.slane %v2949, 1
        %v2952 = vsel %vm1923, %v2947, %v2951
        %v2954 = vshrl.u32 %v2824, 16
        %v2956 = vshll.u32 %v2824, 16
        %v2958 = vrot.slane %v2956, 1
        %v2959 = vor.u32 %v2954, %v2958
        %v2961 = vshll.u32 %v2904, 16
        %v2963 = vrot.slane %v2961, 1
        %v2964 = vsel %vm1923, %v2959, %v2963
        %v2966 = vshrl.u32 %v2825, 16
        %v2968 = vshll.u32 %v2825, 16
        %v2970 = vrot.slane %v2968, 1
        %v2971 = vor.u32 %v2966, %v2970
        %v2973 = vshll.u32 %v2905, 16
        %v2975 = vrot.slane %v2973, 1
        %v2976 = vsel %vm1923, %v2971, %v2975
        %v2978 = vshrl.u32 %v2826, 16
        %v2980 = vshll.u32 %v2826, 16
        %v2982 = vrot.slane %v2980, 1
        %v2983 = vor.u32 %v2978, %v2982
        %v2985 = vshll.u32 %v2906, 16
        %v2987 = vrot.slane %v2985, 1
        %v2988 = vsel %vm1923, %v2983, %v2987
        %v2990 = vshrl.u32 %v2827, 16
        %v2992 = vshll.u32 %v2827, 16
        %v2994 = vrot.slane %v2992, 1
        %v2995 = vor.u32 %v2990, %v2994
        %v2997 = vshll.u32 %v2907, 16
        %v2999 = vrot.slane %v2997, 1
        %v3000 = vsel %vm1923, %v2995, %v2999
        %v3002 = vshrl.u32 %v2828, 16
        %v3004 = vshll.u32 %v2828, 16
        %v3006 = vrot.slane %v3004, 1
        %v3007 = vor.u32 %v3002, %v3006
        %v3009 = vshll.u32 %v2908, 16
        %v3011 = vrot.slane %v3009, 1
        %v3012 = vsel %vm1923, %v3007, %v3011
        %v3014 = vshrl.u32 %v2829, 16
        %v3016 = vshll.u32 %v2829, 16
        %v3018 = vrot.slane %v3016, 1
        %v3019 = vor.u32 %v3014, %v3018
        %v3021 = vshll.u32 %v2909, 16
        %v3023 = vrot.slane %v3021, 1
        %v3024 = vsel %vm1923, %v3019, %v3023
        %v3026 = vshrl.u32 %v2830, 16
        %v3028 = vshll.u32 %v2830, 16
        %v3030 = vrot.slane %v3028, 1
        %v3031 = vor.u32 %v3026, %v3030
        %v3033 = vshll.u32 %v2910, 16
        %v3035 = vrot.slane %v3033, 1
        %v3036 = vsel %vm1923, %v3031, %v3035
        %v3038 = vshrl.u32 %v2831, 16
        %v3040 = vshll.u32 %v2831, 16
        %v3042 = vrot.slane %v3040, 1
        %v3043 = vor.u32 %v3038, %v3042
        %v3045 = vshll.u32 %v2911, 16
        %v3047 = vrot.slane %v3045, 1
        %v3048 = vsel %vm1923, %v3043, %v3047
        %v3050 = vshrl.u32 %v2832, 16
        %v3052 = vshll.u32 %v2832, 16
        %v3054 = vrot.slane %v3052, 1
        %v3055 = vor.u32 %v3050, %v3054
        %v3057 = vshll.u32 %v2912, 16
        %v3059 = vrot.slane %v3057, 1
        %v3060 = vsel %vm1923, %v3055, %v3059
        %v3062 = vshrl.u32 %v2833, 16
        %v3064 = vshll.u32 %v2833, 16
        %v3066 = vrot.slane %v3064, 1
        %v3067 = vor.u32 %v3062, %v3066
        %v3069 = vshll.u32 %v2913, 16
        %v3071 = vrot.slane %v3069, 1
        %v3072 = vsel %vm1923, %v3067, %v3071
        %v3074 = vshrl.u32 %v2834, 16
        %v3076 = vshll.u32 %v2834, 16
        %v3078 = vrot.slane %v3076, 1
        %v3079 = vor.u32 %v3074, %v3078
        %v3081 = vshll.u32 %v2914, 16
        %v3083 = vrot.slane %v3081, 1
        %v3084 = vsel %vm1923, %v3079, %v3083
        %v3086 = vshrl.u32 %v2835, 16
        %v3088 = vshll.u32 %v2835, 16
        %v3090 = vrot.slane %v3088, 1
        %v3091 = vor.u32 %v3086, %v3090
        %v3093 = vshll.u32 %v2915, 16
        %v3095 = vrot.slane %v3093, 1
        %v3096 = vsel %vm1923, %v3091, %v3095
        %v3098 = vshrl.u32 %v2836, 16
        %v3100 = vshll.u32 %v2836, 16
        %v3102 = vrot.slane %v3100, 1
        %v3103 = vor.u32 %v3098, %v3102
        %v3105 = vshll.u32 %v2916, 16
        %v3107 = vrot.slane %v3105, 1
        %v3108 = vsel %vm1923, %v3103, %v3107
        %3109 = vrot.lane.b32.xlu0 %v2928, 96
        %v3110 = vpop.permute.xlu0 %3109
        %3111 = vrot.lane.b32.xlu0 %v2940, 96
        %v3112 = vpop.permute.xlu0 %3111
        %3113 = vrot.lane.b32.xlu0 %v2952, 96
        %v3114 = vpop.permute.xlu0 %3113
        %3115 = vrot.lane.b32.xlu0 %v2964, 96
        %v3116 = vpop.permute.xlu0 %3115
        %3117 = vrot.lane.b32.xlu0 %v2976, 96
        %v3118 = vpop.permute.xlu0 %3117
        %3119 = vrot.lane.b32.xlu0 %v2988, 96
        %v3120 = vpop.permute.xlu0 %3119
        %3121 = vrot.lane.b32.xlu0 %v3000, 96
        %v3122 = vpop.permute.xlu0 %3121
        %3123 = vrot.lane.b32.xlu0 %v3012, 96
        %v3124 = vpop.permute.xlu0 %3123
        %3125 = vrot.lane.b32.xlu0 %v3024, 96
        %v3126 = vpop.permute.xlu0 %3125
        %3127 = vrot.lane.b32.xlu0 %v3036, 96
        %v3128 = vpop.permute.xlu0 %3127
        %3129 = vrot.lane.b32.xlu0 %v3048, 96
        %v3130 = vpop.permute.xlu0 %3129
        %3131 = vrot.lane.b32.xlu0 %v3060, 96
        %v3132 = vpop.permute.xlu0 %3131
        %3133 = vrot.lane.b32.xlu0 %v3072, 96
        %v3134 = vpop.permute.xlu0 %3133
        %3135 = vrot.lane.b32.xlu0 %v3084, 96
        %v3136 = vpop.permute.xlu0 %3135
        %3137 = vrot.lane.b32.xlu0 %v3096, 96
        %v3138 = vpop.permute.xlu0 %3137
        %3139 = vrot.lane.b32.xlu0 %v3108, 96
        %v3140 = vpop.permute.xlu0 %3139
        %v3157 = vunpack.c.l.b16 %v1779
        %v3158 = vunpack.c.l.b16 %v1780
        %v3159 = vunpack.c.l.b16 %v1781
        %v3160 = vunpack.c.l.b16 %v1782
        %v3161 = vunpack.c.l.b16 %v1783
        %v3162 = vunpack.c.l.b16 %v1784
        %v3163 = vunpack.c.l.b16 %v1785
        %v3164 = vunpack.c.l.b16 %v1786
        %v3165 = vunpack.c.l.b16 %v1787
        %v3166 = vunpack.c.l.b16 %v1788
        %v3167 = vunpack.c.l.b16 %v1789
        %v3168 = vunpack.c.l.b16 %v1790
        %v3169 = vunpack.c.l.b16 %v1791
        %v3170 = vunpack.c.l.b16 %v1792
        %v3171 = vunpack.c.l.b16 %v1793
        %v3172 = vunpack.c.l.b16 %v1794
        %v3173 = vpack.c.b16 %v2790, %v3157
        %v3174 = vpack.c.b16 %v2792, %v3158
        %v3175 = vpack.c.b16 %v2794, %v3159
        %v3176 = vpack.c.b16 %v2796, %v3160
        %v3177 = vpack.c.b16 %v2798, %v3161
        %v3178 = vpack.c.b16 %v2800, %v3162
        %v3179 = vpack.c.b16 %v2802, %v3163
        %v3180 = vpack.c.b16 %v2804, %v3164
        %v3181 = vpack.c.b16 %v2806, %v3165
        %v3182 = vpack.c.b16 %v2808, %v3166
        %v3183 = vpack.c.b16 %v2810, %v3167
        %v3184 = vpack.c.b16 %v2812, %v3168
        %v3185 = vpack.c.b16 %v2814, %v3169
        %v3186 = vpack.c.b16 %v2816, %v3170
        %v3187 = vpack.c.b16 %v2818, %v3171
        %v3188 = vpack.c.b16 %v2820, %v3172
        %v3189 = vrot.slane %v3173, 1
        %v3190 = vrot.slane %v2901, 1
        %v3191 = vsel %vm2196, %v3189, %v3190
        %v3192 = vrot.slane %v3174, 1
        %v3193 = vrot.slane %v2902, 1
        %v3194 = vsel %vm2196, %v3192, %v3193
        %v3195 = vrot.slane %v3175, 1
        %v3196 = vrot.slane %v2903, 1
        %v3197 = vsel %vm2196, %v3195, %v3196
        %v3198 = vrot.slane %v3176, 1
        %v3199 = vrot.slane %v2904, 1
        %v3200 = vsel %vm2196, %v3198, %v3199
        %v3201 = vrot.slane %v3177, 1
        %v3202 = vrot.slane %v2905, 1
        %v3203 = vsel %vm2196, %v3201, %v3202
        %v3204 = vrot.slane %v3178, 1
        %v3205 = vrot.slane %v2906, 1
        %v3206 = vsel %vm2196, %v3204, %v3205
        %v3207 = vrot.slane %v3179, 1
        %v3208 = vrot.slane %v2907, 1
        %v3209 = vsel %vm2196, %v3207, %v3208
        %v3210 = vrot.slane %v3180, 1
        %v3211 = vrot.slane %v2908, 1
        %v3212 = vsel %vm2196, %v3210, %v3211
        %v3213 = vrot.slane %v3181, 1
        %v3214 = vrot.slane %v2909, 1
        %v3215 = vsel %vm2196, %v3213, %v3214
        %v3216 = vrot.slane %v3182, 1
        %v3217 = vrot.slane %v2910, 1
        %v3218 = vsel %vm2196, %v3216, %v3217
        %v3219 = vrot.slane %v3183, 1
        %v3220 = vrot.slane %v2911, 1
        %v3221 = vsel %vm2196, %v3219, %v3220
        %v3222 = vrot.slane %v3184, 1
        %v3223 = vrot.slane %v2912, 1
        %v3224 = vsel %vm2196, %v3222, %v3223
        %v3225 = vrot.slane %v3185, 1
        %v3226 = vrot.slane %v2913, 1
        %v3227 = vsel %vm2196, %v3225, %v3226
        %v3228 = vrot.slane %v3186, 1
        %v3229 = vrot.slane %v2914, 1
        %v3230 = vsel %vm2196, %v3228, %v3229
        %v3231 = vrot.slane %v3187, 1
        %v3232 = vrot.slane %v2915, 1
        %v3233 = vsel %vm2196, %v3231, %v3232
        %v3234 = vrot.slane %v3188, 1
        %v3235 = vrot.slane %v2916, 1
        %v3236 = vsel %vm2196, %v3234, %v3235
        %vm3237 = vcmask 261120
        %v3239 = vsel %vm3237, %v1859, %v2117
        %v3241 = vsel %vm3237, %v1860, %v2119
        %v3243 = vsel %vm3237, %v1861, %v2121
        %v3245 = vsel %vm3237, %v1862, %v2123
        %v3247 = vsel %vm3237, %v1863, %v2125
        %v3249 = vsel %vm3237, %v1864, %v2127
        %v3251 = vsel %vm3237, %v1865, %v2129
        %v3253 = vsel %vm3237, %v1866, %v2131
        %v3255 = vsel %vm3237, %v1867, %v2133
        %v3257 = vsel %vm3237, %v1868, %v2135
        %v3259 = vsel %vm3237, %v1869, %v2137
        %v3261 = vsel %vm3237, %v1870, %v2139
        %v3263 = vsel %vm3237, %v1871, %v2141
        %v3265 = vsel %vm3237, %v1872, %v2143
        %v3267 = vsel %vm3237, %v1873, %v2145
        %v3269 = vsel %vm3237, %v1874, %v2147
        %vm3270 = vcmask 523264
        %v3272 = vsel %vm3270, %v3239, %v2246
        %v3274 = vsel %vm3270, %v3241, %v2248
        %v3276 = vsel %vm3270, %v3243, %v2250
        %v3278 = vsel %vm3270, %v3245, %v2252
        %v3280 = vsel %vm3270, %v3247, %v2254
        %v3282 = vsel %vm3270, %v3249, %v2256
        %v3284 = vsel %vm3270, %v3251, %v2258
        %v3286 = vsel %vm3270, %v3253, %v2260
        %v3288 = vsel %vm3270, %v3255, %v2262
        %v3290 = vsel %vm3270, %v3257, %v2264
        %v3292 = vsel %vm3270, %v3259, %v2266
        %v3294 = vsel %vm3270, %v3261, %v2268
        %v3296 = vsel %vm3270, %v3263, %v2270
        %v3298 = vsel %vm3270, %v3265, %v2272
        %v3300 = vsel %vm3270, %v3267, %v2274
        %v3302 = vsel %vm3270, %v3269, %v2276
        %vm3303 = vcmask 785408
        %v3305 = vsel %vm3303, %v3272, %v2358
        %v3308 = vsel %vm3303, %v3274, %v2360
        %v3311 = vsel %vm3303, %v3276, %v2362
        %v3314 = vsel %vm3303, %v3278, %v2364
        %v3317 = vsel %vm3303, %v3280, %v2366
        %v3320 = vsel %vm3303, %v3282, %v2368
        %v3323 = vsel %vm3303, %v3284, %v2370
        %v3326 = vsel %vm3303, %v3286, %v2372
        %v3329 = vsel %vm3303, %v3288, %v2374
        %v3332 = vsel %vm3303, %v3290, %v2376
        %v3335 = vsel %vm3303, %v3292, %v2378
        %v3338 = vsel %vm3303, %v3294, %v2380
        %v3341 = vsel %vm3303, %v3296, %v2382
        %v3344 = vsel %vm3303, %v3298, %v2384
        %v3347 = vsel %vm3303, %v3300, %v2386
        %v3350 = vsel %vm3303, %v3302, %v2388
        %v3354 = vsel %vm3237, %v2448, %v2726
        %v3357 = vsel %vm3237, %v2460, %v2728
        %v3360 = vsel %vm3237, %v2472, %v2730
        %v3363 = vsel %vm3237, %v2484, %v2732
        %v3366 = vsel %vm3237, %v2496, %v2734
        %v3369 = vsel %vm3237, %v2508, %v2736
        %v3372 = vsel %vm3237, %v2520, %v2738
        %v3375 = vsel %vm3237, %v2532, %v2740
        %v3378 = vsel %vm3237, %v2544, %v2742
        %v3381 = vsel %vm3237, %v2556, %v2744
        %v3384 = vsel %vm3237, %v2568, %v2746
        %v3387 = vsel %vm3237, %v2580, %v2748
        %v3390 = vsel %vm3237, %v2592, %v2750
        %v3393 = vsel %vm3237, %v2604, %v2752
        %v3396 = vsel %vm3237, %v2616, %v2754
        %v3399 = vsel %vm3237, %v2628, %v2756
        %v3401 = vsel %vm3270, %v3354, %v2838
        %v3403 = vsel %vm3270, %v3357, %v2840
        %v3405 = vsel %vm3270, %v3360, %v2842
        %v3407 = vsel %vm3270, %v3363, %v2844
        %v3409 = vsel %vm3270, %v3366, %v2846
        %v3411 = vsel %vm3270, %v3369, %v2848
        %v3413 = vsel %vm3270, %v3372, %v2850
        %v3415 = vsel %vm3270, %v3375, %v2852
        %v3417 = vsel %vm3270, %v3378, %v2854
        %v3419 = vsel %vm3270, %v3381, %v2856
        %v3421 = vsel %vm3270, %v3384, %v2858
        %v3423 = vsel %vm3270, %v3387, %v2860
        %v3425 = vsel %vm3270, %v3390, %v2862
        %v3427 = vsel %vm3270, %v3393, %v2864
        %v3429 = vsel %vm3270, %v3396, %v2866
        %v3431 = vsel %vm3270, %v3399, %v2868
        %v3433 = vsel %vm3303, %v3401, %v3110
        %v3436 = vsel %vm3303, %v3403, %v3112
        %v3439 = vsel %vm3303, %v3405, %v3114
        %v3442 = vsel %vm3303, %v3407, %v3116
        %v3445 = vsel %vm3303, %v3409, %v3118
        %v3448 = vsel %vm3303, %v3411, %v3120
        %v3451 = vsel %vm3303, %v3413, %v3122
        %v3454 = vsel %vm3303, %v3415, %v3124
        %v3457 = vsel %vm3303, %v3417, %v3126
        %v3460 = vsel %vm3303, %v3419, %v3128
        %v3463 = vsel %vm3303, %v3421, %v3130
        %v3466 = vsel %vm3303, %v3423, %v3132
        %v3469 = vsel %vm3303, %v3425, %v3134
        %v3472 = vsel %vm3303, %v3427, %v3136
        %v3475 = vsel %vm3303, %v3429, %v3138
        %v3478 = vsel %vm3303, %v3431, %v3140
        %v3480 = vld [vmem:[%s3] sm:$0xf]
        %v3481 = vld [vmem:[%s3 + $0x4] sm:$0xf]
        %v3482 = vld [vmem:[%s3 + $0x8] sm:$0xf]
        %v3483 = vld [vmem:[%s3 + $0xc] sm:$0xf]
        %v3484 = vld [vmem:[%s3 + $0x10] sm:$0xf]
        %v3485 = vld [vmem:[%s3 + $0x14] sm:$0xf]
        %v3486 = vld [vmem:[%s3 + $0x18] sm:$0xf]
        %v3487 = vld [vmem:[%s3 + $0x1c] sm:$0xf]
        %v3488 = vld [vmem:[%s3 + $0x20] sm:$0xf]
        %v3489 = vld [vmem:[%s3 + $0x24] sm:$0xf]
        %v3490 = vld [vmem:[%s3 + $0x28] sm:$0xf]
        %v3491 = vld [vmem:[%s3 + $0x2c] sm:$0xf]
        %v3492 = vld [vmem:[%s3 + $0x30] sm:$0xf]
        %v3493 = vld [vmem:[%s3 + $0x34] sm:$0xf]
        %v3494 = vld [vmem:[%s3 + $0x38] sm:$0xf]
        %v3495 = vld [vmem:[%s3 + $0x3c] sm:$0xf]
        %v3496 = vld [vmem:[%s3 + $0x40] sm:$0xf]
        %v3497 = vld [vmem:[%s3 + $0x44] sm:$0xf]
        %v3498 = vld [vmem:[%s3 + $0x48] sm:$0xf]
        %v3499 = vld [vmem:[%s3 + $0x4c] sm:$0xf]
        %v3500 = vld [vmem:[%s3 + $0x50] sm:$0xf]
        %v3501 = vld [vmem:[%s3 + $0x54] sm:$0xf]
        %v3502 = vld [vmem:[%s3 + $0x58] sm:$0xf]
        %v3503 = vld [vmem:[%s3 + $0x5c] sm:$0xf]
        %v3504 = vld [vmem:[%s3 + $0x60] sm:$0xf]
        %v3505 = vld [vmem:[%s3 + $0x64] sm:$0xf]
        %v3506 = vld [vmem:[%s3 + $0x68] sm:$0xf]
        %v3507 = vld [vmem:[%s3 + $0x6c] sm:$0xf]
        %v3508 = vld [vmem:[%s3 + $0x70] sm:$0xf]
        %v3509 = vld [vmem:[%s3 + $0x74] sm:$0xf]
        %v3510 = vld [vmem:[%s3 + $0x78] sm:$0xf]
        %v3511 = vld [vmem:[%s3 + $0x7c] sm:$0xf]
        %v3512 = vld [vmem:[%s3 + $0x80] sm:$0xf]
        %v3513 = vld [vmem:[%s3 + $0x84] sm:$0xf]
        %v3514 = vld [vmem:[%s3 + $0x88] sm:$0xf]
        %v3515 = vld [vmem:[%s3 + $0x8c] sm:$0xf]
        %v3516 = vld [vmem:[%s4] sm:$0x1]
        %v3518 = vlaneseq
        %v3519 = vshrl.u32 %v3518, 7
        %v3520 = vsub.s32 0, %v3519
        %v3521 = vrot.slane %v3516, %v3520
        %v3559 = vunpack.c.l.b16 %v3480
        %v3560 = vunpack.c.l.b16 %v3481
        %v3561 = vunpack.c.l.b16 %v3482
        %v3562 = vunpack.c.l.b16 %v3483
        %v3563 = vunpack.c.l.b16 %v3484
        %v3564 = vunpack.c.l.b16 %v3485
        %v3565 = vunpack.c.l.b16 %v3486
        %v3566 = vunpack.c.l.b16 %v3487
        %v3567 = vunpack.c.l.b16 %v3488
        %v3568 = vunpack.c.l.b16 %v3489
        %v3569 = vunpack.c.l.b16 %v3490
        %v3570 = vunpack.c.l.b16 %v3491
        %v3571 = vunpack.c.l.b16 %v3492
        %v3572 = vunpack.c.l.b16 %v3493
        %v3573 = vunpack.c.l.b16 %v3494
        %v3574 = vunpack.c.l.b16 %v3495
        %v3575 = vunpack.c.l.b16 %v3496
        %v3576 = vunpack.c.l.b16 %v3497
        %v3577 = vunpack.c.l.b16 %v3498
        %v3578 = vunpack.c.l.b16 %v3499
        %v3579 = vunpack.c.l.b16 %v3500
        %v3580 = vunpack.c.l.b16 %v3501
        %v3581 = vunpack.c.l.b16 %v3502
        %v3582 = vunpack.c.l.b16 %v3503
        %v3583 = vunpack.c.l.b16 %v3504
        %v3584 = vunpack.c.l.b16 %v3505
        %v3585 = vunpack.c.l.b16 %v3506
        %v3586 = vunpack.c.l.b16 %v3507
        %v3587 = vunpack.c.l.b16 %v3508
        %v3588 = vunpack.c.l.b16 %v3509
        %v3589 = vunpack.c.l.b16 %v3510
        %v3590 = vunpack.c.l.b16 %v3511
        %v3591 = vunpack.c.l.b16 %v3512
        %v3592 = vunpack.c.l.b16 %v3513
        %v3593 = vunpack.c.l.b16 %v3514
        %v3594 = vunpack.c.l.b16 %v3515
        %v3595 = vpack.c.b16 %v3560, %v3559
        %v3596 = vpack.c.b16 %v3562, %v3561
        %v3597 = vpack.c.b16 %v3564, %v3563
        %v3598 = vpack.c.b16 %v3566, %v3565
        %v3599 = vpack.c.b16 %v3568, %v3567
        %v3600 = vpack.c.b16 %v3570, %v3569
        %v3601 = vpack.c.b16 %v3572, %v3571
        %v3602 = vpack.c.b16 %v3574, %v3573
        %v3603 = vpack.c.b16 %v3576, %v3575
        %v3604 = vpack.c.b16 %v3578, %v3577
        %v3605 = vpack.c.b16 %v3580, %v3579
        %v3606 = vpack.c.b16 %v3582, %v3581
        %v3607 = vpack.c.b16 %v3584, %v3583
        %v3608 = vpack.c.b16 %v3586, %v3585
        %v3609 = vpack.c.b16 %v3588, %v3587
        %v3610 = vpack.c.b16 %v3590, %v3589
        %v3611 = vpack.c.b16 %v3592, %v3591
        %v3612 = vpack.c.b16 %v3594, %v3593
        %v3632 = vsel %vm3237, %v3191, 0
        %v3635 = vsel %vm3237, %v3194, 0
        %v3638 = vsel %vm3237, %v3197, 0
        %v3641 = vsel %vm3237, %v3200, 0
        %v3644 = vsel %vm3237, %v3203, 0
        %v3647 = vsel %vm3237, %v3206, 0
        %v3650 = vsel %vm3237, %v3209, 0
        %v3653 = vsel %vm3237, %v3212, 0
        %v3656 = vsel %vm3237, %v3215, 0
        %v3659 = vsel %vm3237, %v3218, 0
        %v3662 = vsel %vm3237, %v3221, 0
        %v3665 = vsel %vm3237, %v3224, 0
        %v3668 = vsel %vm3237, %v3227, 0
        %v3671 = vsel %vm3237, %v3230, 0
        %v3674 = vsel %vm3237, %v3233, 0
        %v3677 = vsel %vm3237, %v3236, 0
        %3679 = vmatprep.subr.bf16.mxu0 0
        %3680 = vmatpush1.bf16.msra.mxu0 %v3602
        %3681 = vmatprep.subr.bf16.mxu0 0
        %3682 = vmatpush1.bf16.msra.mxu0 %v3601
        %3683 = vmatprep.subr.bf16.mxu0 0
        %3684 = vmatpush1.bf16.msra.mxu0 %v3600
        %3685 = vmatprep.subr.bf16.mxu0 0
        %3686 = vmatpush1.bf16.msra.mxu0 %v3599
        %3687 = vmatprep.subr.bf16.mxu0 0
        %3688 = vmatpush1.bf16.msra.mxu0 %v3598
        %3689 = vmatprep.subr.bf16.mxu0 0
        %3690 = vmatpush1.bf16.msra.mxu0 %v3597
        %3691 = vmatprep.subr.bf16.mxu0 0
        %3692 = vmatpush1.bf16.msra.mxu0 %v3596
        %3693 = vmatprep.subr.bf16.mxu0 0
        %3694 = vmatpush1.bf16.msra.mxu0 %v3595
        %3695 = vmatprep.subr.bf16.mxu0 0
        %3696 = vmatpush2.bf16.msra.mxu0 %v3610
        %3697 = vmatprep.subr.bf16.mxu0 0
        %3698 = vmatpush2.bf16.msra.mxu0 %v3609
        %3699 = vmatprep.subr.bf16.mxu0 0
        %3700 = vmatpush2.bf16.msra.mxu0 %v3608
        %3701 = vmatprep.subr.bf16.mxu0 0
        %3702 = vmatpush2.bf16.msra.mxu0 %v3607
        %3703 = vmatprep.subr.bf16.mxu0 0
        %3704 = vmatpush2.bf16.msra.mxu0 %v3606
        %3705 = vmatprep.subr.bf16.mxu0 0
        %3706 = vmatpush2.bf16.msra.mxu0 %v3605
        %3707 = vmatprep.subr.bf16.mxu0 0
        %3708 = vmatpush2.bf16.msra.mxu0 %v3604
        %3709 = vmatprep.subr.bf16.mxu0 0
        %3710 = vmatpush2.bf16.msra.mxu0 %v3603
        %3711 = vmatprep.mubr.bf16.mxu0 %v3433
        %3712 = vmatmul.mubr.bf16.gmra.mxu0 %v3305
        %v3713 = vpop.f32.mrf.mxu0
        %v3714 = vadd.f32 %v3521, %v3713
        %v3715 = vpop.f32.mrf.mxu0
        %v3716 = vpop.f32.mrf.mxu0
        %v3717 = vadd.f32 %v3521, %v3716
        %v3718 = vpop.f32.mrf.mxu0
        %3719 = vmatprep.mubr.bf16.mxu0 %v3436
        %3720 = vmatmul.mubr.bf16.gmra.mxu0 %v3308
        %v3721 = vpop.f32.mrf.mxu0
        %v3722 = vadd.f32 %v3521, %v3721
        %v3723 = vpop.f32.mrf.mxu0
        %v3724 = vpop.f32.mrf.mxu0
        %v3725 = vadd.f32 %v3521, %v3724
        %v3726 = vpop.f32.mrf.mxu0
        %3727 = vmatprep.mubr.bf16.mxu0 %v3439
        %3728 = vmatmul.mubr.bf16.gmra.mxu0 %v3311
        %v3729 = vpop.f32.mrf.mxu0
        %v3730 = vadd.f32 %v3521, %v3729
        %v3731 = vpop.f32.mrf.mxu0
        %v3732 = vpop.f32.mrf.mxu0
        %v3733 = vadd.f32 %v3521, %v3732
        %v3734 = vpop.f32.mrf.mxu0
        %3735 = vmatprep.mubr.bf16.mxu0 %v3442
        %3736 = vmatmul.mubr.bf16.gmra.mxu0 %v3314
        %v3737 = vpop.f32.mrf.mxu0
        %v3738 = vadd.f32 %v3521, %v3737
        %v3739 = vpop.f32.mrf.mxu0
        %v3740 = vpop.f32.mrf.mxu0
        %v3741 = vadd.f32 %v3521, %v3740
        %v3742 = vpop.f32.mrf.mxu0
        %3743 = vmatprep.mubr.bf16.mxu0 %v3445
        %3744 = vmatmul.mubr.bf16.gmra.mxu0 %v3317
        %v3745 = vpop.f32.mrf.mxu0
        %v3746 = vadd.f32 %v3521, %v3745
        %v3747 = vpop.f32.mrf.mxu0
        %v3748 = vpop.f32.mrf.mxu0
        %v3749 = vadd.f32 %v3521, %v3748
        %v3750 = vpop.f32.mrf.mxu0
        %3751 = vmatprep.mubr.bf16.mxu0 %v3448
        %3752 = vmatmul.mubr.bf16.gmra.mxu0 %v3320
        %v3753 = vpop.f32.mrf.mxu0
        %v3754 = vadd.f32 %v3521, %v3753
        %v3755 = vpop.f32.mrf.mxu0
        %v3756 = vpop.f32.mrf.mxu0
        %v3757 = vadd.f32 %v3521, %v3756
        %v3758 = vpop.f32.mrf.mxu0
        %3759 = vmatprep.mubr.bf16.mxu0 %v3451
        %3760 = vmatmul.mubr.bf16.gmra.mxu0 %v3323
        %v3761 = vpop.f32.mrf.mxu0
        %v3762 = vadd.f32 %v3521, %v3761
        %v3763 = vpop.f32.mrf.mxu0
        %v3764 = vpop.f32.mrf.mxu0
        %v3765 = vadd.f32 %v3521, %v3764
        %v3766 = vpop.f32.mrf.mxu0
        %3767 = vmatprep.mubr.bf16.mxu0 %v3454
        %3768 = vmatmul.mubr.bf16.gmra.mxu0 %v3326
        %v3769 = vpop.f32.mrf.mxu0
        %v3770 = vadd.f32 %v3521, %v3769
        %v3771 = vpop.f32.mrf.mxu0
        %v3772 = vpop.f32.mrf.mxu0
        %v3773 = vadd.f32 %v3521, %v3772
        %v3774 = vpop.f32.mrf.mxu0
        %3775 = vmatprep.mubr.bf16.mxu0 %v3457
        %3776 = vmatmul.mubr.bf16.gmra.mxu0 %v3329
        %v3777 = vpop.f32.mrf.mxu0
        %v3778 = vadd.f32 %v3521, %v3777
        %v3779 = vpop.f32.mrf.mxu0
        %v3780 = vpop.f32.mrf.mxu0
        %v3781 = vadd.f32 %v3521, %v3780
        %v3782 = vpop.f32.mrf.mxu0
        %3783 = vmatprep.mubr.bf16.mxu0 %v3460
        %3784 = vmatmul.mubr.bf16.gmra.mxu0 %v3332
        %v3785 = vpop.f32.mrf.mxu0
        %v3786 = vadd.f32 %v3521, %v3785
        %v3787 = vpop.f32.mrf.mxu0
        %v3788 = vpop.f32.mrf.mxu0
        %v3789 = vadd.f32 %v3521, %v3788
        %v3790 = vpop.f32.mrf.mxu0
        %3791 = vmatprep.mubr.bf16.mxu0 %v3463
        %3792 = vmatmul.mubr.bf16.gmra.mxu0 %v3335
        %v3793 = vpop.f32.mrf.mxu0
        %v3794 = vadd.f32 %v3521, %v3793
        %v3795 = vpop.f32.mrf.mxu0
        %v3796 = vpop.f32.mrf.mxu0
        %v3797 = vadd.f32 %v3521, %v3796
        %v3798 = vpop.f32.mrf.mxu0
        %3799 = vmatprep.mubr.bf16.mxu0 %v3466
        %3800 = vmatmul.mubr.bf16.gmra.mxu0 %v3338
        %v3801 = vpop.f32.mrf.mxu0
        %v3802 = vadd.f32 %v3521, %v3801
        %v3803 = vpop.f32.mrf.mxu0
        %v3804 = vpop.f32.mrf.mxu0
        %v3805 = vadd.f32 %v3521, %v3804
        %v3806 = vpop.f32.mrf.mxu0
        %3807 = vmatprep.mubr.bf16.mxu0 %v3469
        %3808 = vmatmul.mubr.bf16.gmra.mxu0 %v3341
        %v3809 = vpop.f32.mrf.mxu0
        %v3810 = vadd.f32 %v3521, %v3809
        %v3811 = vpop.f32.mrf.mxu0
        %v3812 = vpop.f32.mrf.mxu0
        %v3813 = vadd.f32 %v3521, %v3812
        %v3814 = vpop.f32.mrf.mxu0
        %3815 = vmatprep.mubr.bf16.mxu0 %v3472
        %3816 = vmatmul.mubr.bf16.gmra.mxu0 %v3344
        %v3817 = vpop.f32.mrf.mxu0
        %v3818 = vadd.f32 %v3521, %v3817
        %v3819 = vpop.f32.mrf.mxu0
        %v3820 = vpop.f32.mrf.mxu0
        %v3821 = vadd.f32 %v3521, %v3820
        %v3822 = vpop.f32.mrf.mxu0
        %3823 = vmatprep.mubr.bf16.mxu0 %v3475
        %3824 = vmatmul.mubr.bf16.gmra.mxu0 %v3347
        %v3825 = vpop.f32.mrf.mxu0
        %v3826 = vadd.f32 %v3521, %v3825
        %v3827 = vpop.f32.mrf.mxu0
        %v3828 = vpop.f32.mrf.mxu0
        %v3829 = vadd.f32 %v3521, %v3828
        %v3830 = vpop.f32.mrf.mxu0
        %3831 = vmatprep.mubr.bf16.mxu0 %v3478
        %3832 = vmatmul.mubr.bf16.gmra.mxu0 %v3350
        %v3833 = vpop.f32.mrf.mxu0
        %v3834 = vadd.f32 %v3521, %v3833
        %v3835 = vpop.f32.mrf.mxu0
        %v3836 = vpop.f32.mrf.mxu0
        %v3837 = vadd.f32 %v3521, %v3836
        %v3838 = vpop.f32.mrf.mxu0
        %3839 = vdwg.mxu0
        %3840 = vmatprep.subr.bf16.mxu0 0
        %3841 = vmatpush1.bf16.msra.mxu0 0
        %3842 = vmatprep.subr.bf16.mxu0 0
        %3843 = vmatpush1.bf16.msra.mxu0 0
        %3844 = vmatprep.subr.bf16.mxu0 0
        %3845 = vmatpush1.bf16.msra.mxu0 0
        %3846 = vmatprep.subr.bf16.mxu0 0
        %3847 = vmatpush1.bf16.msra.mxu0 0
        %3848 = vmatprep.subr.bf16.mxu0 0
        %3849 = vmatpush1.bf16.msra.mxu0 0
        %3850 = vmatprep.subr.bf16.mxu0 0
        %3851 = vmatpush1.bf16.msra.mxu0 0
        %3852 = vmatprep.subr.bf16.mxu0 0
        %3853 = vmatpush1.bf16.msra.mxu0 %v3612
        %3854 = vmatprep.subr.bf16.mxu0 0
        %3855 = vmatpush1.bf16.msra.mxu0 %v3611
        %3856 = vmatprep.subr.bf16.mxu0 0
        %3857 = vmatpush2.bf16.msra.mxu0 0
        %3858 = vmatprep.subr.bf16.mxu0 0
        %3859 = vmatpush2.bf16.msra.mxu0 0
        %3860 = vmatprep.subr.bf16.mxu0 0
        %3861 = vmatpush2.bf16.msra.mxu0 0
        %3862 = vmatprep.subr.bf16.mxu0 0
        %3863 = vmatpush2.bf16.msra.mxu0 0
        %3864 = vmatprep.subr.bf16.mxu0 0
        %3865 = vmatpush2.bf16.msra.mxu0 0
        %3866 = vmatprep.subr.bf16.mxu0 0
        %3867 = vmatpush2.bf16.msra.mxu0 0
        %3868 = vmatprep.subr.bf16.mxu0 0
        %3869 = vmatpush2.bf16.msra.mxu0 0
        %3870 = vmatprep.subr.bf16.mxu0 0
        %3871 = vmatpush2.bf16.msra.mxu0 0
        %3872 = vmatprep.mubr.bf16.mxu0 0
        %3873 = vmatmul.mubr.bf16.gmra.mxu0 %v3632
        %v3874 = vpop.f32.mrf.mxu0
        %v3875 = vadd.f32 %v3714, %v3874
        %v3876 = vpop.f32.mrf.mxu0
        %v3877 = vpop.f32.mrf.mxu0
        %v3878 = vadd.f32 %v3717, %v3877
        %v3879 = vpop.f32.mrf.mxu0
        %3880 = vmatprep.mubr.bf16.mxu0 0
        %3881 = vmatmul.mubr.bf16.gmra.mxu0 %v3635
        %v3882 = vpop.f32.mrf.mxu0
        %v3883 = vadd.f32 %v3722, %v3882
        %v3884 = vpop.f32.mrf.mxu0
        %v3885 = vpop.f32.mrf.mxu0
        %v3886 = vadd.f32 %v3725, %v3885
        %v3887 = vpop.f32.mrf.mxu0
        %3888 = vmatprep.mubr.bf16.mxu0 0
        %3889 = vmatmul.mubr.bf16.gmra.mxu0 %v3638
        %v3890 = vpop.f32.mrf.mxu0
        %v3891 = vadd.f32 %v3730, %v3890
        %v3892 = vpop.f32.mrf.mxu0
        %v3893 = vpop.f32.mrf.mxu0
        %v3894 = vadd.f32 %v3733, %v3893
        %v3895 = vpop.f32.mrf.mxu0
        %3896 = vmatprep.mubr.bf16.mxu0 0
        %3897 = vmatmul.mubr.bf16.gmra.mxu0 %v3641
        %v3898 = vpop.f32.mrf.mxu0
        %v3899 = vadd.f32 %v3738, %v3898
        %v3900 = vpop.f32.mrf.mxu0
        %v3901 = vpop.f32.mrf.mxu0
        %v3902 = vadd.f32 %v3741, %v3901
        %v3903 = vpop.f32.mrf.mxu0
        %3904 = vmatprep.mubr.bf16.mxu0 0
        %3905 = vmatmul.mubr.bf16.gmra.mxu0 %v3644
        %v3906 = vpop.f32.mrf.mxu0
        %v3907 = vadd.f32 %v3746, %v3906
        %v3908 = vpop.f32.mrf.mxu0
        %v3909 = vpop.f32.mrf.mxu0
        %v3910 = vadd.f32 %v3749, %v3909
        %v3911 = vpop.f32.mrf.mxu0
        %3912 = vmatprep.mubr.bf16.mxu0 0
        %3913 = vmatmul.mubr.bf16.gmra.mxu0 %v3647
        %v3914 = vpop.f32.mrf.mxu0
        %v3915 = vadd.f32 %v3754, %v3914
        %v3916 = vpop.f32.mrf.mxu0
        %v3917 = vpop.f32.mrf.mxu0
        %v3918 = vadd.f32 %v3757, %v3917
        %v3919 = vpop.f32.mrf.mxu0
        %3920 = vmatprep.mubr.bf16.mxu0 0
        %3921 = vmatmul.mubr.bf16.gmra.mxu0 %v3650
        %v3922 = vpop.f32.mrf.mxu0
        %v3923 = vadd.f32 %v3762, %v3922
        %v3924 = vpop.f32.mrf.mxu0
        %v3925 = vpop.f32.mrf.mxu0
        %v3926 = vadd.f32 %v3765, %v3925
        %v3927 = vpop.f32.mrf.mxu0
        %3928 = vmatprep.mubr.bf16.mxu0 0
        %3929 = vmatmul.mubr.bf16.gmra.mxu0 %v3653
        %v3930 = vpop.f32.mrf.mxu0
        %v3931 = vadd.f32 %v3770, %v3930
        %v3932 = vpop.f32.mrf.mxu0
        %v3933 = vpop.f32.mrf.mxu0
        %v3934 = vadd.f32 %v3773, %v3933
        %v3935 = vpop.f32.mrf.mxu0
        %3936 = vmatprep.mubr.bf16.mxu0 0
        %3937 = vmatmul.mubr.bf16.gmra.mxu0 %v3656
        %v3938 = vpop.f32.mrf.mxu0
        %v3939 = vadd.f32 %v3778, %v3938
        %v3940 = vpop.f32.mrf.mxu0
        %v3941 = vpop.f32.mrf.mxu0
        %v3942 = vadd.f32 %v3781, %v3941
        %v3943 = vpop.f32.mrf.mxu0
        %3944 = vmatprep.mubr.bf16.mxu0 0
        %3945 = vmatmul.mubr.bf16.gmra.mxu0 %v3659
        %v3946 = vpop.f32.mrf.mxu0
        %v3947 = vadd.f32 %v3786, %v3946
        %v3948 = vpop.f32.mrf.mxu0
        %v3949 = vpop.f32.mrf.mxu0
        %v3950 = vadd.f32 %v3789, %v3949
        %v3951 = vpop.f32.mrf.mxu0
        %3952 = vmatprep.mubr.bf16.mxu0 0
        %3953 = vmatmul.mubr.bf16.gmra.mxu0 %v3662
        %v3954 = vpop.f32.mrf.mxu0
        %v3955 = vadd.f32 %v3794, %v3954
        %v3956 = vpop.f32.mrf.mxu0
        %v3957 = vpop.f32.mrf.mxu0
        %v3958 = vadd.f32 %v3797, %v3957
        %v3959 = vpop.f32.mrf.mxu0
        %3960 = vmatprep.mubr.bf16.mxu0 0
        %3961 = vmatmul.mubr.bf16.gmra.mxu0 %v3665
        %v3962 = vpop.f32.mrf.mxu0
        %v3963 = vadd.f32 %v3802, %v3962
        %v3964 = vpop.f32.mrf.mxu0
        %v3965 = vpop.f32.mrf.mxu0
        %v3966 = vadd.f32 %v3805, %v3965
        %v3967 = vpop.f32.mrf.mxu0
        %3968 = vmatprep.mubr.bf16.mxu0 0
        %3969 = vmatmul.mubr.bf16.gmra.mxu0 %v3668
        %v3970 = vpop.f32.mrf.mxu0
        %v3971 = vadd.f32 %v3810, %v3970
        %v3972 = vpop.f32.mrf.mxu0
        %v3973 = vpop.f32.mrf.mxu0
        %v3974 = vadd.f32 %v3813, %v3973
        %v3975 = vpop.f32.mrf.mxu0
        %3976 = vmatprep.mubr.bf16.mxu0 0
        %3977 = vmatmul.mubr.bf16.gmra.mxu0 %v3671
        %v3978 = vpop.f32.mrf.mxu0
        %v3979 = vadd.f32 %v3818, %v3978
        %v3980 = vpop.f32.mrf.mxu0
        %v3981 = vpop.f32.mrf.mxu0
        %v3982 = vadd.f32 %v3821, %v3981
        %v3983 = vpop.f32.mrf.mxu0
        %3984 = vmatprep.mubr.bf16.mxu0 0
        %3985 = vmatmul.mubr.bf16.gmra.mxu0 %v3674
        %v3986 = vpop.f32.mrf.mxu0
        %v3987 = vadd.f32 %v3826, %v3986
        %v3988 = vpop.f32.mrf.mxu0
        %v3989 = vpop.f32.mrf.mxu0
        %v3990 = vadd.f32 %v3829, %v3989
        %v3991 = vpop.f32.mrf.mxu0
        %3992 = vmatprep.mubr.bf16.mxu0 0
        %3993 = vmatmul.mubr.bf16.gmra.mxu0 %v3677
        %v3994 = vpop.f32.mrf.mxu0
        %v3995 = vadd.f32 %v3834, %v3994
        %v3996 = vpop.f32.mrf.mxu0
        %v3997 = vpop.f32.mrf.mxu0
        %v3998 = vadd.f32 %v3837, %v3997
        %v3999 = vpop.f32.mrf.mxu0
        %4000 = vdwg.mxu0
        %v4001 = vmax.f32 %v3875, 0.0
        %v4002 = vmax.f32 %v3878, 0.0
        %v4003 = vmax.f32 %v3883, 0.0
        %v4004 = vmax.f32 %v3886, 0.0
        %v4005 = vmax.f32 %v3891, 0.0
        %v4006 = vmax.f32 %v3894, 0.0
        %v4007 = vmax.f32 %v3899, 0.0
        %v4008 = vmax.f32 %v3902, 0.0
        %v4009 = vmax.f32 %v3907, 0.0
        %v4010 = vmax.f32 %v3910, 0.0
        %v4011 = vmax.f32 %v3915, 0.0
        %v4012 = vmax.f32 %v3918, 0.0
        %v4013 = vmax.f32 %v3923, 0.0
        %v4014 = vmax.f32 %v3926, 0.0
        %v4015 = vmax.f32 %v3931, 0.0
        %v4016 = vmax.f32 %v3934, 0.0
        %v4017 = vmax.f32 %v3939, 0.0
        %v4018 = vmax.f32 %v3942, 0.0
        %v4019 = vmax.f32 %v3947, 0.0
        %v4020 = vmax.f32 %v3950, 0.0
        %v4021 = vmax.f32 %v3955, 0.0
        %v4022 = vmax.f32 %v3958, 0.0
        %v4023 = vmax.f32 %v3963, 0.0
        %v4024 = vmax.f32 %v3966, 0.0
        %v4025 = vmax.f32 %v3971, 0.0
        %v4026 = vmax.f32 %v3974, 0.0
        %v4027 = vmax.f32 %v3979, 0.0
        %v4028 = vmax.f32 %v3982, 0.0
        %v4029 = vmax.f32 %v3987, 0.0
        %v4030 = vmax.f32 %v3990, 0.0
        %v4031 = vmax.f32 %v3995, 0.0
        %v4032 = vmax.f32 %v3998, 0.0
        %vm4033 = vcmask 519168
        %4034 = vst.msk [vmem:[#allocation3] sm:$0xf] %vm4033, 0
        %vm4035 = vcmask 516096
        %4036 = vst.msk [vmem:[#allocation3 + $0x4] sm:$0x1] %vm4035, 0
        %s4037 = scalar_lea.vmem [#allocation3], 72
        %4038 = vst.msk [vmem:[%s4037] sm:$0xf] %vm4033, 0
        %4039 = vst.msk [vmem:[%s4037 + $0x4] sm:$0x1] %vm4035, 0
        %vm4040 = vcmask 516096
        %vm4041 = vmand %vm4040, %vm973
        %v4042 = vld [vmem:[#allocation3] sm:$0x1]
        %v4043 = vsel %vm4041, 0, %v4042
        %4044 = vst [vmem:[#allocation3] sm:$0x1] %v4043
        %v4045 = vld [vmem:[#allocation3 + $0x8] sm:$0x1]
        %v4046 = vsel %vm4041, 0, %v4045
        %4047 = vst [vmem:[#allocation3 + $0x8] sm:$0x1] %v4046
        %v4048 = vld [vmem:[#allocation3 + $0x10] sm:$0x1]
        %v4049 = vsel %vm4041, 0, %v4048
        %4050 = vst [vmem:[#allocation3 + $0x10] sm:$0x1] %v4049
        %v4051 = vld [vmem:[#allocation3 + $0x18] sm:$0x1]
        %v4052 = vsel %vm4041, 0, %v4051
        %4053 = vst [vmem:[#allocation3 + $0x18] sm:$0x1] %v4052
        %v4054 = vld [vmem:[#allocation3 + $0x20] sm:$0x1]
        %v4055 = vsel %vm4041, 0, %v4054
        %4056 = vst [vmem:[#allocation3 + $0x20] sm:$0x1] %v4055
        %v4057 = vld [vmem:[#allocation3 + $0x28] sm:$0x1]
        %v4058 = vsel %vm4041, 0, %v4057
        %4059 = vst [vmem:[#allocation3 + $0x28] sm:$0x1] %v4058
        %v4060 = vld [vmem:[#allocation3 + $0x30] sm:$0x1]
        %v4061 = vsel %vm4041, 0, %v4060
        %4062 = vst [vmem:[#allocation3 + $0x30] sm:$0x1] %v4061
        %v4063 = vld [vmem:[#allocation3 + $0x38] sm:$0x1]
        %v4064 = vsel %vm4041, 0, %v4063
        %4065 = vst [vmem:[#allocation3 + $0x38] sm:$0x1] %v4064
        %v4066 = vld [vmem:[#allocation3 + $0x40] sm:$0x1]
        %v4067 = vsel %vm4041, 0, %v4066
        %4068 = vst [vmem:[#allocation3 + $0x40] sm:$0x1] %v4067
        %v4069 = vld [vmem:[#allocation3 + $0x48] sm:$0x1]
        %v4070 = vsel %vm4041, 0, %v4069
        %4071 = vst [vmem:[#allocation3 + $0x48] sm:$0x1] %v4070
        %vm4072 = vmand %vm4040, %vm1029
        %v4073 = vld [vmem:[#allocation3 + $0x4] sm:$0x1]
        %v4074 = vsel %vm4072, 0, %v4073
        %4075 = vst [vmem:[#allocation3 + $0x4] sm:$0x1] %v4074
        %v4076 = vld [vmem:[#allocation3 + $0xc] sm:$0x1]
        %v4077 = vsel %vm4072, 0, %v4076
        %4078 = vst [vmem:[#allocation3 + $0xc] sm:$0x1] %v4077
        %v4079 = vld [vmem:[#allocation3 + $0x14] sm:$0x1]
        %v4080 = vsel %vm4072, 0, %v4079
        %4081 = vst [vmem:[#allocation3 + $0x14] sm:$0x1] %v4080
        %v4082 = vld [vmem:[#allocation3 + $0x1c] sm:$0x1]
        %v4083 = vsel %vm4072, 0, %v4082
        %4084 = vst [vmem:[#allocation3 + $0x1c] sm:$0x1] %v4083
        %v4085 = vld [vmem:[#allocation3 + $0x24] sm:$0x1]
        %v4086 = vsel %vm4072, 0, %v4085
        %4087 = vst [vmem:[#allocation3 + $0x24] sm:$0x1] %v4086
        %v4088 = vld [vmem:[#allocation3 + $0x2c] sm:$0x1]
        %v4089 = vsel %vm4072, 0, %v4088
        %4090 = vst [vmem:[#allocation3 + $0x2c] sm:$0x1] %v4089
        %v4091 = vld [vmem:[#allocation3 + $0x34] sm:$0x1]
        %v4092 = vsel %vm4072, 0, %v4091
        %4093 = vst [vmem:[#allocation3 + $0x34] sm:$0x1] %v4092
        %v4094 = vld [vmem:[#allocation3 + $0x3c] sm:$0x1]
        %v4095 = vsel %vm4072, 0, %v4094
        %4096 = vst [vmem:[#allocation3 + $0x3c] sm:$0x1] %v4095
        %v4097 = vld [vmem:[#allocation3 + $0x44] sm:$0x1]
        %v4098 = vsel %vm4072, 0, %v4097
        %4099 = vst [vmem:[#allocation3 + $0x44] sm:$0x1] %v4098
        %v4100 = vld [vmem:[#allocation3 + $0x4c] sm:$0x1]
        %v4101 = vsel %vm4072, 0, %v4100
        %4102 = vst [vmem:[#allocation3 + $0x4c] sm:$0x1] %v4101
        %v4103 = vmax.f32 %v4001, %v4003
        %v4104 = vmax.f32 %v4002, %v4004
        %v4105 = vmax.f32 %v4005, %v4007
        %v4106 = vmax.f32 %v4006, %v4008
        %v4107 = vmax.f32 %v4009, %v4011
        %v4108 = vmax.f32 %v4010, %v4012
        %v4109 = vmax.f32 %v4013, %v4015
        %v4110 = vmax.f32 %v4014, %v4016
        %v4111 = vmax.f32 %v4017, %v4019
        %v4112 = vmax.f32 %v4018, %v4020
        %v4113 = vmax.f32 %v4021, %v4023
        %v4114 = vmax.f32 %v4022, %v4024
        %v4115 = vmax.f32 %v4025, %v4027
        %v4116 = vmax.f32 %v4026, %v4028
        %v4117 = vmax.f32 %v4029, %v4031
        %v4118 = vmax.f32 %v4030, %v4032
        %vm4119 = vcmask 517120
        %v4120 = vsel %vm4119, %v4103, -inf
        %v4121 = vrot.slane %v4120, 4
        %v4122 = vmax.f32 %v4120, %v4121
        %v4123 = vrot.slane %v4122, 2
        %v4124 = vmax.f32 %v4122, %v4123
        %v4125 = vrot.slane %v4124, 1
        %v4126 = vmax.f32 %v4124, %v4125
        %v4127 = vsel %vm4119, %v4105, -inf
        %v4128 = vrot.slane %v4127, 4
        %v4129 = vmax.f32 %v4127, %v4128
        %v4130 = vrot.slane %v4129, 2
        %v4131 = vmax.f32 %v4129, %v4130
        %v4132 = vrot.slane %v4131, 1
        %v4133 = vmax.f32 %v4131, %v4132
        %v4134 = vsel %vm4119, %v4107, -inf
        %v4135 = vrot.slane %v4134, 4
        %v4136 = vmax.f32 %v4134, %v4135
        %v4137 = vrot.slane %v4136, 2
        %v4138 = vmax.f32 %v4136, %v4137
        %v4139 = vrot.slane %v4138, 1
        %v4140 = vmax.f32 %v4138, %v4139
        %v4141 = vsel %vm4119, %v4109, -inf
        %v4142 = vrot.slane %v4141, 4
        %v4143 = vmax.f32 %v4141, %v4142
        %v4144 = vrot.slane %v4143, 2
        %v4145 = vmax.f32 %v4143, %v4144
        %v4146 = vrot.slane %v4145, 1
        %v4147 = vmax.f32 %v4145, %v4146
        %v4148 = vsel %vm4119, %v4111, -inf
        %v4149 = vrot.slane %v4148, 4
        %v4150 = vmax.f32 %v4148, %v4149
        %v4151 = vrot.slane %v4150, 2
        %v4152 = vmax.f32 %v4150, %v4151
        %v4153 = vrot.slane %v4152, 1
        %v4154 = vmax.f32 %v4152, %v4153
        %v4155 = vsel %vm4119, %v4113, -inf
        %v4156 = vrot.slane %v4155, 4
        %v4157 = vmax.f32 %v4155, %v4156
        %v4158 = vrot.slane %v4157, 2
        %v4159 = vmax.f32 %v4157, %v4158
        %v4160 = vrot.slane %v4159, 1
        %v4161 = vmax.f32 %v4159, %v4160
        %v4162 = vsel %vm4119, %v4115, -inf
        %v4163 = vrot.slane %v4162, 4
        %v4164 = vmax.f32 %v4162, %v4163
        %v4165 = vrot.slane %v4164, 2
        %v4166 = vmax.f32 %v4164, %v4165
        %v4167 = vrot.slane %v4166, 1
        %v4168 = vmax.f32 %v4166, %v4167
        %v4169 = vsel %vm4119, %v4117, -inf
        %v4170 = vrot.slane %v4169, 4
        %v4171 = vmax.f32 %v4169, %v4170
        %v4172 = vrot.slane %v4171, 2
        %v4173 = vmax.f32 %v4171, %v4172
        %v4174 = vrot.slane %v4173, 1
        %v4175 = vmax.f32 %v4173, %v4174
        %v4176 = vpack.c.bf16 %v4126, %v4126
        %v4177 = vpack.c.bf16 %v4133, %v4133
        %v4178 = vpack.c.bf16 %v4140, %v4140
        %v4179 = vpack.c.bf16 %v4147, %v4147
        %v4180 = vpack.c.bf16 %v4154, %v4154
        %v4181 = vpack.c.bf16 %v4161, %v4161
        %v4182 = vpack.c.bf16 %v4168, %v4168
        %v4183 = vpack.c.bf16 %v4175, %v4175
        %s4184 = scalar_lea.vmem [#allocation3], 8
        %v4185 = vld [vmem:[%s4184] sm:$0x1]
        %v4186 = vsel %vm4072, %v4176, %v4185
        %4187 = vst [vmem:[%s4184] sm:$0x1] %v4186
        %v4188 = vld [vmem:[%s4184 + $0x8] sm:$0x1]
        %v4189 = vsel %vm4072, %v4177, %v4188
        %4190 = vst [vmem:[%s4184 + $0x8] sm:$0x1] %v4189
        %v4191 = vld [vmem:[%s4184 + $0x10] sm:$0x1]
        %v4192 = vsel %vm4072, %v4178, %v4191
        %4193 = vst [vmem:[%s4184 + $0x10] sm:$0x1] %v4192
        %v4194 = vld [vmem:[%s4184 + $0x18] sm:$0x1]
        %v4195 = vsel %vm4072, %v4179, %v4194
        %4196 = vst [vmem:[%s4184 + $0x18] sm:$0x1] %v4195
        %v4197 = vld [vmem:[%s4184 + $0x20] sm:$0x1]
        %v4198 = vsel %vm4072, %v4180, %v4197
        %4199 = vst [vmem:[%s4184 + $0x20] sm:$0x1] %v4198
        %v4200 = vld [vmem:[%s4184 + $0x28] sm:$0x1]
        %v4201 = vsel %vm4072, %v4181, %v4200
        %4202 = vst [vmem:[%s4184 + $0x28] sm:$0x1] %v4201
        %v4203 = vld [vmem:[%s4184 + $0x30] sm:$0x1]
        %v4204 = vsel %vm4072, %v4182, %v4203
        %4205 = vst [vmem:[%s4184 + $0x30] sm:$0x1] %v4204
        %v4206 = vld [vmem:[%s4184 + $0x38] sm:$0x1]
        %v4207 = vsel %vm4072, %v4183, %v4206
        %4208 = vst [vmem:[%s4184 + $0x38] sm:$0x1] %v4207
        %vm4209 = vcmask 519170
        %v4210 = vsel %vm4209, %v4103, -inf
        %v4211 = vrot.slane %v4210, 4
        %v4212 = vmax.f32 %v4210, %v4211
        %v4213 = vrot.slane %v4212, 2
        %v4214 = vmax.f32 %v4212, %v4213
        %v4215 = vrot.slane %v4214, 1
        %v4216 = vmax.f32 %v4214, %v4215
        %v4217 = vsel %vm4209, %v4105, -inf
        %v4218 = vrot.slane %v4217, 4
        %v4219 = vmax.f32 %v4217, %v4218
        %v4220 = vrot.slane %v4219, 2
        %v4221 = vmax.f32 %v4219, %v4220
        %v4222 = vrot.slane %v4221, 1
        %v4223 = vmax.f32 %v4221, %v4222
        %v4224 = vsel %vm4209, %v4107, -inf
        %v4225 = vrot.slane %v4224, 4
        %v4226 = vmax.f32 %v4224, %v4225
        %v4227 = vrot.slane %v4226, 2
        %v4228 = vmax.f32 %v4226, %v4227
        %v4229 = vrot.slane %v4228, 1
        %v4230 = vmax.f32 %v4228, %v4229
        %v4231 = vsel %vm4209, %v4109, -inf
        %v4232 = vrot.slane %v4231, 4
        %v4233 = vmax.f32 %v4231, %v4232
        %v4234 = vrot.slane %v4233, 2
        %v4235 = vmax.f32 %v4233, %v4234
        %v4236 = vrot.slane %v4235, 1
        %v4237 = vmax.f32 %v4235, %v4236
        %v4238 = vsel %vm4209, %v4111, -inf
        %v4239 = vrot.slane %v4238, 4
        %v4240 = vmax.f32 %v4238, %v4239
        %v4241 = vrot.slane %v4240, 2
        %v4242 = vmax.f32 %v4240, %v4241
        %v4243 = vrot.slane %v4242, 1
        %v4244 = vmax.f32 %v4242, %v4243
        %v4245 = vsel %vm4209, %v4113, -inf
        %v4246 = vrot.slane %v4245, 4
        %v4247 = vmax.f32 %v4245, %v4246
        %v4248 = vrot.slane %v4247, 2
        %v4249 = vmax.f32 %v4247, %v4248
        %v4250 = vrot.slane %v4249, 1
        %v4251 = vmax.f32 %v4249, %v4250
        %v4252 = vsel %vm4209, %v4115, -inf
        %v4253 = vrot.slane %v4252, 4
        %v4254 = vmax.f32 %v4252, %v4253
        %v4255 = vrot.slane %v4254, 2
        %v4256 = vmax.f32 %v4254, %v4255
        %v4257 = vrot.slane %v4256, 1
        %v4258 = vmax.f32 %v4256, %v4257
        %v4259 = vsel %vm4209, %v4117, -inf
        %v4260 = vrot.slane %v4259, 4
        %v4261 = vmax.f32 %v4259, %v4260
        %v4262 = vrot.slane %v4261, 2
        %v4263 = vmax.f32 %v4261, %v4262
        %v4264 = vrot.slane %v4263, 1
        %v4265 = vmax.f32 %v4263, %v4264
        %v4266 = vpack.c.bf16 %v4216, %v4216
        %v4267 = vpack.c.bf16 %v4223, %v4223
        %v4268 = vpack.c.bf16 %v4230, %v4230
        %v4269 = vpack.c.bf16 %v4237, %v4237
        %v4270 = vpack.c.bf16 %v4244, %v4244
        %v4271 = vpack.c.bf16 %v4251, %v4251
        %v4272 = vpack.c.bf16 %v4258, %v4258
        %v4273 = vpack.c.bf16 %v4265, %v4265
        %vm4274 = vcmask 517121
        %vm4275 = vsmask.f32 1280
        %vm4276 = vmand %vm4274, %vm4275
        %v4277 = vld [vmem:[%s4184] sm:$0x2]
        %v4278 = vsel %vm4276, %v4266, %v4277
        %4279 = vst [vmem:[%s4184] sm:$0x2] %v4278
        %v4280 = vld [vmem:[%s4184 + $0x8] sm:$0x2]
        %v4281 = vsel %vm4276, %v4267, %v4280
        %4282 = vst [vmem:[%s4184 + $0x8] sm:$0x2] %v4281
        %v4283 = vld [vmem:[%s4184 + $0x10] sm:$0x2]
        %v4284 = vsel %vm4276, %v4268, %v4283
        %4285 = vst [vmem:[%s4184 + $0x10] sm:$0x2] %v4284
        %v4286 = vld [vmem:[%s4184 + $0x18] sm:$0x2]
        %v4287 = vsel %vm4276, %v4269, %v4286
        %4288 = vst [vmem:[%s4184 + $0x18] sm:$0x2] %v4287
        %v4289 = vld [vmem:[%s4184 + $0x20] sm:$0x2]
        %v4290 = vsel %vm4276, %v4270, %v4289
        %4291 = vst [vmem:[%s4184 + $0x20] sm:$0x2] %v4290
        %v4292 = vld [vmem:[%s4184 + $0x28] sm:$0x2]
        %v4293 = vsel %vm4276, %v4271, %v4292
        %4294 = vst [vmem:[%s4184 + $0x28] sm:$0x2] %v4293
        %v4295 = vld [vmem:[%s4184 + $0x30] sm:$0x2]
        %v4296 = vsel %vm4276, %v4272, %v4295
        %4297 = vst [vmem:[%s4184 + $0x30] sm:$0x2] %v4296
        %v4298 = vld [vmem:[%s4184 + $0x38] sm:$0x2]
        %v4299 = vsel %vm4276, %v4273, %v4298
        %4300 = vst [vmem:[%s4184 + $0x38] sm:$0x2] %v4299
        %vm4301 = vcmask 521220
        %v4302 = vsel %vm4301, %v4103, -inf
        %v4303 = vrot.slane %v4302, 4
        %v4304 = vmax.f32 %v4302, %v4303
        %v4305 = vrot.slane %v4304, 2
        %v4306 = vmax.f32 %v4304, %v4305
        %v4307 = vrot.slane %v4306, 1
        %v4308 = vmax.f32 %v4306, %v4307
        %v4309 = vsel %vm4301, %v4105, -inf
        %v4310 = vrot.slane %v4309, 4
        %v4311 = vmax.f32 %v4309, %v4310
        %v4312 = vrot.slane %v4311, 2
        %v4313 = vmax.f32 %v4311, %v4312
        %v4314 = vrot.slane %v4313, 1
        %v4315 = vmax.f32 %v4313, %v4314
        %v4316 = vsel %vm4301, %v4107, -inf
        %v4317 = vrot.slane %v4316, 4
        %v4318 = vmax.f32 %v4316, %v4317
        %v4319 = vrot.slane %v4318, 2
        %v4320 = vmax.f32 %v4318, %v4319
        %v4321 = vrot.slane %v4320, 1
        %v4322 = vmax.f32 %v4320, %v4321
        %v4323 = vsel %vm4301, %v4109, -inf
        %v4324 = vrot.slane %v4323, 4
        %v4325 = vmax.f32 %v4323, %v4324
        %v4326 = vrot.slane %v4325, 2
        %v4327 = vmax.f32 %v4325, %v4326
        %v4328 = vrot.slane %v4327, 1
        %v4329 = vmax.f32 %v4327, %v4328
        %v4330 = vsel %vm4301, %v4111, -inf
        %v4331 = vrot.slane %v4330, 4
        %v4332 = vmax.f32 %v4330, %v4331
        %v4333 = vrot.slane %v4332, 2
        %v4334 = vmax.f32 %v4332, %v4333
        %v4335 = vrot.slane %v4334, 1
        %v4336 = vmax.f32 %v4334, %v4335
        %v4337 = vsel %vm4301, %v4113, -inf
        %v4338 = vrot.slane %v4337, 4
        %v4339 = vmax.f32 %v4337, %v4338
        %v4340 = vrot.slane %v4339, 2
        %v4341 = vmax.f32 %v4339, %v4340
        %v4342 = vrot.slane %v4341, 1
        %v4343 = vmax.f32 %v4341, %v4342
        %v4344 = vsel %vm4301, %v4115, -inf
        %v4345 = vrot.slane %v4344, 4
        %v4346 = vmax.f32 %v4344, %v4345
        %v4347 = vrot.slane %v4346, 2
        %v4348 = vmax.f32 %v4346, %v4347
        %v4349 = vrot.slane %v4348, 1
        %v4350 = vmax.f32 %v4348, %v4349
        %v4351 = vsel %vm4301, %v4117, -inf
        %v4352 = vrot.slane %v4351, 4
        %v4353 = vmax.f32 %v4351, %v4352
        %v4354 = vrot.slane %v4353, 2
        %v4355 = vmax.f32 %v4353, %v4354
        %v4356 = vrot.slane %v4355, 1
        %v4357 = vmax.f32 %v4355, %v4356
        %v4358 = vpack.c.bf16 %v4308, %v4308
        %v4359 = vpack.c.bf16 %v4315, %v4315
        %v4360 = vpack.c.bf16 %v4322, %v4322
        %v4361 = vpack.c.bf16 %v4329, %v4329
        %v4362 = vpack.c.bf16 %v4336, %v4336
        %v4363 = vpack.c.bf16 %v4343, %v4343
        %v4364 = vpack.c.bf16 %v4350, %v4350
        %v4365 = vpack.c.bf16 %v4357, %v4357
        %vm4366 = vsmask.f32 7942
        %vm4367 = vmand %vm4274, %vm4366
        %v4368 = vld [vmem:[%s4184] sm:$0x2]
        %v4369 = vsel %vm4367, %v4358, %v4368
        %4370 = vst [vmem:[%s4184] sm:$0x2] %v4369
        %v4371 = vld [vmem:[%s4184 + $0x8] sm:$0x2]
        %v4372 = vsel %vm4367, %v4359, %v4371
        %4373 = vst [vmem:[%s4184 + $0x8] sm:$0x2] %v4372
        %v4374 = vld [vmem:[%s4184 + $0x10] sm:$0x2]
        %v4375 = vsel %vm4367, %v4360, %v4374
        %4376 = vst [vmem:[%s4184 + $0x10] sm:$0x2] %v4375
        %v4377 = vld [vmem:[%s4184 + $0x18] sm:$0x2]
        %v4378 = vsel %vm4367, %v4361, %v4377
        %4379 = vst [vmem:[%s4184 + $0x18] sm:$0x2] %v4378
        %v4380 = vld [vmem:[%s4184 + $0x20] sm:$0x2]
        %v4381 = vsel %vm4367, %v4362, %v4380
        %4382 = vst [vmem:[%s4184 + $0x20] sm:$0x2] %v4381
        %v4383 = vld [vmem:[%s4184 + $0x28] sm:$0x2]
        %v4384 = vsel %vm4367, %v4363, %v4383
        %4385 = vst [vmem:[%s4184 + $0x28] sm:$0x2] %v4384
        %v4386 = vld [vmem:[%s4184 + $0x30] sm:$0x2]
        %v4387 = vsel %vm4367, %v4364, %v4386
        %4388 = vst [vmem:[%s4184 + $0x30] sm:$0x2] %v4387
        %v4389 = vld [vmem:[%s4184 + $0x38] sm:$0x2]
        %v4390 = vsel %vm4367, %v4365, %v4389
        %4391 = vst [vmem:[%s4184 + $0x38] sm:$0x2] %v4390
        %vm4392 = vcmask 523270
        %v4393 = vsel %vm4392, %v4103, -inf
        %v4394 = vrot.slane %v4393, 4
        %v4395 = vmax.f32 %v4393, %v4394
        %v4396 = vrot.slane %v4395, 2
        %v4397 = vmax.f32 %v4395, %v4396
        %v4398 = vrot.slane %v4397, 1
        %v4399 = vmax.f32 %v4397, %v4398
        %v4400 = vsel %vm4392, %v4105, -inf
        %v4401 = vrot.slane %v4400, 4
        %v4402 = vmax.f32 %v4400, %v4401
        %v4403 = vrot.slane %v4402, 2
        %v4404 = vmax.f32 %v4402, %v4403
        %v4405 = vrot.slane %v4404, 1
        %v4406 = vmax.f32 %v4404, %v4405
        %v4407 = vsel %vm4392, %v4107, -inf
        %v4408 = vrot.slane %v4407, 4
        %v4409 = vmax.f32 %v4407, %v4408
        %v4410 = vrot.slane %v4409, 2
        %v4411 = vmax.f32 %v4409, %v4410
        %v4412 = vrot.slane %v4411, 1
        %v4413 = vmax.f32 %v4411, %v4412
        %v4414 = vsel %vm4392, %v4109, -inf
        %v4415 = vrot.slane %v4414, 4
        %v4416 = vmax.f32 %v4414, %v4415
        %v4417 = vrot.slane %v4416, 2
        %v4418 = vmax.f32 %v4416, %v4417
        %v4419 = vrot.slane %v4418, 1
        %v4420 = vmax.f32 %v4418, %v4419
        %v4421 = vsel %vm4392, %v4111, -inf
        %v4422 = vrot.slane %v4421, 4
        %v4423 = vmax.f32 %v4421, %v4422
        %v4424 = vrot.slane %v4423, 2
        %v4425 = vmax.f32 %v4423, %v4424
        %v4426 = vrot.slane %v4425, 1
        %v4427 = vmax.f32 %v4425, %v4426
        %v4428 = vsel %vm4392, %v4113, -inf
        %v4429 = vrot.slane %v4428, 4
        %v4430 = vmax.f32 %v4428, %v4429
        %v4431 = vrot.slane %v4430, 2
        %v4432 = vmax.f32 %v4430, %v4431
        %v4433 = vrot.slane %v4432, 1
        %v4434 = vmax.f32 %v4432, %v4433
        %v4435 = vsel %vm4392, %v4115, -inf
        %v4436 = vrot.slane %v4435, 4
        %v4437 = vmax.f32 %v4435, %v4436
        %v4438 = vrot.slane %v4437, 2
        %v4439 = vmax.f32 %v4437, %v4438
        %v4440 = vrot.slane %v4439, 1
        %v4441 = vmax.f32 %v4439, %v4440
        %v4442 = vsel %vm4392, %v4117, -inf
        %v4443 = vrot.slane %v4442, 4
        %v4444 = vmax.f32 %v4442, %v4443
        %v4445 = vrot.slane %v4444, 2
        %v4446 = vmax.f32 %v4444, %v4445
        %v4447 = vrot.slane %v4446, 1
        %v4448 = vmax.f32 %v4446, %v4447
        %v4449 = vpack.c.bf16 %v4399, %v4399
        %v4450 = vpack.c.bf16 %v4406, %v4406
        %v4451 = vpack.c.bf16 %v4413, %v4413
        %v4452 = vpack.c.bf16 %v4420, %v4420
        %v4453 = vpack.c.bf16 %v4427, %v4427
        %v4454 = vpack.c.bf16 %v4434, %v4434
        %v4455 = vpack.c.bf16 %v4441, %v4441
        %v4456 = vpack.c.bf16 %v4448, %v4448
        %vm4457 = vcmask 518146
        %vm4458 = vsmask.f32 2304
        %vm4459 = vmand %vm4457, %vm4458
        %v4460 = vld [vmem:[%s4184] sm:$0x4]
        %v4461 = vsel %vm4459, %v4449, %v4460
        %4462 = vst [vmem:[%s4184] sm:$0x4] %v4461
        %v4463 = vld [vmem:[%s4184 + $0x8] sm:$0x4]
        %v4464 = vsel %vm4459, %v4450, %v4463
        %4465 = vst [vmem:[%s4184 + $0x8] sm:$0x4] %v4464
        %v4466 = vld [vmem:[%s4184 + $0x10] sm:$0x4]
        %v4467 = vsel %vm4459, %v4451, %v4466
        %4468 = vst [vmem:[%s4184 + $0x10] sm:$0x4] %v4467
        %v4469 = vld [vmem:[%s4184 + $0x18] sm:$0x4]
        %v4470 = vsel %vm4459, %v4452, %v4469
        %4471 = vst [vmem:[%s4184 + $0x18] sm:$0x4] %v4470
        %v4472 = vld [vmem:[%s4184 + $0x20] sm:$0x4]
        %v4473 = vsel %vm4459, %v4453, %v4472
        %4474 = vst [vmem:[%s4184 + $0x20] sm:$0x4] %v4473
        %v4475 = vld [vmem:[%s4184 + $0x28] sm:$0x4]
        %v4476 = vsel %vm4459, %v4454, %v4475
        %4477 = vst [vmem:[%s4184 + $0x28] sm:$0x4] %v4476
        %v4478 = vld [vmem:[%s4184 + $0x30] sm:$0x4]
        %v4479 = vsel %vm4459, %v4455, %v4478
        %4480 = vst [vmem:[%s4184 + $0x30] sm:$0x4] %v4479
        %v4481 = vld [vmem:[%s4184 + $0x38] sm:$0x4]
        %v4482 = vsel %vm4459, %v4456, %v4481
        %4483 = vst [vmem:[%s4184 + $0x38] sm:$0x4] %v4482
        %v4484 = vsel %vm4119, %v4104, -inf
        %v4485 = vrot.slane %v4484, 4
        %v4486 = vmax.f32 %v4484, %v4485
        %v4487 = vrot.slane %v4486, 2
        %v4488 = vmax.f32 %v4486, %v4487
        %v4489 = vrot.slane %v4488, 1
        %v4490 = vmax.f32 %v4488, %v4489
        %v4491 = vsel %vm4119, %v4106, -inf
        %v4492 = vrot.slane %v4491, 4
        %v4493 = vmax.f32 %v4491, %v4492
        %v4494 = vrot.slane %v4493, 2
        %v4495 = vmax.f32 %v4493, %v4494
        %v4496 = vrot.slane %v4495, 1
        %v4497 = vmax.f32 %v4495, %v4496
        %v4498 = vsel %vm4119, %v4108, -inf
        %v4499 = vrot.slane %v4498, 4
        %v4500 = vmax.f32 %v4498, %v4499
        %v4501 = vrot.slane %v4500, 2
        %v4502 = vmax.f32 %v4500, %v4501
        %v4503 = vrot.slane %v4502, 1
        %v4504 = vmax.f32 %v4502, %v4503
        %v4505 = vsel %vm4119, %v4110, -inf
        %v4506 = vrot.slane %v4505, 4
        %v4507 = vmax.f32 %v4505, %v4506
        %v4508 = vrot.slane %v4507, 2
        %v4509 = vmax.f32 %v4507, %v4508
        %v4510 = vrot.slane %v4509, 1
        %v4511 = vmax.f32 %v4509, %v4510
        %v4512 = vsel %vm4119, %v4112, -inf
        %v4513 = vrot.slane %v4512, 4
        %v4514 = vmax.f32 %v4512, %v4513
        %v4515 = vrot.slane %v4514, 2
        %v4516 = vmax.f32 %v4514, %v4515
        %v4517 = vrot.slane %v4516, 1
        %v4518 = vmax.f32 %v4516, %v4517
        %v4519 = vsel %vm4119, %v4114, -inf
        %v4520 = vrot.slane %v4519, 4
        %v4521 = vmax.f32 %v4519, %v4520
        %v4522 = vrot.slane %v4521, 2
        %v4523 = vmax.f32 %v4521, %v4522
        %v4524 = vrot.slane %v4523, 1
        %v4525 = vmax.f32 %v4523, %v4524
        %v4526 = vsel %vm4119, %v4116, -inf
        %v4527 = vrot.slane %v4526, 4
        %v4528 = vmax.f32 %v4526, %v4527
        %v4529 = vrot.slane %v4528, 2
        %v4530 = vmax.f32 %v4528, %v4529
        %v4531 = vrot.slane %v4530, 1
        %v4532 = vmax.f32 %v4530, %v4531
        %v4533 = vsel %vm4119, %v4118, -inf
        %v4534 = vrot.slane %v4533, 4
        %v4535 = vmax.f32 %v4533, %v4534
        %v4536 = vrot.slane %v4535, 2
        %v4537 = vmax.f32 %v4535, %v4536
        %v4538 = vrot.slane %v4537, 1
        %v4539 = vmax.f32 %v4537, %v4538
        %v4540 = vpack.c.bf16 %v4490, %v4490
        %v4541 = vpack.c.bf16 %v4497, %v4497
        %v4542 = vpack.c.bf16 %v4504, %v4504
        %v4543 = vpack.c.bf16 %v4511, %v4511
        %v4544 = vpack.c.bf16 %v4518, %v4518
        %v4545 = vpack.c.bf16 %v4525, %v4525
        %v4546 = vpack.c.bf16 %v4532, %v4532
        %v4547 = vpack.c.bf16 %v4539, %v4539
        %vm4548 = vsmask.f32 7946
        %vm4549 = vmand %vm4457, %vm4548
        %v4550 = vld [vmem:[%s4184] sm:$0x4]
        %v4551 = vsel %vm4549, %v4540, %v4550
        %4552 = vst [vmem:[%s4184] sm:$0x4] %v4551
        %v4553 = vld [vmem:[%s4184 + $0x8] sm:$0x4]
        %v4554 = vsel %vm4549, %v4541, %v4553
        %4555 = vst [vmem:[%s4184 + $0x8] sm:$0x4] %v4554
        %v4556 = vld [vmem:[%s4184 + $0x10] sm:$0x4]
        %v4557 = vsel %vm4549, %v4542, %v4556
        %4558 = vst [vmem:[%s4184 + $0x10] sm:$0x4] %v4557
        %v4559 = vld [vmem:[%s4184 + $0x18] sm:$0x4]
        %v4560 = vsel %vm4549, %v4543, %v4559
        %4561 = vst [vmem:[%s4184 + $0x18] sm:$0x4] %v4560
        %v4562 = vld [vmem:[%s4184 + $0x20] sm:$0x4]
        %v4563 = vsel %vm4549, %v4544, %v4562
        %4564 = vst [vmem:[%s4184 + $0x20] sm:$0x4] %v4563
        %v4565 = vld [vmem:[%s4184 + $0x28] sm:$0x4]
        %v4566 = vsel %vm4549, %v4545, %v4565
        %4567 = vst [vmem:[%s4184 + $0x28] sm:$0x4] %v4566
        %v4568 = vld [vmem:[%s4184 + $0x30] sm:$0x4]
        %v4569 = vsel %vm4549, %v4546, %v4568
        %4570 = vst [vmem:[%s4184 + $0x30] sm:$0x4] %v4569
        %v4571 = vld [vmem:[%s4184 + $0x38] sm:$0x4]
        %v4572 = vsel %vm4549, %v4547, %v4571
        %4573 = vst [vmem:[%s4184 + $0x38] sm:$0x4] %v4572
        %v4574 = vsel %vm4209, %v4104, -inf
        %v4575 = vrot.slane %v4574, 4
        %v4576 = vmax.f32 %v4574, %v4575
        %v4577 = vrot.slane %v4576, 2
        %v4578 = vmax.f32 %v4576, %v4577
        %v4579 = vrot.slane %v4578, 1
        %v4580 = vmax.f32 %v4578, %v4579
        %v4581 = vsel %vm4209, %v4106, -inf
        %v4582 = vrot.slane %v4581, 4
        %v4583 = vmax.f32 %v4581, %v4582
        %v4584 = vrot.slane %v4583, 2
        %v4585 = vmax.f32 %v4583, %v4584
        %v4586 = vrot.slane %v4585, 1
        %v4587 = vmax.f32 %v4585, %v4586
        %v4588 = vsel %vm4209, %v4108, -inf
        %v4589 = vrot.slane %v4588, 4
        %v4590 = vmax.f32 %v4588, %v4589
        %v4591 = vrot.slane %v4590, 2
        %v4592 = vmax.f32 %v4590, %v4591
        %v4593 = vrot.slane %v4592, 1
        %v4594 = vmax.f32 %v4592, %v4593
        %v4595 = vsel %vm4209, %v4110, -inf
        %v4596 = vrot.slane %v4595, 4
        %v4597 = vmax.f32 %v4595, %v4596
        %v4598 = vrot.slane %v4597, 2
        %v4599 = vmax.f32 %v4597, %v4598
        %v4600 = vrot.slane %v4599, 1
        %v4601 = vmax.f32 %v4599, %v4600
        %v4602 = vsel %vm4209, %v4112, -inf
        %v4603 = vrot.slane %v4602, 4
        %v4604 = vmax.f32 %v4602, %v4603
        %v4605 = vrot.slane %v4604, 2
        %v4606 = vmax.f32 %v4604, %v4605
        %v4607 = vrot.slane %v4606, 1
        %v4608 = vmax.f32 %v4606, %v4607
        %v4609 = vsel %vm4209, %v4114, -inf
        %v4610 = vrot.slane %v4609, 4
        %v4611 = vmax.f32 %v4609, %v4610
        %v4612 = vrot.slane %v4611, 2
        %v4613 = vmax.f32 %v4611, %v4612
        %v4614 = vrot.slane %v4613, 1
        %v4615 = vmax.f32 %v4613, %v4614
        %v4616 = vsel %vm4209, %v4116, -inf
        %v4617 = vrot.slane %v4616, 4
        %v4618 = vmax.f32 %v4616, %v4617
        %v4619 = vrot.slane %v4618, 2
        %v4620 = vmax.f32 %v4618, %v4619
        %v4621 = vrot.slane %v4620, 1
        %v4622 = vmax.f32 %v4620, %v4621
        %v4623 = vsel %vm4209, %v4118, -inf
        %v4624 = vrot.slane %v4623, 4
        %v4625 = vmax.f32 %v4623, %v4624
        %v4626 = vrot.slane %v4625, 2
        %v4627 = vmax.f32 %v4625, %v4626
        %v4628 = vrot.slane %v4627, 1
        %v4629 = vmax.f32 %v4627, %v4628
        %v4630 = vpack.c.bf16 %v4580, %v4580
        %v4631 = vpack.c.bf16 %v4587, %v4587
        %v4632 = vpack.c.bf16 %v4594, %v4594
        %v4633 = vpack.c.bf16 %v4601, %v4601
        %v4634 = vpack.c.bf16 %v4608, %v4608
        %v4635 = vpack.c.bf16 %v4615, %v4615
        %v4636 = vpack.c.bf16 %v4622, %v4622
        %v4637 = vpack.c.bf16 %v4629, %v4629
        %vm4638 = vcmask 519171
        %vm4639 = vsmask.f32 3328
        %vm4640 = vmand %vm4638, %vm4639
        %v4641 = vld [vmem:[%s4184] sm:$0x8]
        %v4642 = vsel %vm4640, %v4630, %v4641
        %4643 = vst [vmem:[%s4184] sm:$0x8] %v4642
        %v4644 = vld [vmem:[%s4184 + $0x8] sm:$0x8]
        %v4645 = vsel %vm4640, %v4631, %v4644
        %4646 = vst [vmem:[%s4184 + $0x8] sm:$0x8] %v4645
        %v4647 = vld [vmem:[%s4184 + $0x10] sm:$0x8]
        %v4648 = vsel %vm4640, %v4632, %v4647
        %4649 = vst [vmem:[%s4184 + $0x10] sm:$0x8] %v4648
        %v4650 = vld [vmem:[%s4184 + $0x18] sm:$0x8]
        %v4651 = vsel %vm4640, %v4633, %v4650
        %4652 = vst [vmem:[%s4184 + $0x18] sm:$0x8] %v4651
        %v4653 = vld [vmem:[%s4184 + $0x20] sm:$0x8]
        %v4654 = vsel %vm4640, %v4634, %v4653
        %4655 = vst [vmem:[%s4184 + $0x20] sm:$0x8] %v4654
        %v4656 = vld [vmem:[%s4184 + $0x28] sm:$0x8]
        %v4657 = vsel %vm4640, %v4635, %v4656
        %4658 = vst [vmem:[%s4184 + $0x28] sm:$0x8] %v4657
        %v4659 = vld [vmem:[%s4184 + $0x30] sm:$0x8]
        %v4660 = vsel %vm4640, %v4636, %v4659
        %4661 = vst [vmem:[%s4184 + $0x30] sm:$0x8] %v4660
        %v4662 = vld [vmem:[%s4184 + $0x38] sm:$0x8]
        %v4663 = vsel %vm4640, %v4637, %v4662
        %4664 = vst [vmem:[%s4184 + $0x38] sm:$0x8] %v4663
        %v4665 = vsel %vm4301, %v4104, -inf
        %v4666 = vrot.slane %v4665, 4
        %v4667 = vmax.f32 %v4665, %v4666
        %v4668 = vrot.slane %v4667, 2
        %v4669 = vmax.f32 %v4667, %v4668
        %v4670 = vrot.slane %v4669, 1
        %v4671 = vmax.f32 %v4669, %v4670
        %v4672 = vsel %vm4301, %v4106, -inf
        %v4673 = vrot.slane %v4672, 4
        %v4674 = vmax.f32 %v4672, %v4673
        %v4675 = vrot.slane %v4674, 2
        %v4676 = vmax.f32 %v4674, %v4675
        %v4677 = vrot.slane %v4676, 1
        %v4678 = vmax.f32 %v4676, %v4677
        %v4679 = vsel %vm4301, %v4108, -inf
        %v4680 = vrot.slane %v4679, 4
        %v4681 = vmax.f32 %v4679, %v4680
        %v4682 = vrot.slane %v4681, 2
        %v4683 = vmax.f32 %v4681, %v4682
        %v4684 = vrot.slane %v4683, 1
        %v4685 = vmax.f32 %v4683, %v4684
        %v4686 = vsel %vm4301, %v4110, -inf
        %v4687 = vrot.slane %v4686, 4
        %v4688 = vmax.f32 %v4686, %v4687
        %v4689 = vrot.slane %v4688, 2
        %v4690 = vmax.f32 %v4688, %v4689
        %v4691 = vrot.slane %v4690, 1
        %v4692 = vmax.f32 %v4690, %v4691
        %v4693 = vsel %vm4301, %v4112, -inf
        %v4694 = vrot.slane %v4693, 4
        %v4695 = vmax.f32 %v4693, %v4694
        %v4696 = vrot.slane %v4695, 2
        %v4697 = vmax.f32 %v4695, %v4696
        %v4698 = vrot.slane %v4697, 1
        %v4699 = vmax.f32 %v4697, %v4698
        %v4700 = vsel %vm4301, %v4114, -inf
        %v4701 = vrot.slane %v4700, 4
        %v4702 = vmax.f32 %v4700, %v4701
        %v4703 = vrot.slane %v4702, 2
        %v4704 = vmax.f32 %v4702, %v4703
        %v4705 = vrot.slane %v4704, 1
        %v4706 = vmax.f32 %v4704, %v4705
        %v4707 = vsel %vm4301, %v4116, -inf
        %v4708 = vrot.slane %v4707, 4
        %v4709 = vmax.f32 %v4707, %v4708
        %v4710 = vrot.slane %v4709, 2
        %v4711 = vmax.f32 %v4709, %v4710
        %v4712 = vrot.slane %v4711, 1
        %v4713 = vmax.f32 %v4711, %v4712
        %v4714 = vsel %vm4301, %v4118, -inf
        %v4715 = vrot.slane %v4714, 4
        %v4716 = vmax.f32 %v4714, %v4715
        %v4717 = vrot.slane %v4716, 2
        %v4718 = vmax.f32 %v4716, %v4717
        %v4719 = vrot.slane %v4718, 1
        %v4720 = vmax.f32 %v4718, %v4719
        %v4721 = vpack.c.bf16 %v4671, %v4671
        %v4722 = vpack.c.bf16 %v4678, %v4678
        %v4723 = vpack.c.bf16 %v4685, %v4685
        %v4724 = vpack.c.bf16 %v4692, %v4692
        %v4725 = vpack.c.bf16 %v4699, %v4699
        %v4726 = vpack.c.bf16 %v4706, %v4706
        %v4727 = vpack.c.bf16 %v4713, %v4713
        %v4728 = vpack.c.bf16 %v4720, %v4720
        %vm4729 = vsmask.f32 7950
        %vm4730 = vmand %vm4638, %vm4729
        %v4731 = vld [vmem:[%s4184] sm:$0x8]
        %v4732 = vsel %vm4730, %v4721, %v4731
        %4733 = vst [vmem:[%s4184] sm:$0x8] %v4732
        %v4734 = vld [vmem:[%s4184 + $0x8] sm:$0x8]
        %v4735 = vsel %vm4730, %v4722, %v4734
        %4736 = vst [vmem:[%s4184 + $0x8] sm:$0x8] %v4735
        %v4737 = vld [vmem:[%s4184 + $0x10] sm:$0x8]
        %v4738 = vsel %vm4730, %v4723, %v4737
        %4739 = vst [vmem:[%s4184 + $0x10] sm:$0x8] %v4738
        %v4740 = vld [vmem:[%s4184 + $0x18] sm:$0x8]
        %v4741 = vsel %vm4730, %v4724, %v4740
        %4742 = vst [vmem:[%s4184 + $0x18] sm:$0x8] %v4741
        %v4743 = vld [vmem:[%s4184 + $0x20] sm:$0x8]
        %v4744 = vsel %vm4730, %v4725, %v4743
        %4745 = vst [vmem:[%s4184 + $0x20] sm:$0x8] %v4744
        %v4746 = vld [vmem:[%s4184 + $0x28] sm:$0x8]
        %v4747 = vsel %vm4730, %v4726, %v4746
        %4748 = vst [vmem:[%s4184 + $0x28] sm:$0x8] %v4747
        %v4749 = vld [vmem:[%s4184 + $0x30] sm:$0x8]
        %v4750 = vsel %vm4730, %v4727, %v4749
        %4751 = vst [vmem:[%s4184 + $0x30] sm:$0x8] %v4750
        %v4752 = vld [vmem:[%s4184 + $0x38] sm:$0x8]
        %v4753 = vsel %vm4730, %v4728, %v4752
        %4754 = vst [vmem:[%s4184 + $0x38] sm:$0x8] %v4753
        %v4755 = vsel %vm4392, %v4104, -inf
        %v4756 = vrot.slane %v4755, 4
        %v4757 = vmax.f32 %v4755, %v4756
        %v4758 = vrot.slane %v4757, 2
        %v4759 = vmax.f32 %v4757, %v4758
        %v4760 = vrot.slane %v4759, 1
        %v4761 = vmax.f32 %v4759, %v4760
        %v4762 = vsel %vm4392, %v4106, -inf
        %v4763 = vrot.slane %v4762, 4
        %v4764 = vmax.f32 %v4762, %v4763
        %v4765 = vrot.slane %v4764, 2
        %v4766 = vmax.f32 %v4764, %v4765
        %v4767 = vrot.slane %v4766, 1
        %v4768 = vmax.f32 %v4766, %v4767
        %v4769 = vsel %vm4392, %v4108, -inf
        %v4770 = vrot.slane %v4769, 4
        %v4771 = vmax.f32 %v4769, %v4770
        %v4772 = vrot.slane %v4771, 2
        %v4773 = vmax.f32 %v4771, %v4772
        %v4774 = vrot.slane %v4773, 1
        %v4775 = vmax.f32 %v4773, %v4774
        %v4776 = vsel %vm4392, %v4110, -inf
        %v4777 = vrot.slane %v4776, 4
        %v4778 = vmax.f32 %v4776, %v4777
        %v4779 = vrot.slane %v4778, 2
        %v4780 = vmax.f32 %v4778, %v4779
        %v4781 = vrot.slane %v4780, 1
        %v4782 = vmax.f32 %v4780, %v4781
        %v4783 = vsel %vm4392, %v4112, -inf
        %v4784 = vrot.slane %v4783, 4
        %v4785 = vmax.f32 %v4783, %v4784
        %v4786 = vrot.slane %v4785, 2
        %v4787 = vmax.f32 %v4785, %v4786
        %v4788 = vrot.slane %v4787, 1
        %v4789 = vmax.f32 %v4787, %v4788
        %v4790 = vsel %vm4392, %v4114, -inf
        %v4791 = vrot.slane %v4790, 4
        %v4792 = vmax.f32 %v4790, %v4791
        %v4793 = vrot.slane %v4792, 2
        %v4794 = vmax.f32 %v4792, %v4793
        %v4795 = vrot.slane %v4794, 1
        %v4796 = vmax.f32 %v4794, %v4795
        %v4797 = vsel %vm4392, %v4116, -inf
        %v4798 = vrot.slane %v4797, 4
        %v4799 = vmax.f32 %v4797, %v4798
        %v4800 = vrot.slane %v4799, 2
        %v4801 = vmax.f32 %v4799, %v4800
        %v4802 = vrot.slane %v4801, 1
        %v4803 = vmax.f32 %v4801, %v4802
        %v4804 = vsel %vm4392, %v4118, -inf
        %v4805 = vrot.slane %v4804, 4
        %v4806 = vmax.f32 %v4804, %v4805
        %v4807 = vrot.slane %v4806, 2
        %v4808 = vmax.f32 %v4806, %v4807
        %v4809 = vrot.slane %v4808, 1
        %v4810 = vmax.f32 %v4808, %v4809
        %v4811 = vpack.c.bf16 %v4761, %v4761
        %v4812 = vpack.c.bf16 %v4768, %v4768
        %v4813 = vpack.c.bf16 %v4775, %v4775
        %v4814 = vpack.c.bf16 %v4782, %v4782
        %v4815 = vpack.c.bf16 %v4789, %v4789
        %v4816 = vpack.c.bf16 %v4796, %v4796
        %v4817 = vpack.c.bf16 %v4803, %v4803
        %v4818 = vpack.c.bf16 %v4810, %v4810
        %v4819 = vld [vmem:[%s4184 + $0x4] sm:$0x1]
        %v4820 = vsel %vm4041, %v4811, %v4819
        %4821 = vst [vmem:[%s4184 + $0x4] sm:$0x1] %v4820
        %v4822 = vld [vmem:[%s4184 + $0xc] sm:$0x1]
        %v4823 = vsel %vm4041, %v4812, %v4822
        %4824 = vst [vmem:[%s4184 + $0xc] sm:$0x1] %v4823
        %v4825 = vld [vmem:[%s4184 + $0x14] sm:$0x1]
        %v4826 = vsel %vm4041, %v4813, %v4825
        %4827 = vst [vmem:[%s4184 + $0x14] sm:$0x1] %v4826
        %v4828 = vld [vmem:[%s4184 + $0x1c] sm:$0x1]
        %v4829 = vsel %vm4041, %v4814, %v4828
        %4830 = vst [vmem:[%s4184 + $0x1c] sm:$0x1] %v4829
        %v4831 = vld [vmem:[%s4184 + $0x24] sm:$0x1]
        %v4832 = vsel %vm4041, %v4815, %v4831
        %4833 = vst [vmem:[%s4184 + $0x24] sm:$0x1] %v4832
        %v4834 = vld [vmem:[%s4184 + $0x2c] sm:$0x1]
        %v4835 = vsel %vm4041, %v4816, %v4834
        %4836 = vst [vmem:[%s4184 + $0x2c] sm:$0x1] %v4835
        %v4837 = vld [vmem:[%s4184 + $0x34] sm:$0x1]
        %v4838 = vsel %vm4041, %v4817, %v4837
        %4839 = vst [vmem:[%s4184 + $0x34] sm:$0x1] %v4838
        %v4840 = vld [vmem:[%s4184 + $0x3c] sm:$0x1]
        %v4841 = vsel %vm4041, %v4818, %v4840
        %4842 = vst [vmem:[%s4184 + $0x3c] sm:$0x1] %v4841
        %v4843 = vld [vmem:[#allocation3] sm:$0xf]
        %v4844 = vld [vmem:[#allocation3 + $0x8] sm:$0xf]
        %v4845 = vld [vmem:[#allocation3 + $0x10] sm:$0xf]
        %v4846 = vld [vmem:[#allocation3 + $0x18] sm:$0xf]
        %v4847 = vld [vmem:[#allocation3 + $0x20] sm:$0xf]
        %v4848 = vld [vmem:[#allocation3 + $0x28] sm:$0xf]
        %v4849 = vld [vmem:[#allocation3 + $0x30] sm:$0xf]
        %v4850 = vld [vmem:[#allocation3 + $0x38] sm:$0xf]
        %v4851 = vld [vmem:[#allocation3 + $0x4] sm:$0x1]
        %v4852 = vld [vmem:[#allocation3 + $0xc] sm:$0x1]
        %v4853 = vld [vmem:[#allocation3 + $0x14] sm:$0x1]
        %v4854 = vld [vmem:[#allocation3 + $0x1c] sm:$0x1]
        %v4855 = vld [vmem:[#allocation3 + $0x24] sm:$0x1]
        %v4856 = vld [vmem:[#allocation3 + $0x2c] sm:$0x1]
        %v4857 = vld [vmem:[#allocation3 + $0x34] sm:$0x1]
        %v4858 = vld [vmem:[#allocation3 + $0x3c] sm:$0x1]
        %v4859 = vld [vmem:[#allocation3] sm:$0xe]
        %v4860 = vld [vmem:[#allocation3 + $0x8] sm:$0xe]
        %v4861 = vld [vmem:[#allocation3 + $0x10] sm:$0xe]
        %v4862 = vld [vmem:[#allocation3 + $0x18] sm:$0xe]
        %v4863 = vld [vmem:[#allocation3 + $0x20] sm:$0xe]
        %v4864 = vld [vmem:[#allocation3 + $0x28] sm:$0xe]
        %v4865 = vld [vmem:[#allocation3 + $0x30] sm:$0xe]
        %v4866 = vld [vmem:[#allocation3 + $0x38] sm:$0xe]
        %v4867 = vld [vmem:[%s4184] sm:$0xf]
        %v4868 = vld [vmem:[%s4184 + $0x8] sm:$0xf]
        %v4869 = vld [vmem:[%s4184 + $0x10] sm:$0xf]
        %v4870 = vld [vmem:[%s4184 + $0x18] sm:$0xf]
        %v4871 = vld [vmem:[%s4184 + $0x20] sm:$0xf]
        %v4872 = vld [vmem:[%s4184 + $0x28] sm:$0xf]
        %v4873 = vld [vmem:[%s4184 + $0x30] sm:$0xf]
        %v4874 = vld [vmem:[%s4184 + $0x38] sm:$0xf]
        %v4875 = vld [vmem:[%s4184 + $0x4] sm:$0x1]
        %v4876 = vld [vmem:[%s4184 + $0xc] sm:$0x1]
        %v4877 = vld [vmem:[%s4184 + $0x14] sm:$0x1]
        %v4878 = vld [vmem:[%s4184 + $0x1c] sm:$0x1]
        %v4879 = vld [vmem:[%s4184 + $0x24] sm:$0x1]
        %v4880 = vld [vmem:[%s4184 + $0x2c] sm:$0x1]
        %v4881 = vld [vmem:[%s4184 + $0x34] sm:$0x1]
        %v4882 = vld [vmem:[%s4184 + $0x3c] sm:$0x1]
        %v4883 = vld [vmem:[%s4184] sm:$0xe]
        %v4884 = vld [vmem:[%s4184 + $0x8] sm:$0xe]
        %v4885 = vld [vmem:[%s4184 + $0x10] sm:$0xe]
        %v4886 = vld [vmem:[%s4184 + $0x18] sm:$0xe]
        %v4887 = vld [vmem:[%s4184 + $0x20] sm:$0xe]
        %v4888 = vld [vmem:[%s4184 + $0x28] sm:$0xe]
        %v4889 = vld [vmem:[%s4184 + $0x30] sm:$0xe]
        %v4890 = vld [vmem:[%s4184 + $0x38] sm:$0xe]
        %s4891 = scalar_lea.vmem [#allocation3], 16
        %v4892 = vld [vmem:[%s4891] sm:$0xf]
        %v4893 = vld [vmem:[%s4891 + $0x8] sm:$0xf]
        %v4894 = vld [vmem:[%s4891 + $0x10] sm:$0xf]
        %v4895 = vld [vmem:[%s4891 + $0x18] sm:$0xf]
        %v4896 = vld [vmem:[%s4891 + $0x20] sm:$0xf]
        %v4897 = vld [vmem:[%s4891 + $0x28] sm:$0xf]
        %v4898 = vld [vmem:[%s4891 + $0x30] sm:$0xf]
        %v4899 = vld [vmem:[%s4891 + $0x38] sm:$0xf]
        %v4900 = vld [vmem:[%s4891 + $0x4] sm:$0x1]
        %v4901 = vld [vmem:[%s4891 + $0xc] sm:$0x1]
        %v4902 = vld [vmem:[%s4891 + $0x14] sm:$0x1]
        %v4903 = vld [vmem:[%s4891 + $0x1c] sm:$0x1]
        %v4904 = vld [vmem:[%s4891 + $0x24] sm:$0x1]
        %v4905 = vld [vmem:[%s4891 + $0x2c] sm:$0x1]
        %v4906 = vld [vmem:[%s4891 + $0x34] sm:$0x1]
        %v4907 = vld [vmem:[%s4891 + $0x3c] sm:$0x1]
        %v4908 = vld [vmem:[%s4891] sm:$0xe]
        %v4909 = vld [vmem:[%s4891 + $0x8] sm:$0xe]
        %v4910 = vld [vmem:[%s4891 + $0x10] sm:$0xe]
        %v4911 = vld [vmem:[%s4891 + $0x18] sm:$0xe]
        %v4912 = vld [vmem:[%s4891 + $0x20] sm:$0xe]
        %v4913 = vld [vmem:[%s4891 + $0x28] sm:$0xe]
        %v4914 = vld [vmem:[%s4891 + $0x30] sm:$0xe]
        %v4915 = vld [vmem:[%s4891 + $0x38] sm:$0xe]
        %v4932 = vunpack.c.l.b16 %v4843
        %v4933 = vunpack.c.l.b16 %v4851
        %v4934 = vunpack.c.l.b16 %v4844
        %v4935 = vunpack.c.l.b16 %v4852
        %v4936 = vunpack.c.l.b16 %v4845
        %v4937 = vunpack.c.l.b16 %v4853
        %v4938 = vunpack.c.l.b16 %v4846
        %v4939 = vunpack.c.l.b16 %v4854
        %v4940 = vunpack.c.l.b16 %v4847
        %v4941 = vunpack.c.l.b16 %v4855
        %v4942 = vunpack.c.l.b16 %v4848
        %v4943 = vunpack.c.l.b16 %v4856
        %v4944 = vunpack.c.l.b16 %v4849
        %v4945 = vunpack.c.l.b16 %v4857
        %v4946 = vunpack.c.l.b16 %v4850
        %v4947 = vunpack.c.l.b16 %v4858
        %v4948 = vpack.c.b16 %v4933, %v4932
        %v4949 = vpack.c.b16 %v4935, %v4934
        %v4950 = vpack.c.b16 %v4937, %v4936
        %v4951 = vpack.c.b16 %v4939, %v4938
        %v4952 = vpack.c.b16 %v4941, %v4940
        %v4953 = vpack.c.b16 %v4943, %v4942
        %v4954 = vpack.c.b16 %v4945, %v4944
        %v4955 = vpack.c.b16 %v4947, %v4946
        %v4957 = vshrl.u32 %v4948, 16
        %v4959 = vshll.u32 %v4948, 16
        %v4961 = vrot.slane %v4959, 1
        %v4962 = vor.u32 %v4957, %v4961
        %v4964 = vshrl.u32 %v4949, 16
        %v4966 = vshll.u32 %v4949, 16
        %v4968 = vrot.slane %v4966, 1
        %v4969 = vor.u32 %v4964, %v4968
        %v4971 = vshrl.u32 %v4950, 16
        %v4973 = vshll.u32 %v4950, 16
        %v4975 = vrot.slane %v4973, 1
        %v4976 = vor.u32 %v4971, %v4975
        %v4978 = vshrl.u32 %v4951, 16
        %v4980 = vshll.u32 %v4951, 16
        %v4982 = vrot.slane %v4980, 1
        %v4983 = vor.u32 %v4978, %v4982
        %v4985 = vshrl.u32 %v4952, 16
        %v4987 = vshll.u32 %v4952, 16
        %v4989 = vrot.slane %v4987, 1
        %v4990 = vor.u32 %v4985, %v4989
        %v4992 = vshrl.u32 %v4953, 16
        %v4994 = vshll.u32 %v4953, 16
        %v4996 = vrot.slane %v4994, 1
        %v4997 = vor.u32 %v4992, %v4996
        %v4999 = vshrl.u32 %v4954, 16
        %v5001 = vshll.u32 %v4954, 16
        %v5003 = vrot.slane %v5001, 1
        %v5004 = vor.u32 %v4999, %v5003
        %v5006 = vshrl.u32 %v4955, 16
        %v5008 = vshll.u32 %v4955, 16
        %v5010 = vrot.slane %v5008, 1
        %v5011 = vor.u32 %v5006, %v5010
        %5012 = vrot.lane.b32.xlu0 %v4962, 64
        %v5013 = vpop.permute.xlu0 %5012
        %5014 = vrot.lane.b32.xlu0 %v4969, 64
        %v5015 = vpop.permute.xlu0 %5014
        %5016 = vrot.lane.b32.xlu0 %v4976, 64
        %v5017 = vpop.permute.xlu0 %5016
        %5018 = vrot.lane.b32.xlu0 %v4983, 64
        %v5019 = vpop.permute.xlu0 %5018
        %5020 = vrot.lane.b32.xlu0 %v4990, 64
        %v5021 = vpop.permute.xlu0 %5020
        %5022 = vrot.lane.b32.xlu0 %v4997, 64
        %v5023 = vpop.permute.xlu0 %5022
        %5024 = vrot.lane.b32.xlu0 %v5004, 64
        %v5025 = vpop.permute.xlu0 %5024
        %5026 = vrot.lane.b32.xlu0 %v5011, 64
        %v5027 = vpop.permute.xlu0 %5026
        %v5036 = vunpack.c.l.b16 %v4859
        %v5037 = vunpack.c.l.b16 %v4860
        %v5038 = vunpack.c.l.b16 %v4861
        %v5039 = vunpack.c.l.b16 %v4862
        %v5040 = vunpack.c.l.b16 %v4863
        %v5041 = vunpack.c.l.b16 %v4864
        %v5042 = vunpack.c.l.b16 %v4865
        %v5043 = vunpack.c.l.b16 %v4866
        %v5044 = vpack.c.b16 %v4933, %v5036
        %v5045 = vpack.c.b16 %v4935, %v5037
        %v5046 = vpack.c.b16 %v4937, %v5038
        %v5047 = vpack.c.b16 %v4939, %v5039
        %v5048 = vpack.c.b16 %v4941, %v5040
        %v5049 = vpack.c.b16 %v4943, %v5041
        %v5050 = vpack.c.b16 %v4945, %v5042
        %v5051 = vpack.c.b16 %v4947, %v5043
        %v5052 = vrot.slane %v5044, 1
        %v5053 = vrot.slane %v5045, 1
        %v5054 = vrot.slane %v5046, 1
        %v5055 = vrot.slane %v5047, 1
        %v5056 = vrot.slane %v5048, 1
        %v5057 = vrot.slane %v5049, 1
        %v5058 = vrot.slane %v5050, 1
        %v5059 = vrot.slane %v5051, 1
        %v5068 = vunpack.c.l.b16 %v4867
        %v5069 = vunpack.c.l.b16 %v4868
        %v5070 = vunpack.c.l.b16 %v4869
        %v5071 = vunpack.c.l.b16 %v4870
        %v5072 = vunpack.c.l.b16 %v4871
        %v5073 = vunpack.c.l.b16 %v4872
        %v5074 = vunpack.c.l.b16 %v4873
        %v5075 = vunpack.c.l.b16 %v4874
        %v5076 = vpack.c.b16 %v5068, %v5068
        %v5077 = vpack.c.b16 %v5069, %v5069
        %v5078 = vpack.c.b16 %v5070, %v5070
        %v5079 = vpack.c.b16 %v5071, %v5071
        %v5080 = vpack.c.b16 %v5072, %v5072
        %v5081 = vpack.c.b16 %v5073, %v5073
        %v5082 = vpack.c.b16 %v5074, %v5074
        %v5083 = vpack.c.b16 %v5075, %v5075
        %5084 = vrot.lane.b32.xlu0 %v5076, 64
        %v5085 = vpop.permute.xlu0 %5084
        %5086 = vrot.lane.b32.xlu0 %v5077, 64
        %v5087 = vpop.permute.xlu0 %5086
        %5088 = vrot.lane.b32.xlu0 %v5078, 64
        %v5089 = vpop.permute.xlu0 %5088
        %5090 = vrot.lane.b32.xlu0 %v5079, 64
        %v5091 = vpop.permute.xlu0 %5090
        %5092 = vrot.lane.b32.xlu0 %v5080, 64
        %v5093 = vpop.permute.xlu0 %5092
        %5094 = vrot.lane.b32.xlu0 %v5081, 64
        %v5095 = vpop.permute.xlu0 %5094
        %5096 = vrot.lane.b32.xlu0 %v5082, 64
        %v5097 = vpop.permute.xlu0 %5096
        %5098 = vrot.lane.b32.xlu0 %v5083, 64
        %v5099 = vpop.permute.xlu0 %5098
        %v5108 = vunpack.c.l.b16 %v4875
        %v5109 = vunpack.c.l.b16 %v4876
        %v5110 = vunpack.c.l.b16 %v4877
        %v5111 = vunpack.c.l.b16 %v4878
        %v5112 = vunpack.c.l.b16 %v4879
        %v5113 = vunpack.c.l.b16 %v4880
        %v5114 = vunpack.c.l.b16 %v4881
        %v5115 = vunpack.c.l.b16 %v4882
        %v5116 = vpack.c.b16 %v5108, %v5068
        %v5117 = vpack.c.b16 %v5109, %v5069
        %v5118 = vpack.c.b16 %v5110, %v5070
        %v5119 = vpack.c.b16 %v5111, %v5071
        %v5120 = vpack.c.b16 %v5112, %v5072
        %v5121 = vpack.c.b16 %v5113, %v5073
        %v5122 = vpack.c.b16 %v5114, %v5074
        %v5123 = vpack.c.b16 %v5115, %v5075
        %v5125 = vshrl.u32 %v5116, 16
        %v5127 = vshll.u32 %v5116, 16
        %v5129 = vrot.slane %v5127, 1
        %v5130 = vor.u32 %v5125, %v5129
        %v5132 = vshrl.u32 %v5117, 16
        %v5134 = vshll.u32 %v5117, 16
        %v5136 = vrot.slane %v5134, 1
        %v5137 = vor.u32 %v5132, %v5136
        %v5139 = vshrl.u32 %v5118, 16
        %v5141 = vshll.u32 %v5118, 16
        %v5143 = vrot.slane %v5141, 1
        %v5144 = vor.u32 %v5139, %v5143
        %v5146 = vshrl.u32 %v5119, 16
        %v5148 = vshll.u32 %v5119, 16
        %v5150 = vrot.slane %v5148, 1
        %v5151 = vor.u32 %v5146, %v5150
        %v5153 = vshrl.u32 %v5120, 16
        %v5155 = vshll.u32 %v5120, 16
        %v5157 = vrot.slane %v5155, 1
        %v5158 = vor.u32 %v5153, %v5157
        %v5160 = vshrl.u32 %v5121, 16
        %v5162 = vshll.u32 %v5121, 16
        %v5164 = vrot.slane %v5162, 1
        %v5165 = vor.u32 %v5160, %v5164
        %v5167 = vshrl.u32 %v5122, 16
        %v5169 = vshll.u32 %v5122, 16
        %v5171 = vrot.slane %v5169, 1
        %v5172 = vor.u32 %v5167, %v5171
        %v5174 = vshrl.u32 %v5123, 16
        %v5176 = vshll.u32 %v5123, 16
        %v5178 = vrot.slane %v5176, 1
        %v5179 = vor.u32 %v5174, %v5178
        %v5188 = vunpack.c.l.b16 %v4883
        %v5189 = vunpack.c.l.b16 %v4884
        %v5190 = vunpack.c.l.b16 %v4885
        %v5191 = vunpack.c.l.b16 %v4886
        %v5192 = vunpack.c.l.b16 %v4887
        %v5193 = vunpack.c.l.b16 %v4888
        %v5194 = vunpack.c.l.b16 %v4889
        %v5195 = vunpack.c.l.b16 %v4890
        %v5196 = vpack.c.b16 %v5108, %v5188
        %v5197 = vpack.c.b16 %v5109, %v5189
        %v5198 = vpack.c.b16 %v5110, %v5190
        %v5199 = vpack.c.b16 %v5111, %v5191
        %v5200 = vpack.c.b16 %v5112, %v5192
        %v5201 = vpack.c.b16 %v5113, %v5193
        %v5202 = vpack.c.b16 %v5114, %v5194
        %v5203 = vpack.c.b16 %v5115, %v5195
        %v5204 = vrot.slane %v5196, 1
        %v5205 = vrot.slane %v5197, 1
        %v5206 = vrot.slane %v5198, 1
        %v5207 = vrot.slane %v5199, 1
        %v5208 = vrot.slane %v5200, 1
        %v5209 = vrot.slane %v5201, 1
        %v5210 = vrot.slane %v5202, 1
        %v5211 = vrot.slane %v5203, 1
        %5212 = vrot.lane.b32.xlu0 %v5204, 64
        %v5213 = vpop.permute.xlu0 %5212
        %5214 = vrot.lane.b32.xlu0 %v5205, 64
        %v5215 = vpop.permute.xlu0 %5214
        %5216 = vrot.lane.b32.xlu0 %v5206, 64
        %v5217 = vpop.permute.xlu0 %5216
        %5218 = vrot.lane.b32.xlu0 %v5207, 64
        %v5219 = vpop.permute.xlu0 %5218
        %5220 = vrot.lane.b32.xlu0 %v5208, 64
        %v5221 = vpop.permute.xlu0 %5220
        %5222 = vrot.lane.b32.xlu0 %v5209, 64
        %v5223 = vpop.permute.xlu0 %5222
        %5224 = vrot.lane.b32.xlu0 %v5210, 64
        %v5225 = vpop.permute.xlu0 %5224
        %5226 = vrot.lane.b32.xlu0 %v5211, 64
        %v5227 = vpop.permute.xlu0 %5226
        %v5244 = vunpack.c.l.b16 %v4892
        %v5245 = vunpack.c.l.b16 %v4900
        %v5246 = vunpack.c.l.b16 %v4893
        %v5247 = vunpack.c.l.b16 %v4901
        %v5248 = vunpack.c.l.b16 %v4894
        %v5249 = vunpack.c.l.b16 %v4902
        %v5250 = vunpack.c.l.b16 %v4895
        %v5251 = vunpack.c.l.b16 %v4903
        %v5252 = vunpack.c.l.b16 %v4896
        %v5253 = vunpack.c.l.b16 %v4904
        %v5254 = vunpack.c.l.b16 %v4897
        %v5255 = vunpack.c.l.b16 %v4905
        %v5256 = vunpack.c.l.b16 %v4898
        %v5257 = vunpack.c.l.b16 %v4906
        %v5258 = vunpack.c.l.b16 %v4899
        %v5259 = vunpack.c.l.b16 %v4907
        %v5260 = vpack.c.b16 %v5245, %v5244
        %v5261 = vpack.c.b16 %v5247, %v5246
        %v5262 = vpack.c.b16 %v5249, %v5248
        %v5263 = vpack.c.b16 %v5251, %v5250
        %v5264 = vpack.c.b16 %v5253, %v5252
        %v5265 = vpack.c.b16 %v5255, %v5254
        %v5266 = vpack.c.b16 %v5257, %v5256
        %v5267 = vpack.c.b16 %v5259, %v5258
        %v5269 = vshrl.u32 %v5260, 16
        %v5271 = vshll.u32 %v5260, 16
        %v5273 = vrot.slane %v5271, 1
        %v5274 = vor.u32 %v5269, %v5273
        %v5276 = vshrl.u32 %v5261, 16
        %v5278 = vshll.u32 %v5261, 16
        %v5280 = vrot.slane %v5278, 1
        %v5281 = vor.u32 %v5276, %v5280
        %v5283 = vshrl.u32 %v5262, 16
        %v5285 = vshll.u32 %v5262, 16
        %v5287 = vrot.slane %v5285, 1
        %v5288 = vor.u32 %v5283, %v5287
        %v5290 = vshrl.u32 %v5263, 16
        %v5292 = vshll.u32 %v5263, 16
        %v5294 = vrot.slane %v5292, 1
        %v5295 = vor.u32 %v5290, %v5294
        %v5297 = vshrl.u32 %v5264, 16
        %v5299 = vshll.u32 %v5264, 16
        %v5301 = vrot.slane %v5299, 1
        %v5302 = vor.u32 %v5297, %v5301
        %v5304 = vshrl.u32 %v5265, 16
        %v5306 = vshll.u32 %v5265, 16
        %v5308 = vrot.slane %v5306, 1
        %v5309 = vor.u32 %v5304, %v5308
        %v5311 = vshrl.u32 %v5266, 16
        %v5313 = vshll.u32 %v5266, 16
        %v5315 = vrot.slane %v5313, 1
        %v5316 = vor.u32 %v5311, %v5315
        %v5318 = vshrl.u32 %v5267, 16
        %v5320 = vshll.u32 %v5267, 16
        %v5322 = vrot.slane %v5320, 1
        %v5323 = vor.u32 %v5318, %v5322
        %5324 = vrot.lane.b32.xlu0 %v5274, 64
        %v5325 = vpop.permute.xlu0 %5324
        %5326 = vrot.lane.b32.xlu0 %v5281, 64
        %v5327 = vpop.permute.xlu0 %5326
        %5328 = vrot.lane.b32.xlu0 %v5288, 64
        %v5329 = vpop.permute.xlu0 %5328
        %5330 = vrot.lane.b32.xlu0 %v5295, 64
        %v5331 = vpop.permute.xlu0 %5330
        %5332 = vrot.lane.b32.xlu0 %v5302, 64
        %v5333 = vpop.permute.xlu0 %5332
        %5334 = vrot.lane.b32.xlu0 %v5309, 64
        %v5335 = vpop.permute.xlu0 %5334
        %5336 = vrot.lane.b32.xlu0 %v5316, 64
        %v5337 = vpop.permute.xlu0 %5336
        %5338 = vrot.lane.b32.xlu0 %v5323, 64
        %v5339 = vpop.permute.xlu0 %5338
        %v5348 = vunpack.c.l.b16 %v4908
        %v5349 = vunpack.c.l.b16 %v4909
        %v5350 = vunpack.c.l.b16 %v4910
        %v5351 = vunpack.c.l.b16 %v4911
        %v5352 = vunpack.c.l.b16 %v4912
        %v5353 = vunpack.c.l.b16 %v4913
        %v5354 = vunpack.c.l.b16 %v4914
        %v5355 = vunpack.c.l.b16 %v4915
        %v5356 = vpack.c.b16 %v5245, %v5348
        %v5357 = vpack.c.b16 %v5247, %v5349
        %v5358 = vpack.c.b16 %v5249, %v5350
        %v5359 = vpack.c.b16 %v5251, %v5351
        %v5360 = vpack.c.b16 %v5253, %v5352
        %v5361 = vpack.c.b16 %v5255, %v5353
        %v5362 = vpack.c.b16 %v5257, %v5354
        %v5363 = vpack.c.b16 %v5259, %v5355
        %v5364 = vrot.slane %v5356, 1
        %v5365 = vrot.slane %v5357, 1
        %v5366 = vrot.slane %v5358, 1
        %v5367 = vrot.slane %v5359, 1
        %v5368 = vrot.slane %v5360, 1
        %v5369 = vrot.slane %v5361, 1
        %v5370 = vrot.slane %v5362, 1
        %v5371 = vrot.slane %v5363, 1
        %v5374 = vsel %vm3270, %v4843, %v5013
        %v5377 = vsel %vm3270, %v4844, %v5015
        %v5380 = vsel %vm3270, %v4845, %v5017
        %v5383 = vsel %vm3270, %v4846, %v5019
        %v5386 = vsel %vm3270, %v4847, %v5021
        %v5389 = vsel %vm3270, %v4848, %v5023
        %v5392 = vsel %vm3270, %v4849, %v5025
        %v5395 = vsel %vm3270, %v4850, %v5027
        %v5398 = vsel %vm3270, %v5052, %v5085
        %v5401 = vsel %vm3270, %v5053, %v5087
        %v5404 = vsel %vm3270, %v5054, %v5089
        %v5407 = vsel %vm3270, %v5055, %v5091
        %v5410 = vsel %vm3270, %v5056, %v5093
        %v5413 = vsel %vm3270, %v5057, %v5095
        %v5416 = vsel %vm3270, %v5058, %v5097
        %v5419 = vsel %vm3270, %v5059, %v5099
        %v5422 = vsel %vm3270, %v5130, %v5213
        %v5425 = vsel %vm3270, %v5137, %v5215
        %v5428 = vsel %vm3270, %v5144, %v5217
        %v5431 = vsel %vm3270, %v5151, %v5219
        %v5434 = vsel %vm3270, %v5158, %v5221
        %v5437 = vsel %vm3270, %v5165, %v5223
        %v5440 = vsel %vm3270, %v5172, %v5225
        %v5443 = vsel %vm3270, %v5179, %v5227
        %v5446 = vsel %vm3270, %v4892, %v5325
        %v5449 = vsel %vm3270, %v4893, %v5327
        %v5452 = vsel %vm3270, %v4894, %v5329
        %v5455 = vsel %vm3270, %v4895, %v5331
        %v5458 = vsel %vm3270, %v4896, %v5333
        %v5461 = vsel %vm3270, %v4897, %v5335
        %v5464 = vsel %vm3270, %v4898, %v5337
        %v5467 = vsel %vm3270, %v4899, %v5339
        %v5500 = vunpack.c.l.b16 %v5374
        %v5501 = vunpack.c.l.b16 %v5398
        %v5502 = vunpack.c.l.b16 %v5422
        %v5503 = vunpack.c.l.b16 %v5446
        %v5504 = vunpack.c.l.b16 %v5364
        %v5505 = vunpack.c.l.b16 %v5377
        %v5506 = vunpack.c.l.b16 %v5401
        %v5507 = vunpack.c.l.b16 %v5425
        %v5508 = vunpack.c.l.b16 %v5449
        %v5509 = vunpack.c.l.b16 %v5365
        %v5510 = vunpack.c.l.b16 %v5380
        %v5511 = vunpack.c.l.b16 %v5404
        %v5512 = vunpack.c.l.b16 %v5428
        %v5513 = vunpack.c.l.b16 %v5452
        %v5514 = vunpack.c.l.b16 %v5366
        %v5515 = vunpack.c.l.b16 %v5383
        %v5516 = vunpack.c.l.b16 %v5407
        %v5517 = vunpack.c.l.b16 %v5431
        %v5518 = vunpack.c.l.b16 %v5455
        %v5519 = vunpack.c.l.b16 %v5367
        %v5520 = vunpack.c.l.b16 %v5386
        %v5521 = vunpack.c.l.b16 %v5410
        %v5522 = vunpack.c.l.b16 %v5434
        %v5523 = vunpack.c.l.b16 %v5458
        %v5524 = vunpack.c.l.b16 %v5368
        %v5525 = vunpack.c.l.b16 %v5389
        %v5526 = vunpack.c.l.b16 %v5413
        %v5527 = vunpack.c.l.b16 %v5437
        %v5528 = vunpack.c.l.b16 %v5461
        %v5529 = vunpack.c.l.b16 %v5369
        %v5530 = vunpack.c.l.b16 %v5392
        %v5531 = vunpack.c.l.b16 %v5416
        %v5532 = vunpack.c.l.b16 %v5440
        %v5533 = vunpack.c.l.b16 %v5464
        %v5534 = vunpack.c.l.b16 %v5370
        %v5535 = vunpack.c.l.b16 %v5395
        %v5536 = vunpack.c.l.b16 %v5419
        %v5537 = vunpack.c.l.b16 %v5443
        %v5538 = vunpack.c.l.b16 %v5467
        %v5539 = vunpack.c.l.b16 %v5371
        %v5540 = vld [vmem:[%s5] sm:$0xf]
        %v5541 = vld [vmem:[%s5 + $0x4] sm:$0xf]
        %v5542 = vld [vmem:[%s5 + $0x8] sm:$0xf]
        %v5543 = vld [vmem:[%s5 + $0xc] sm:$0xf]
        %v5544 = vld [vmem:[%s5 + $0x10] sm:$0xf]
        %v5545 = vld [vmem:[%s5 + $0x14] sm:$0xf]
        %v5546 = vld [vmem:[%s5 + $0x18] sm:$0xf]
        %v5547 = vld [vmem:[%s5 + $0x1c] sm:$0xf]
        %v5548 = vld [vmem:[%s5 + $0x20] sm:$0xf]
        %v5549 = vld [vmem:[%s5 + $0x24] sm:$0xf]
        %v5550 = vld [vmem:[%s5 + $0x28] sm:$0xf]
        %v5551 = vld [vmem:[%s5 + $0x2c] sm:$0xf]
        %v5552 = vld [vmem:[%s5 + $0x30] sm:$0xf]
        %v5553 = vld [vmem:[%s5 + $0x34] sm:$0xf]
        %v5554 = vld [vmem:[%s5 + $0x38] sm:$0xf]
        %v5555 = vld [vmem:[%s5 + $0x3c] sm:$0xf]
        %v5556 = vld [vmem:[%s5 + $0x40] sm:$0xf]
        %v5557 = vld [vmem:[%s5 + $0x44] sm:$0xf]
        %v5558 = vld [vmem:[%s5 + $0x48] sm:$0xf]
        %v5559 = vld [vmem:[%s5 + $0x4c] sm:$0xf]
        %v5560 = vld [vmem:[%s5 + $0x50] sm:$0xf]
        %v5561 = vld [vmem:[%s5 + $0x54] sm:$0xf]
        %v5562 = vld [vmem:[%s5 + $0x58] sm:$0xf]
        %v5563 = vld [vmem:[%s5 + $0x5c] sm:$0xf]
        %v5564 = vld [vmem:[%s5 + $0x60] sm:$0xf]
        %v5565 = vld [vmem:[%s5 + $0x64] sm:$0xf]
        %v5566 = vld [vmem:[%s5 + $0x68] sm:$0xf]
        %v5567 = vld [vmem:[%s5 + $0x6c] sm:$0xf]
        %v5568 = vld [vmem:[%s5 + $0x70] sm:$0xf]
        %v5569 = vld [vmem:[%s5 + $0x74] sm:$0xf]
        %v5570 = vld [vmem:[%s5 + $0x78] sm:$0xf]
        %v5571 = vld [vmem:[%s5 + $0x7c] sm:$0xf]
        %v5572 = vld [vmem:[%s5 + $0x80] sm:$0xf]
        %v5573 = vld [vmem:[%s5 + $0x84] sm:$0xf]
        %v5574 = vld [vmem:[%s5 + $0x88] sm:$0xf]
        %v5575 = vld [vmem:[%s5 + $0x8c] sm:$0xf]
        %v5576 = vld [vmem:[%s5 + $0x90] sm:$0xf]
        %v5577 = vld [vmem:[%s5 + $0x94] sm:$0xf]
        %v5578 = vld [vmem:[%s5 + $0x98] sm:$0xf]
        %v5579 = vld [vmem:[%s5 + $0x9c] sm:$0xf]
        %v5580 = vld [vmem:[%s5 + $0xa0] sm:$0xf]
        %v5581 = vld [vmem:[%s5 + $0xa4] sm:$0xf]
        %v5582 = vld [vmem:[%s5 + $0xa8] sm:$0xf]
        %v5583 = vld [vmem:[%s5 + $0xac] sm:$0xf]
        %v5584 = vld [vmem:[%s5 + $0xb0] sm:$0xf]
        %v5585 = vld [vmem:[%s5 + $0xb4] sm:$0xf]
        %v5586 = vld [vmem:[%s5 + $0xb8] sm:$0xf]
        %v5587 = vld [vmem:[%s5 + $0xbc] sm:$0xf]
        %v5588 = vld [vmem:[%s5 + $0xc0] sm:$0xf]
        %v5589 = vld [vmem:[%s5 + $0xc4] sm:$0xf]
        %v5590 = vld [vmem:[%s5 + $0xc8] sm:$0xf]
        %v5591 = vld [vmem:[%s5 + $0xcc] sm:$0xf]
        %v5592 = vld [vmem:[%s5 + $0xd0] sm:$0xf]
        %v5593 = vld [vmem:[%s5 + $0xd4] sm:$0xf]
        %v5594 = vld [vmem:[%s5 + $0xd8] sm:$0xf]
        %v5595 = vld [vmem:[%s5 + $0xdc] sm:$0xf]
        %v5596 = vld [vmem:[%s5 + $0xe0] sm:$0xf]
        %v5597 = vld [vmem:[%s5 + $0xe4] sm:$0xf]
        %v5598 = vld [vmem:[%s5 + $0xe8] sm:$0xf]
        %v5599 = vld [vmem:[%s5 + $0xec] sm:$0xf]
        %v5600 = vld [vmem:[%s5 + $0xf0] sm:$0xf]
        %v5601 = vld [vmem:[%s5 + $0xf4] sm:$0xf]
        %v5602 = vld [vmem:[%s5 + $0xf8] sm:$0xf]
        %v5603 = vld [vmem:[%s5 + $0xfc] sm:$0xf]
        %v5604 = vld [vmem:[%s5 + $0x100] sm:$0xf]
        %v5605 = vld [vmem:[%s5 + $0x104] sm:$0xf]
        %v5606 = vld [vmem:[%s5 + $0x108] sm:$0xf]
        %v5607 = vld [vmem:[%s5 + $0x10c] sm:$0xf]
        %v5608 = vld [vmem:[%s5 + $0x110] sm:$0xf]
        %v5609 = vld [vmem:[%s5 + $0x114] sm:$0xf]
        %v5610 = vld [vmem:[%s5 + $0x118] sm:$0xf]
        %v5611 = vld [vmem:[%s5 + $0x11c] sm:$0xf]
        %v5612 = vld [vmem:[%s6] sm:$0x1]
        %v5614 = vlaneseq
        %v5615 = vshrl.u32 %v5614, 7
        %v5616 = vsub.s32 0, %v5615
        %v5617 = vrot.slane %v5612, %v5616
        %v5619 = vpack.c.b16 %v5505, %v5500
        %v5620 = vpack.c.b16 %v5506, %v5501
        %v5621 = vpack.c.b16 %v5507, %v5502
        %v5622 = vpack.c.b16 %v5508, %v5503
        %v5623 = vpack.c.b16 %v5509, %v5504
        %v5624 = vpack.c.b16 %v5515, %v5510
        %v5625 = vpack.c.b16 %v5516, %v5511
        %v5626 = vpack.c.b16 %v5517, %v5512
        %v5627 = vpack.c.b16 %v5518, %v5513
        %v5628 = vpack.c.b16 %v5519, %v5514
        %v5629 = vpack.c.b16 %v5525, %v5520
        %v5630 = vpack.c.b16 %v5526, %v5521
        %v5631 = vpack.c.b16 %v5527, %v5522
        %v5632 = vpack.c.b16 %v5528, %v5523
        %v5633 = vpack.c.b16 %v5529, %v5524
        %v5634 = vpack.c.b16 %v5535, %v5530
        %v5635 = vpack.c.b16 %v5536, %v5531
        %v5636 = vpack.c.b16 %v5537, %v5532
        %v5637 = vpack.c.b16 %v5538, %v5533
        %v5638 = vpack.c.b16 %v5539, %v5534
        %v5727 = vunpack.c.l.b16 %v5540
        %v5728 = vunpack.c.l.b16 %v5541
        %v5729 = vunpack.c.l.b16 %v5542
        %v5730 = vunpack.c.l.b16 %v5543
        %v5731 = vunpack.c.l.b16 %v5544
        %v5732 = vunpack.c.l.b16 %v5545
        %v5733 = vunpack.c.l.b16 %v5546
        %v5734 = vunpack.c.l.b16 %v5547
        %v5735 = vunpack.c.l.b16 %v5548
        %v5736 = vunpack.c.l.b16 %v5549
        %v5737 = vunpack.c.l.b16 %v5550
        %v5738 = vunpack.c.l.b16 %v5551
        %v5739 = vunpack.c.l.b16 %v5552
        %v5740 = vunpack.c.l.b16 %v5553
        %v5741 = vunpack.c.l.b16 %v5554
        %v5742 = vunpack.c.l.b16 %v5555
        %v5743 = vunpack.c.l.b16 %v5556
        %v5744 = vunpack.c.l.b16 %v5557
        %v5745 = vunpack.c.l.b16 %v5558
        %v5746 = vunpack.c.l.b16 %v5559
        %v5747 = vunpack.c.l.b16 %v5560
        %v5748 = vunpack.c.l.b16 %v5561
        %v5749 = vunpack.c.l.b16 %v5562
        %v5750 = vunpack.c.l.b16 %v5563
        %v5751 = vunpack.c.l.b16 %v5564
        %v5752 = vunpack.c.l.b16 %v5565
        %v5753 = vunpack.c.l.b16 %v5566
        %v5754 = vunpack.c.l.b16 %v5567
        %v5755 = vunpack.c.l.b16 %v5568
        %v5756 = vunpack.c.l.b16 %v5569
        %v5757 = vunpack.c.l.b16 %v5570
        %v5758 = vunpack.c.l.b16 %v5571
        %v5759 = vunpack.c.l.b16 %v5572
        %v5760 = vunpack.c.l.b16 %v5573
        %v5761 = vunpack.c.l.b16 %v5574
        %v5762 = vunpack.c.l.b16 %v5575
        %v5763 = vunpack.c.l.b16 %v5576
        %v5764 = vunpack.c.l.b16 %v5577
        %v5765 = vunpack.c.l.b16 %v5578
        %v5766 = vunpack.c.l.b16 %v5579
        %v5767 = vunpack.c.l.b16 %v5580
        %v5768 = vunpack.c.l.b16 %v5581
        %v5769 = vunpack.c.l.b16 %v5582
        %v5770 = vunpack.c.l.b16 %v5583
        %v5771 = vunpack.c.l.b16 %v5584
        %v5772 = vunpack.c.l.b16 %v5585
        %v5773 = vunpack.c.l.b16 %v5586
        %v5774 = vunpack.c.l.b16 %v5587
        %v5775 = vunpack.c.l.b16 %v5588
        %v5776 = vunpack.c.l.b16 %v5589
        %v5777 = vunpack.c.l.b16 %v5590
        %v5778 = vunpack.c.l.b16 %v5591
        %v5779 = vunpack.c.l.b16 %v5592
        %v5780 = vunpack.c.l.b16 %v5593
        %v5781 = vunpack.c.l.b16 %v5594
        %v5782 = vunpack.c.l.b16 %v5595
        %v5783 = vunpack.c.l.b16 %v5596
        %v5784 = vunpack.c.l.b16 %v5597
        %v5785 = vunpack.c.l.b16 %v5598
        %v5786 = vunpack.c.l.b16 %v5599
        %v5787 = vunpack.c.l.b16 %v5600
        %v5788 = vunpack.c.l.b16 %v5601
        %v5789 = vunpack.c.l.b16 %v5602
        %v5790 = vunpack.c.l.b16 %v5603
        %v5791 = vunpack.c.l.b16 %v5604
        %v5792 = vunpack.c.l.b16 %v5605
        %v5793 = vunpack.c.l.b16 %v5606
        %v5794 = vunpack.c.l.b16 %v5607
        %v5795 = vunpack.c.l.b16 %v5608
        %v5796 = vunpack.c.l.b16 %v5609
        %v5797 = vunpack.c.l.b16 %v5610
        %v5798 = vunpack.c.l.b16 %v5611
        %v5799 = vpack.c.b16 %v5728, %v5727
        %v5800 = vpack.c.b16 %v5730, %v5729
        %v5801 = vpack.c.b16 %v5732, %v5731
        %v5802 = vpack.c.b16 %v5734, %v5733
        %v5803 = vpack.c.b16 %v5736, %v5735
        %v5804 = vpack.c.b16 %v5738, %v5737
        %v5805 = vpack.c.b16 %v5740, %v5739
        %v5806 = vpack.c.b16 %v5742, %v5741
        %v5807 = vpack.c.b16 %v5744, %v5743
        %v5808 = vpack.c.b16 %v5746, %v5745
        %v5809 = vpack.c.b16 %v5748, %v5747
        %v5810 = vpack.c.b16 %v5750, %v5749
        %v5811 = vpack.c.b16 %v5752, %v5751
        %v5812 = vpack.c.b16 %v5754, %v5753
        %v5813 = vpack.c.b16 %v5756, %v5755
        %v5814 = vpack.c.b16 %v5758, %v5757
        %v5815 = vpack.c.b16 %v5760, %v5759
        %v5816 = vpack.c.b16 %v5762, %v5761
        %v5817 = vpack.c.b16 %v5764, %v5763
        %v5818 = vpack.c.b16 %v5766, %v5765
        %v5819 = vpack.c.b16 %v5768, %v5767
        %v5820 = vpack.c.b16 %v5770, %v5769
        %v5821 = vpack.c.b16 %v5772, %v5771
        %v5822 = vpack.c.b16 %v5774, %v5773
        %v5823 = vpack.c.b16 %v5776, %v5775
        %v5824 = vpack.c.b16 %v5778, %v5777
        %v5825 = vpack.c.b16 %v5780, %v5779
        %v5826 = vpack.c.b16 %v5782, %v5781
        %v5827 = vpack.c.b16 %v5784, %v5783
        %v5828 = vpack.c.b16 %v5786, %v5785
        %v5829 = vpack.c.b16 %v5788, %v5787
        %v5830 = vpack.c.b16 %v5790, %v5789
        %v5831 = vpack.c.b16 %v5792, %v5791
        %v5832 = vpack.c.b16 %v5794, %v5793
        %v5833 = vpack.c.b16 %v5796, %v5795
        %v5834 = vpack.c.b16 %v5798, %v5797
        %v5872 = vsel %vm3270, %v5623, 0
        %v5875 = vsel %vm3270, %v5628, 0
        %v5878 = vsel %vm3270, %v5633, 0
        %v5881 = vsel %vm3270, %v5638, 0
        %5883 = vmatprep.subr.bf16.mxu0 0
        %5884 = vmatpush1.bf16.msra.mxu0 %v5806
        %5885 = vmatprep.subr.bf16.mxu0 0
        %5886 = vmatpush1.bf16.msra.mxu0 %v5805
        %5887 = vmatprep.subr.bf16.mxu0 0
        %5888 = vmatpush1.bf16.msra.mxu0 %v5804
        %5889 = vmatprep.subr.bf16.mxu0 0
        %5890 = vmatpush1.bf16.msra.mxu0 %v5803
        %5891 = vmatprep.subr.bf16.mxu0 0
        %5892 = vmatpush1.bf16.msra.mxu0 %v5802
        %5893 = vmatprep.subr.bf16.mxu0 0
        %5894 = vmatpush1.bf16.msra.mxu0 %v5801
        %5895 = vmatprep.subr.bf16.mxu0 0
        %5896 = vmatpush1.bf16.msra.mxu0 %v5800
        %5897 = vmatprep.subr.bf16.mxu0 0
        %5898 = vmatpush1.bf16.msra.mxu0 %v5799
        %5899 = vmatprep.subr.bf16.mxu0 0
        %5900 = vmatpush2.bf16.msra.mxu0 %v5814
        %5901 = vmatprep.subr.bf16.mxu0 0
        %5902 = vmatpush2.bf16.msra.mxu0 %v5813
        %5903 = vmatprep.subr.bf16.mxu0 0
        %5904 = vmatpush2.bf16.msra.mxu0 %v5812
        %5905 = vmatprep.subr.bf16.mxu0 0
        %5906 = vmatpush2.bf16.msra.mxu0 %v5811
        %5907 = vmatprep.subr.bf16.mxu0 0
        %5908 = vmatpush2.bf16.msra.mxu0 %v5810
        %5909 = vmatprep.subr.bf16.mxu0 0
        %5910 = vmatpush2.bf16.msra.mxu0 %v5809
        %5911 = vmatprep.subr.bf16.mxu0 0
        %5912 = vmatpush2.bf16.msra.mxu0 %v5808
        %5913 = vmatprep.subr.bf16.mxu0 0
        %5914 = vmatpush2.bf16.msra.mxu0 %v5807
        %5915 = vmatprep.mubr.bf16.mxu0 %v5620
        %5916 = vmatmul.mubr.bf16.gmra.mxu0 %v5619
        %v5917 = vpop.f32.mrf.mxu0
        %v5918 = vadd.f32 %v5617, %v5917
        %v5919 = vpop.f32.mrf.mxu0
        %v5920 = vpop.f32.mrf.mxu0
        %v5921 = vadd.f32 %v5617, %v5920
        %v5922 = vpop.f32.mrf.mxu0
        %5923 = vmatprep.mubr.bf16.mxu0 %v5625
        %5924 = vmatmul.mubr.bf16.gmra.mxu0 %v5624
        %v5925 = vpop.f32.mrf.mxu0
        %v5926 = vadd.f32 %v5617, %v5925
        %v5927 = vpop.f32.mrf.mxu0
        %v5928 = vpop.f32.mrf.mxu0
        %v5929 = vadd.f32 %v5617, %v5928
        %v5930 = vpop.f32.mrf.mxu0
        %5931 = vmatprep.mubr.bf16.mxu0 %v5630
        %5932 = vmatmul.mubr.bf16.gmra.mxu0 %v5629
        %v5933 = vpop.f32.mrf.mxu0
        %v5934 = vadd.f32 %v5617, %v5933
        %v5935 = vpop.f32.mrf.mxu0
        %v5936 = vpop.f32.mrf.mxu0
        %v5937 = vadd.f32 %v5617, %v5936
        %v5938 = vpop.f32.mrf.mxu0
        %5939 = vmatprep.mubr.bf16.mxu0 %v5635
        %5940 = vmatmul.mubr.bf16.gmra.mxu0 %v5634
        %v5941 = vpop.f32.mrf.mxu0
        %v5942 = vadd.f32 %v5617, %v5941
        %v5943 = vpop.f32.mrf.mxu0
        %v5944 = vpop.f32.mrf.mxu0
        %v5945 = vadd.f32 %v5617, %v5944
        %v5946 = vpop.f32.mrf.mxu0
        %5947 = vdwg.mxu0
        %5948 = vmatprep.subr.bf16.mxu0 0
        %5949 = vmatpush1.bf16.msra.mxu0 %v5822
        %5950 = vmatprep.subr.bf16.mxu0 0
        %5951 = vmatpush1.bf16.msra.mxu0 %v5821
        %5952 = vmatprep.subr.bf16.mxu0 0
        %5953 = vmatpush1.bf16.msra.mxu0 %v5820
        %5954 = vmatprep.subr.bf16.mxu0 0
        %5955 = vmatpush1.bf16.msra.mxu0 %v5819
        %5956 = vmatprep.subr.bf16.mxu0 0
        %5957 = vmatpush1.bf16.msra.mxu0 %v5818
        %5958 = vmatprep.subr.bf16.mxu0 0
        %5959 = vmatpush1.bf16.msra.mxu0 %v5817
        %5960 = vmatprep.subr.bf16.mxu0 0
        %5961 = vmatpush1.bf16.msra.mxu0 %v5816
        %5962 = vmatprep.subr.bf16.mxu0 0
        %5963 = vmatpush1.bf16.msra.mxu0 %v5815
        %5964 = vmatprep.subr.bf16.mxu0 0
        %5965 = vmatpush2.bf16.msra.mxu0 %v5830
        %5966 = vmatprep.subr.bf16.mxu0 0
        %5967 = vmatpush2.bf16.msra.mxu0 %v5829
        %5968 = vmatprep.subr.bf16.mxu0 0
        %5969 = vmatpush2.bf16.msra.mxu0 %v5828
        %5970 = vmatprep.subr.bf16.mxu0 0
        %5971 = vmatpush2.bf16.msra.mxu0 %v5827
        %5972 = vmatprep.subr.bf16.mxu0 0
        %5973 = vmatpush2.bf16.msra.mxu0 %v5826
        %5974 = vmatprep.subr.bf16.mxu0 0
        %5975 = vmatpush2.bf16.msra.mxu0 %v5825
        %5976 = vmatprep.subr.bf16.mxu0 0
        %5977 = vmatpush2.bf16.msra.mxu0 %v5824
        %5978 = vmatprep.subr.bf16.mxu0 0
        %5979 = vmatpush2.bf16.msra.mxu0 %v5823
        %5980 = vmatprep.mubr.bf16.mxu0 %v5622
        %5981 = vmatmul.mubr.bf16.gmra.mxu0 %v5621
        %v5982 = vpop.f32.mrf.mxu0
        %v5983 = vadd.f32 %v5918, %v5982
        %v5984 = vpop.f32.mrf.mxu0
        %v5985 = vpop.f32.mrf.mxu0
        %v5986 = vadd.f32 %v5921, %v5985
        %v5987 = vpop.f32.mrf.mxu0
        %5988 = vmatprep.mubr.bf16.mxu0 %v5627
        %5989 = vmatmul.mubr.bf16.gmra.mxu0 %v5626
        %v5990 = vpop.f32.mrf.mxu0
        %v5991 = vadd.f32 %v5926, %v5990
        %v5992 = vpop.f32.mrf.mxu0
        %v5993 = vpop.f32.mrf.mxu0
        %v5994 = vadd.f32 %v5929, %v5993
        %v5995 = vpop.f32.mrf.mxu0
        %5996 = vmatprep.mubr.bf16.mxu0 %v5632
        %5997 = vmatmul.mubr.bf16.gmra.mxu0 %v5631
        %v5998 = vpop.f32.mrf.mxu0
        %v5999 = vadd.f32 %v5934, %v5998
        %v6000 = vpop.f32.mrf.mxu0
        %v6001 = vpop.f32.mrf.mxu0
        %v6002 = vadd.f32 %v5937, %v6001
        %v6003 = vpop.f32.mrf.mxu0
        %6004 = vmatprep.mubr.bf16.mxu0 %v5637
        %6005 = vmatmul.mubr.bf16.gmra.mxu0 %v5636
        %v6006 = vpop.f32.mrf.mxu0
        %v6007 = vadd.f32 %v5942, %v6006
        %v6008 = vpop.f32.mrf.mxu0
        %v6009 = vpop.f32.mrf.mxu0
        %v6010 = vadd.f32 %v5945, %v6009
        %v6011 = vpop.f32.mrf.mxu0
        %6012 = vdwg.mxu0
        %6013 = vmatprep.subr.bf16.mxu0 0
        %6014 = vmatpush1.bf16.msra.mxu0 0
        %6015 = vmatprep.subr.bf16.mxu0 0
        %6016 = vmatpush1.bf16.msra.mxu0 0
        %6017 = vmatprep.subr.bf16.mxu0 0
        %6018 = vmatpush1.bf16.msra.mxu0 0
        %6019 = vmatprep.subr.bf16.mxu0 0
        %6020 = vmatpush1.bf16.msra.mxu0 0
        %6021 = vmatprep.subr.bf16.mxu0 0
        %6022 = vmatpush1.bf16.msra.mxu0 %v5834
        %6023 = vmatprep.subr.bf16.mxu0 0
        %6024 = vmatpush1.bf16.msra.mxu0 %v5833
        %6025 = vmatprep.subr.bf16.mxu0 0
        %6026 = vmatpush1.bf16.msra.mxu0 %v5832
        %6027 = vmatprep.subr.bf16.mxu0 0
        %6028 = vmatpush1.bf16.msra.mxu0 %v5831
        %6029 = vmatprep.subr.bf16.mxu0 0
        %6030 = vmatpush2.bf16.msra.mxu0 0
        %6031 = vmatprep.subr.bf16.mxu0 0
        %6032 = vmatpush2.bf16.msra.mxu0 0
        %6033 = vmatprep.subr.bf16.mxu0 0
        %6034 = vmatpush2.bf16.msra.mxu0 0
        %6035 = vmatprep.subr.bf16.mxu0 0
        %6036 = vmatpush2.bf16.msra.mxu0 0
        %6037 = vmatprep.subr.bf16.mxu0 0
        %6038 = vmatpush2.bf16.msra.mxu0 0
        %6039 = vmatprep.subr.bf16.mxu0 0
        %6040 = vmatpush2.bf16.msra.mxu0 0
        %6041 = vmatprep.subr.bf16.mxu0 0
        %6042 = vmatpush2.bf16.msra.mxu0 0
        %6043 = vmatprep.subr.bf16.mxu0 0
        %6044 = vmatpush2.bf16.msra.mxu0 0
        %6045 = vmatprep.mubr.bf16.mxu0 0
        %6046 = vmatmul.mubr.bf16.gmra.mxu0 %v5872
        %v6047 = vpop.f32.mrf.mxu0
        %v6048 = vadd.f32 %v5983, %v6047
        %v6049 = vpop.f32.mrf.mxu0
        %v6050 = vpop.f32.mrf.mxu0
        %v6051 = vadd.f32 %v5986, %v6050
        %v6052 = vpop.f32.mrf.mxu0
        %6053 = vmatprep.mubr.bf16.mxu0 0
        %6054 = vmatmul.mubr.bf16.gmra.mxu0 %v5875
        %v6055 = vpop.f32.mrf.mxu0
        %v6056 = vadd.f32 %v5991, %v6055
        %v6057 = vpop.f32.mrf.mxu0
        %v6058 = vpop.f32.mrf.mxu0
        %v6059 = vadd.f32 %v5994, %v6058
        %v6060 = vpop.f32.mrf.mxu0
        %6061 = vmatprep.mubr.bf16.mxu0 0
        %6062 = vmatmul.mubr.bf16.gmra.mxu0 %v5878
        %v6063 = vpop.f32.mrf.mxu0
        %v6064 = vadd.f32 %v5999, %v6063
        %v6065 = vpop.f32.mrf.mxu0
        %v6066 = vpop.f32.mrf.mxu0
        %v6067 = vadd.f32 %v6002, %v6066
        %v6068 = vpop.f32.mrf.mxu0
        %6069 = vmatprep.mubr.bf16.mxu0 0
        %6070 = vmatmul.mubr.bf16.gmra.mxu0 %v5881
        %v6071 = vpop.f32.mrf.mxu0
        %v6072 = vadd.f32 %v6007, %v6071
        %v6073 = vpop.f32.mrf.mxu0
        %v6074 = vpop.f32.mrf.mxu0
        %v6075 = vadd.f32 %v6010, %v6074
        %v6076 = vpop.f32.mrf.mxu0
        %6077 = vdwg.mxu0
        %v6078 = vmax.f32 %v6048, 0.0
        %v6079 = vmax.f32 %v6051, 0.0
        %v6080 = vmax.f32 %v6056, 0.0
        %v6081 = vmax.f32 %v6059, 0.0
        %v6082 = vmax.f32 %v6064, 0.0
        %v6083 = vmax.f32 %v6067, 0.0
        %v6084 = vmax.f32 %v6072, 0.0
        %v6085 = vmax.f32 %v6075, 0.0
        %v6086 = vpack.c.bf16 %v6079, %v6078
        %v6087 = vpack.c.bf16 %v6081, %v6080
        %v6088 = vpack.c.bf16 %v6083, %v6082
        %v6089 = vpack.c.bf16 %v6085, %v6084
        %v6094 = vunpack.c.l.b16 %v6086
        %v6095 = vunpack.c.h.b16 %v6086
        %v6096 = vunpack.c.l.b16 %v6087
        %v6097 = vunpack.c.h.b16 %v6087
        %v6098 = vunpack.c.l.b16 %v6088
        %v6099 = vunpack.c.h.b16 %v6088
        %v6100 = vunpack.c.l.b16 %v6089
        %v6101 = vunpack.c.h.b16 %v6089
        %v6102 = vpack.c.b16 %v6094, %v6094
        %v6103 = vpack.c.b16 %v6095, %v6095
        %v6104 = vpack.c.b16 %v6096, %v6096
        %v6105 = vpack.c.b16 %v6097, %v6097
        %v6106 = vpack.c.b16 %v6098, %v6098
        %v6107 = vpack.c.b16 %v6099, %v6099
        %v6108 = vpack.c.b16 %v6100, %v6100
        %v6109 = vpack.c.b16 %v6101, %v6101
        %6110 = vst [vmem:[#allocation4] sm:$0xf] 0
        %6111 = vst [vmem:[#allocation4 + $0x4] sm:$0x1] 0
        %s6112 = scalar_lea.vmem [#allocation4], 72
        %6113 = vst [vmem:[%s6112] sm:$0xf] 0
        %6114 = vst [vmem:[%s6112 + $0x4] sm:$0x1] 0
        %vm6115 = vcmask 1040384
        %vm6116 = vmand %vm6115, %vm973
        %v6117 = vld [vmem:[#allocation4] sm:$0x1]
        %v6118 = vsel %vm6116, 0, %v6117
        %6119 = vst [vmem:[#allocation4] sm:$0x1] %v6118
        %v6120 = vld [vmem:[#allocation4 + $0x8] sm:$0x1]
        %v6121 = vsel %vm6116, 0, %v6120
        %6122 = vst [vmem:[#allocation4 + $0x8] sm:$0x1] %v6121
        %v6123 = vld [vmem:[#allocation4 + $0x10] sm:$0x1]
        %v6124 = vsel %vm6116, 0, %v6123
        %6125 = vst [vmem:[#allocation4 + $0x10] sm:$0x1] %v6124
        %v6126 = vld [vmem:[#allocation4 + $0x18] sm:$0x1]
        %v6127 = vsel %vm6116, 0, %v6126
        %6128 = vst [vmem:[#allocation4 + $0x18] sm:$0x1] %v6127
        %v6129 = vld [vmem:[#allocation4 + $0x20] sm:$0x1]
        %v6130 = vsel %vm6116, 0, %v6129
        %6131 = vst [vmem:[#allocation4 + $0x20] sm:$0x1] %v6130
        %v6132 = vld [vmem:[#allocation4 + $0x28] sm:$0x1]
        %v6133 = vsel %vm6116, 0, %v6132
        %6134 = vst [vmem:[#allocation4 + $0x28] sm:$0x1] %v6133
        %v6135 = vld [vmem:[#allocation4 + $0x30] sm:$0x1]
        %v6136 = vsel %vm6116, 0, %v6135
        %6137 = vst [vmem:[#allocation4 + $0x30] sm:$0x1] %v6136
        %v6138 = vld [vmem:[#allocation4 + $0x38] sm:$0x1]
        %v6139 = vsel %vm6116, 0, %v6138
        %6140 = vst [vmem:[#allocation4 + $0x38] sm:$0x1] %v6139
        %v6141 = vld [vmem:[#allocation4 + $0x40] sm:$0x1]
        %v6142 = vsel %vm6116, 0, %v6141
        %6143 = vst [vmem:[#allocation4 + $0x40] sm:$0x1] %v6142
        %v6144 = vld [vmem:[#allocation4 + $0x48] sm:$0x1]
        %v6145 = vsel %vm6116, 0, %v6144
        %6146 = vst [vmem:[#allocation4 + $0x48] sm:$0x1] %v6145
        %vm6147 = vmand %vm6115, %vm1029
        %v6148 = vld [vmem:[#allocation4 + $0x4] sm:$0x1]
        %v6149 = vsel %vm6147, 0, %v6148
        %6150 = vst [vmem:[#allocation4 + $0x4] sm:$0x1] %v6149
        %v6151 = vld [vmem:[#allocation4 + $0xc] sm:$0x1]
        %v6152 = vsel %vm6147, 0, %v6151
        %6153 = vst [vmem:[#allocation4 + $0xc] sm:$0x1] %v6152
        %v6154 = vld [vmem:[#allocation4 + $0x14] sm:$0x1]
        %v6155 = vsel %vm6147, 0, %v6154
        %6156 = vst [vmem:[#allocation4 + $0x14] sm:$0x1] %v6155
        %v6157 = vld [vmem:[#allocation4 + $0x1c] sm:$0x1]
        %v6158 = vsel %vm6147, 0, %v6157
        %6159 = vst [vmem:[#allocation4 + $0x1c] sm:$0x1] %v6158
        %v6160 = vld [vmem:[#allocation4 + $0x24] sm:$0x1]
        %v6161 = vsel %vm6147, 0, %v6160
        %6162 = vst [vmem:[#allocation4 + $0x24] sm:$0x1] %v6161
        %v6163 = vld [vmem:[#allocation4 + $0x2c] sm:$0x1]
        %v6164 = vsel %vm6147, 0, %v6163
        %6165 = vst [vmem:[#allocation4 + $0x2c] sm:$0x1] %v6164
        %v6166 = vld [vmem:[#allocation4 + $0x34] sm:$0x1]
        %v6167 = vsel %vm6147, 0, %v6166
        %6168 = vst [vmem:[#allocation4 + $0x34] sm:$0x1] %v6167
        %v6169 = vld [vmem:[#allocation4 + $0x3c] sm:$0x1]
        %v6170 = vsel %vm6147, 0, %v6169
        %6171 = vst [vmem:[#allocation4 + $0x3c] sm:$0x1] %v6170
        %v6172 = vld [vmem:[#allocation4 + $0x44] sm:$0x1]
        %v6173 = vsel %vm6147, 0, %v6172
        %6174 = vst [vmem:[#allocation4 + $0x44] sm:$0x1] %v6173
        %v6175 = vld [vmem:[#allocation4 + $0x4c] sm:$0x1]
        %v6176 = vsel %vm6147, 0, %v6175
        %6177 = vst [vmem:[#allocation4 + $0x4c] sm:$0x1] %v6176
        %v6179 = vshrl.u32 %v6102, 16
        %v6181 = vrot.slane %v6179, 7
        %v6182 = vshll.u32 %v6102, 16
        %v6184 = vor.u32 %v6181, %v6182
        %v6185 = vrot.slane %v6181, 4
        %v6187 = vshrl.u32 %v6103, 16
        %v6189 = vrot.slane %v6187, 7
        %v6190 = vshll.u32 %v6103, 16
        %v6192 = vor.u32 %v6189, %v6190
        %v6193 = vrot.slane %v6189, 4
        %v6195 = vshrl.u32 %v6104, 16
        %v6197 = vrot.slane %v6195, 7
        %v6198 = vshll.u32 %v6104, 16
        %v6200 = vor.u32 %v6197, %v6198
        %v6201 = vrot.slane %v6197, 4
        %v6203 = vshrl.u32 %v6105, 16
        %v6205 = vrot.slane %v6203, 7
        %v6206 = vshll.u32 %v6105, 16
        %v6208 = vor.u32 %v6205, %v6206
        %v6209 = vrot.slane %v6205, 4
        %v6211 = vshrl.u32 %v6106, 16
        %v6213 = vrot.slane %v6211, 7
        %v6214 = vshll.u32 %v6106, 16
        %v6216 = vor.u32 %v6213, %v6214
        %v6217 = vrot.slane %v6213, 4
        %v6219 = vshrl.u32 %v6107, 16
        %v6221 = vrot.slane %v6219, 7
        %v6222 = vshll.u32 %v6107, 16
        %v6224 = vor.u32 %v6221, %v6222
        %v6225 = vrot.slane %v6221, 4
        %v6227 = vshrl.u32 %v6108, 16
        %v6229 = vrot.slane %v6227, 7
        %v6230 = vshll.u32 %v6108, 16
        %v6232 = vor.u32 %v6229, %v6230
        %v6233 = vrot.slane %v6229, 4
        %v6235 = vshrl.u32 %v6109, 16
        %v6237 = vrot.slane %v6235, 7
        %v6238 = vshll.u32 %v6109, 16
        %v6240 = vor.u32 %v6237, %v6238
        %v6241 = vrot.slane %v6237, 4
        %s6258 = scalar_lea.vmem [#allocation4], 8
        %vm6259 = vcmask 1043456
        %vm6260 = vmand %vm6259, %vm1029
        %v6261 = vld [vmem:[%s6258] sm:$0xf]
        %v6262 = vsel %vm6260, %v6184, %v6261
        %6263 = vst [vmem:[%s6258] sm:$0xf] %v6262
        %v6264 = vld [vmem:[%s6258 + $0x4] sm:$0x1]
        %v6265 = vsel %vm6116, %v6185, %v6264
        %6266 = vst [vmem:[%s6258 + $0x4] sm:$0x1] %v6265
        %v6267 = vld [vmem:[%s6258 + $0x8] sm:$0xf]
        %v6268 = vsel %vm6260, %v6192, %v6267
        %6269 = vst [vmem:[%s6258 + $0x8] sm:$0xf] %v6268
        %v6270 = vld [vmem:[%s6258 + $0xc] sm:$0x1]
        %v6271 = vsel %vm6116, %v6193, %v6270
        %6272 = vst [vmem:[%s6258 + $0xc] sm:$0x1] %v6271
        %v6273 = vld [vmem:[%s6258 + $0x10] sm:$0xf]
        %v6274 = vsel %vm6260, %v6200, %v6273
        %6275 = vst [vmem:[%s6258 + $0x10] sm:$0xf] %v6274
        %v6276 = vld [vmem:[%s6258 + $0x14] sm:$0x1]
        %v6277 = vsel %vm6116, %v6201, %v6276
        %6278 = vst [vmem:[%s6258 + $0x14] sm:$0x1] %v6277
        %v6279 = vld [vmem:[%s6258 + $0x18] sm:$0xf]
        %v6280 = vsel %vm6260, %v6208, %v6279
        %6281 = vst [vmem:[%s6258 + $0x18] sm:$0xf] %v6280
        %v6282 = vld [vmem:[%s6258 + $0x1c] sm:$0x1]
        %v6283 = vsel %vm6116, %v6209, %v6282
        %6284 = vst [vmem:[%s6258 + $0x1c] sm:$0x1] %v6283
        %v6285 = vld [vmem:[%s6258 + $0x20] sm:$0xf]
        %v6286 = vsel %vm6260, %v6216, %v6285
        %6287 = vst [vmem:[%s6258 + $0x20] sm:$0xf] %v6286
        %v6288 = vld [vmem:[%s6258 + $0x24] sm:$0x1]
        %v6289 = vsel %vm6116, %v6217, %v6288
        %6290 = vst [vmem:[%s6258 + $0x24] sm:$0x1] %v6289
        %v6291 = vld [vmem:[%s6258 + $0x28] sm:$0xf]
        %v6292 = vsel %vm6260, %v6224, %v6291
        %6293 = vst [vmem:[%s6258 + $0x28] sm:$0xf] %v6292
        %v6294 = vld [vmem:[%s6258 + $0x2c] sm:$0x1]
        %v6295 = vsel %vm6116, %v6225, %v6294
        %6296 = vst [vmem:[%s6258 + $0x2c] sm:$0x1] %v6295
        %v6297 = vld [vmem:[%s6258 + $0x30] sm:$0xf]
        %v6298 = vsel %vm6260, %v6232, %v6297
        %6299 = vst [vmem:[%s6258 + $0x30] sm:$0xf] %v6298
        %v6300 = vld [vmem:[%s6258 + $0x34] sm:$0x1]
        %v6301 = vsel %vm6116, %v6233, %v6300
        %6302 = vst [vmem:[%s6258 + $0x34] sm:$0x1] %v6301
        %v6303 = vld [vmem:[%s6258 + $0x38] sm:$0xf]
        %v6304 = vsel %vm6260, %v6240, %v6303
        %6305 = vst [vmem:[%s6258 + $0x38] sm:$0xf] %v6304
        %v6306 = vld [vmem:[%s6258 + $0x3c] sm:$0x1]
        %v6307 = vsel %vm6116, %v6241, %v6306
        %6308 = vst [vmem:[%s6258 + $0x3c] sm:$0x1] %v6307
        %v6309 = vld [vmem:[#allocation4] sm:$0xf]
        %v6310 = vld [vmem:[#allocation4 + $0x8] sm:$0xf]
        %v6311 = vld [vmem:[#allocation4 + $0x10] sm:$0xf]
        %v6312 = vld [vmem:[#allocation4 + $0x18] sm:$0xf]
        %v6313 = vld [vmem:[#allocation4 + $0x20] sm:$0xf]
        %v6314 = vld [vmem:[#allocation4 + $0x28] sm:$0xf]
        %v6315 = vld [vmem:[#allocation4 + $0x30] sm:$0xf]
        %v6316 = vld [vmem:[#allocation4 + $0x38] sm:$0xf]
        %v6317 = vld [vmem:[#allocation4 + $0x4] sm:$0x1]
        %v6318 = vld [vmem:[#allocation4 + $0xc] sm:$0x1]
        %v6319 = vld [vmem:[#allocation4 + $0x14] sm:$0x1]
        %v6320 = vld [vmem:[#allocation4 + $0x1c] sm:$0x1]
        %v6321 = vld [vmem:[#allocation4 + $0x24] sm:$0x1]
        %v6322 = vld [vmem:[#allocation4 + $0x2c] sm:$0x1]
        %v6323 = vld [vmem:[#allocation4 + $0x34] sm:$0x1]
        %v6324 = vld [vmem:[#allocation4 + $0x3c] sm:$0x1]
        %v6325 = vld [vmem:[#allocation4] sm:$0xe]
        %v6326 = vld [vmem:[#allocation4 + $0x8] sm:$0xe]
        %v6327 = vld [vmem:[#allocation4 + $0x10] sm:$0xe]
        %v6328 = vld [vmem:[#allocation4 + $0x18] sm:$0xe]
        %v6329 = vld [vmem:[#allocation4 + $0x20] sm:$0xe]
        %v6330 = vld [vmem:[#allocation4 + $0x28] sm:$0xe]
        %v6331 = vld [vmem:[#allocation4 + $0x30] sm:$0xe]
        %v6332 = vld [vmem:[#allocation4 + $0x38] sm:$0xe]
        %v6333 = vld [vmem:[%s6258] sm:$0xf]
        %v6334 = vld [vmem:[%s6258 + $0x8] sm:$0xf]
        %v6335 = vld [vmem:[%s6258 + $0x10] sm:$0xf]
        %v6336 = vld [vmem:[%s6258 + $0x18] sm:$0xf]
        %v6337 = vld [vmem:[%s6258 + $0x20] sm:$0xf]
        %v6338 = vld [vmem:[%s6258 + $0x28] sm:$0xf]
        %v6339 = vld [vmem:[%s6258 + $0x30] sm:$0xf]
        %v6340 = vld [vmem:[%s6258 + $0x38] sm:$0xf]
        %v6341 = vld [vmem:[%s6258 + $0x4] sm:$0x1]
        %v6342 = vld [vmem:[%s6258 + $0xc] sm:$0x1]
        %v6343 = vld [vmem:[%s6258 + $0x14] sm:$0x1]
        %v6344 = vld [vmem:[%s6258 + $0x1c] sm:$0x1]
        %v6345 = vld [vmem:[%s6258 + $0x24] sm:$0x1]
        %v6346 = vld [vmem:[%s6258 + $0x2c] sm:$0x1]
        %v6347 = vld [vmem:[%s6258 + $0x34] sm:$0x1]
        %v6348 = vld [vmem:[%s6258 + $0x3c] sm:$0x1]
        %v6349 = vld [vmem:[%s6258] sm:$0xe]
        %v6350 = vld [vmem:[%s6258 + $0x8] sm:$0xe]
        %v6351 = vld [vmem:[%s6258 + $0x10] sm:$0xe]
        %v6352 = vld [vmem:[%s6258 + $0x18] sm:$0xe]
        %v6353 = vld [vmem:[%s6258 + $0x20] sm:$0xe]
        %v6354 = vld [vmem:[%s6258 + $0x28] sm:$0xe]
        %v6355 = vld [vmem:[%s6258 + $0x30] sm:$0xe]
        %v6356 = vld [vmem:[%s6258 + $0x38] sm:$0xe]
        %s6357 = scalar_lea.vmem [#allocation4], 16
        %v6358 = vld [vmem:[%s6357] sm:$0xf]
        %v6359 = vld [vmem:[%s6357 + $0x8] sm:$0xf]
        %v6360 = vld [vmem:[%s6357 + $0x10] sm:$0xf]
        %v6361 = vld [vmem:[%s6357 + $0x18] sm:$0xf]
        %v6362 = vld [vmem:[%s6357 + $0x20] sm:$0xf]
        %v6363 = vld [vmem:[%s6357 + $0x28] sm:$0xf]
        %v6364 = vld [vmem:[%s6357 + $0x30] sm:$0xf]
        %v6365 = vld [vmem:[%s6357 + $0x38] sm:$0xf]
        %v6366 = vld [vmem:[%s6357 + $0x4] sm:$0x1]
        %v6367 = vld [vmem:[%s6357 + $0xc] sm:$0x1]
        %v6368 = vld [vmem:[%s6357 + $0x14] sm:$0x1]
        %v6369 = vld [vmem:[%s6357 + $0x1c] sm:$0x1]
        %v6370 = vld [vmem:[%s6357 + $0x24] sm:$0x1]
        %v6371 = vld [vmem:[%s6357 + $0x2c] sm:$0x1]
        %v6372 = vld [vmem:[%s6357 + $0x34] sm:$0x1]
        %v6373 = vld [vmem:[%s6357 + $0x3c] sm:$0x1]
        %v6374 = vld [vmem:[%s6357] sm:$0xe]
        %v6375 = vld [vmem:[%s6357 + $0x8] sm:$0xe]
        %v6376 = vld [vmem:[%s6357 + $0x10] sm:$0xe]
        %v6377 = vld [vmem:[%s6357 + $0x18] sm:$0xe]
        %v6378 = vld [vmem:[%s6357 + $0x20] sm:$0xe]
        %v6379 = vld [vmem:[%s6357 + $0x28] sm:$0xe]
        %v6380 = vld [vmem:[%s6357 + $0x30] sm:$0xe]
        %v6381 = vld [vmem:[%s6357 + $0x38] sm:$0xe]
        %v6398 = vunpack.c.l.b16 %v6309
        %v6399 = vunpack.c.l.b16 %v6317
        %v6400 = vunpack.c.l.b16 %v6310
        %v6401 = vunpack.c.l.b16 %v6318
        %v6402 = vunpack.c.l.b16 %v6311
        %v6403 = vunpack.c.l.b16 %v6319
        %v6404 = vunpack.c.l.b16 %v6312
        %v6405 = vunpack.c.l.b16 %v6320
        %v6406 = vunpack.c.l.b16 %v6313
        %v6407 = vunpack.c.l.b16 %v6321
        %v6408 = vunpack.c.l.b16 %v6314
        %v6409 = vunpack.c.l.b16 %v6322
        %v6410 = vunpack.c.l.b16 %v6315
        %v6411 = vunpack.c.l.b16 %v6323
        %v6412 = vunpack.c.l.b16 %v6316
        %v6413 = vunpack.c.l.b16 %v6324
        %v6414 = vpack.c.b16 %v6399, %v6398
        %v6415 = vpack.c.b16 %v6401, %v6400
        %v6416 = vpack.c.b16 %v6403, %v6402
        %v6417 = vpack.c.b16 %v6405, %v6404
        %v6418 = vpack.c.b16 %v6407, %v6406
        %v6419 = vpack.c.b16 %v6409, %v6408
        %v6420 = vpack.c.b16 %v6411, %v6410
        %v6421 = vpack.c.b16 %v6413, %v6412
        %v6423 = vshrl.u32 %v6414, 16
        %v6425 = vshll.u32 %v6414, 16
        %v6427 = vrot.slane %v6425, 1
        %v6428 = vor.u32 %v6423, %v6427
        %v6430 = vshrl.u32 %v6415, 16
        %v6432 = vshll.u32 %v6415, 16
        %v6434 = vrot.slane %v6432, 1
        %v6435 = vor.u32 %v6430, %v6434
        %v6437 = vshrl.u32 %v6416, 16
        %v6439 = vshll.u32 %v6416, 16
        %v6441 = vrot.slane %v6439, 1
        %v6442 = vor.u32 %v6437, %v6441
        %v6444 = vshrl.u32 %v6417, 16
        %v6446 = vshll.u32 %v6417, 16
        %v6448 = vrot.slane %v6446, 1
        %v6449 = vor.u32 %v6444, %v6448
        %v6451 = vshrl.u32 %v6418, 16
        %v6453 = vshll.u32 %v6418, 16
        %v6455 = vrot.slane %v6453, 1
        %v6456 = vor.u32 %v6451, %v6455
        %v6458 = vshrl.u32 %v6419, 16
        %v6460 = vshll.u32 %v6419, 16
        %v6462 = vrot.slane %v6460, 1
        %v6463 = vor.u32 %v6458, %v6462
        %v6465 = vshrl.u32 %v6420, 16
        %v6467 = vshll.u32 %v6420, 16
        %v6469 = vrot.slane %v6467, 1
        %v6470 = vor.u32 %v6465, %v6469
        %v6472 = vshrl.u32 %v6421, 16
        %v6474 = vshll.u32 %v6421, 16
        %v6476 = vrot.slane %v6474, 1
        %v6477 = vor.u32 %v6472, %v6476
        %v6486 = vunpack.c.l.b16 %v6325
        %v6487 = vunpack.c.l.b16 %v6326
        %v6488 = vunpack.c.l.b16 %v6327
        %v6489 = vunpack.c.l.b16 %v6328
        %v6490 = vunpack.c.l.b16 %v6329
        %v6491 = vunpack.c.l.b16 %v6330
        %v6492 = vunpack.c.l.b16 %v6331
        %v6493 = vunpack.c.l.b16 %v6332
        %v6494 = vpack.c.b16 %v6399, %v6486
        %v6495 = vpack.c.b16 %v6401, %v6487
        %v6496 = vpack.c.b16 %v6403, %v6488
        %v6497 = vpack.c.b16 %v6405, %v6489
        %v6498 = vpack.c.b16 %v6407, %v6490
        %v6499 = vpack.c.b16 %v6409, %v6491
        %v6500 = vpack.c.b16 %v6411, %v6492
        %v6501 = vpack.c.b16 %v6413, %v6493
        %v6502 = vrot.slane %v6494, 1
        %v6503 = vrot.slane %v6495, 1
        %v6504 = vrot.slane %v6496, 1
        %v6505 = vrot.slane %v6497, 1
        %v6506 = vrot.slane %v6498, 1
        %v6507 = vrot.slane %v6499, 1
        %v6508 = vrot.slane %v6500, 1
        %v6509 = vrot.slane %v6501, 1
        %v6526 = vunpack.c.l.b16 %v6333
        %v6527 = vunpack.c.l.b16 %v6341
        %v6528 = vunpack.c.l.b16 %v6334
        %v6529 = vunpack.c.l.b16 %v6342
        %v6530 = vunpack.c.l.b16 %v6335
        %v6531 = vunpack.c.l.b16 %v6343
        %v6532 = vunpack.c.l.b16 %v6336
        %v6533 = vunpack.c.l.b16 %v6344
        %v6534 = vunpack.c.l.b16 %v6337
        %v6535 = vunpack.c.l.b16 %v6345
        %v6536 = vunpack.c.l.b16 %v6338
        %v6537 = vunpack.c.l.b16 %v6346
        %v6538 = vunpack.c.l.b16 %v6339
        %v6539 = vunpack.c.l.b16 %v6347
        %v6540 = vunpack.c.l.b16 %v6340
        %v6541 = vunpack.c.l.b16 %v6348
        %v6542 = vpack.c.b16 %v6527, %v6526
        %v6543 = vpack.c.b16 %v6529, %v6528
        %v6544 = vpack.c.b16 %v6531, %v6530
        %v6545 = vpack.c.b16 %v6533, %v6532
        %v6546 = vpack.c.b16 %v6535, %v6534
        %v6547 = vpack.c.b16 %v6537, %v6536
        %v6548 = vpack.c.b16 %v6539, %v6538
        %v6549 = vpack.c.b16 %v6541, %v6540
        %v6551 = vshrl.u32 %v6542, 16
        %v6553 = vshll.u32 %v6542, 16
        %v6555 = vrot.slane %v6553, 1
        %v6556 = vor.u32 %v6551, %v6555
        %v6558 = vshrl.u32 %v6543, 16
        %v6560 = vshll.u32 %v6543, 16
        %v6562 = vrot.slane %v6560, 1
        %v6563 = vor.u32 %v6558, %v6562
        %v6565 = vshrl.u32 %v6544, 16
        %v6567 = vshll.u32 %v6544, 16
        %v6569 = vrot.slane %v6567, 1
        %v6570 = vor.u32 %v6565, %v6569
        %v6572 = vshrl.u32 %v6545, 16
        %v6574 = vshll.u32 %v6545, 16
        %v6576 = vrot.slane %v6574, 1
        %v6577 = vor.u32 %v6572, %v6576
        %v6579 = vshrl.u32 %v6546, 16
        %v6581 = vshll.u32 %v6546, 16
        %v6583 = vrot.slane %v6581, 1
        %v6584 = vor.u32 %v6579, %v6583
        %v6586 = vshrl.u32 %v6547, 16
        %v6588 = vshll.u32 %v6547, 16
        %v6590 = vrot.slane %v6588, 1
        %v6591 = vor.u32 %v6586, %v6590
        %v6593 = vshrl.u32 %v6548, 16
        %v6595 = vshll.u32 %v6548, 16
        %v6597 = vrot.slane %v6595, 1
        %v6598 = vor.u32 %v6593, %v6597
        %v6600 = vshrl.u32 %v6549, 16
        %v6602 = vshll.u32 %v6549, 16
        %v6604 = vrot.slane %v6602, 1
        %v6605 = vor.u32 %v6600, %v6604
        %v6614 = vunpack.c.l.b16 %v6349
        %v6615 = vunpack.c.l.b16 %v6350
        %v6616 = vunpack.c.l.b16 %v6351
        %v6617 = vunpack.c.l.b16 %v6352
        %v6618 = vunpack.c.l.b16 %v6353
        %v6619 = vunpack.c.l.b16 %v6354
        %v6620 = vunpack.c.l.b16 %v6355
        %v6621 = vunpack.c.l.b16 %v6356
        %v6622 = vpack.c.b16 %v6527, %v6614
        %v6623 = vpack.c.b16 %v6529, %v6615
        %v6624 = vpack.c.b16 %v6531, %v6616
        %v6625 = vpack.c.b16 %v6533, %v6617
        %v6626 = vpack.c.b16 %v6535, %v6618
        %v6627 = vpack.c.b16 %v6537, %v6619
        %v6628 = vpack.c.b16 %v6539, %v6620
        %v6629 = vpack.c.b16 %v6541, %v6621
        %v6630 = vrot.slane %v6622, 1
        %v6631 = vrot.slane %v6623, 1
        %v6632 = vrot.slane %v6624, 1
        %v6633 = vrot.slane %v6625, 1
        %v6634 = vrot.slane %v6626, 1
        %v6635 = vrot.slane %v6627, 1
        %v6636 = vrot.slane %v6628, 1
        %v6637 = vrot.slane %v6629, 1
        %v6654 = vunpack.c.l.b16 %v6358
        %v6655 = vunpack.c.l.b16 %v6366
        %v6656 = vunpack.c.l.b16 %v6359
        %v6657 = vunpack.c.l.b16 %v6367
        %v6658 = vunpack.c.l.b16 %v6360
        %v6659 = vunpack.c.l.b16 %v6368
        %v6660 = vunpack.c.l.b16 %v6361
        %v6661 = vunpack.c.l.b16 %v6369
        %v6662 = vunpack.c.l.b16 %v6362
        %v6663 = vunpack.c.l.b16 %v6370
        %v6664 = vunpack.c.l.b16 %v6363
        %v6665 = vunpack.c.l.b16 %v6371
        %v6666 = vunpack.c.l.b16 %v6364
        %v6667 = vunpack.c.l.b16 %v6372
        %v6668 = vunpack.c.l.b16 %v6365
        %v6669 = vunpack.c.l.b16 %v6373
        %v6670 = vpack.c.b16 %v6655, %v6654
        %v6671 = vpack.c.b16 %v6657, %v6656
        %v6672 = vpack.c.b16 %v6659, %v6658
        %v6673 = vpack.c.b16 %v6661, %v6660
        %v6674 = vpack.c.b16 %v6663, %v6662
        %v6675 = vpack.c.b16 %v6665, %v6664
        %v6676 = vpack.c.b16 %v6667, %v6666
        %v6677 = vpack.c.b16 %v6669, %v6668
        %v6679 = vshrl.u32 %v6670, 16
        %v6681 = vshll.u32 %v6670, 16
        %v6683 = vrot.slane %v6681, 1
        %v6684 = vor.u32 %v6679, %v6683
        %v6686 = vshrl.u32 %v6671, 16
        %v6688 = vshll.u32 %v6671, 16
        %v6690 = vrot.slane %v6688, 1
        %v6691 = vor.u32 %v6686, %v6690
        %v6693 = vshrl.u32 %v6672, 16
        %v6695 = vshll.u32 %v6672, 16
        %v6697 = vrot.slane %v6695, 1
        %v6698 = vor.u32 %v6693, %v6697
        %v6700 = vshrl.u32 %v6673, 16
        %v6702 = vshll.u32 %v6673, 16
        %v6704 = vrot.slane %v6702, 1
        %v6705 = vor.u32 %v6700, %v6704
        %v6707 = vshrl.u32 %v6674, 16
        %v6709 = vshll.u32 %v6674, 16
        %v6711 = vrot.slane %v6709, 1
        %v6712 = vor.u32 %v6707, %v6711
        %v6714 = vshrl.u32 %v6675, 16
        %v6716 = vshll.u32 %v6675, 16
        %v6718 = vrot.slane %v6716, 1
        %v6719 = vor.u32 %v6714, %v6718
        %v6721 = vshrl.u32 %v6676, 16
        %v6723 = vshll.u32 %v6676, 16
        %v6725 = vrot.slane %v6723, 1
        %v6726 = vor.u32 %v6721, %v6725
        %v6728 = vshrl.u32 %v6677, 16
        %v6730 = vshll.u32 %v6677, 16
        %v6732 = vrot.slane %v6730, 1
        %v6733 = vor.u32 %v6728, %v6732
        %v6742 = vunpack.c.l.b16 %v6374
        %v6743 = vunpack.c.l.b16 %v6375
        %v6744 = vunpack.c.l.b16 %v6376
        %v6745 = vunpack.c.l.b16 %v6377
        %v6746 = vunpack.c.l.b16 %v6378
        %v6747 = vunpack.c.l.b16 %v6379
        %v6748 = vunpack.c.l.b16 %v6380
        %v6749 = vunpack.c.l.b16 %v6381
        %v6750 = vpack.c.b16 %v6655, %v6742
        %v6751 = vpack.c.b16 %v6657, %v6743
        %v6752 = vpack.c.b16 %v6659, %v6744
        %v6753 = vpack.c.b16 %v6661, %v6745
        %v6754 = vpack.c.b16 %v6663, %v6746
        %v6755 = vpack.c.b16 %v6665, %v6747
        %v6756 = vpack.c.b16 %v6667, %v6748
        %v6757 = vpack.c.b16 %v6669, %v6749
        %v6758 = vrot.slane %v6750, 1
        %v6759 = vrot.slane %v6751, 1
        %v6760 = vrot.slane %v6752, 1
        %v6761 = vrot.slane %v6753, 1
        %v6762 = vrot.slane %v6754, 1
        %v6763 = vrot.slane %v6755, 1
        %v6764 = vrot.slane %v6756, 1
        %v6765 = vrot.slane %v6757, 1
        %v6766 = vunpack.c.l.b16 %v6428
        %v6767 = vunpack.c.l.b16 %v6502
        %v6768 = vunpack.c.l.b16 %v6556
        %v6769 = vunpack.c.l.b16 %v6630
        %v6770 = vunpack.c.l.b16 %v6684
        %v6771 = vunpack.c.l.b16 %v6758
        %v6772 = vunpack.c.l.b16 %v6435
        %v6773 = vunpack.c.l.b16 %v6503
        %v6774 = vunpack.c.l.b16 %v6563
        %v6775 = vunpack.c.l.b16 %v6631
        %v6776 = vunpack.c.l.b16 %v6691
        %v6777 = vunpack.c.l.b16 %v6759
        %v6778 = vunpack.c.l.b16 %v6442
        %v6779 = vunpack.c.l.b16 %v6504
        %v6780 = vunpack.c.l.b16 %v6570
        %v6781 = vunpack.c.l.b16 %v6632
        %v6782 = vunpack.c.l.b16 %v6698
        %v6783 = vunpack.c.l.b16 %v6760
        %v6784 = vunpack.c.l.b16 %v6449
        %v6785 = vunpack.c.l.b16 %v6505
        %v6786 = vunpack.c.l.b16 %v6577
        %v6787 = vunpack.c.l.b16 %v6633
        %v6788 = vunpack.c.l.b16 %v6705
        %v6789 = vunpack.c.l.b16 %v6761
        %v6790 = vunpack.c.l.b16 %v6456
        %v6791 = vunpack.c.l.b16 %v6506
        %v6792 = vunpack.c.l.b16 %v6584
        %v6793 = vunpack.c.l.b16 %v6634
        %v6794 = vunpack.c.l.b16 %v6712
        %v6795 = vunpack.c.l.b16 %v6762
        %v6796 = vunpack.c.l.b16 %v6463
        %v6797 = vunpack.c.l.b16 %v6507
        %v6798 = vunpack.c.l.b16 %v6591
        %v6799 = vunpack.c.l.b16 %v6635
        %v6800 = vunpack.c.l.b16 %v6719
        %v6801 = vunpack.c.l.b16 %v6763
        %v6802 = vunpack.c.l.b16 %v6470
        %v6803 = vunpack.c.l.b16 %v6508
        %v6804 = vunpack.c.l.b16 %v6598
        %v6805 = vunpack.c.l.b16 %v6636
        %v6806 = vunpack.c.l.b16 %v6726
        %v6807 = vunpack.c.l.b16 %v6764
        %v6808 = vunpack.c.l.b16 %v6477
        %v6809 = vunpack.c.l.b16 %v6509
        %v6810 = vunpack.c.l.b16 %v6605
        %v6811 = vunpack.c.l.b16 %v6637
        %v6812 = vunpack.c.l.b16 %v6733
        %v6813 = vunpack.c.l.b16 %v6765
        %v6814 = vld [vmem:[%s7] sm:$0xff]
        %v6815 = vld [vmem:[%s7 + $0x8] sm:$0xff]
        %v6816 = vld [vmem:[%s7 + $0x10] sm:$0xff]
        %v6817 = vld [vmem:[%s7 + $0x18] sm:$0xff]
        %v6818 = vld [vmem:[%s7 + $0x20] sm:$0xff]
        %v6819 = vld [vmem:[%s7 + $0x28] sm:$0xff]
        %v6820 = vld [vmem:[%s7 + $0x30] sm:$0xff]
        %v6821 = vld [vmem:[%s7 + $0x38] sm:$0xff]
        %v6822 = vld [vmem:[%s7 + $0x40] sm:$0xff]
        %v6823 = vld [vmem:[%s7 + $0x48] sm:$0xff]
        %v6824 = vld [vmem:[%s7 + $0x50] sm:$0xff]
        %v6825 = vld [vmem:[%s7 + $0x58] sm:$0xff]
        %v6826 = vld [vmem:[%s7 + $0x60] sm:$0xff]
        %v6827 = vld [vmem:[%s7 + $0x68] sm:$0xff]
        %v6828 = vld [vmem:[%s7 + $0x70] sm:$0xff]
        %v6829 = vld [vmem:[%s7 + $0x78] sm:$0xff]
        %v6830 = vld [vmem:[%s7 + $0x80] sm:$0xff]
        %v6831 = vld [vmem:[%s7 + $0x88] sm:$0xff]
        %v6832 = vld [vmem:[%s7 + $0x90] sm:$0xff]
        %v6833 = vld [vmem:[%s7 + $0x98] sm:$0xff]
        %v6834 = vld [vmem:[%s7 + $0xa0] sm:$0xff]
        %v6835 = vld [vmem:[%s7 + $0xa8] sm:$0xff]
        %v6836 = vld [vmem:[%s7 + $0xb0] sm:$0xff]
        %v6837 = vld [vmem:[%s7 + $0xb8] sm:$0xff]
        %v6838 = vld [vmem:[%s7 + $0xc0] sm:$0xff]
        %v6839 = vld [vmem:[%s7 + $0xc8] sm:$0xff]
        %v6840 = vld [vmem:[%s7 + $0xd0] sm:$0xff]
        %v6841 = vld [vmem:[%s7 + $0xd8] sm:$0xff]
        %v6842 = vld [vmem:[%s7 + $0xe0] sm:$0xff]
        %v6843 = vld [vmem:[%s7 + $0xe8] sm:$0xff]
        %v6844 = vld [vmem:[%s7 + $0xf0] sm:$0xff]
        %v6845 = vld [vmem:[%s7 + $0xf8] sm:$0xff]
        %v6846 = vld [vmem:[%s7 + $0x100] sm:$0xff]
        %v6847 = vld [vmem:[%s7 + $0x108] sm:$0xff]
        %v6848 = vld [vmem:[%s7 + $0x110] sm:$0xff]
        %v6849 = vld [vmem:[%s7 + $0x118] sm:$0xff]
        %v6850 = vld [vmem:[%s7 + $0x120] sm:$0xff]
        %v6851 = vld [vmem:[%s7 + $0x128] sm:$0xff]
        %v6852 = vld [vmem:[%s7 + $0x130] sm:$0xff]
        %v6853 = vld [vmem:[%s7 + $0x138] sm:$0xff]
        %v6854 = vld [vmem:[%s7 + $0x140] sm:$0xff]
        %v6855 = vld [vmem:[%s7 + $0x148] sm:$0xff]
        %v6856 = vld [vmem:[%s7 + $0x150] sm:$0xff]
        %v6857 = vld [vmem:[%s7 + $0x158] sm:$0xff]
        %v6858 = vld [vmem:[%s7 + $0x160] sm:$0xff]
        %v6859 = vld [vmem:[%s7 + $0x168] sm:$0xff]
        %v6860 = vld [vmem:[%s7 + $0x170] sm:$0xff]
        %v6861 = vld [vmem:[%s7 + $0x178] sm:$0xff]
        %v6862 = vld [vmem:[%s7 + $0x180] sm:$0xff]
        %v6863 = vld [vmem:[%s7 + $0x188] sm:$0xff]
        %v6864 = vld [vmem:[%s7 + $0x190] sm:$0xff]
        %v6865 = vld [vmem:[%s7 + $0x198] sm:$0xff]
        %v6866 = vld [vmem:[%s7 + $0x1a0] sm:$0xff]
        %v6867 = vld [vmem:[%s7 + $0x1a8] sm:$0xff]
        %v6868 = vld [vmem:[%s7 + $0x1b0] sm:$0xff]
        %v6869 = vld [vmem:[%s7 + $0x1b8] sm:$0xff]
        %v6870 = vld [vmem:[%s7 + $0x1c0] sm:$0xff]
        %v6871 = vld [vmem:[%s7 + $0x1c8] sm:$0xff]
        %v6872 = vld [vmem:[%s7 + $0x1d0] sm:$0xff]
        %v6873 = vld [vmem:[%s7 + $0x1d8] sm:$0xff]
        %v6874 = vld [vmem:[%s7 + $0x1e0] sm:$0xff]
        %v6875 = vld [vmem:[%s7 + $0x1e8] sm:$0xff]
        %v6876 = vld [vmem:[%s7 + $0x1f0] sm:$0xff]
        %v6877 = vld [vmem:[%s7 + $0x1f8] sm:$0xff]
        %v6878 = vld [vmem:[%s7 + $0x200] sm:$0xff]
        %v6879 = vld [vmem:[%s7 + $0x208] sm:$0xff]
        %v6880 = vld [vmem:[%s7 + $0x210] sm:$0xff]
        %v6881 = vld [vmem:[%s7 + $0x218] sm:$0xff]
        %v6882 = vld [vmem:[%s7 + $0x220] sm:$0xff]
        %v6883 = vld [vmem:[%s7 + $0x228] sm:$0xff]
        %v6884 = vld [vmem:[%s7 + $0x230] sm:$0xff]
        %v6885 = vld [vmem:[%s7 + $0x238] sm:$0xff]
        %v6886 = vld [vmem:[%s7 + $0x240] sm:$0xff]
        %v6887 = vld [vmem:[%s7 + $0x248] sm:$0xff]
        %v6888 = vld [vmem:[%s7 + $0x250] sm:$0xff]
        %v6889 = vld [vmem:[%s7 + $0x258] sm:$0xff]
        %v6890 = vld [vmem:[%s7 + $0x260] sm:$0xff]
        %v6891 = vld [vmem:[%s7 + $0x268] sm:$0xff]
        %v6892 = vld [vmem:[%s7 + $0x270] sm:$0xff]
        %v6893 = vld [vmem:[%s7 + $0x278] sm:$0xff]
        %v6894 = vld [vmem:[%s7 + $0x280] sm:$0xff]
        %v6895 = vld [vmem:[%s7 + $0x288] sm:$0xff]
        %v6896 = vld [vmem:[%s7 + $0x290] sm:$0xff]
        %v6897 = vld [vmem:[%s7 + $0x298] sm:$0xff]
        %v6898 = vld [vmem:[%s7 + $0x2a0] sm:$0xff]
        %v6899 = vld [vmem:[%s7 + $0x2a8] sm:$0xff]
        %v6900 = vld [vmem:[%s7 + $0x2b0] sm:$0xff]
        %v6901 = vld [vmem:[%s7 + $0x2b8] sm:$0xff]
        %v6902 = vld [vmem:[%s7 + $0x2c0] sm:$0xff]
        %v6903 = vld [vmem:[%s7 + $0x2c8] sm:$0xff]
        %v6904 = vld [vmem:[%s7 + $0x2d0] sm:$0xff]
        %v6905 = vld [vmem:[%s7 + $0x2d8] sm:$0xff]
        %v6906 = vld [vmem:[%s7 + $0x2e0] sm:$0xff]
        %v6907 = vld [vmem:[%s7 + $0x2e8] sm:$0xff]
        %v6908 = vld [vmem:[%s7 + $0x2f0] sm:$0xff]
        %v6909 = vld [vmem:[%s7 + $0x2f8] sm:$0xff]
        %v6910 = vld [vmem:[%s7 + $0x300] sm:$0xff]
        %v6911 = vld [vmem:[%s7 + $0x308] sm:$0xff]
        %v6912 = vld [vmem:[%s7 + $0x310] sm:$0xff]
        %v6913 = vld [vmem:[%s7 + $0x318] sm:$0xff]
        %v6914 = vld [vmem:[%s7 + $0x320] sm:$0xff]
        %v6915 = vld [vmem:[%s7 + $0x328] sm:$0xff]
        %v6916 = vld [vmem:[%s7 + $0x330] sm:$0xff]
        %v6917 = vld [vmem:[%s7 + $0x338] sm:$0xff]
        %v6918 = vld [vmem:[%s7 + $0x340] sm:$0xff]
        %v6919 = vld [vmem:[%s7 + $0x348] sm:$0xff]
        %v6920 = vld [vmem:[%s7 + $0x350] sm:$0xff]
        %v6921 = vld [vmem:[%s7 + $0x358] sm:$0xff]
        %v6922 = vld [vmem:[%s7 + $0x360] sm:$0xff]
        %v6923 = vld [vmem:[%s7 + $0x368] sm:$0xff]
        %v6924 = vld [vmem:[%s7 + $0x370] sm:$0xff]
        %v6925 = vld [vmem:[%s7 + $0x378] sm:$0xff]
        %v6926 = vld [vmem:[%s7 + $0x380] sm:$0xff]
        %v6927 = vld [vmem:[%s7 + $0x388] sm:$0xff]
        %v6928 = vld [vmem:[%s7 + $0x390] sm:$0xff]
        %v6929 = vld [vmem:[%s7 + $0x398] sm:$0xff]
        %v6930 = vld [vmem:[%s7 + $0x3a0] sm:$0xff]
        %v6931 = vld [vmem:[%s7 + $0x3a8] sm:$0xff]
        %v6932 = vld [vmem:[%s7 + $0x3b0] sm:$0xff]
        %v6933 = vld [vmem:[%s7 + $0x3b8] sm:$0xff]
        %v6934 = vld [vmem:[%s7 + $0x3c0] sm:$0xff]
        %v6935 = vld [vmem:[%s7 + $0x3c8] sm:$0xff]
        %v6936 = vld [vmem:[%s7 + $0x3d0] sm:$0xff]
        %v6937 = vld [vmem:[%s7 + $0x3d8] sm:$0xff]
        %v6938 = vld [vmem:[%s7 + $0x3e0] sm:$0xff]
        %v6939 = vld [vmem:[%s7 + $0x3e8] sm:$0xff]
        %v6940 = vld [vmem:[%s7 + $0x3f0] sm:$0xff]
        %v6941 = vld [vmem:[%s7 + $0x3f8] sm:$0xff]
        %v6942 = vld [vmem:[%s7 + $0x400] sm:$0xff]
        %v6943 = vld [vmem:[%s7 + $0x408] sm:$0xff]
        %v6944 = vld [vmem:[%s7 + $0x410] sm:$0xff]
        %v6945 = vld [vmem:[%s7 + $0x418] sm:$0xff]
        %v6946 = vld [vmem:[%s7 + $0x420] sm:$0xff]
        %v6947 = vld [vmem:[%s7 + $0x428] sm:$0xff]
        %v6948 = vld [vmem:[%s7 + $0x430] sm:$0xff]
        %v6949 = vld [vmem:[%s7 + $0x438] sm:$0xff]
        %v6950 = vld [vmem:[%s7 + $0x440] sm:$0xff]
        %v6951 = vld [vmem:[%s7 + $0x448] sm:$0xff]
        %v6952 = vld [vmem:[%s7 + $0x450] sm:$0xff]
        %v6953 = vld [vmem:[%s7 + $0x458] sm:$0xff]
        %v6954 = vld [vmem:[%s7 + $0x460] sm:$0xff]
        %v6955 = vld [vmem:[%s7 + $0x468] sm:$0xff]
        %v6956 = vld [vmem:[%s7 + $0x470] sm:$0xff]
        %v6957 = vld [vmem:[%s7 + $0x478] sm:$0xff]
        %v6958 = vld [vmem:[%s8] sm:$0x3]
        %v6960 = vlaneseq
        %v6961 = vshrl.u32 %v6960, 7
        %v6962 = vsub.s32 0, %v6961
        %v6963 = vrot.slane %v6958, %v6962
        %v6964 = vlaneseq
        %v6965 = vshrl.u32 %v6964, 7
        %v6966 = vsub.s32 1, %v6965
        %v6967 = vrot.slane %v6958, %v6966
        %v6970 = vpack.c.b16 %v6400, %v6398
        %v6971 = vpack.c.b16 %v6772, %v6766
        %v6972 = vpack.c.b16 %v6773, %v6767
        %v6973 = vpack.c.b16 %v6528, %v6526
        %v6974 = vpack.c.b16 %v6774, %v6768
        %v6975 = vpack.c.b16 %v6775, %v6769
        %v6976 = vpack.c.b16 %v6656, %v6654
        %v6977 = vpack.c.b16 %v6776, %v6770
        %v6978 = vpack.c.b16 %v6777, %v6771
        %v6979 = vpack.c.b16 %v6404, %v6402
        %v6980 = vpack.c.b16 %v6784, %v6778
        %v6981 = vpack.c.b16 %v6785, %v6779
        %v6982 = vpack.c.b16 %v6532, %v6530
        %v6983 = vpack.c.b16 %v6786, %v6780
        %v6984 = vpack.c.b16 %v6787, %v6781
        %v6985 = vpack.c.b16 %v6660, %v6658
        %v6986 = vpack.c.b16 %v6788, %v6782
        %v6987 = vpack.c.b16 %v6789, %v6783
        %v6988 = vpack.c.b16 %v6408, %v6406
        %v6989 = vpack.c.b16 %v6796, %v6790
        %v6990 = vpack.c.b16 %v6797, %v6791
        %v6991 = vpack.c.b16 %v6536, %v6534
        %v6992 = vpack.c.b16 %v6798, %v6792
        %v6993 = vpack.c.b16 %v6799, %v6793
        %v6994 = vpack.c.b16 %v6664, %v6662
        %v6995 = vpack.c.b16 %v6800, %v6794
        %v6996 = vpack.c.b16 %v6801, %v6795
        %v6997 = vpack.c.b16 %v6412, %v6410
        %v6998 = vpack.c.b16 %v6808, %v6802
        %v6999 = vpack.c.b16 %v6809, %v6803
        %v7000 = vpack.c.b16 %v6540, %v6538
        %v7001 = vpack.c.b16 %v6810, %v6804
        %v7002 = vpack.c.b16 %v6811, %v6805
        %v7003 = vpack.c.b16 %v6668, %v6666
        %v7004 = vpack.c.b16 %v6812, %v6806
        %v7005 = vpack.c.b16 %v6813, %v6807
        %v7186 = vunpack.c.l.b16 %v6814
        %v7187 = vunpack.c.h.b16 %v6814
        %v7188 = vunpack.c.l.b16 %v6815
        %v7189 = vunpack.c.h.b16 %v6815
        %v7190 = vunpack.c.l.b16 %v6816
        %v7191 = vunpack.c.h.b16 %v6816
        %v7192 = vunpack.c.l.b16 %v6817
        %v7193 = vunpack.c.h.b16 %v6817
        %v7194 = vunpack.c.l.b16 %v6818
        %v7195 = vunpack.c.h.b16 %v6818
        %v7196 = vunpack.c.l.b16 %v6819
        %v7197 = vunpack.c.h.b16 %v6819
        %v7198 = vunpack.c.l.b16 %v6820
        %v7199 = vunpack.c.h.b16 %v6820
        %v7200 = vunpack.c.l.b16 %v6821
        %v7201 = vunpack.c.h.b16 %v6821
        %v7202 = vunpack.c.l.b16 %v6822
        %v7203 = vunpack.c.h.b16 %v6822
        %v7204 = vunpack.c.l.b16 %v6823
        %v7205 = vunpack.c.h.b16 %v6823
        %v7206 = vunpack.c.l.b16 %v6824
        %v7207 = vunpack.c.h.b16 %v6824
        %v7208 = vunpack.c.l.b16 %v6825
        %v7209 = vunpack.c.h.b16 %v6825
        %v7210 = vunpack.c.l.b16 %v6826
        %v7211 = vunpack.c.h.b16 %v6826
        %v7212 = vunpack.c.l.b16 %v6827
        %v7213 = vunpack.c.h.b16 %v6827
        %v7214 = vunpack.c.l.b16 %v6828
        %v7215 = vunpack.c.h.b16 %v6828
        %v7216 = vunpack.c.l.b16 %v6829
        %v7217 = vunpack.c.h.b16 %v6829
        %v7218 = vunpack.c.l.b16 %v6830
        %v7219 = vunpack.c.h.b16 %v6830
        %v7220 = vunpack.c.l.b16 %v6831
        %v7221 = vunpack.c.h.b16 %v6831
        %v7222 = vunpack.c.l.b16 %v6832
        %v7223 = vunpack.c.h.b16 %v6832
        %v7224 = vunpack.c.l.b16 %v6833
        %v7225 = vunpack.c.h.b16 %v6833
        %v7226 = vunpack.c.l.b16 %v6834
        %v7227 = vunpack.c.h.b16 %v6834
        %v7228 = vunpack.c.l.b16 %v6835
        %v7229 = vunpack.c.h.b16 %v6835
        %v7230 = vunpack.c.l.b16 %v6836
        %v7231 = vunpack.c.h.b16 %v6836
        %v7232 = vunpack.c.l.b16 %v6837
        %v7233 = vunpack.c.h.b16 %v6837
        %v7234 = vunpack.c.l.b16 %v6838
        %v7235 = vunpack.c.h.b16 %v6838
        %v7236 = vunpack.c.l.b16 %v6839
        %v7237 = vunpack.c.h.b16 %v6839
        %v7238 = vunpack.c.l.b16 %v6840
        %v7239 = vunpack.c.h.b16 %v6840
        %v7240 = vunpack.c.l.b16 %v6841
        %v7241 = vunpack.c.h.b16 %v6841
        %v7242 = vunpack.c.l.b16 %v6842
        %v7243 = vunpack.c.h.b16 %v6842
        %v7244 = vunpack.c.l.b16 %v6843
        %v7245 = vunpack.c.h.b16 %v6843
        %v7246 = vunpack.c.l.b16 %v6844
        %v7247 = vunpack.c.h.b16 %v6844
        %v7248 = vunpack.c.l.b16 %v6845
        %v7249 = vunpack.c.h.b16 %v6845
        %v7250 = vunpack.c.l.b16 %v6846
        %v7251 = vunpack.c.h.b16 %v6846
        %v7252 = vunpack.c.l.b16 %v6847
        %v7253 = vunpack.c.h.b16 %v6847
        %v7254 = vunpack.c.l.b16 %v6848
        %v7255 = vunpack.c.h.b16 %v6848
        %v7256 = vunpack.c.l.b16 %v6849
        %v7257 = vunpack.c.h.b16 %v6849
        %v7258 = vunpack.c.l.b16 %v6850
        %v7259 = vunpack.c.h.b16 %v6850
        %v7260 = vunpack.c.l.b16 %v6851
        %v7261 = vunpack.c.h.b16 %v6851
        %v7262 = vunpack.c.l.b16 %v6852
        %v7263 = vunpack.c.h.b16 %v6852
        %v7264 = vunpack.c.l.b16 %v6853
        %v7265 = vunpack.c.h.b16 %v6853
        %v7266 = vunpack.c.l.b16 %v6854
        %v7267 = vunpack.c.h.b16 %v6854
        %v7268 = vunpack.c.l.b16 %v6855
        %v7269 = vunpack.c.h.b16 %v6855
        %v7270 = vunpack.c.l.b16 %v6856
        %v7271 = vunpack.c.h.b16 %v6856
        %v7272 = vunpack.c.l.b16 %v6857
        %v7273 = vunpack.c.h.b16 %v6857
        %v7274 = vunpack.c.l.b16 %v6858
        %v7275 = vunpack.c.h.b16 %v6858
        %v7276 = vunpack.c.l.b16 %v6859
        %v7277 = vunpack.c.h.b16 %v6859
        %v7278 = vunpack.c.l.b16 %v6860
        %v7279 = vunpack.c.h.b16 %v6860
        %v7280 = vunpack.c.l.b16 %v6861
        %v7281 = vunpack.c.h.b16 %v6861
        %v7282 = vunpack.c.l.b16 %v6862
        %v7283 = vunpack.c.h.b16 %v6862
        %v7284 = vunpack.c.l.b16 %v6863
        %v7285 = vunpack.c.h.b16 %v6863
        %v7286 = vunpack.c.l.b16 %v6864
        %v7287 = vunpack.c.h.b16 %v6864
        %v7288 = vunpack.c.l.b16 %v6865
        %v7289 = vunpack.c.h.b16 %v6865
        %v7290 = vunpack.c.l.b16 %v6866
        %v7291 = vunpack.c.h.b16 %v6866
        %v7292 = vunpack.c.l.b16 %v6867
        %v7293 = vunpack.c.h.b16 %v6867
        %v7294 = vunpack.c.l.b16 %v6868
        %v7295 = vunpack.c.h.b16 %v6868
        %v7296 = vunpack.c.l.b16 %v6869
        %v7297 = vunpack.c.h.b16 %v6869
        %v7298 = vunpack.c.l.b16 %v6870
        %v7299 = vunpack.c.h.b16 %v6870
        %v7300 = vunpack.c.l.b16 %v6871
        %v7301 = vunpack.c.h.b16 %v6871
        %v7302 = vunpack.c.l.b16 %v6872
        %v7303 = vunpack.c.h.b16 %v6872
        %v7304 = vunpack.c.l.b16 %v6873
        %v7305 = vunpack.c.h.b16 %v6873
        %v7306 = vunpack.c.l.b16 %v6874
        %v7307 = vunpack.c.h.b16 %v6874
        %v7308 = vunpack.c.l.b16 %v6875
        %v7309 = vunpack.c.h.b16 %v6875
        %v7310 = vunpack.c.l.b16 %v6876
        %v7311 = vunpack.c.h.b16 %v6876
        %v7312 = vunpack.c.l.b16 %v6877
        %v7313 = vunpack.c.h.b16 %v6877
        %v7314 = vunpack.c.l.b16 %v6878
        %v7315 = vunpack.c.h.b16 %v6878
        %v7316 = vunpack.c.l.b16 %v6879
        %v7317 = vunpack.c.h.b16 %v6879
        %v7318 = vunpack.c.l.b16 %v6880
        %v7319 = vunpack.c.h.b16 %v6880
        %v7320 = vunpack.c.l.b16 %v6881
        %v7321 = vunpack.c.h.b16 %v6881
        %v7322 = vunpack.c.l.b16 %v6882
        %v7323 = vunpack.c.h.b16 %v6882
        %v7324 = vunpack.c.l.b16 %v6883
        %v7325 = vunpack.c.h.b16 %v6883
        %v7326 = vunpack.c.l.b16 %v6884
        %v7327 = vunpack.c.h.b16 %v6884
        %v7328 = vunpack.c.l.b16 %v6885
        %v7329 = vunpack.c.h.b16 %v6885
        %v7330 = vunpack.c.l.b16 %v6886
        %v7331 = vunpack.c.h.b16 %v6886
        %v7332 = vunpack.c.l.b16 %v6887
        %v7333 = vunpack.c.h.b16 %v6887
        %v7334 = vunpack.c.l.b16 %v6888
        %v7335 = vunpack.c.h.b16 %v6888
        %v7336 = vunpack.c.l.b16 %v6889
        %v7337 = vunpack.c.h.b16 %v6889
        %v7338 = vunpack.c.l.b16 %v6890
        %v7339 = vunpack.c.h.b16 %v6890
        %v7340 = vunpack.c.l.b16 %v6891
        %v7341 = vunpack.c.h.b16 %v6891
        %v7342 = vunpack.c.l.b16 %v6892
        %v7343 = vunpack.c.h.b16 %v6892
        %v7344 = vunpack.c.l.b16 %v6893
        %v7345 = vunpack.c.h.b16 %v6893
        %v7346 = vunpack.c.l.b16 %v6894
        %v7347 = vunpack.c.h.b16 %v6894
        %v7348 = vunpack.c.l.b16 %v6895
        %v7349 = vunpack.c.h.b16 %v6895
        %v7350 = vunpack.c.l.b16 %v6896
        %v7351 = vunpack.c.h.b16 %v6896
        %v7352 = vunpack.c.l.b16 %v6897
        %v7353 = vunpack.c.h.b16 %v6897
        %v7354 = vunpack.c.l.b16 %v6898
        %v7355 = vunpack.c.h.b16 %v6898
        %v7356 = vunpack.c.l.b16 %v6899
        %v7357 = vunpack.c.h.b16 %v6899
        %v7358 = vunpack.c.l.b16 %v6900
        %v7359 = vunpack.c.h.b16 %v6900
        %v7360 = vunpack.c.l.b16 %v6901
        %v7361 = vunpack.c.h.b16 %v6901
        %v7362 = vunpack.c.l.b16 %v6902
        %v7363 = vunpack.c.h.b16 %v6902
        %v7364 = vunpack.c.l.b16 %v6903
        %v7365 = vunpack.c.h.b16 %v6903
        %v7366 = vunpack.c.l.b16 %v6904
        %v7367 = vunpack.c.h.b16 %v6904
        %v7368 = vunpack.c.l.b16 %v6905
        %v7369 = vunpack.c.h.b16 %v6905
        %v7370 = vunpack.c.l.b16 %v6906
        %v7371 = vunpack.c.h.b16 %v6906
        %v7372 = vunpack.c.l.b16 %v6907
        %v7373 = vunpack.c.h.b16 %v6907
        %v7374 = vunpack.c.l.b16 %v6908
        %v7375 = vunpack.c.h.b16 %v6908
        %v7376 = vunpack.c.l.b16 %v6909
        %v7377 = vunpack.c.h.b16 %v6909
        %v7378 = vunpack.c.l.b16 %v6910
        %v7379 = vunpack.c.h.b16 %v6910
        %v7380 = vunpack.c.l.b16 %v6911
        %v7381 = vunpack.c.h.b16 %v6911
        %v7382 = vunpack.c.l.b16 %v6912
        %v7383 = vunpack.c.h.b16 %v6912
        %v7384 = vunpack.c.l.b16 %v6913
        %v7385 = vunpack.c.h.b16 %v6913
        %v7386 = vunpack.c.l.b16 %v6914
        %v7387 = vunpack.c.h.b16 %v6914
        %v7388 = vunpack.c.l.b16 %v6915
        %v7389 = vunpack.c.h.b16 %v6915
        %v7390 = vunpack.c.l.b16 %v6916
        %v7391 = vunpack.c.h.b16 %v6916
        %v7392 = vunpack.c.l.b16 %v6917
        %v7393 = vunpack.c.h.b16 %v6917
        %v7394 = vunpack.c.l.b16 %v6918
        %v7395 = vunpack.c.h.b16 %v6918
        %v7396 = vunpack.c.l.b16 %v6919
        %v7397 = vunpack.c.h.b16 %v6919
        %v7398 = vunpack.c.l.b16 %v6920
        %v7399 = vunpack.c.h.b16 %v6920
        %v7400 = vunpack.c.l.b16 %v6921
        %v7401 = vunpack.c.h.b16 %v6921
        %v7402 = vunpack.c.l.b16 %v6922
        %v7403 = vunpack.c.h.b16 %v6922
        %v7404 = vunpack.c.l.b16 %v6923
        %v7405 = vunpack.c.h.b16 %v6923
        %v7406 = vunpack.c.l.b16 %v6924
        %v7407 = vunpack.c.h.b16 %v6924
        %v7408 = vunpack.c.l.b16 %v6925
        %v7409 = vunpack.c.h.b16 %v6925
        %v7410 = vunpack.c.l.b16 %v6926
        %v7411 = vunpack.c.h.b16 %v6926
        %v7412 = vunpack.c.l.b16 %v6927
        %v7413 = vunpack.c.h.b16 %v6927
        %v7414 = vunpack.c.l.b16 %v6928
        %v7415 = vunpack.c.h.b16 %v6928
        %v7416 = vunpack.c.l.b16 %v6929
        %v7417 = vunpack.c.h.b16 %v6929
        %v7418 = vunpack.c.l.b16 %v6930
        %v7419 = vunpack.c.h.b16 %v6930
        %v7420 = vunpack.c.l.b16 %v6931
        %v7421 = vunpack.c.h.b16 %v6931
        %v7422 = vunpack.c.l.b16 %v6932
        %v7423 = vunpack.c.h.b16 %v6932
        %v7424 = vunpack.c.l.b16 %v6933
        %v7425 = vunpack.c.h.b16 %v6933
        %v7426 = vunpack.c.l.b16 %v6934
        %v7427 = vunpack.c.h.b16 %v6934
        %v7428 = vunpack.c.l.b16 %v6935
        %v7429 = vunpack.c.h.b16 %v6935
        %v7430 = vunpack.c.l.b16 %v6936
        %v7431 = vunpack.c.h.b16 %v6936
        %v7432 = vunpack.c.l.b16 %v6937
        %v7433 = vunpack.c.h.b16 %v6937
        %v7434 = vunpack.c.l.b16 %v6938
        %v7435 = vunpack.c.h.b16 %v6938
        %v7436 = vunpack.c.l.b16 %v6939
        %v7437 = vunpack.c.h.b16 %v6939
        %v7438 = vunpack.c.l.b16 %v6940
        %v7439 = vunpack.c.h.b16 %v6940
        %v7440 = vunpack.c.l.b16 %v6941
        %v7441 = vunpack.c.h.b16 %v6941
        %v7442 = vunpack.c.l.b16 %v6942
        %v7443 = vunpack.c.h.b16 %v6942
        %v7444 = vunpack.c.l.b16 %v6943
        %v7445 = vunpack.c.h.b16 %v6943
        %v7446 = vunpack.c.l.b16 %v6944
        %v7447 = vunpack.c.h.b16 %v6944
        %v7448 = vunpack.c.l.b16 %v6945
        %v7449 = vunpack.c.h.b16 %v6945
        %v7450 = vunpack.c.l.b16 %v6946
        %v7451 = vunpack.c.h.b16 %v6946
        %v7452 = vunpack.c.l.b16 %v6947
        %v7453 = vunpack.c.h.b16 %v6947
        %v7454 = vunpack.c.l.b16 %v6948
        %v7455 = vunpack.c.h.b16 %v6948
        %v7456 = vunpack.c.l.b16 %v6949
        %v7457 = vunpack.c.h.b16 %v6949
        %v7458 = vunpack.c.l.b16 %v6950
        %v7459 = vunpack.c.h.b16 %v6950
        %v7460 = vunpack.c.l.b16 %v6951
        %v7461 = vunpack.c.h.b16 %v6951
        %v7462 = vunpack.c.l.b16 %v6952
        %v7463 = vunpack.c.h.b16 %v6952
        %v7464 = vunpack.c.l.b16 %v6953
        %v7465 = vunpack.c.h.b16 %v6953
        %v7466 = vunpack.c.l.b16 %v6954
        %v7467 = vunpack.c.h.b16 %v6954
        %v7468 = vunpack.c.l.b16 %v6955
        %v7469 = vunpack.c.h.b16 %v6955
        %v7470 = vunpack.c.l.b16 %v6956
        %v7471 = vunpack.c.h.b16 %v6956
        %v7472 = vunpack.c.l.b16 %v6957
        %v7473 = vunpack.c.h.b16 %v6957
        %v7474 = vpack.c.b16 %v7188, %v7186
        %v7475 = vpack.c.b16 %v7189, %v7187
        %v7476 = vpack.c.b16 %v7192, %v7190
        %v7477 = vpack.c.b16 %v7193, %v7191
        %v7478 = vpack.c.b16 %v7196, %v7194
        %v7479 = vpack.c.b16 %v7197, %v7195
        %v7480 = vpack.c.b16 %v7200, %v7198
        %v7481 = vpack.c.b16 %v7201, %v7199
        %v7482 = vpack.c.b16 %v7204, %v7202
        %v7483 = vpack.c.b16 %v7205, %v7203
        %v7484 = vpack.c.b16 %v7208, %v7206
        %v7485 = vpack.c.b16 %v7209, %v7207
        %v7486 = vpack.c.b16 %v7212, %v7210
        %v7487 = vpack.c.b16 %v7213, %v7211
        %v7488 = vpack.c.b16 %v7216, %v7214
        %v7489 = vpack.c.b16 %v7217, %v7215
        %v7490 = vpack.c.b16 %v7220, %v7218
        %v7491 = vpack.c.b16 %v7221, %v7219
        %v7492 = vpack.c.b16 %v7224, %v7222
        %v7493 = vpack.c.b16 %v7225, %v7223
        %v7494 = vpack.c.b16 %v7228, %v7226
        %v7495 = vpack.c.b16 %v7229, %v7227
        %v7496 = vpack.c.b16 %v7232, %v7230
        %v7497 = vpack.c.b16 %v7233, %v7231
        %v7498 = vpack.c.b16 %v7236, %v7234
        %v7499 = vpack.c.b16 %v7237, %v7235
        %v7500 = vpack.c.b16 %v7240, %v7238
        %v7501 = vpack.c.b16 %v7241, %v7239
        %v7502 = vpack.c.b16 %v7244, %v7242
        %v7503 = vpack.c.b16 %v7245, %v7243
        %v7504 = vpack.c.b16 %v7248, %v7246
        %v7505 = vpack.c.b16 %v7249, %v7247
        %v7506 = vpack.c.b16 %v7252, %v7250
        %v7507 = vpack.c.b16 %v7253, %v7251
        %v7508 = vpack.c.b16 %v7256, %v7254
        %v7509 = vpack.c.b16 %v7257, %v7255
        %v7510 = vpack.c.b16 %v7260, %v7258
        %v7511 = vpack.c.b16 %v7261, %v7259
        %v7512 = vpack.c.b16 %v7264, %v7262
        %v7513 = vpack.c.b16 %v7265, %v7263
        %v7514 = vpack.c.b16 %v7268, %v7266
        %v7515 = vpack.c.b16 %v7269, %v7267
        %v7516 = vpack.c.b16 %v7272, %v7270
        %v7517 = vpack.c.b16 %v7273, %v7271
        %v7518 = vpack.c.b16 %v7276, %v7274
        %v7519 = vpack.c.b16 %v7277, %v7275
        %v7520 = vpack.c.b16 %v7280, %v7278
        %v7521 = vpack.c.b16 %v7281, %v7279
        %v7522 = vpack.c.b16 %v7284, %v7282
        %v7523 = vpack.c.b16 %v7285, %v7283
        %v7524 = vpack.c.b16 %v7288, %v7286
        %v7525 = vpack.c.b16 %v7289, %v7287
        %v7526 = vpack.c.b16 %v7292, %v7290
        %v7527 = vpack.c.b16 %v7293, %v7291
        %v7528 = vpack.c.b16 %v7296, %v7294
        %v7529 = vpack.c.b16 %v7297, %v7295
        %v7530 = vpack.c.b16 %v7300, %v7298
        %v7531 = vpack.c.b16 %v7301, %v7299
        %v7532 = vpack.c.b16 %v7304, %v7302
        %v7533 = vpack.c.b16 %v7305, %v7303
        %v7534 = vpack.c.b16 %v7308, %v7306
        %v7535 = vpack.c.b16 %v7309, %v7307
        %v7536 = vpack.c.b16 %v7312, %v7310
        %v7537 = vpack.c.b16 %v7313, %v7311
        %v7538 = vpack.c.b16 %v7316, %v7314
        %v7539 = vpack.c.b16 %v7317, %v7315
        %v7540 = vpack.c.b16 %v7320, %v7318
        %v7541 = vpack.c.b16 %v7321, %v7319
        %v7542 = vpack.c.b16 %v7324, %v7322
        %v7543 = vpack.c.b16 %v7325, %v7323
        %v7544 = vpack.c.b16 %v7328, %v7326
        %v7545 = vpack.c.b16 %v7329, %v7327
        %v7546 = vpack.c.b16 %v7332, %v7330
        %v7547 = vpack.c.b16 %v7333, %v7331
        %v7548 = vpack.c.b16 %v7336, %v7334
        %v7549 = vpack.c.b16 %v7337, %v7335
        %v7550 = vpack.c.b16 %v7340, %v7338
        %v7551 = vpack.c.b16 %v7341, %v7339
        %v7552 = vpack.c.b16 %v7344, %v7342
        %v7553 = vpack.c.b16 %v7345, %v7343
        %v7554 = vpack.c.b16 %v7348, %v7346
        %v7555 = vpack.c.b16 %v7349, %v7347
        %v7556 = vpack.c.b16 %v7352, %v7350
        %v7557 = vpack.c.b16 %v7353, %v7351
        %v7558 = vpack.c.b16 %v7356, %v7354
        %v7559 = vpack.c.b16 %v7357, %v7355
        %v7560 = vpack.c.b16 %v7360, %v7358
        %v7561 = vpack.c.b16 %v7361, %v7359
        %v7562 = vpack.c.b16 %v7364, %v7362
        %v7563 = vpack.c.b16 %v7365, %v7363
        %v7564 = vpack.c.b16 %v7368, %v7366
        %v7565 = vpack.c.b16 %v7369, %v7367
        %v7566 = vpack.c.b16 %v7372, %v7370
        %v7567 = vpack.c.b16 %v7373, %v7371
        %v7568 = vpack.c.b16 %v7376, %v7374
        %v7569 = vpack.c.b16 %v7377, %v7375
        %v7570 = vpack.c.b16 %v7380, %v7378
        %v7571 = vpack.c.b16 %v7381, %v7379
        %v7572 = vpack.c.b16 %v7384, %v7382
        %v7573 = vpack.c.b16 %v7385, %v7383
        %v7574 = vpack.c.b16 %v7388, %v7386
        %v7575 = vpack.c.b16 %v7389, %v7387
        %v7576 = vpack.c.b16 %v7392, %v7390
        %v7577 = vpack.c.b16 %v7393, %v7391
        %v7578 = vpack.c.b16 %v7396, %v7394
        %v7579 = vpack.c.b16 %v7397, %v7395
        %v7580 = vpack.c.b16 %v7400, %v7398
        %v7581 = vpack.c.b16 %v7401, %v7399
        %v7582 = vpack.c.b16 %v7404, %v7402
        %v7583 = vpack.c.b16 %v7405, %v7403
        %v7584 = vpack.c.b16 %v7408, %v7406
        %v7585 = vpack.c.b16 %v7409, %v7407
        %v7586 = vpack.c.b16 %v7412, %v7410
        %v7587 = vpack.c.b16 %v7413, %v7411
        %v7588 = vpack.c.b16 %v7416, %v7414
        %v7589 = vpack.c.b16 %v7417, %v7415
        %v7590 = vpack.c.b16 %v7420, %v7418
        %v7591 = vpack.c.b16 %v7421, %v7419
        %v7592 = vpack.c.b16 %v7424, %v7422
        %v7593 = vpack.c.b16 %v7425, %v7423
        %v7594 = vpack.c.b16 %v7428, %v7426
        %v7595 = vpack.c.b16 %v7429, %v7427
        %v7596 = vpack.c.b16 %v7432, %v7430
        %v7597 = vpack.c.b16 %v7433, %v7431
        %v7598 = vpack.c.b16 %v7436, %v7434
        %v7599 = vpack.c.b16 %v7437, %v7435
        %v7600 = vpack.c.b16 %v7440, %v7438
        %v7601 = vpack.c.b16 %v7441, %v7439
        %v7602 = vpack.c.b16 %v7444, %v7442
        %v7603 = vpack.c.b16 %v7445, %v7443
        %v7604 = vpack.c.b16 %v7448, %v7446
        %v7605 = vpack.c.b16 %v7449, %v7447
        %v7606 = vpack.c.b16 %v7452, %v7450
        %v7607 = vpack.c.b16 %v7453, %v7451
        %v7608 = vpack.c.b16 %v7456, %v7454
        %v7609 = vpack.c.b16 %v7457, %v7455
        %v7610 = vpack.c.b16 %v7460, %v7458
        %v7611 = vpack.c.b16 %v7461, %v7459
        %v7612 = vpack.c.b16 %v7464, %v7462
        %v7613 = vpack.c.b16 %v7465, %v7463
        %v7614 = vpack.c.b16 %v7468, %v7466
        %v7615 = vpack.c.b16 %v7469, %v7467
        %v7616 = vpack.c.b16 %v7472, %v7470
        %v7617 = vpack.c.b16 %v7473, %v7471
        %7762 = vmatprep.subr.bf16.mxu0 %v7489
        %7763 = vmatpush1.bf16.msra.mxu0 %v7488
        %7764 = vmatprep.subr.bf16.mxu0 %v7487
        %7765 = vmatpush1.bf16.msra.mxu0 %v7486
        %7766 = vmatprep.subr.bf16.mxu0 %v7485
        %7767 = vmatpush1.bf16.msra.mxu0 %v7484
        %7768 = vmatprep.subr.bf16.mxu0 %v7483
        %7769 = vmatpush1.bf16.msra.mxu0 %v7482
        %7770 = vmatprep.subr.bf16.mxu0 %v7481
        %7771 = vmatpush1.bf16.msra.mxu0 %v7480
        %7772 = vmatprep.subr.bf16.mxu0 %v7479
        %7773 = vmatpush1.bf16.msra.mxu0 %v7478
        %7774 = vmatprep.subr.bf16.mxu0 %v7477
        %7775 = vmatpush1.bf16.msra.mxu0 %v7476
        %7776 = vmatprep.subr.bf16.mxu0 %v7475
        %7777 = vmatpush1.bf16.msra.mxu0 %v7474
        %7778 = vmatprep.subr.bf16.mxu0 %v7505
        %7779 = vmatpush2.bf16.msra.mxu0 %v7504
        %7780 = vmatprep.subr.bf16.mxu0 %v7503
        %7781 = vmatpush2.bf16.msra.mxu0 %v7502
        %7782 = vmatprep.subr.bf16.mxu0 %v7501
        %7783 = vmatpush2.bf16.msra.mxu0 %v7500
        %7784 = vmatprep.subr.bf16.mxu0 %v7499
        %7785 = vmatpush2.bf16.msra.mxu0 %v7498
        %7786 = vmatprep.subr.bf16.mxu0 %v7497
        %7787 = vmatpush2.bf16.msra.mxu0 %v7496
        %7788 = vmatprep.subr.bf16.mxu0 %v7495
        %7789 = vmatpush2.bf16.msra.mxu0 %v7494
        %7790 = vmatprep.subr.bf16.mxu0 %v7493
        %7791 = vmatpush2.bf16.msra.mxu0 %v7492
        %7792 = vmatprep.subr.bf16.mxu0 %v7491
        %7793 = vmatpush2.bf16.msra.mxu0 %v7490
        %7794 = vmatprep.mubr.bf16.mxu0 %v6971
        %7795 = vmatmul.mubr.bf16.gmra.mxu0 %v6970
        %v7796 = vpop.f32.mrf.mxu0
        %v7797 = vadd.f32 %v6963, %v7796
        %v7798 = vpop.f32.mrf.mxu0
        %v7799 = vadd.f32 %v6967, %v7798
        %v7800 = vpop.f32.mrf.mxu0
        %v7801 = vadd.f32 %v6963, %v7800
        %v7802 = vpop.f32.mrf.mxu0
        %v7803 = vadd.f32 %v6967, %v7802
        %7804 = vmatprep.mubr.bf16.mxu0 %v6980
        %7805 = vmatmul.mubr.bf16.gmra.mxu0 %v6979
        %v7806 = vpop.f32.mrf.mxu0
        %v7807 = vadd.f32 %v6963, %v7806
        %v7808 = vpop.f32.mrf.mxu0
        %v7809 = vadd.f32 %v6967, %v7808
        %v7810 = vpop.f32.mrf.mxu0
        %v7811 = vadd.f32 %v6963, %v7810
        %v7812 = vpop.f32.mrf.mxu0
        %v7813 = vadd.f32 %v6967, %v7812
        %7814 = vmatprep.mubr.bf16.mxu0 %v6989
        %7815 = vmatmul.mubr.bf16.gmra.mxu0 %v6988
        %v7816 = vpop.f32.mrf.mxu0
        %v7817 = vadd.f32 %v6963, %v7816
        %v7818 = vpop.f32.mrf.mxu0
        %v7819 = vadd.f32 %v6967, %v7818
        %v7820 = vpop.f32.mrf.mxu0
        %v7821 = vadd.f32 %v6963, %v7820
        %v7822 = vpop.f32.mrf.mxu0
        %v7823 = vadd.f32 %v6967, %v7822
        %7824 = vmatprep.mubr.bf16.mxu0 %v6998
        %7825 = vmatmul.mubr.bf16.gmra.mxu0 %v6997
        %v7826 = vpop.f32.mrf.mxu0
        %v7827 = vadd.f32 %v6963, %v7826
        %v7828 = vpop.f32.mrf.mxu0
        %v7829 = vadd.f32 %v6967, %v7828
        %v7830 = vpop.f32.mrf.mxu0
        %v7831 = vadd.f32 %v6963, %v7830
        %v7832 = vpop.f32.mrf.mxu0
        %v7833 = vadd.f32 %v6967, %v7832
        %7834 = vdwg.mxu0
        %7835 = vmatprep.subr.bf16.mxu0 %v7521
        %7836 = vmatpush1.bf16.msra.mxu0 %v7520
        %7837 = vmatprep.subr.bf16.mxu0 %v7519
        %7838 = vmatpush1.bf16.msra.mxu0 %v7518
        %7839 = vmatprep.subr.bf16.mxu0 %v7517
        %7840 = vmatpush1.bf16.msra.mxu0 %v7516
        %7841 = vmatprep.subr.bf16.mxu0 %v7515
        %7842 = vmatpush1.bf16.msra.mxu0 %v7514
        %7843 = vmatprep.subr.bf16.mxu0 %v7513
        %7844 = vmatpush1.bf16.msra.mxu0 %v7512
        %7845 = vmatprep.subr.bf16.mxu0 %v7511
        %7846 = vmatpush1.bf16.msra.mxu0 %v7510
        %7847 = vmatprep.subr.bf16.mxu0 %v7509
        %7848 = vmatpush1.bf16.msra.mxu0 %v7508
        %7849 = vmatprep.subr.bf16.mxu0 %v7507
        %7850 = vmatpush1.bf16.msra.mxu0 %v7506
        %7851 = vmatprep.subr.bf16.mxu0 %v7537
        %7852 = vmatpush2.bf16.msra.mxu0 %v7536
        %7853 = vmatprep.subr.bf16.mxu0 %v7535
        %7854 = vmatpush2.bf16.msra.mxu0 %v7534
        %7855 = vmatprep.subr.bf16.mxu0 %v7533
        %7856 = vmatpush2.bf16.msra.mxu0 %v7532
        %7857 = vmatprep.subr.bf16.mxu0 %v7531
        %7858 = vmatpush2.bf16.msra.mxu0 %v7530
        %7859 = vmatprep.subr.bf16.mxu0 %v7529
        %7860 = vmatpush2.bf16.msra.mxu0 %v7528
        %7861 = vmatprep.subr.bf16.mxu0 %v7527
        %7862 = vmatpush2.bf16.msra.mxu0 %v7526
        %7863 = vmatprep.subr.bf16.mxu0 %v7525
        %7864 = vmatpush2.bf16.msra.mxu0 %v7524
        %7865 = vmatprep.subr.bf16.mxu0 %v7523
        %7866 = vmatpush2.bf16.msra.mxu0 %v7522
        %7867 = vmatprep.mubr.bf16.mxu0 %v6973
        %7868 = vmatmul.mubr.bf16.gmra.mxu0 %v6972
        %v7869 = vpop.f32.mrf.mxu0
        %v7870 = vadd.f32 %v7797, %v7869
        %v7871 = vpop.f32.mrf.mxu0
        %v7872 = vadd.f32 %v7799, %v7871
        %v7873 = vpop.f32.mrf.mxu0
        %v7874 = vadd.f32 %v7801, %v7873
        %v7875 = vpop.f32.mrf.mxu0
        %v7876 = vadd.f32 %v7803, %v7875
        %7877 = vmatprep.mubr.bf16.mxu0 %v6982
        %7878 = vmatmul.mubr.bf16.gmra.mxu0 %v6981
        %v7879 = vpop.f32.mrf.mxu0
        %v7880 = vadd.f32 %v7807, %v7879
        %v7881 = vpop.f32.mrf.mxu0
        %v7882 = vadd.f32 %v7809, %v7881
        %v7883 = vpop.f32.mrf.mxu0
        %v7884 = vadd.f32 %v7811, %v7883
        %v7885 = vpop.f32.mrf.mxu0
        %v7886 = vadd.f32 %v7813, %v7885
        %7887 = vmatprep.mubr.bf16.mxu0 %v6991
        %7888 = vmatmul.mubr.bf16.gmra.mxu0 %v6990
        %v7889 = vpop.f32.mrf.mxu0
        %v7890 = vadd.f32 %v7817, %v7889
        %v7891 = vpop.f32.mrf.mxu0
        %v7892 = vadd.f32 %v7819, %v7891
        %v7893 = vpop.f32.mrf.mxu0
        %v7894 = vadd.f32 %v7821, %v7893
        %v7895 = vpop.f32.mrf.mxu0
        %v7896 = vadd.f32 %v7823, %v7895
        %7897 = vmatprep.mubr.bf16.mxu0 %v7000
        %7898 = vmatmul.mubr.bf16.gmra.mxu0 %v6999
        %v7899 = vpop.f32.mrf.mxu0
        %v7900 = vadd.f32 %v7827, %v7899
        %v7901 = vpop.f32.mrf.mxu0
        %v7902 = vadd.f32 %v7829, %v7901
        %v7903 = vpop.f32.mrf.mxu0
        %v7904 = vadd.f32 %v7831, %v7903
        %v7905 = vpop.f32.mrf.mxu0
        %v7906 = vadd.f32 %v7833, %v7905
        %7907 = vdwg.mxu0
        %7908 = vmatprep.subr.bf16.mxu0 %v7553
        %7909 = vmatpush1.bf16.msra.mxu0 %v7552
        %7910 = vmatprep.subr.bf16.mxu0 %v7551
        %7911 = vmatpush1.bf16.msra.mxu0 %v7550
        %7912 = vmatprep.subr.bf16.mxu0 %v7549
        %7913 = vmatpush1.bf16.msra.mxu0 %v7548
        %7914 = vmatprep.subr.bf16.mxu0 %v7547
        %7915 = vmatpush1.bf16.msra.mxu0 %v7546
        %7916 = vmatprep.subr.bf16.mxu0 %v7545
        %7917 = vmatpush1.bf16.msra.mxu0 %v7544
        %7918 = vmatprep.subr.bf16.mxu0 %v7543
        %7919 = vmatpush1.bf16.msra.mxu0 %v7542
        %7920 = vmatprep.subr.bf16.mxu0 %v7541
        %7921 = vmatpush1.bf16.msra.mxu0 %v7540
        %7922 = vmatprep.subr.bf16.mxu0 %v7539
        %7923 = vmatpush1.bf16.msra.mxu0 %v7538
        %7924 = vmatprep.subr.bf16.mxu0 %v7569
        %7925 = vmatpush2.bf16.msra.mxu0 %v7568
        %7926 = vmatprep.subr.bf16.mxu0 %v7567
        %7927 = vmatpush2.bf16.msra.mxu0 %v7566
        %7928 = vmatprep.subr.bf16.mxu0 %v7565
        %7929 = vmatpush2.bf16.msra.mxu0 %v7564
        %7930 = vmatprep.subr.bf16.mxu0 %v7563
        %7931 = vmatpush2.bf16.msra.mxu0 %v7562
        %7932 = vmatprep.subr.bf16.mxu0 %v7561
        %7933 = vmatpush2.bf16.msra.mxu0 %v7560
        %7934 = vmatprep.subr.bf16.mxu0 %v7559
        %7935 = vmatpush2.bf16.msra.mxu0 %v7558
        %7936 = vmatprep.subr.bf16.mxu0 %v7557
        %7937 = vmatpush2.bf16.msra.mxu0 %v7556
        %7938 = vmatprep.subr.bf16.mxu0 %v7555
        %7939 = vmatpush2.bf16.msra.mxu0 %v7554
        %7940 = vmatprep.mubr.bf16.mxu0 %v6975
        %7941 = vmatmul.mubr.bf16.gmra.mxu0 %v6974
        %v7942 = vpop.f32.mrf.mxu0
        %v7943 = vadd.f32 %v7870, %v7942
        %v7944 = vpop.f32.mrf.mxu0
        %v7945 = vadd.f32 %v7872, %v7944
        %v7946 = vpop.f32.mrf.mxu0
        %v7947 = vadd.f32 %v7874, %v7946
        %v7948 = vpop.f32.mrf.mxu0
        %v7949 = vadd.f32 %v7876, %v7948
        %7950 = vmatprep.mubr.bf16.mxu0 %v6984
        %7951 = vmatmul.mubr.bf16.gmra.mxu0 %v6983
        %v7952 = vpop.f32.mrf.mxu0
        %v7953 = vadd.f32 %v7880, %v7952
        %v7954 = vpop.f32.mrf.mxu0
        %v7955 = vadd.f32 %v7882, %v7954
        %v7956 = vpop.f32.mrf.mxu0
        %v7957 = vadd.f32 %v7884, %v7956
        %v7958 = vpop.f32.mrf.mxu0
        %v7959 = vadd.f32 %v7886, %v7958
        %7960 = vmatprep.mubr.bf16.mxu0 %v6993
        %7961 = vmatmul.mubr.bf16.gmra.mxu0 %v6992
        %v7962 = vpop.f32.mrf.mxu0
        %v7963 = vadd.f32 %v7890, %v7962
        %v7964 = vpop.f32.mrf.mxu0
        %v7965 = vadd.f32 %v7892, %v7964
        %v7966 = vpop.f32.mrf.mxu0
        %v7967 = vadd.f32 %v7894, %v7966
        %v7968 = vpop.f32.mrf.mxu0
        %v7969 = vadd.f32 %v7896, %v7968
        %7970 = vmatprep.mubr.bf16.mxu0 %v7002
        %7971 = vmatmul.mubr.bf16.gmra.mxu0 %v7001
        %v7972 = vpop.f32.mrf.mxu0
        %v7973 = vadd.f32 %v7900, %v7972
        %v7974 = vpop.f32.mrf.mxu0
        %v7975 = vadd.f32 %v7902, %v7974
        %v7976 = vpop.f32.mrf.mxu0
        %v7977 = vadd.f32 %v7904, %v7976
        %v7978 = vpop.f32.mrf.mxu0
        %v7979 = vadd.f32 %v7906, %v7978
        %7980 = vdwg.mxu0
        %7981 = vmatprep.subr.bf16.mxu0 %v7585
        %7982 = vmatpush1.bf16.msra.mxu0 %v7584
        %7983 = vmatprep.subr.bf16.mxu0 %v7583
        %7984 = vmatpush1.bf16.msra.mxu0 %v7582
        %7985 = vmatprep.subr.bf16.mxu0 %v7581
        %7986 = vmatpush1.bf16.msra.mxu0 %v7580
        %7987 = vmatprep.subr.bf16.mxu0 %v7579
        %7988 = vmatpush1.bf16.msra.mxu0 %v7578
        %7989 = vmatprep.subr.bf16.mxu0 %v7577
        %7990 = vmatpush1.bf16.msra.mxu0 %v7576
        %7991 = vmatprep.subr.bf16.mxu0 %v7575
        %7992 = vmatpush1.bf16.msra.mxu0 %v7574
        %7993 = vmatprep.subr.bf16.mxu0 %v7573
        %7994 = vmatpush1.bf16.msra.mxu0 %v7572
        %7995 = vmatprep.subr.bf16.mxu0 %v7571
        %7996 = vmatpush1.bf16.msra.mxu0 %v7570
        %7997 = vmatprep.subr.bf16.mxu0 %v7601
        %7998 = vmatpush2.bf16.msra.mxu0 %v7600
        %7999 = vmatprep.subr.bf16.mxu0 %v7599
        %8000 = vmatpush2.bf16.msra.mxu0 %v7598
        %8001 = vmatprep.subr.bf16.mxu0 %v7597
        %8002 = vmatpush2.bf16.msra.mxu0 %v7596
        %8003 = vmatprep.subr.bf16.mxu0 %v7595
        %8004 = vmatpush2.bf16.msra.mxu0 %v7594
        %8005 = vmatprep.subr.bf16.mxu0 %v7593
        %8006 = vmatpush2.bf16.msra.mxu0 %v7592
        %8007 = vmatprep.subr.bf16.mxu0 %v7591
        %8008 = vmatpush2.bf16.msra.mxu0 %v7590
        %8009 = vmatprep.subr.bf16.mxu0 %v7589
        %8010 = vmatpush2.bf16.msra.mxu0 %v7588
        %8011 = vmatprep.subr.bf16.mxu0 %v7587
        %8012 = vmatpush2.bf16.msra.mxu0 %v7586
        %8013 = vmatprep.mubr.bf16.mxu0 %v6977
        %8014 = vmatmul.mubr.bf16.gmra.mxu0 %v6976
        %v8015 = vpop.f32.mrf.mxu0
        %v8016 = vadd.f32 %v7943, %v8015
        %v8017 = vpop.f32.mrf.mxu0
        %v8018 = vadd.f32 %v7945, %v8017
        %v8019 = vpop.f32.mrf.mxu0
        %v8020 = vadd.f32 %v7947, %v8019
        %v8021 = vpop.f32.mrf.mxu0
        %v8022 = vadd.f32 %v7949, %v8021
        %8023 = vmatprep.mubr.bf16.mxu0 %v6986
        %8024 = vmatmul.mubr.bf16.gmra.mxu0 %v6985
        %v8025 = vpop.f32.mrf.mxu0
        %v8026 = vadd.f32 %v7953, %v8025
        %v8027 = vpop.f32.mrf.mxu0
        %v8028 = vadd.f32 %v7955, %v8027
        %v8029 = vpop.f32.mrf.mxu0
        %v8030 = vadd.f32 %v7957, %v8029
        %v8031 = vpop.f32.mrf.mxu0
        %v8032 = vadd.f32 %v7959, %v8031
        %8033 = vmatprep.mubr.bf16.mxu0 %v6995
        %8034 = vmatmul.mubr.bf16.gmra.mxu0 %v6994
        %v8035 = vpop.f32.mrf.mxu0
        %v8036 = vadd.f32 %v7963, %v8035
        %v8037 = vpop.f32.mrf.mxu0
        %v8038 = vadd.f32 %v7965, %v8037
        %v8039 = vpop.f32.mrf.mxu0
        %v8040 = vadd.f32 %v7967, %v8039
        %v8041 = vpop.f32.mrf.mxu0
        %v8042 = vadd.f32 %v7969, %v8041
        %8043 = vmatprep.mubr.bf16.mxu0 %v7004
        %8044 = vmatmul.mubr.bf16.gmra.mxu0 %v7003
        %v8045 = vpop.f32.mrf.mxu0
        %v8046 = vadd.f32 %v7973, %v8045
        %v8047 = vpop.f32.mrf.mxu0
        %v8048 = vadd.f32 %v7975, %v8047
        %v8049 = vpop.f32.mrf.mxu0
        %v8050 = vadd.f32 %v7977, %v8049
        %v8051 = vpop.f32.mrf.mxu0
        %v8052 = vadd.f32 %v7979, %v8051
        %8053 = vdwg.mxu0
        %8054 = vmatprep.subr.bf16.mxu0 %v7617
        %8055 = vmatpush1.bf16.msra.mxu0 %v7616
        %8056 = vmatprep.subr.bf16.mxu0 %v7615
        %8057 = vmatpush1.bf16.msra.mxu0 %v7614
        %8058 = vmatprep.subr.bf16.mxu0 %v7613
        %8059 = vmatpush1.bf16.msra.mxu0 %v7612
        %8060 = vmatprep.subr.bf16.mxu0 %v7611
        %8061 = vmatpush1.bf16.msra.mxu0 %v7610
        %8062 = vmatprep.subr.bf16.mxu0 %v7609
        %8063 = vmatpush1.bf16.msra.mxu0 %v7608
        %8064 = vmatprep.subr.bf16.mxu0 %v7607
        %8065 = vmatpush1.bf16.msra.mxu0 %v7606
        %8066 = vmatprep.subr.bf16.mxu0 %v7605
        %8067 = vmatpush1.bf16.msra.mxu0 %v7604
        %8068 = vmatprep.subr.bf16.mxu0 %v7603
        %8069 = vmatpush1.bf16.msra.mxu0 %v7602
        %8070 = vmatprep.subr.bf16.mxu0 0
        %8071 = vmatpush2.bf16.msra.mxu0 0
        %8072 = vmatprep.subr.bf16.mxu0 0
        %8073 = vmatpush2.bf16.msra.mxu0 0
        %8074 = vmatprep.subr.bf16.mxu0 0
        %8075 = vmatpush2.bf16.msra.mxu0 0
        %8076 = vmatprep.subr.bf16.mxu0 0
        %8077 = vmatpush2.bf16.msra.mxu0 0
        %8078 = vmatprep.subr.bf16.mxu0 0
        %8079 = vmatpush2.bf16.msra.mxu0 0
        %8080 = vmatprep.subr.bf16.mxu0 0
        %8081 = vmatpush2.bf16.msra.mxu0 0
        %8082 = vmatprep.subr.bf16.mxu0 0
        %8083 = vmatpush2.bf16.msra.mxu0 0
        %8084 = vmatprep.subr.bf16.mxu0 0
        %8085 = vmatpush2.bf16.msra.mxu0 0
        %8086 = vmatprep.mubr.bf16.mxu0 0
        %8087 = vmatmul.mubr.bf16.gmra.mxu0 %v6978
        %v8088 = vpop.f32.mrf.mxu0
        %v8089 = vadd.f32 %v8016, %v8088
        %v8090 = vpop.f32.mrf.mxu0
        %v8091 = vadd.f32 %v8018, %v8090
        %v8092 = vpop.f32.mrf.mxu0
        %v8093 = vadd.f32 %v8020, %v8092
        %v8094 = vpop.f32.mrf.mxu0
        %v8095 = vadd.f32 %v8022, %v8094
        %8096 = vmatprep.mubr.bf16.mxu0 0
        %8097 = vmatmul.mubr.bf16.gmra.mxu0 %v6987
        %v8098 = vpop.f32.mrf.mxu0
        %v8099 = vadd.f32 %v8026, %v8098
        %v8100 = vpop.f32.mrf.mxu0
        %v8101 = vadd.f32 %v8028, %v8100
        %v8102 = vpop.f32.mrf.mxu0
        %v8103 = vadd.f32 %v8030, %v8102
        %v8104 = vpop.f32.mrf.mxu0
        %v8105 = vadd.f32 %v8032, %v8104
        %8106 = vmatprep.mubr.bf16.mxu0 0
        %8107 = vmatmul.mubr.bf16.gmra.mxu0 %v6996
        %v8108 = vpop.f32.mrf.mxu0
        %v8109 = vadd.f32 %v8036, %v8108
        %v8110 = vpop.f32.mrf.mxu0
        %v8111 = vadd.f32 %v8038, %v8110
        %v8112 = vpop.f32.mrf.mxu0
        %v8113 = vadd.f32 %v8040, %v8112
        %v8114 = vpop.f32.mrf.mxu0
        %v8115 = vadd.f32 %v8042, %v8114
        %8116 = vmatprep.mubr.bf16.mxu0 0
        %8117 = vmatmul.mubr.bf16.gmra.mxu0 %v7005
        %v8118 = vpop.f32.mrf.mxu0
        %v8119 = vadd.f32 %v8046, %v8118
        %v8120 = vpop.f32.mrf.mxu0
        %v8121 = vadd.f32 %v8048, %v8120
        %v8122 = vpop.f32.mrf.mxu0
        %v8123 = vadd.f32 %v8050, %v8122
        %v8124 = vpop.f32.mrf.mxu0
        %v8125 = vadd.f32 %v8052, %v8124
        %8126 = vdwg.mxu0
        %v8127 = vmax.f32 %v8089, 0.0
        %v8128 = vmax.f32 %v8091, 0.0
        %v8129 = vmax.f32 %v8093, 0.0
        %v8130 = vmax.f32 %v8095, 0.0
        %v8131 = vmax.f32 %v8099, 0.0
        %v8132 = vmax.f32 %v8101, 0.0
        %v8133 = vmax.f32 %v8103, 0.0
        %v8134 = vmax.f32 %v8105, 0.0
        %v8135 = vmax.f32 %v8109, 0.0
        %v8136 = vmax.f32 %v8111, 0.0
        %v8137 = vmax.f32 %v8113, 0.0
        %v8138 = vmax.f32 %v8115, 0.0
        %v8139 = vmax.f32 %v8119, 0.0
        %v8140 = vmax.f32 %v8121, 0.0
        %v8141 = vmax.f32 %v8123, 0.0
        %v8142 = vmax.f32 %v8125, 0.0
        %v8143 = vmax.f32 %v8127, %v8129
        %v8144 = vmax.f32 %v8128, %v8130
        %v8145 = vsel %vm748, %v8143, -inf
        %v8146 = vrot.slane %v8145, 4
        %v8147 = vmax.f32 %v8145, %v8146
        %v8148 = vrot.slane %v8147, 2
        %v8149 = vmax.f32 %v8147, %v8148
        %v8150 = vrot.slane %v8149, 1
        %v8151 = vmax.f32 %v8149, %v8150
        %v8152 = vsel %vm748, %v8144, -inf
        %v8153 = vrot.slane %v8152, 4
        %v8154 = vmax.f32 %v8152, %v8153
        %v8155 = vrot.slane %v8154, 2
        %v8156 = vmax.f32 %v8154, %v8155
        %v8157 = vrot.slane %v8156, 1
        %v8158 = vmax.f32 %v8156, %v8157
        %vm8159 = vcmask 1043458
        %v8160 = vsel %vm8159, %v8143, -inf
        %v8161 = vrot.slane %v8160, 4
        %v8162 = vmax.f32 %v8160, %v8161
        %v8163 = vrot.slane %v8162, 2
        %v8164 = vmax.f32 %v8162, %v8163
        %v8165 = vrot.slane %v8164, 1
        %v8166 = vmax.f32 %v8164, %v8165
        %v8167 = vsel %vm8159, %v8144, -inf
        %v8168 = vrot.slane %v8167, 4
        %v8169 = vmax.f32 %v8167, %v8168
        %v8170 = vrot.slane %v8169, 2
        %v8171 = vmax.f32 %v8169, %v8170
        %v8172 = vrot.slane %v8171, 1
        %v8173 = vmax.f32 %v8171, %v8172
        %vm8174 = vcmask 1045508
        %v8175 = vsel %vm8174, %v8143, -inf
        %v8176 = vrot.slane %v8175, 4
        %v8177 = vmax.f32 %v8175, %v8176
        %v8178 = vrot.slane %v8177, 2
        %v8179 = vmax.f32 %v8177, %v8178
        %v8180 = vrot.slane %v8179, 1
        %v8181 = vmax.f32 %v8179, %v8180
        %v8182 = vsel %vm8174, %v8144, -inf
        %v8183 = vrot.slane %v8182, 4
        %v8184 = vmax.f32 %v8182, %v8183
        %v8185 = vrot.slane %v8184, 2
        %v8186 = vmax.f32 %v8184, %v8185
        %v8187 = vrot.slane %v8186, 1
        %v8188 = vmax.f32 %v8186, %v8187
        %vm8189 = vcmask 1047558
        %v8190 = vsel %vm8189, %v8143, -inf
        %v8191 = vrot.slane %v8190, 4
        %v8192 = vmax.f32 %v8190, %v8191
        %v8193 = vrot.slane %v8192, 2
        %v8194 = vmax.f32 %v8192, %v8193
        %v8195 = vrot.slane %v8194, 1
        %v8196 = vmax.f32 %v8194, %v8195
        %v8197 = vsel %vm8189, %v8144, -inf
        %v8198 = vrot.slane %v8197, 4
        %v8199 = vmax.f32 %v8197, %v8198
        %v8200 = vrot.slane %v8199, 2
        %v8201 = vmax.f32 %v8199, %v8200
        %v8202 = vrot.slane %v8201, 1
        %v8203 = vmax.f32 %v8201, %v8202
        %v8204 = vmax.f32 %v8131, %v8133
        %v8205 = vmax.f32 %v8132, %v8134
        %v8206 = vsel %vm748, %v8204, -inf
        %v8207 = vrot.slane %v8206, 4
        %v8208 = vmax.f32 %v8206, %v8207
        %v8209 = vrot.slane %v8208, 2
        %v8210 = vmax.f32 %v8208, %v8209
        %v8211 = vrot.slane %v8210, 1
        %v8212 = vmax.f32 %v8210, %v8211
        %v8213 = vsel %vm748, %v8205, -inf
        %v8214 = vrot.slane %v8213, 4
        %v8215 = vmax.f32 %v8213, %v8214
        %v8216 = vrot.slane %v8215, 2
        %v8217 = vmax.f32 %v8215, %v8216
        %v8218 = vrot.slane %v8217, 1
        %v8219 = vmax.f32 %v8217, %v8218
        %v8220 = vsel %vm8159, %v8204, -inf
        %v8221 = vrot.slane %v8220, 4
        %v8222 = vmax.f32 %v8220, %v8221
        %v8223 = vrot.slane %v8222, 2
        %v8224 = vmax.f32 %v8222, %v8223
        %v8225 = vrot.slane %v8224, 1
        %v8226 = vmax.f32 %v8224, %v8225
        %v8227 = vsel %vm8159, %v8205, -inf
        %v8228 = vrot.slane %v8227, 4
        %v8229 = vmax.f32 %v8227, %v8228
        %v8230 = vrot.slane %v8229, 2
        %v8231 = vmax.f32 %v8229, %v8230
        %v8232 = vrot.slane %v8231, 1
        %v8233 = vmax.f32 %v8231, %v8232
        %v8234 = vsel %vm8174, %v8204, -inf
        %v8235 = vrot.slane %v8234, 4
        %v8236 = vmax.f32 %v8234, %v8235
        %v8237 = vrot.slane %v8236, 2
        %v8238 = vmax.f32 %v8236, %v8237
        %v8239 = vrot.slane %v8238, 1
        %v8240 = vmax.f32 %v8238, %v8239
        %v8241 = vsel %vm8174, %v8205, -inf
        %v8242 = vrot.slane %v8241, 4
        %v8243 = vmax.f32 %v8241, %v8242
        %v8244 = vrot.slane %v8243, 2
        %v8245 = vmax.f32 %v8243, %v8244
        %v8246 = vrot.slane %v8245, 1
        %v8247 = vmax.f32 %v8245, %v8246
        %v8248 = vsel %vm8189, %v8204, -inf
        %v8249 = vrot.slane %v8248, 4
        %v8250 = vmax.f32 %v8248, %v8249
        %v8251 = vrot.slane %v8250, 2
        %v8252 = vmax.f32 %v8250, %v8251
        %v8253 = vrot.slane %v8252, 1
        %v8254 = vmax.f32 %v8252, %v8253
        %v8255 = vsel %vm8189, %v8205, -inf
        %v8256 = vrot.slane %v8255, 4
        %v8257 = vmax.f32 %v8255, %v8256
        %v8258 = vrot.slane %v8257, 2
        %v8259 = vmax.f32 %v8257, %v8258
        %v8260 = vrot.slane %v8259, 1
        %v8261 = vmax.f32 %v8259, %v8260
        %v8262 = vmax.f32 %v8135, %v8137
        %v8263 = vmax.f32 %v8136, %v8138
        %v8264 = vsel %vm748, %v8262, -inf
        %v8265 = vrot.slane %v8264, 4
        %v8266 = vmax.f32 %v8264, %v8265
        %v8267 = vrot.slane %v8266, 2
        %v8268 = vmax.f32 %v8266, %v8267
        %v8269 = vrot.slane %v8268, 1
        %v8270 = vmax.f32 %v8268, %v8269
        %v8271 = vsel %vm748, %v8263, -inf
        %v8272 = vrot.slane %v8271, 4
        %v8273 = vmax.f32 %v8271, %v8272
        %v8274 = vrot.slane %v8273, 2
        %v8275 = vmax.f32 %v8273, %v8274
        %v8276 = vrot.slane %v8275, 1
        %v8277 = vmax.f32 %v8275, %v8276
        %v8278 = vsel %vm8159, %v8262, -inf
        %v8279 = vrot.slane %v8278, 4
        %v8280 = vmax.f32 %v8278, %v8279
        %v8281 = vrot.slane %v8280, 2
        %v8282 = vmax.f32 %v8280, %v8281
        %v8283 = vrot.slane %v8282, 1
        %v8284 = vmax.f32 %v8282, %v8283
        %v8285 = vsel %vm8159, %v8263, -inf
        %v8286 = vrot.slane %v8285, 4
        %v8287 = vmax.f32 %v8285, %v8286
        %v8288 = vrot.slane %v8287, 2
        %v8289 = vmax.f32 %v8287, %v8288
        %v8290 = vrot.slane %v8289, 1
        %v8291 = vmax.f32 %v8289, %v8290
        %v8292 = vsel %vm8174, %v8262, -inf
        %v8293 = vrot.slane %v8292, 4
        %v8294 = vmax.f32 %v8292, %v8293
        %v8295 = vrot.slane %v8294, 2
        %v8296 = vmax.f32 %v8294, %v8295
        %v8297 = vrot.slane %v8296, 1
        %v8298 = vmax.f32 %v8296, %v8297
        %v8299 = vsel %vm8174, %v8263, -inf
        %v8300 = vrot.slane %v8299, 4
        %v8301 = vmax.f32 %v8299, %v8300
        %v8302 = vrot.slane %v8301, 2
        %v8303 = vmax.f32 %v8301, %v8302
        %v8304 = vrot.slane %v8303, 1
        %v8305 = vmax.f32 %v8303, %v8304
        %v8306 = vsel %vm8189, %v8262, -inf
        %v8307 = vrot.slane %v8306, 4
        %v8308 = vmax.f32 %v8306, %v8307
        %v8309 = vrot.slane %v8308, 2
        %v8310 = vmax.f32 %v8308, %v8309
        %v8311 = vrot.slane %v8310, 1
        %v8312 = vmax.f32 %v8310, %v8311
        %v8313 = vsel %vm8189, %v8263, -inf
        %v8314 = vrot.slane %v8313, 4
        %v8315 = vmax.f32 %v8313, %v8314
        %v8316 = vrot.slane %v8315, 2
        %v8317 = vmax.f32 %v8315, %v8316
        %v8318 = vrot.slane %v8317, 1
        %v8319 = vmax.f32 %v8317, %v8318
        %v8320 = vmax.f32 %v8139, %v8141
        %v8321 = vmax.f32 %v8140, %v8142
        %v8322 = vsel %vm748, %v8320, -inf
        %v8323 = vrot.slane %v8322, 4
        %v8324 = vmax.f32 %v8322, %v8323
        %v8325 = vrot.slane %v8324, 2
        %v8326 = vmax.f32 %v8324, %v8325
        %v8327 = vrot.slane %v8326, 1
        %v8328 = vmax.f32 %v8326, %v8327
        %v8329 = vsel %vm748, %v8321, -inf
        %v8330 = vrot.slane %v8329, 4
        %v8331 = vmax.f32 %v8329, %v8330
        %v8332 = vrot.slane %v8331, 2
        %v8333 = vmax.f32 %v8331, %v8332
        %v8334 = vrot.slane %v8333, 1
        %v8335 = vmax.f32 %v8333, %v8334
        %v8336 = vsel %vm8159, %v8320, -inf
        %v8337 = vrot.slane %v8336, 4
        %v8338 = vmax.f32 %v8336, %v8337
        %v8339 = vrot.slane %v8338, 2
        %v8340 = vmax.f32 %v8338, %v8339
        %v8341 = vrot.slane %v8340, 1
        %v8342 = vmax.f32 %v8340, %v8341
        %v8343 = vsel %vm8159, %v8321, -inf
        %v8344 = vrot.slane %v8343, 4
        %v8345 = vmax.f32 %v8343, %v8344
        %v8346 = vrot.slane %v8345, 2
        %v8347 = vmax.f32 %v8345, %v8346
        %v8348 = vrot.slane %v8347, 1
        %v8349 = vmax.f32 %v8347, %v8348
        %v8350 = vsel %vm8174, %v8320, -inf
        %v8351 = vrot.slane %v8350, 4
        %v8352 = vmax.f32 %v8350, %v8351
        %v8353 = vrot.slane %v8352, 2
        %v8354 = vmax.f32 %v8352, %v8353
        %v8355 = vrot.slane %v8354, 1
        %v8356 = vmax.f32 %v8354, %v8355
        %v8357 = vsel %vm8174, %v8321, -inf
        %v8358 = vrot.slane %v8357, 4
        %v8359 = vmax.f32 %v8357, %v8358
        %v8360 = vrot.slane %v8359, 2
        %v8361 = vmax.f32 %v8359, %v8360
        %v8362 = vrot.slane %v8361, 1
        %v8363 = vmax.f32 %v8361, %v8362
        %v8364 = vsel %vm8189, %v8320, -inf
        %v8365 = vrot.slane %v8364, 4
        %v8366 = vmax.f32 %v8364, %v8365
        %v8367 = vrot.slane %v8366, 2
        %v8368 = vmax.f32 %v8366, %v8367
        %v8369 = vrot.slane %v8368, 1
        %v8370 = vmax.f32 %v8368, %v8369
        %v8371 = vsel %vm8189, %v8321, -inf
        %v8372 = vrot.slane %v8371, 4
        %v8373 = vmax.f32 %v8371, %v8372
        %v8374 = vrot.slane %v8373, 2
        %v8375 = vmax.f32 %v8373, %v8374
        %v8376 = vrot.slane %v8375, 1
        %v8377 = vmax.f32 %v8375, %v8376
        %v8378 = vpack.c.bf16 %v8151, %v8151
        %v8379 = vpack.c.bf16 %v8158, %v8158
        %v8380 = vpack.c.bf16 %v8166, %v8166
        %v8381 = vpack.c.bf16 %v8173, %v8173
        %v8382 = vpack.c.bf16 %v8181, %v8181
        %v8383 = vpack.c.bf16 %v8188, %v8188
        %v8384 = vpack.c.bf16 %v8196, %v8196
        %v8385 = vpack.c.bf16 %v8203, %v8203
        %v8386 = vpack.c.bf16 %v8212, %v8212
        %v8387 = vpack.c.bf16 %v8219, %v8219
        %v8388 = vpack.c.bf16 %v8226, %v8226
        %v8389 = vpack.c.bf16 %v8233, %v8233
        %v8390 = vpack.c.bf16 %v8240, %v8240
        %v8391 = vpack.c.bf16 %v8247, %v8247
        %v8392 = vpack.c.bf16 %v8254, %v8254
        %v8393 = vpack.c.bf16 %v8261, %v8261
        %v8394 = vpack.c.bf16 %v8270, %v8270
        %v8395 = vpack.c.bf16 %v8277, %v8277
        %v8396 = vpack.c.bf16 %v8284, %v8284
        %v8397 = vpack.c.bf16 %v8291, %v8291
        %v8398 = vpack.c.bf16 %v8298, %v8298
        %v8399 = vpack.c.bf16 %v8305, %v8305
        %v8400 = vpack.c.bf16 %v8312, %v8312
        %v8401 = vpack.c.bf16 %v8319, %v8319
        %v8402 = vpack.c.bf16 %v8328, %v8328
        %v8403 = vpack.c.bf16 %v8335, %v8335
        %v8404 = vpack.c.bf16 %v8342, %v8342
        %v8405 = vpack.c.bf16 %v8349, %v8349
        %v8406 = vpack.c.bf16 %v8356, %v8356
        %v8407 = vpack.c.bf16 %v8363, %v8363
        %v8408 = vpack.c.bf16 %v8370, %v8370
        %v8409 = vpack.c.bf16 %v8377, %v8377
        %v8410 = vld [vmem:[%s9] sm:$0xf]
        %v8411 = vld [vmem:[%s9 + $0x4] sm:$0xf]
        %v8412 = vld [vmem:[%s9 + $0x8] sm:$0xf]
        %v8413 = vld [vmem:[%s9 + $0xc] sm:$0xf]
        %v8414 = vld [vmem:[%s9 + $0x10] sm:$0xf]
        %v8415 = vld [vmem:[%s9 + $0x14] sm:$0xf]
        %v8416 = vld [vmem:[%s9 + $0x18] sm:$0xf]
        %v8417 = vld [vmem:[%s9 + $0x1c] sm:$0xf]
        %v8418 = vld [vmem:[%s9 + $0x20] sm:$0xf]
        %v8419 = vld [vmem:[%s9 + $0x24] sm:$0xf]
        %v8420 = vld [vmem:[%s9 + $0x28] sm:$0xf]
        %v8421 = vld [vmem:[%s9 + $0x2c] sm:$0xf]
        %v8422 = vld [vmem:[%s9 + $0x30] sm:$0xf]
        %v8423 = vld [vmem:[%s9 + $0x34] sm:$0xf]
        %v8424 = vld [vmem:[%s9 + $0x38] sm:$0xf]
        %v8425 = vld [vmem:[%s9 + $0x3c] sm:$0xf]
        %v8426 = vld [vmem:[%s9 + $0x40] sm:$0xf]
        %v8427 = vld [vmem:[%s9 + $0x44] sm:$0xf]
        %v8428 = vld [vmem:[%s9 + $0x48] sm:$0xf]
        %v8429 = vld [vmem:[%s9 + $0x4c] sm:$0xf]
        %v8430 = vld [vmem:[%s9 + $0x50] sm:$0xf]
        %v8431 = vld [vmem:[%s9 + $0x54] sm:$0xf]
        %v8432 = vld [vmem:[%s9 + $0x58] sm:$0xf]
        %v8433 = vld [vmem:[%s9 + $0x5c] sm:$0xf]
        %v8434 = vld [vmem:[%s9 + $0x60] sm:$0xf]
        %v8435 = vld [vmem:[%s9 + $0x64] sm:$0xf]
        %v8436 = vld [vmem:[%s9 + $0x68] sm:$0xf]
        %v8437 = vld [vmem:[%s9 + $0x6c] sm:$0xf]
        %v8438 = vld [vmem:[%s9 + $0x70] sm:$0xf]
        %v8439 = vld [vmem:[%s9 + $0x74] sm:$0xf]
        %v8440 = vld [vmem:[%s9 + $0x78] sm:$0xf]
        %v8441 = vld [vmem:[%s9 + $0x7c] sm:$0xf]
        %v8442 = vld [vmem:[%s9 + $0x80] sm:$0xf]
        %v8443 = vld [vmem:[%s9 + $0x84] sm:$0xf]
        %v8444 = vld [vmem:[%s9 + $0x88] sm:$0xf]
        %v8445 = vld [vmem:[%s9 + $0x8c] sm:$0xf]
        %v8446 = vld [vmem:[%s9 + $0x90] sm:$0xf]
        %v8447 = vld [vmem:[%s9 + $0x94] sm:$0xf]
        %v8448 = vld [vmem:[%s9 + $0x98] sm:$0xf]
        %v8449 = vld [vmem:[%s9 + $0x9c] sm:$0xf]
        %v8450 = vld [vmem:[%s9 + $0xa0] sm:$0xf]
        %v8451 = vld [vmem:[%s9 + $0xa4] sm:$0xf]
        %v8452 = vld [vmem:[%s9 + $0xa8] sm:$0xf]
        %v8453 = vld [vmem:[%s9 + $0xac] sm:$0xf]
        %v8454 = vld [vmem:[%s9 + $0xb0] sm:$0xf]
        %v8455 = vld [vmem:[%s9 + $0xb4] sm:$0xf]
        %v8456 = vld [vmem:[%s9 + $0xb8] sm:$0xf]
        %v8457 = vld [vmem:[%s9 + $0xbc] sm:$0xf]
        %v8458 = vld [vmem:[%s9 + $0xc0] sm:$0xf]
        %v8459 = vld [vmem:[%s9 + $0xc4] sm:$0xf]
        %v8460 = vld [vmem:[%s9 + $0xc8] sm:$0xf]
        %v8461 = vld [vmem:[%s9 + $0xcc] sm:$0xf]
        %v8462 = vld [vmem:[%s9 + $0xd0] sm:$0xf]
        %v8463 = vld [vmem:[%s9 + $0xd4] sm:$0xf]
        %v8464 = vld [vmem:[%s9 + $0xd8] sm:$0xf]
        %v8465 = vld [vmem:[%s9 + $0xdc] sm:$0xf]
        %v8466 = vld [vmem:[%s9 + $0xe0] sm:$0xf]
        %v8467 = vld [vmem:[%s9 + $0xe4] sm:$0xf]
        %v8468 = vld [vmem:[%s9 + $0xe8] sm:$0xf]
        %v8469 = vld [vmem:[%s9 + $0xec] sm:$0xf]
        %v8470 = vld [vmem:[%s9 + $0xf0] sm:$0xf]
        %v8471 = vld [vmem:[%s9 + $0xf4] sm:$0xf]
        %v8472 = vld [vmem:[%s9 + $0xf8] sm:$0xf]
        %v8473 = vld [vmem:[%s9 + $0xfc] sm:$0xf]
        %v8474 = vld [vmem:[%s9 + $0x100] sm:$0xf]
        %v8475 = vld [vmem:[%s9 + $0x104] sm:$0xf]
        %v8476 = vld [vmem:[%s9 + $0x108] sm:$0xf]
        %v8477 = vld [vmem:[%s9 + $0x10c] sm:$0xf]
        %v8478 = vld [vmem:[%s9 + $0x110] sm:$0xf]
        %v8479 = vld [vmem:[%s9 + $0x114] sm:$0xf]
        %v8480 = vld [vmem:[%s9 + $0x118] sm:$0xf]
        %v8481 = vld [vmem:[%s9 + $0x11c] sm:$0xf]
        %v8482 = vld [vmem:[%s9 + $0x120] sm:$0xf]
        %v8483 = vld [vmem:[%s9 + $0x124] sm:$0xf]
        %v8484 = vld [vmem:[%s9 + $0x128] sm:$0xf]
        %v8485 = vld [vmem:[%s9 + $0x12c] sm:$0xf]
        %v8486 = vld [vmem:[%s9 + $0x130] sm:$0xf]
        %v8487 = vld [vmem:[%s9 + $0x134] sm:$0xf]
        %v8488 = vld [vmem:[%s9 + $0x138] sm:$0xf]
        %v8489 = vld [vmem:[%s9 + $0x13c] sm:$0xf]
        %v8490 = vld [vmem:[%s9 + $0x140] sm:$0xf]
        %v8491 = vld [vmem:[%s9 + $0x144] sm:$0xf]
        %v8492 = vld [vmem:[%s9 + $0x148] sm:$0xf]
        %v8493 = vld [vmem:[%s9 + $0x14c] sm:$0xf]
        %v8494 = vld [vmem:[%s9 + $0x150] sm:$0xf]
        %v8495 = vld [vmem:[%s9 + $0x154] sm:$0xf]
        %v8496 = vld [vmem:[%s9 + $0x158] sm:$0xf]
        %v8497 = vld [vmem:[%s9 + $0x15c] sm:$0xf]
        %v8498 = vld [vmem:[%s9 + $0x160] sm:$0xf]
        %v8499 = vld [vmem:[%s9 + $0x164] sm:$0xf]
        %v8500 = vld [vmem:[%s9 + $0x168] sm:$0xf]
        %v8501 = vld [vmem:[%s9 + $0x16c] sm:$0xf]
        %v8502 = vld [vmem:[%s9 + $0x170] sm:$0xf]
        %v8503 = vld [vmem:[%s9 + $0x174] sm:$0xf]
        %v8504 = vld [vmem:[%s9 + $0x178] sm:$0xf]
        %v8505 = vld [vmem:[%s9 + $0x17c] sm:$0xf]
        %v8506 = vld [vmem:[%s9 + $0x180] sm:$0xf]
        %v8507 = vld [vmem:[%s9 + $0x184] sm:$0xf]
        %v8508 = vld [vmem:[%s9 + $0x188] sm:$0xf]
        %v8509 = vld [vmem:[%s9 + $0x18c] sm:$0xf]
        %v8510 = vld [vmem:[%s9 + $0x190] sm:$0xf]
        %v8511 = vld [vmem:[%s9 + $0x194] sm:$0xf]
        %v8512 = vld [vmem:[%s9 + $0x198] sm:$0xf]
        %v8513 = vld [vmem:[%s9 + $0x19c] sm:$0xf]
        %v8514 = vld [vmem:[%s9 + $0x1a0] sm:$0xf]
        %v8515 = vld [vmem:[%s9 + $0x1a4] sm:$0xf]
        %v8516 = vld [vmem:[%s9 + $0x1a8] sm:$0xf]
        %v8517 = vld [vmem:[%s9 + $0x1ac] sm:$0xf]
        %v8518 = vld [vmem:[%s9 + $0x1b0] sm:$0xf]
        %v8519 = vld [vmem:[%s9 + $0x1b4] sm:$0xf]
        %v8520 = vld [vmem:[%s9 + $0x1b8] sm:$0xf]
        %v8521 = vld [vmem:[%s9 + $0x1bc] sm:$0xf]
        %v8522 = vld [vmem:[%s9 + $0x1c0] sm:$0xf]
        %v8523 = vld [vmem:[%s9 + $0x1c4] sm:$0xf]
        %v8524 = vld [vmem:[%s9 + $0x1c8] sm:$0xf]
        %v8525 = vld [vmem:[%s9 + $0x1cc] sm:$0xf]
        %v8526 = vld [vmem:[%s9 + $0x1d0] sm:$0xf]
        %v8527 = vld [vmem:[%s9 + $0x1d4] sm:$0xf]
        %v8528 = vld [vmem:[%s9 + $0x1d8] sm:$0xf]
        %v8529 = vld [vmem:[%s9 + $0x1dc] sm:$0xf]
        %v8530 = vld [vmem:[%s9 + $0x1e0] sm:$0xf]
        %v8531 = vld [vmem:[%s9 + $0x1e4] sm:$0xf]
        %v8532 = vld [vmem:[%s9 + $0x1e8] sm:$0xf]
        %v8533 = vld [vmem:[%s9 + $0x1ec] sm:$0xf]
        %v8534 = vld [vmem:[%s9 + $0x1f0] sm:$0xf]
        %v8535 = vld [vmem:[%s9 + $0x1f4] sm:$0xf]
        %v8536 = vld [vmem:[%s9 + $0x1f8] sm:$0xf]
        %v8537 = vld [vmem:[%s9 + $0x1fc] sm:$0xf]
        %v8538 = vld [vmem:[%s9 + $0x200] sm:$0xf]
        %v8539 = vld [vmem:[%s9 + $0x204] sm:$0xf]
        %v8540 = vld [vmem:[%s9 + $0x208] sm:$0xf]
        %v8541 = vld [vmem:[%s9 + $0x20c] sm:$0xf]
        %v8542 = vld [vmem:[%s9 + $0x210] sm:$0xf]
        %v8543 = vld [vmem:[%s9 + $0x214] sm:$0xf]
        %v8544 = vld [vmem:[%s9 + $0x218] sm:$0xf]
        %v8545 = vld [vmem:[%s9 + $0x21c] sm:$0xf]
        %v8546 = vld [vmem:[%s9 + $0x220] sm:$0xf]
        %v8547 = vld [vmem:[%s9 + $0x224] sm:$0xf]
        %v8548 = vld [vmem:[%s9 + $0x228] sm:$0xf]
        %v8549 = vld [vmem:[%s9 + $0x22c] sm:$0xf]
        %v8550 = vld [vmem:[%s9 + $0x230] sm:$0xf]
        %v8551 = vld [vmem:[%s9 + $0x234] sm:$0xf]
        %v8552 = vld [vmem:[%s9 + $0x238] sm:$0xf]
        %v8553 = vld [vmem:[%s9 + $0x23c] sm:$0xf]
        %v8554 = vld [vmem:[%s9 + $0x240] sm:$0xf]
        %v8555 = vld [vmem:[%s9 + $0x244] sm:$0xf]
        %v8556 = vld [vmem:[%s9 + $0x248] sm:$0xf]
        %v8557 = vld [vmem:[%s9 + $0x24c] sm:$0xf]
        %v8558 = vld [vmem:[%s9 + $0x250] sm:$0xf]
        %v8559 = vld [vmem:[%s9 + $0x254] sm:$0xf]
        %v8560 = vld [vmem:[%s9 + $0x258] sm:$0xf]
        %v8561 = vld [vmem:[%s9 + $0x25c] sm:$0xf]
        %v8562 = vld [vmem:[%s9 + $0x260] sm:$0xf]
        %v8563 = vld [vmem:[%s9 + $0x264] sm:$0xf]
        %v8564 = vld [vmem:[%s9 + $0x268] sm:$0xf]
        %v8565 = vld [vmem:[%s9 + $0x26c] sm:$0xf]
        %v8566 = vld [vmem:[%s9 + $0x270] sm:$0xf]
        %v8567 = vld [vmem:[%s9 + $0x274] sm:$0xf]
        %v8568 = vld [vmem:[%s9 + $0x278] sm:$0xf]
        %v8569 = vld [vmem:[%s9 + $0x27c] sm:$0xf]
        %v8570 = vld [vmem:[%s9 + $0x280] sm:$0xf]
        %v8571 = vld [vmem:[%s9 + $0x284] sm:$0xf]
        %v8572 = vld [vmem:[%s9 + $0x288] sm:$0xf]
        %v8573 = vld [vmem:[%s9 + $0x28c] sm:$0xf]
        %v8574 = vld [vmem:[%s9 + $0x290] sm:$0xf]
        %v8575 = vld [vmem:[%s9 + $0x294] sm:$0xf]
        %v8576 = vld [vmem:[%s9 + $0x298] sm:$0xf]
        %v8577 = vld [vmem:[%s9 + $0x29c] sm:$0xf]
        %v8578 = vld [vmem:[%s9 + $0x2a0] sm:$0xf]
        %v8579 = vld [vmem:[%s9 + $0x2a4] sm:$0xf]
        %v8580 = vld [vmem:[%s9 + $0x2a8] sm:$0xf]
        %v8581 = vld [vmem:[%s9 + $0x2ac] sm:$0xf]
        %v8582 = vld [vmem:[%s9 + $0x2b0] sm:$0xf]
        %v8583 = vld [vmem:[%s9 + $0x2b4] sm:$0xf]
        %v8584 = vld [vmem:[%s9 + $0x2b8] sm:$0xf]
        %v8585 = vld [vmem:[%s9 + $0x2bc] sm:$0xf]
        %v8586 = vld [vmem:[%s9 + $0x2c0] sm:$0xf]
        %v8587 = vld [vmem:[%s9 + $0x2c4] sm:$0xf]
        %v8588 = vld [vmem:[%s9 + $0x2c8] sm:$0xf]
        %v8589 = vld [vmem:[%s9 + $0x2cc] sm:$0xf]
        %v8590 = vld [vmem:[%s9 + $0x2d0] sm:$0xf]
        %v8591 = vld [vmem:[%s9 + $0x2d4] sm:$0xf]
        %v8592 = vld [vmem:[%s9 + $0x2d8] sm:$0xf]
        %v8593 = vld [vmem:[%s9 + $0x2dc] sm:$0xf]
        %v8594 = vld [vmem:[%s9 + $0x2e0] sm:$0xf]
        %v8595 = vld [vmem:[%s9 + $0x2e4] sm:$0xf]
        %v8596 = vld [vmem:[%s9 + $0x2e8] sm:$0xf]
        %v8597 = vld [vmem:[%s9 + $0x2ec] sm:$0xf]
        %v8598 = vld [vmem:[%s9 + $0x2f0] sm:$0xf]
        %v8599 = vld [vmem:[%s9 + $0x2f4] sm:$0xf]
        %v8600 = vld [vmem:[%s9 + $0x2f8] sm:$0xf]
        %v8601 = vld [vmem:[%s9 + $0x2fc] sm:$0xf]
        %v8602 = vld [vmem:[%s9 + $0x300] sm:$0xf]
        %v8603 = vld [vmem:[%s9 + $0x304] sm:$0xf]
        %v8604 = vld [vmem:[%s9 + $0x308] sm:$0xf]
        %v8605 = vld [vmem:[%s9 + $0x30c] sm:$0xf]
        %v8606 = vld [vmem:[%s9 + $0x310] sm:$0xf]
        %v8607 = vld [vmem:[%s9 + $0x314] sm:$0xf]
        %v8608 = vld [vmem:[%s9 + $0x318] sm:$0xf]
        %v8609 = vld [vmem:[%s9 + $0x31c] sm:$0xf]
        %v8610 = vld [vmem:[%s9 + $0x320] sm:$0xf]
        %v8611 = vld [vmem:[%s9 + $0x324] sm:$0xf]
        %v8612 = vld [vmem:[%s9 + $0x328] sm:$0xf]
        %v8613 = vld [vmem:[%s9 + $0x32c] sm:$0xf]
        %v8614 = vld [vmem:[%s9 + $0x330] sm:$0xf]
        %v8615 = vld [vmem:[%s9 + $0x334] sm:$0xf]
        %v8616 = vld [vmem:[%s9 + $0x338] sm:$0xf]
        %v8617 = vld [vmem:[%s9 + $0x33c] sm:$0xf]
        %v8618 = vld [vmem:[%s9 + $0x340] sm:$0xf]
        %v8619 = vld [vmem:[%s9 + $0x344] sm:$0xf]
        %v8620 = vld [vmem:[%s9 + $0x348] sm:$0xf]
        %v8621 = vld [vmem:[%s9 + $0x34c] sm:$0xf]
        %v8622 = vld [vmem:[%s9 + $0x350] sm:$0xf]
        %v8623 = vld [vmem:[%s9 + $0x354] sm:$0xf]
        %v8624 = vld [vmem:[%s9 + $0x358] sm:$0xf]
        %v8625 = vld [vmem:[%s9 + $0x35c] sm:$0xf]
        %v8626 = vld [vmem:[%s9 + $0x360] sm:$0xf]
        %v8627 = vld [vmem:[%s9 + $0x364] sm:$0xf]
        %v8628 = vld [vmem:[%s9 + $0x368] sm:$0xf]
        %v8629 = vld [vmem:[%s9 + $0x36c] sm:$0xf]
        %v8630 = vld [vmem:[%s9 + $0x370] sm:$0xf]
        %v8631 = vld [vmem:[%s9 + $0x374] sm:$0xf]
        %v8632 = vld [vmem:[%s9 + $0x378] sm:$0xf]
        %v8633 = vld [vmem:[%s9 + $0x37c] sm:$0xf]
        %v8634 = vld [vmem:[%s9 + $0x380] sm:$0xf]
        %v8635 = vld [vmem:[%s9 + $0x384] sm:$0xf]
        %v8636 = vld [vmem:[%s9 + $0x388] sm:$0xf]
        %v8637 = vld [vmem:[%s9 + $0x38c] sm:$0xf]
        %v8638 = vld [vmem:[%s9 + $0x390] sm:$0xf]
        %v8639 = vld [vmem:[%s9 + $0x394] sm:$0xf]
        %v8640 = vld [vmem:[%s9 + $0x398] sm:$0xf]
        %v8641 = vld [vmem:[%s9 + $0x39c] sm:$0xf]
        %v8642 = vld [vmem:[%s9 + $0x3a0] sm:$0xf]
        %v8643 = vld [vmem:[%s9 + $0x3a4] sm:$0xf]
        %v8644 = vld [vmem:[%s9 + $0x3a8] sm:$0xf]
        %v8645 = vld [vmem:[%s9 + $0x3ac] sm:$0xf]
        %v8646 = vld [vmem:[%s9 + $0x3b0] sm:$0xf]
        %v8647 = vld [vmem:[%s9 + $0x3b4] sm:$0xf]
        %v8648 = vld [vmem:[%s9 + $0x3b8] sm:$0xf]
        %v8649 = vld [vmem:[%s9 + $0x3bc] sm:$0xf]
        %v8650 = vld [vmem:[%s9 + $0x3c0] sm:$0xf]
        %v8651 = vld [vmem:[%s9 + $0x3c4] sm:$0xf]
        %v8652 = vld [vmem:[%s9 + $0x3c8] sm:$0xf]
        %v8653 = vld [vmem:[%s9 + $0x3cc] sm:$0xf]
        %v8654 = vld [vmem:[%s9 + $0x3d0] sm:$0xf]
        %v8655 = vld [vmem:[%s9 + $0x3d4] sm:$0xf]
        %v8656 = vld [vmem:[%s9 + $0x3d8] sm:$0xf]
        %v8657 = vld [vmem:[%s9 + $0x3dc] sm:$0xf]
        %v8658 = vld [vmem:[%s9 + $0x3e0] sm:$0xf]
        %v8659 = vld [vmem:[%s9 + $0x3e4] sm:$0xf]
        %v8660 = vld [vmem:[%s9 + $0x3e8] sm:$0xf]
        %v8661 = vld [vmem:[%s9 + $0x3ec] sm:$0xf]
        %v8662 = vld [vmem:[%s9 + $0x3f0] sm:$0xf]
        %v8663 = vld [vmem:[%s9 + $0x3f4] sm:$0xf]
        %v8664 = vld [vmem:[%s9 + $0x3f8] sm:$0xf]
        %v8665 = vld [vmem:[%s9 + $0x3fc] sm:$0xf]
        %v8666 = vld [vmem:[%s9 + $0x400] sm:$0xf]
        %v8667 = vld [vmem:[%s9 + $0x404] sm:$0xf]
        %v8668 = vld [vmem:[%s9 + $0x408] sm:$0xf]
        %v8669 = vld [vmem:[%s9 + $0x40c] sm:$0xf]
        %v8670 = vld [vmem:[%s9 + $0x410] sm:$0xf]
        %v8671 = vld [vmem:[%s9 + $0x414] sm:$0xf]
        %v8672 = vld [vmem:[%s9 + $0x418] sm:$0xf]
        %v8673 = vld [vmem:[%s9 + $0x41c] sm:$0xf]
        %v8674 = vld [vmem:[%s9 + $0x420] sm:$0xf]
        %v8675 = vld [vmem:[%s9 + $0x424] sm:$0xf]
        %v8676 = vld [vmem:[%s9 + $0x428] sm:$0xf]
        %v8677 = vld [vmem:[%s9 + $0x42c] sm:$0xf]
        %v8678 = vld [vmem:[%s9 + $0x430] sm:$0xf]
        %v8679 = vld [vmem:[%s9 + $0x434] sm:$0xf]
        %v8680 = vld [vmem:[%s9 + $0x438] sm:$0xf]
        %v8681 = vld [vmem:[%s9 + $0x43c] sm:$0xf]
        %v8682 = vld [vmem:[%s9 + $0x440] sm:$0xf]
        %v8683 = vld [vmem:[%s9 + $0x444] sm:$0xf]
        %v8684 = vld [vmem:[%s9 + $0x448] sm:$0xf]
        %v8685 = vld [vmem:[%s9 + $0x44c] sm:$0xf]
        %v8686 = vld [vmem:[%s9 + $0x450] sm:$0xf]
        %v8687 = vld [vmem:[%s9 + $0x454] sm:$0xf]
        %v8688 = vld [vmem:[%s9 + $0x458] sm:$0xf]
        %v8689 = vld [vmem:[%s9 + $0x45c] sm:$0xf]
        %v8690 = vld [vmem:[%s9 + $0x460] sm:$0xf]
        %v8691 = vld [vmem:[%s9 + $0x464] sm:$0xf]
        %v8692 = vld [vmem:[%s9 + $0x468] sm:$0xf]
        %v8693 = vld [vmem:[%s9 + $0x46c] sm:$0xf]
        %v8694 = vld [vmem:[%s9 + $0x470] sm:$0xf]
        %v8695 = vld [vmem:[%s9 + $0x474] sm:$0xf]
        %v8696 = vld [vmem:[%s9 + $0x478] sm:$0xf]
        %v8697 = vld [vmem:[%s9 + $0x47c] sm:$0xf]
        %v8698 = vld [vmem:[%s9 + $0x480] sm:$0xf]
        %v8699 = vld [vmem:[%s9 + $0x484] sm:$0xf]
        %v8700 = vld [vmem:[%s9 + $0x488] sm:$0xf]
        %v8701 = vld [vmem:[%s9 + $0x48c] sm:$0xf]
        %v8702 = vld [vmem:[%s9 + $0x490] sm:$0xf]
        %v8703 = vld [vmem:[%s9 + $0x494] sm:$0xf]
        %v8704 = vld [vmem:[%s9 + $0x498] sm:$0xf]
        %v8705 = vld [vmem:[%s9 + $0x49c] sm:$0xf]
        %v8706 = vld [vmem:[%s9 + $0x4a0] sm:$0xf]
        %v8707 = vld [vmem:[%s9 + $0x4a4] sm:$0xf]
        %v8708 = vld [vmem:[%s9 + $0x4a8] sm:$0xf]
        %v8709 = vld [vmem:[%s9 + $0x4ac] sm:$0xf]
        %v8710 = vld [vmem:[%s9 + $0x4b0] sm:$0xf]
        %v8711 = vld [vmem:[%s9 + $0x4b4] sm:$0xf]
        %v8712 = vld [vmem:[%s9 + $0x4b8] sm:$0xf]
        %v8713 = vld [vmem:[%s9 + $0x4bc] sm:$0xf]
        %v8714 = vld [vmem:[%s9 + $0x4c0] sm:$0xf]
        %v8715 = vld [vmem:[%s9 + $0x4c4] sm:$0xf]
        %v8716 = vld [vmem:[%s9 + $0x4c8] sm:$0xf]
        %v8717 = vld [vmem:[%s9 + $0x4cc] sm:$0xf]
        %v8718 = vld [vmem:[%s9 + $0x4d0] sm:$0xf]
        %v8719 = vld [vmem:[%s9 + $0x4d4] sm:$0xf]
        %v8720 = vld [vmem:[%s9 + $0x4d8] sm:$0xf]
        %v8721 = vld [vmem:[%s9 + $0x4dc] sm:$0xf]
        %v8722 = vld [vmem:[%s9 + $0x4e0] sm:$0xf]
        %v8723 = vld [vmem:[%s9 + $0x4e4] sm:$0xf]
        %v8724 = vld [vmem:[%s9 + $0x4e8] sm:$0xf]
        %v8725 = vld [vmem:[%s9 + $0x4ec] sm:$0xf]
        %v8726 = vld [vmem:[%s9 + $0x4f0] sm:$0xf]
        %v8727 = vld [vmem:[%s9 + $0x4f4] sm:$0xf]
        %v8728 = vld [vmem:[%s9 + $0x4f8] sm:$0xf]
        %v8729 = vld [vmem:[%s9 + $0x4fc] sm:$0xf]
        %v8730 = vld [vmem:[%s9 + $0x500] sm:$0xf]
        %v8731 = vld [vmem:[%s9 + $0x504] sm:$0xf]
        %v8732 = vld [vmem:[%s9 + $0x508] sm:$0xf]
        %v8733 = vld [vmem:[%s9 + $0x50c] sm:$0xf]
        %v8734 = vld [vmem:[%s9 + $0x510] sm:$0xf]
        %v8735 = vld [vmem:[%s9 + $0x514] sm:$0xf]
        %v8736 = vld [vmem:[%s9 + $0x518] sm:$0xf]
        %v8737 = vld [vmem:[%s9 + $0x51c] sm:$0xf]
        %v8738 = vld [vmem:[%s9 + $0x520] sm:$0xf]
        %v8739 = vld [vmem:[%s9 + $0x524] sm:$0xf]
        %v8740 = vld [vmem:[%s9 + $0x528] sm:$0xf]
        %v8741 = vld [vmem:[%s9 + $0x52c] sm:$0xf]
        %v8742 = vld [vmem:[%s9 + $0x530] sm:$0xf]
        %v8743 = vld [vmem:[%s9 + $0x534] sm:$0xf]
        %v8744 = vld [vmem:[%s9 + $0x538] sm:$0xf]
        %v8745 = vld [vmem:[%s9 + $0x53c] sm:$0xf]
        %v8746 = vld [vmem:[%s9 + $0x540] sm:$0xf]
        %v8747 = vld [vmem:[%s9 + $0x544] sm:$0xf]
        %v8748 = vld [vmem:[%s9 + $0x548] sm:$0xf]
        %v8749 = vld [vmem:[%s9 + $0x54c] sm:$0xf]
        %v8750 = vld [vmem:[%s9 + $0x550] sm:$0xf]
        %v8751 = vld [vmem:[%s9 + $0x554] sm:$0xf]
        %v8752 = vld [vmem:[%s9 + $0x558] sm:$0xf]
        %v8753 = vld [vmem:[%s9 + $0x55c] sm:$0xf]
        %v8754 = vld [vmem:[%s9 + $0x560] sm:$0xf]
        %v8755 = vld [vmem:[%s9 + $0x564] sm:$0xf]
        %v8756 = vld [vmem:[%s9 + $0x568] sm:$0xf]
        %v8757 = vld [vmem:[%s9 + $0x56c] sm:$0xf]
        %v8758 = vld [vmem:[%s9 + $0x570] sm:$0xf]
        %v8759 = vld [vmem:[%s9 + $0x574] sm:$0xf]
        %v8760 = vld [vmem:[%s9 + $0x578] sm:$0xf]
        %v8761 = vld [vmem:[%s9 + $0x57c] sm:$0xf]
        %v8762 = vld [vmem:[%s9 + $0x580] sm:$0xf]
        %v8763 = vld [vmem:[%s9 + $0x584] sm:$0xf]
        %v8764 = vld [vmem:[%s9 + $0x588] sm:$0xf]
        %v8765 = vld [vmem:[%s9 + $0x58c] sm:$0xf]
        %v8766 = vld [vmem:[%s9 + $0x590] sm:$0xf]
        %v8767 = vld [vmem:[%s9 + $0x594] sm:$0xf]
        %v8768 = vld [vmem:[%s9 + $0x598] sm:$0xf]
        %v8769 = vld [vmem:[%s9 + $0x59c] sm:$0xf]
        %v8770 = vld [vmem:[%s9 + $0x5a0] sm:$0xf]
        %v8771 = vld [vmem:[%s9 + $0x5a4] sm:$0xf]
        %v8772 = vld [vmem:[%s9 + $0x5a8] sm:$0xf]
        %v8773 = vld [vmem:[%s9 + $0x5ac] sm:$0xf]
        %v8774 = vld [vmem:[%s9 + $0x5b0] sm:$0xf]
        %v8775 = vld [vmem:[%s9 + $0x5b4] sm:$0xf]
        %v8776 = vld [vmem:[%s9 + $0x5b8] sm:$0xf]
        %v8777 = vld [vmem:[%s9 + $0x5bc] sm:$0xf]
        %v8778 = vld [vmem:[%s9 + $0x5c0] sm:$0xf]
        %v8779 = vld [vmem:[%s9 + $0x5c4] sm:$0xf]
        %v8780 = vld [vmem:[%s9 + $0x5c8] sm:$0xf]
        %v8781 = vld [vmem:[%s9 + $0x5cc] sm:$0xf]
        %v8782 = vld [vmem:[%s9 + $0x5d0] sm:$0xf]
        %v8783 = vld [vmem:[%s9 + $0x5d4] sm:$0xf]
        %v8784 = vld [vmem:[%s9 + $0x5d8] sm:$0xf]
        %v8785 = vld [vmem:[%s9 + $0x5dc] sm:$0xf]
        %v8786 = vld [vmem:[%s9 + $0x5e0] sm:$0xf]
        %v8787 = vld [vmem:[%s9 + $0x5e4] sm:$0xf]
        %v8788 = vld [vmem:[%s9 + $0x5e8] sm:$0xf]
        %v8789 = vld [vmem:[%s9 + $0x5ec] sm:$0xf]
        %v8790 = vld [vmem:[%s9 + $0x5f0] sm:$0xf]
        %v8791 = vld [vmem:[%s9 + $0x5f4] sm:$0xf]
        %v8792 = vld [vmem:[%s9 + $0x5f8] sm:$0xf]
        %v8793 = vld [vmem:[%s9 + $0x5fc] sm:$0xf]
        %v8794 = vld [vmem:[%s9 + $0x600] sm:$0xf]
        %v8795 = vld [vmem:[%s9 + $0x604] sm:$0xf]
        %v8796 = vld [vmem:[%s9 + $0x608] sm:$0xf]
        %v8797 = vld [vmem:[%s9 + $0x60c] sm:$0xf]
        %v8798 = vld [vmem:[%s9 + $0x610] sm:$0xf]
        %v8799 = vld [vmem:[%s9 + $0x614] sm:$0xf]
        %v8800 = vld [vmem:[%s9 + $0x618] sm:$0xf]
        %v8801 = vld [vmem:[%s9 + $0x61c] sm:$0xf]
        %v8802 = vld [vmem:[%s9 + $0x620] sm:$0xf]
        %v8803 = vld [vmem:[%s9 + $0x624] sm:$0xf]
        %v8804 = vld [vmem:[%s9 + $0x628] sm:$0xf]
        %v8805 = vld [vmem:[%s9 + $0x62c] sm:$0xf]
        %v8806 = vld [vmem:[%s9 + $0x630] sm:$0xf]
        %v8807 = vld [vmem:[%s9 + $0x634] sm:$0xf]
        %v8808 = vld [vmem:[%s9 + $0x638] sm:$0xf]
        %v8809 = vld [vmem:[%s9 + $0x63c] sm:$0xf]
        %v8810 = vld [vmem:[%s9 + $0x640] sm:$0xf]
        %v8811 = vld [vmem:[%s9 + $0x644] sm:$0xf]
        %v8812 = vld [vmem:[%s9 + $0x648] sm:$0xf]
        %v8813 = vld [vmem:[%s9 + $0x64c] sm:$0xf]
        %v8814 = vld [vmem:[%s9 + $0x650] sm:$0xf]
        %v8815 = vld [vmem:[%s9 + $0x654] sm:$0xf]
        %v8816 = vld [vmem:[%s9 + $0x658] sm:$0xf]
        %v8817 = vld [vmem:[%s9 + $0x65c] sm:$0xf]
        %v8818 = vld [vmem:[%s9 + $0x660] sm:$0xf]
        %v8819 = vld [vmem:[%s9 + $0x664] sm:$0xf]
        %v8820 = vld [vmem:[%s9 + $0x668] sm:$0xf]
        %v8821 = vld [vmem:[%s9 + $0x66c] sm:$0xf]
        %v8822 = vld [vmem:[%s9 + $0x670] sm:$0xf]
        %v8823 = vld [vmem:[%s9 + $0x674] sm:$0xf]
        %v8824 = vld [vmem:[%s9 + $0x678] sm:$0xf]
        %v8825 = vld [vmem:[%s9 + $0x67c] sm:$0xf]
        %v8826 = vld [vmem:[%s9 + $0x680] sm:$0xf]
        %v8827 = vld [vmem:[%s9 + $0x684] sm:$0xf]
        %v8828 = vld [vmem:[%s9 + $0x688] sm:$0xf]
        %v8829 = vld [vmem:[%s9 + $0x68c] sm:$0xf]
        %v8830 = vld [vmem:[%s9 + $0x690] sm:$0xf]
        %v8831 = vld [vmem:[%s9 + $0x694] sm:$0xf]
        %v8832 = vld [vmem:[%s9 + $0x698] sm:$0xf]
        %v8833 = vld [vmem:[%s9 + $0x69c] sm:$0xf]
        %v8834 = vld [vmem:[%s9 + $0x6a0] sm:$0xf]
        %v8835 = vld [vmem:[%s9 + $0x6a4] sm:$0xf]
        %v8836 = vld [vmem:[%s9 + $0x6a8] sm:$0xf]
        %v8837 = vld [vmem:[%s9 + $0x6ac] sm:$0xf]
        %v8838 = vld [vmem:[%s9 + $0x6b0] sm:$0xf]
        %v8839 = vld [vmem:[%s9 + $0x6b4] sm:$0xf]
        %v8840 = vld [vmem:[%s9 + $0x6b8] sm:$0xf]
        %v8841 = vld [vmem:[%s9 + $0x6bc] sm:$0xf]
        %v8842 = vld [vmem:[%s9 + $0x6c0] sm:$0xf]
        %v8843 = vld [vmem:[%s9 + $0x6c4] sm:$0xf]
        %v8844 = vld [vmem:[%s9 + $0x6c8] sm:$0xf]
        %v8845 = vld [vmem:[%s9 + $0x6cc] sm:$0xf]
        %v8846 = vld [vmem:[%s9 + $0x6d0] sm:$0xf]
        %v8847 = vld [vmem:[%s9 + $0x6d4] sm:$0xf]
        %v8848 = vld [vmem:[%s9 + $0x6d8] sm:$0xf]
        %v8849 = vld [vmem:[%s9 + $0x6dc] sm:$0xf]
        %v8850 = vld [vmem:[%s9 + $0x6e0] sm:$0xf]
        %v8851 = vld [vmem:[%s9 + $0x6e4] sm:$0xf]
        %v8852 = vld [vmem:[%s9 + $0x6e8] sm:$0xf]
        %v8853 = vld [vmem:[%s9 + $0x6ec] sm:$0xf]
        %v8854 = vld [vmem:[%s9 + $0x6f0] sm:$0xf]
        %v8855 = vld [vmem:[%s9 + $0x6f4] sm:$0xf]
        %v8856 = vld [vmem:[%s9 + $0x6f8] sm:$0xf]
        %v8857 = vld [vmem:[%s9 + $0x6fc] sm:$0xf]
        %v8858 = vld [vmem:[%s9 + $0x700] sm:$0xf]
        %v8859 = vld [vmem:[%s9 + $0x704] sm:$0xf]
        %v8860 = vld [vmem:[%s9 + $0x708] sm:$0xf]
        %v8861 = vld [vmem:[%s9 + $0x70c] sm:$0xf]
        %v8862 = vld [vmem:[%s9 + $0x710] sm:$0xf]
        %v8863 = vld [vmem:[%s9 + $0x714] sm:$0xf]
        %v8864 = vld [vmem:[%s9 + $0x718] sm:$0xf]
        %v8865 = vld [vmem:[%s9 + $0x71c] sm:$0xf]
        %v8866 = vld [vmem:[%s9 + $0x720] sm:$0xf]
        %v8867 = vld [vmem:[%s9 + $0x724] sm:$0xf]
        %v8868 = vld [vmem:[%s9 + $0x728] sm:$0xf]
        %v8869 = vld [vmem:[%s9 + $0x72c] sm:$0xf]
        %v8870 = vld [vmem:[%s9 + $0x730] sm:$0xf]
        %v8871 = vld [vmem:[%s9 + $0x734] sm:$0xf]
        %v8872 = vld [vmem:[%s9 + $0x738] sm:$0xf]
        %v8873 = vld [vmem:[%s9 + $0x73c] sm:$0xf]
        %v8874 = vld [vmem:[%s9 + $0x740] sm:$0xf]
        %v8875 = vld [vmem:[%s9 + $0x744] sm:$0xf]
        %v8876 = vld [vmem:[%s9 + $0x748] sm:$0xf]
        %v8877 = vld [vmem:[%s9 + $0x74c] sm:$0xf]
        %v8878 = vld [vmem:[%s9 + $0x750] sm:$0xf]
        %v8879 = vld [vmem:[%s9 + $0x754] sm:$0xf]
        %v8880 = vld [vmem:[%s9 + $0x758] sm:$0xf]
        %v8881 = vld [vmem:[%s9 + $0x75c] sm:$0xf]
        %v8882 = vld [vmem:[%s9 + $0x760] sm:$0xf]
        %v8883 = vld [vmem:[%s9 + $0x764] sm:$0xf]
        %v8884 = vld [vmem:[%s9 + $0x768] sm:$0xf]
        %v8885 = vld [vmem:[%s9 + $0x76c] sm:$0xf]
        %v8886 = vld [vmem:[%s9 + $0x770] sm:$0xf]
        %v8887 = vld [vmem:[%s9 + $0x774] sm:$0xf]
        %v8888 = vld [vmem:[%s9 + $0x778] sm:$0xf]
        %v8889 = vld [vmem:[%s9 + $0x77c] sm:$0xf]
        %v8890 = vld [vmem:[%s9 + $0x780] sm:$0xf]
        %v8891 = vld [vmem:[%s9 + $0x784] sm:$0xf]
        %v8892 = vld [vmem:[%s9 + $0x788] sm:$0xf]
        %v8893 = vld [vmem:[%s9 + $0x78c] sm:$0xf]
        %v8894 = vld [vmem:[%s9 + $0x790] sm:$0xf]
        %v8895 = vld [vmem:[%s9 + $0x794] sm:$0xf]
        %v8896 = vld [vmem:[%s9 + $0x798] sm:$0xf]
        %v8897 = vld [vmem:[%s9 + $0x79c] sm:$0xf]
        %v8898 = vld [vmem:[%s9 + $0x7a0] sm:$0xf]
        %v8899 = vld [vmem:[%s9 + $0x7a4] sm:$0xf]
        %v8900 = vld [vmem:[%s9 + $0x7a8] sm:$0xf]
        %v8901 = vld [vmem:[%s9 + $0x7ac] sm:$0xf]
        %v8902 = vld [vmem:[%s9 + $0x7b0] sm:$0xf]
        %v8903 = vld [vmem:[%s9 + $0x7b4] sm:$0xf]
        %v8904 = vld [vmem:[%s9 + $0x7b8] sm:$0xf]
        %v8905 = vld [vmem:[%s9 + $0x7bc] sm:$0xf]
        %v8906 = vld [vmem:[%s9 + $0x7c0] sm:$0xf]
        %v8907 = vld [vmem:[%s9 + $0x7c4] sm:$0xf]
        %v8908 = vld [vmem:[%s9 + $0x7c8] sm:$0xf]
        %v8909 = vld [vmem:[%s9 + $0x7cc] sm:$0xf]
        %v8910 = vld [vmem:[%s9 + $0x7d0] sm:$0xf]
        %v8911 = vld [vmem:[%s9 + $0x7d4] sm:$0xf]
        %v8912 = vld [vmem:[%s9 + $0x7d8] sm:$0xf]
        %v8913 = vld [vmem:[%s9 + $0x7dc] sm:$0xf]
        %v8914 = vld [vmem:[%s9 + $0x7e0] sm:$0xf]
        %v8915 = vld [vmem:[%s9 + $0x7e4] sm:$0xf]
        %v8916 = vld [vmem:[%s9 + $0x7e8] sm:$0xf]
        %v8917 = vld [vmem:[%s9 + $0x7ec] sm:$0xf]
        %v8918 = vld [vmem:[%s9 + $0x7f0] sm:$0xf]
        %v8919 = vld [vmem:[%s9 + $0x7f4] sm:$0xf]
        %v8920 = vld [vmem:[%s9 + $0x7f8] sm:$0xf]
        %v8921 = vld [vmem:[%s9 + $0x7fc] sm:$0xf]
        %v8922 = vld [vmem:[%s10] sm:$0x1]
        %v9435 = vunpack.c.l.b16 %v8410
        %v9436 = vunpack.c.l.b16 %v8411
        %v9437 = vunpack.c.l.b16 %v8412
        %v9438 = vunpack.c.l.b16 %v8413
        %v9439 = vunpack.c.l.b16 %v8414
        %v9440 = vunpack.c.l.b16 %v8415
        %v9441 = vunpack.c.l.b16 %v8416
        %v9442 = vunpack.c.l.b16 %v8417
        %v9443 = vunpack.c.l.b16 %v8418
        %v9444 = vunpack.c.l.b16 %v8419
        %v9445 = vunpack.c.l.b16 %v8420
        %v9446 = vunpack.c.l.b16 %v8421
        %v9447 = vunpack.c.l.b16 %v8422
        %v9448 = vunpack.c.l.b16 %v8423
        %v9449 = vunpack.c.l.b16 %v8424
        %v9450 = vunpack.c.l.b16 %v8425
        %v9451 = vunpack.c.l.b16 %v8426
        %v9452 = vunpack.c.l.b16 %v8427
        %v9453 = vunpack.c.l.b16 %v8428
        %v9454 = vunpack.c.l.b16 %v8429
        %v9455 = vunpack.c.l.b16 %v8430
        %v9456 = vunpack.c.l.b16 %v8431
        %v9457 = vunpack.c.l.b16 %v8432
        %v9458 = vunpack.c.l.b16 %v8433
        %v9459 = vunpack.c.l.b16 %v8434
        %v9460 = vunpack.c.l.b16 %v8435
        %v9461 = vunpack.c.l.b16 %v8436
        %v9462 = vunpack.c.l.b16 %v8437
        %v9463 = vunpack.c.l.b16 %v8438
        %v9464 = vunpack.c.l.b16 %v8439
        %v9465 = vunpack.c.l.b16 %v8440
        %v9466 = vunpack.c.l.b16 %v8441
        %v9467 = vunpack.c.l.b16 %v8442
        %v9468 = vunpack.c.l.b16 %v8443
        %v9469 = vunpack.c.l.b16 %v8444
        %v9470 = vunpack.c.l.b16 %v8445
        %v9471 = vunpack.c.l.b16 %v8446
        %v9472 = vunpack.c.l.b16 %v8447
        %v9473 = vunpack.c.l.b16 %v8448
        %v9474 = vunpack.c.l.b16 %v8449
        %v9475 = vunpack.c.l.b16 %v8450
        %v9476 = vunpack.c.l.b16 %v8451
        %v9477 = vunpack.c.l.b16 %v8452
        %v9478 = vunpack.c.l.b16 %v8453
        %v9479 = vunpack.c.l.b16 %v8454
        %v9480 = vunpack.c.l.b16 %v8455
        %v9481 = vunpack.c.l.b16 %v8456
        %v9482 = vunpack.c.l.b16 %v8457
        %v9483 = vunpack.c.l.b16 %v8458
        %v9484 = vunpack.c.l.b16 %v8459
        %v9485 = vunpack.c.l.b16 %v8460
        %v9486 = vunpack.c.l.b16 %v8461
        %v9487 = vunpack.c.l.b16 %v8462
        %v9488 = vunpack.c.l.b16 %v8463
        %v9489 = vunpack.c.l.b16 %v8464
        %v9490 = vunpack.c.l.b16 %v8465
        %v9491 = vunpack.c.l.b16 %v8466
        %v9492 = vunpack.c.l.b16 %v8467
        %v9493 = vunpack.c.l.b16 %v8468
        %v9494 = vunpack.c.l.b16 %v8469
        %v9495 = vunpack.c.l.b16 %v8470
        %v9496 = vunpack.c.l.b16 %v8471
        %v9497 = vunpack.c.l.b16 %v8472
        %v9498 = vunpack.c.l.b16 %v8473
        %v9499 = vunpack.c.l.b16 %v8474
        %v9500 = vunpack.c.l.b16 %v8475
        %v9501 = vunpack.c.l.b16 %v8476
        %v9502 = vunpack.c.l.b16 %v8477
        %v9503 = vunpack.c.l.b16 %v8478
        %v9504 = vunpack.c.l.b16 %v8479
        %v9505 = vunpack.c.l.b16 %v8480
        %v9506 = vunpack.c.l.b16 %v8481
        %v9507 = vunpack.c.l.b16 %v8482
        %v9508 = vunpack.c.l.b16 %v8483
        %v9509 = vunpack.c.l.b16 %v8484
        %v9510 = vunpack.c.l.b16 %v8485
        %v9511 = vunpack.c.l.b16 %v8486
        %v9512 = vunpack.c.l.b16 %v8487
        %v9513 = vunpack.c.l.b16 %v8488
        %v9514 = vunpack.c.l.b16 %v8489
        %v9515 = vunpack.c.l.b16 %v8490
        %v9516 = vunpack.c.l.b16 %v8491
        %v9517 = vunpack.c.l.b16 %v8492
        %v9518 = vunpack.c.l.b16 %v8493
        %v9519 = vunpack.c.l.b16 %v8494
        %v9520 = vunpack.c.l.b16 %v8495
        %v9521 = vunpack.c.l.b16 %v8496
        %v9522 = vunpack.c.l.b16 %v8497
        %v9523 = vunpack.c.l.b16 %v8498
        %v9524 = vunpack.c.l.b16 %v8499
        %v9525 = vunpack.c.l.b16 %v8500
        %v9526 = vunpack.c.l.b16 %v8501
        %v9527 = vunpack.c.l.b16 %v8502
        %v9528 = vunpack.c.l.b16 %v8503
        %v9529 = vunpack.c.l.b16 %v8504
        %v9530 = vunpack.c.l.b16 %v8505
        %v9531 = vunpack.c.l.b16 %v8506
        %v9532 = vunpack.c.l.b16 %v8507
        %v9533 = vunpack.c.l.b16 %v8508
        %v9534 = vunpack.c.l.b16 %v8509
        %v9535 = vunpack.c.l.b16 %v8510
        %v9536 = vunpack.c.l.b16 %v8511
        %v9537 = vunpack.c.l.b16 %v8512
        %v9538 = vunpack.c.l.b16 %v8513
        %v9539 = vunpack.c.l.b16 %v8514
        %v9540 = vunpack.c.l.b16 %v8515
        %v9541 = vunpack.c.l.b16 %v8516
        %v9542 = vunpack.c.l.b16 %v8517
        %v9543 = vunpack.c.l.b16 %v8518
        %v9544 = vunpack.c.l.b16 %v8519
        %v9545 = vunpack.c.l.b16 %v8520
        %v9546 = vunpack.c.l.b16 %v8521
        %v9547 = vunpack.c.l.b16 %v8522
        %v9548 = vunpack.c.l.b16 %v8523
        %v9549 = vunpack.c.l.b16 %v8524
        %v9550 = vunpack.c.l.b16 %v8525
        %v9551 = vunpack.c.l.b16 %v8526
        %v9552 = vunpack.c.l.b16 %v8527
        %v9553 = vunpack.c.l.b16 %v8528
        %v9554 = vunpack.c.l.b16 %v8529
        %v9555 = vunpack.c.l.b16 %v8530
        %v9556 = vunpack.c.l.b16 %v8531
        %v9557 = vunpack.c.l.b16 %v8532
        %v9558 = vunpack.c.l.b16 %v8533
        %v9559 = vunpack.c.l.b16 %v8534
        %v9560 = vunpack.c.l.b16 %v8535
        %v9561 = vunpack.c.l.b16 %v8536
        %v9562 = vunpack.c.l.b16 %v8537
        %v9563 = vunpack.c.l.b16 %v8538
        %v9564 = vunpack.c.l.b16 %v8539
        %v9565 = vunpack.c.l.b16 %v8540
        %v9566 = vunpack.c.l.b16 %v8541
        %v9567 = vunpack.c.l.b16 %v8542
        %v9568 = vunpack.c.l.b16 %v8543
        %v9569 = vunpack.c.l.b16 %v8544
        %v9570 = vunpack.c.l.b16 %v8545
        %v9571 = vunpack.c.l.b16 %v8546
        %v9572 = vunpack.c.l.b16 %v8547
        %v9573 = vunpack.c.l.b16 %v8548
        %v9574 = vunpack.c.l.b16 %v8549
        %v9575 = vunpack.c.l.b16 %v8550
        %v9576 = vunpack.c.l.b16 %v8551
        %v9577 = vunpack.c.l.b16 %v8552
        %v9578 = vunpack.c.l.b16 %v8553
        %v9579 = vunpack.c.l.b16 %v8554
        %v9580 = vunpack.c.l.b16 %v8555
        %v9581 = vunpack.c.l.b16 %v8556
        %v9582 = vunpack.c.l.b16 %v8557
        %v9583 = vunpack.c.l.b16 %v8558
        %v9584 = vunpack.c.l.b16 %v8559
        %v9585 = vunpack.c.l.b16 %v8560
        %v9586 = vunpack.c.l.b16 %v8561
        %v9587 = vunpack.c.l.b16 %v8562
        %v9588 = vunpack.c.l.b16 %v8563
        %v9589 = vunpack.c.l.b16 %v8564
        %v9590 = vunpack.c.l.b16 %v8565
        %v9591 = vunpack.c.l.b16 %v8566
        %v9592 = vunpack.c.l.b16 %v8567
        %v9593 = vunpack.c.l.b16 %v8568
        %v9594 = vunpack.c.l.b16 %v8569
        %v9595 = vunpack.c.l.b16 %v8570
        %v9596 = vunpack.c.l.b16 %v8571
        %v9597 = vunpack.c.l.b16 %v8572
        %v9598 = vunpack.c.l.b16 %v8573
        %v9599 = vunpack.c.l.b16 %v8574
        %v9600 = vunpack.c.l.b16 %v8575
        %v9601 = vunpack.c.l.b16 %v8576
        %v9602 = vunpack.c.l.b16 %v8577
        %v9603 = vunpack.c.l.b16 %v8578
        %v9604 = vunpack.c.l.b16 %v8579
        %v9605 = vunpack.c.l.b16 %v8580
        %v9606 = vunpack.c.l.b16 %v8581
        %v9607 = vunpack.c.l.b16 %v8582
        %v9608 = vunpack.c.l.b16 %v8583
        %v9609 = vunpack.c.l.b16 %v8584
        %v9610 = vunpack.c.l.b16 %v8585
        %v9611 = vunpack.c.l.b16 %v8586
        %v9612 = vunpack.c.l.b16 %v8587
        %v9613 = vunpack.c.l.b16 %v8588
        %v9614 = vunpack.c.l.b16 %v8589
        %v9615 = vunpack.c.l.b16 %v8590
        %v9616 = vunpack.c.l.b16 %v8591
        %v9617 = vunpack.c.l.b16 %v8592
        %v9618 = vunpack.c.l.b16 %v8593
        %v9619 = vunpack.c.l.b16 %v8594
        %v9620 = vunpack.c.l.b16 %v8595
        %v9621 = vunpack.c.l.b16 %v8596
        %v9622 = vunpack.c.l.b16 %v8597
        %v9623 = vunpack.c.l.b16 %v8598
        %v9624 = vunpack.c.l.b16 %v8599
        %v9625 = vunpack.c.l.b16 %v8600
        %v9626 = vunpack.c.l.b16 %v8601
        %v9627 = vunpack.c.l.b16 %v8602
        %v9628 = vunpack.c.l.b16 %v8603
        %v9629 = vunpack.c.l.b16 %v8604
        %v9630 = vunpack.c.l.b16 %v8605
        %v9631 = vunpack.c.l.b16 %v8606
        %v9632 = vunpack.c.l.b16 %v8607
        %v9633 = vunpack.c.l.b16 %v8608
        %v9634 = vunpack.c.l.b16 %v8609
        %v9635 = vunpack.c.l.b16 %v8610
        %v9636 = vunpack.c.l.b16 %v8611
        %v9637 = vunpack.c.l.b16 %v8612
        %v9638 = vunpack.c.l.b16 %v8613
        %v9639 = vunpack.c.l.b16 %v8614
        %v9640 = vunpack.c.l.b16 %v8615
        %v9641 = vunpack.c.l.b16 %v8616
        %v9642 = vunpack.c.l.b16 %v8617
        %v9643 = vunpack.c.l.b16 %v8618
        %v9644 = vunpack.c.l.b16 %v8619
        %v9645 = vunpack.c.l.b16 %v8620
        %v9646 = vunpack.c.l.b16 %v8621
        %v9647 = vunpack.c.l.b16 %v8622
        %v9648 = vunpack.c.l.b16 %v8623
        %v9649 = vunpack.c.l.b16 %v8624
        %v9650 = vunpack.c.l.b16 %v8625
        %v9651 = vunpack.c.l.b16 %v8626
        %v9652 = vunpack.c.l.b16 %v8627
        %v9653 = vunpack.c.l.b16 %v8628
        %v9654 = vunpack.c.l.b16 %v8629
        %v9655 = vunpack.c.l.b16 %v8630
        %v9656 = vunpack.c.l.b16 %v8631
        %v9657 = vunpack.c.l.b16 %v8632
        %v9658 = vunpack.c.l.b16 %v8633
        %v9659 = vunpack.c.l.b16 %v8634
        %v9660 = vunpack.c.l.b16 %v8635
        %v9661 = vunpack.c.l.b16 %v8636
        %v9662 = vunpack.c.l.b16 %v8637
        %v9663 = vunpack.c.l.b16 %v8638
        %v9664 = vunpack.c.l.b16 %v8639
        %v9665 = vunpack.c.l.b16 %v8640
        %v9666 = vunpack.c.l.b16 %v8641
        %v9667 = vunpack.c.l.b16 %v8642
        %v9668 = vunpack.c.l.b16 %v8643
        %v9669 = vunpack.c.l.b16 %v8644
        %v9670 = vunpack.c.l.b16 %v8645
        %v9671 = vunpack.c.l.b16 %v8646
        %v9672 = vunpack.c.l.b16 %v8647
        %v9673 = vunpack.c.l.b16 %v8648
        %v9674 = vunpack.c.l.b16 %v8649
        %v9675 = vunpack.c.l.b16 %v8650
        %v9676 = vunpack.c.l.b16 %v8651
        %v9677 = vunpack.c.l.b16 %v8652
        %v9678 = vunpack.c.l.b16 %v8653
        %v9679 = vunpack.c.l.b16 %v8654
        %v9680 = vunpack.c.l.b16 %v8655
        %v9681 = vunpack.c.l.b16 %v8656
        %v9682 = vunpack.c.l.b16 %v8657
        %v9683 = vunpack.c.l.b16 %v8658
        %v9684 = vunpack.c.l.b16 %v8659
        %v9685 = vunpack.c.l.b16 %v8660
        %v9686 = vunpack.c.l.b16 %v8661
        %v9687 = vunpack.c.l.b16 %v8662
        %v9688 = vunpack.c.l.b16 %v8663
        %v9689 = vunpack.c.l.b16 %v8664
        %v9690 = vunpack.c.l.b16 %v8665
        %v9691 = vunpack.c.l.b16 %v8666
        %v9692 = vunpack.c.l.b16 %v8667
        %v9693 = vunpack.c.l.b16 %v8668
        %v9694 = vunpack.c.l.b16 %v8669
        %v9695 = vunpack.c.l.b16 %v8670
        %v9696 = vunpack.c.l.b16 %v8671
        %v9697 = vunpack.c.l.b16 %v8672
        %v9698 = vunpack.c.l.b16 %v8673
        %v9699 = vunpack.c.l.b16 %v8674
        %v9700 = vunpack.c.l.b16 %v8675
        %v9701 = vunpack.c.l.b16 %v8676
        %v9702 = vunpack.c.l.b16 %v8677
        %v9703 = vunpack.c.l.b16 %v8678
        %v9704 = vunpack.c.l.b16 %v8679
        %v9705 = vunpack.c.l.b16 %v8680
        %v9706 = vunpack.c.l.b16 %v8681
        %v9707 = vunpack.c.l.b16 %v8682
        %v9708 = vunpack.c.l.b16 %v8683
        %v9709 = vunpack.c.l.b16 %v8684
        %v9710 = vunpack.c.l.b16 %v8685
        %v9711 = vunpack.c.l.b16 %v8686
        %v9712 = vunpack.c.l.b16 %v8687
        %v9713 = vunpack.c.l.b16 %v8688
        %v9714 = vunpack.c.l.b16 %v8689
        %v9715 = vunpack.c.l.b16 %v8690
        %v9716 = vunpack.c.l.b16 %v8691
        %v9717 = vunpack.c.l.b16 %v8692
        %v9718 = vunpack.c.l.b16 %v8693
        %v9719 = vunpack.c.l.b16 %v8694
        %v9720 = vunpack.c.l.b16 %v8695
        %v9721 = vunpack.c.l.b16 %v8696
        %v9722 = vunpack.c.l.b16 %v8697
        %v9723 = vunpack.c.l.b16 %v8698
        %v9724 = vunpack.c.l.b16 %v8699
        %v9725 = vunpack.c.l.b16 %v8700
        %v9726 = vunpack.c.l.b16 %v8701
        %v9727 = vunpack.c.l.b16 %v8702
        %v9728 = vunpack.c.l.b16 %v8703
        %v9729 = vunpack.c.l.b16 %v8704
        %v9730 = vunpack.c.l.b16 %v8705
        %v9731 = vunpack.c.l.b16 %v8706
        %v9732 = vunpack.c.l.b16 %v8707
        %v9733 = vunpack.c.l.b16 %v8708
        %v9734 = vunpack.c.l.b16 %v8709
        %v9735 = vunpack.c.l.b16 %v8710
        %v9736 = vunpack.c.l.b16 %v8711
        %v9737 = vunpack.c.l.b16 %v8712
        %v9738 = vunpack.c.l.b16 %v8713
        %v9739 = vunpack.c.l.b16 %v8714
        %v9740 = vunpack.c.l.b16 %v8715
        %v9741 = vunpack.c.l.b16 %v8716
        %v9742 = vunpack.c.l.b16 %v8717
        %v9743 = vunpack.c.l.b16 %v8718
        %v9744 = vunpack.c.l.b16 %v8719
        %v9745 = vunpack.c.l.b16 %v8720
        %v9746 = vunpack.c.l.b16 %v8721
        %v9747 = vunpack.c.l.b16 %v8722
        %v9748 = vunpack.c.l.b16 %v8723
        %v9749 = vunpack.c.l.b16 %v8724
        %v9750 = vunpack.c.l.b16 %v8725
        %v9751 = vunpack.c.l.b16 %v8726
        %v9752 = vunpack.c.l.b16 %v8727
        %v9753 = vunpack.c.l.b16 %v8728
        %v9754 = vunpack.c.l.b16 %v8729
        %v9755 = vunpack.c.l.b16 %v8730
        %v9756 = vunpack.c.l.b16 %v8731
        %v9757 = vunpack.c.l.b16 %v8732
        %v9758 = vunpack.c.l.b16 %v8733
        %v9759 = vunpack.c.l.b16 %v8734
        %v9760 = vunpack.c.l.b16 %v8735
        %v9761 = vunpack.c.l.b16 %v8736
        %v9762 = vunpack.c.l.b16 %v8737
        %v9763 = vunpack.c.l.b16 %v8738
        %v9764 = vunpack.c.l.b16 %v8739
        %v9765 = vunpack.c.l.b16 %v8740
        %v9766 = vunpack.c.l.b16 %v8741
        %v9767 = vunpack.c.l.b16 %v8742
        %v9768 = vunpack.c.l.b16 %v8743
        %v9769 = vunpack.c.l.b16 %v8744
        %v9770 = vunpack.c.l.b16 %v8745
        %v9771 = vunpack.c.l.b16 %v8746
        %v9772 = vunpack.c.l.b16 %v8747
        %v9773 = vunpack.c.l.b16 %v8748
        %v9774 = vunpack.c.l.b16 %v8749
        %v9775 = vunpack.c.l.b16 %v8750
        %v9776 = vunpack.c.l.b16 %v8751
        %v9777 = vunpack.c.l.b16 %v8752
        %v9778 = vunpack.c.l.b16 %v8753
        %v9779 = vunpack.c.l.b16 %v8754
        %v9780 = vunpack.c.l.b16 %v8755
        %v9781 = vunpack.c.l.b16 %v8756
        %v9782 = vunpack.c.l.b16 %v8757
        %v9783 = vunpack.c.l.b16 %v8758
        %v9784 = vunpack.c.l.b16 %v8759
        %v9785 = vunpack.c.l.b16 %v8760
        %v9786 = vunpack.c.l.b16 %v8761
        %v9787 = vunpack.c.l.b16 %v8762
        %v9788 = vunpack.c.l.b16 %v8763
        %v9789 = vunpack.c.l.b16 %v8764
        %v9790 = vunpack.c.l.b16 %v8765
        %v9791 = vunpack.c.l.b16 %v8766
        %v9792 = vunpack.c.l.b16 %v8767
        %v9793 = vunpack.c.l.b16 %v8768
        %v9794 = vunpack.c.l.b16 %v8769
        %v9795 = vunpack.c.l.b16 %v8770
        %v9796 = vunpack.c.l.b16 %v8771
        %v9797 = vunpack.c.l.b16 %v8772
        %v9798 = vunpack.c.l.b16 %v8773
        %v9799 = vunpack.c.l.b16 %v8774
        %v9800 = vunpack.c.l.b16 %v8775
        %v9801 = vunpack.c.l.b16 %v8776
        %v9802 = vunpack.c.l.b16 %v8777
        %v9803 = vunpack.c.l.b16 %v8778
        %v9804 = vunpack.c.l.b16 %v8779
        %v9805 = vunpack.c.l.b16 %v8780
        %v9806 = vunpack.c.l.b16 %v8781
        %v9807 = vunpack.c.l.b16 %v8782
        %v9808 = vunpack.c.l.b16 %v8783
        %v9809 = vunpack.c.l.b16 %v8784
        %v9810 = vunpack.c.l.b16 %v8785
        %v9811 = vunpack.c.l.b16 %v8786
        %v9812 = vunpack.c.l.b16 %v8787
        %v9813 = vunpack.c.l.b16 %v8788
        %v9814 = vunpack.c.l.b16 %v8789
        %v9815 = vunpack.c.l.b16 %v8790
        %v9816 = vunpack.c.l.b16 %v8791
        %v9817 = vunpack.c.l.b16 %v8792
        %v9818 = vunpack.c.l.b16 %v8793
        %v9819 = vunpack.c.l.b16 %v8794
        %v9820 = vunpack.c.l.b16 %v8795
        %v9821 = vunpack.c.l.b16 %v8796
        %v9822 = vunpack.c.l.b16 %v8797
        %v9823 = vunpack.c.l.b16 %v8798
        %v9824 = vunpack.c.l.b16 %v8799
        %v9825 = vunpack.c.l.b16 %v8800
        %v9826 = vunpack.c.l.b16 %v8801
        %v9827 = vunpack.c.l.b16 %v8802
        %v9828 = vunpack.c.l.b16 %v8803
        %v9829 = vunpack.c.l.b16 %v8804
        %v9830 = vunpack.c.l.b16 %v8805
        %v9831 = vunpack.c.l.b16 %v8806
        %v9832 = vunpack.c.l.b16 %v8807
        %v9833 = vunpack.c.l.b16 %v8808
        %v9834 = vunpack.c.l.b16 %v8809
        %v9835 = vunpack.c.l.b16 %v8810
        %v9836 = vunpack.c.l.b16 %v8811
        %v9837 = vunpack.c.l.b16 %v8812
        %v9838 = vunpack.c.l.b16 %v8813
        %v9839 = vunpack.c.l.b16 %v8814
        %v9840 = vunpack.c.l.b16 %v8815
        %v9841 = vunpack.c.l.b16 %v8816
        %v9842 = vunpack.c.l.b16 %v8817
        %v9843 = vunpack.c.l.b16 %v8818
        %v9844 = vunpack.c.l.b16 %v8819
        %v9845 = vunpack.c.l.b16 %v8820
        %v9846 = vunpack.c.l.b16 %v8821
        %v9847 = vunpack.c.l.b16 %v8822
        %v9848 = vunpack.c.l.b16 %v8823
        %v9849 = vunpack.c.l.b16 %v8824
        %v9850 = vunpack.c.l.b16 %v8825
        %v9851 = vunpack.c.l.b16 %v8826
        %v9852 = vunpack.c.l.b16 %v8827
        %v9853 = vunpack.c.l.b16 %v8828
        %v9854 = vunpack.c.l.b16 %v8829
        %v9855 = vunpack.c.l.b16 %v8830
        %v9856 = vunpack.c.l.b16 %v8831
        %v9857 = vunpack.c.l.b16 %v8832
        %v9858 = vunpack.c.l.b16 %v8833
        %v9859 = vunpack.c.l.b16 %v8834
        %v9860 = vunpack.c.l.b16 %v8835
        %v9861 = vunpack.c.l.b16 %v8836
        %v9862 = vunpack.c.l.b16 %v8837
        %v9863 = vunpack.c.l.b16 %v8838
        %v9864 = vunpack.c.l.b16 %v8839
        %v9865 = vunpack.c.l.b16 %v8840
        %v9866 = vunpack.c.l.b16 %v8841
        %v9867 = vunpack.c.l.b16 %v8842
        %v9868 = vunpack.c.l.b16 %v8843
        %v9869 = vunpack.c.l.b16 %v8844
        %v9870 = vunpack.c.l.b16 %v8845
        %v9871 = vunpack.c.l.b16 %v8846
        %v9872 = vunpack.c.l.b16 %v8847
        %v9873 = vunpack.c.l.b16 %v8848
        %v9874 = vunpack.c.l.b16 %v8849
        %v9875 = vunpack.c.l.b16 %v8850
        %v9876 = vunpack.c.l.b16 %v8851
        %v9877 = vunpack.c.l.b16 %v8852
        %v9878 = vunpack.c.l.b16 %v8853
        %v9879 = vunpack.c.l.b16 %v8854
        %v9880 = vunpack.c.l.b16 %v8855
        %v9881 = vunpack.c.l.b16 %v8856
        %v9882 = vunpack.c.l.b16 %v8857
        %v9883 = vunpack.c.l.b16 %v8858
        %v9884 = vunpack.c.l.b16 %v8859
        %v9885 = vunpack.c.l.b16 %v8860
        %v9886 = vunpack.c.l.b16 %v8861
        %v9887 = vunpack.c.l.b16 %v8862
        %v9888 = vunpack.c.l.b16 %v8863
        %v9889 = vunpack.c.l.b16 %v8864
        %v9890 = vunpack.c.l.b16 %v8865
        %v9891 = vunpack.c.l.b16 %v8866
        %v9892 = vunpack.c.l.b16 %v8867
        %v9893 = vunpack.c.l.b16 %v8868
        %v9894 = vunpack.c.l.b16 %v8869
        %v9895 = vunpack.c.l.b16 %v8870
        %v9896 = vunpack.c.l.b16 %v8871
        %v9897 = vunpack.c.l.b16 %v8872
        %v9898 = vunpack.c.l.b16 %v8873
        %v9899 = vunpack.c.l.b16 %v8874
        %v9900 = vunpack.c.l.b16 %v8875
        %v9901 = vunpack.c.l.b16 %v8876
        %v9902 = vunpack.c.l.b16 %v8877
        %v9903 = vunpack.c.l.b16 %v8878
        %v9904 = vunpack.c.l.b16 %v8879
        %v9905 = vunpack.c.l.b16 %v8880
        %v9906 = vunpack.c.l.b16 %v8881
        %v9907 = vunpack.c.l.b16 %v8882
        %v9908 = vunpack.c.l.b16 %v8883
        %v9909 = vunpack.c.l.b16 %v8884
        %v9910 = vunpack.c.l.b16 %v8885
        %v9911 = vunpack.c.l.b16 %v8886
        %v9912 = vunpack.c.l.b16 %v8887
        %v9913 = vunpack.c.l.b16 %v8888
        %v9914 = vunpack.c.l.b16 %v8889
        %v9915 = vunpack.c.l.b16 %v8890
        %v9916 = vunpack.c.l.b16 %v8891
        %v9917 = vunpack.c.l.b16 %v8892
        %v9918 = vunpack.c.l.b16 %v8893
        %v9919 = vunpack.c.l.b16 %v8894
        %v9920 = vunpack.c.l.b16 %v8895
        %v9921 = vunpack.c.l.b16 %v8896
        %v9922 = vunpack.c.l.b16 %v8897
        %v9923 = vunpack.c.l.b16 %v8898
        %v9924 = vunpack.c.l.b16 %v8899
        %v9925 = vunpack.c.l.b16 %v8900
        %v9926 = vunpack.c.l.b16 %v8901
        %v9927 = vunpack.c.l.b16 %v8902
        %v9928 = vunpack.c.l.b16 %v8903
        %v9929 = vunpack.c.l.b16 %v8904
        %v9930 = vunpack.c.l.b16 %v8905
        %v9931 = vunpack.c.l.b16 %v8906
        %v9932 = vunpack.c.l.b16 %v8907
        %v9933 = vunpack.c.l.b16 %v8908
        %v9934 = vunpack.c.l.b16 %v8909
        %v9935 = vunpack.c.l.b16 %v8910
        %v9936 = vunpack.c.l.b16 %v8911
        %v9937 = vunpack.c.l.b16 %v8912
        %v9938 = vunpack.c.l.b16 %v8913
        %v9939 = vunpack.c.l.b16 %v8914
        %v9940 = vunpack.c.l.b16 %v8915
        %v9941 = vunpack.c.l.b16 %v8916
        %v9942 = vunpack.c.l.b16 %v8917
        %v9943 = vunpack.c.l.b16 %v8918
        %v9944 = vunpack.c.l.b16 %v8919
        %v9945 = vunpack.c.l.b16 %v8920
        %v9946 = vunpack.c.l.b16 %v8921
        %v9947 = vpack.c.b16 %v9436, %v9435
        %v9948 = vpack.c.b16 %v9438, %v9437
        %v9949 = vpack.c.b16 %v9440, %v9439
        %v9950 = vpack.c.b16 %v9442, %v9441
        %v9951 = vpack.c.b16 %v9444, %v9443
        %v9952 = vpack.c.b16 %v9446, %v9445
        %v9953 = vpack.c.b16 %v9448, %v9447
        %v9954 = vpack.c.b16 %v9450, %v9449
        %v9955 = vpack.c.b16 %v9452, %v9451
        %v9956 = vpack.c.b16 %v9454, %v9453
        %v9957 = vpack.c.b16 %v9456, %v9455
        %v9958 = vpack.c.b16 %v9458, %v9457
        %v9959 = vpack.c.b16 %v9460, %v9459
        %v9960 = vpack.c.b16 %v9462, %v9461
        %v9961 = vpack.c.b16 %v9464, %v9463
        %v9962 = vpack.c.b16 %v9466, %v9465
        %v9963 = vpack.c.b16 %v9468, %v9467
        %v9964 = vpack.c.b16 %v9470, %v9469
        %v9965 = vpack.c.b16 %v9472, %v9471
        %v9966 = vpack.c.b16 %v9474, %v9473
        %v9967 = vpack.c.b16 %v9476, %v9475
        %v9968 = vpack.c.b16 %v9478, %v9477
        %v9969 = vpack.c.b16 %v9480, %v9479
        %v9970 = vpack.c.b16 %v9482, %v9481
        %v9971 = vpack.c.b16 %v9484, %v9483
        %v9972 = vpack.c.b16 %v9486, %v9485
        %v9973 = vpack.c.b16 %v9488, %v9487
        %v9974 = vpack.c.b16 %v9490, %v9489
        %v9975 = vpack.c.b16 %v9492, %v9491
        %v9976 = vpack.c.b16 %v9494, %v9493
        %v9977 = vpack.c.b16 %v9496, %v9495
        %v9978 = vpack.c.b16 %v9498, %v9497
        %v9979 = vpack.c.b16 %v9500, %v9499
        %v9980 = vpack.c.b16 %v9502, %v9501
        %v9981 = vpack.c.b16 %v9504, %v9503
        %v9982 = vpack.c.b16 %v9506, %v9505
        %v9983 = vpack.c.b16 %v9508, %v9507
        %v9984 = vpack.c.b16 %v9510, %v9509
        %v9985 = vpack.c.b16 %v9512, %v9511
        %v9986 = vpack.c.b16 %v9514, %v9513
        %v9987 = vpack.c.b16 %v9516, %v9515
        %v9988 = vpack.c.b16 %v9518, %v9517
        %v9989 = vpack.c.b16 %v9520, %v9519
        %v9990 = vpack.c.b16 %v9522, %v9521
        %v9991 = vpack.c.b16 %v9524, %v9523
        %v9992 = vpack.c.b16 %v9526, %v9525
        %v9993 = vpack.c.b16 %v9528, %v9527
        %v9994 = vpack.c.b16 %v9530, %v9529
        %v9995 = vpack.c.b16 %v9532, %v9531
        %v9996 = vpack.c.b16 %v9534, %v9533
        %v9997 = vpack.c.b16 %v9536, %v9535
        %v9998 = vpack.c.b16 %v9538, %v9537
        %v9999 = vpack.c.b16 %v9540, %v9539
        %v10000 = vpack.c.b16 %v9542, %v9541
        %v10001 = vpack.c.b16 %v9544, %v9543
        %v10002 = vpack.c.b16 %v9546, %v9545
        %v10003 = vpack.c.b16 %v9548, %v9547
        %v10004 = vpack.c.b16 %v9550, %v9549
        %v10005 = vpack.c.b16 %v9552, %v9551
        %v10006 = vpack.c.b16 %v9554, %v9553
        %v10007 = vpack.c.b16 %v9556, %v9555
        %v10008 = vpack.c.b16 %v9558, %v9557
        %v10009 = vpack.c.b16 %v9560, %v9559
        %v10010 = vpack.c.b16 %v9562, %v9561
        %v10011 = vpack.c.b16 %v9564, %v9563
        %v10012 = vpack.c.b16 %v9566, %v9565
        %v10013 = vpack.c.b16 %v9568, %v9567
        %v10014 = vpack.c.b16 %v9570, %v9569
        %v10015 = vpack.c.b16 %v9572, %v9571
        %v10016 = vpack.c.b16 %v9574, %v9573
        %v10017 = vpack.c.b16 %v9576, %v9575
        %v10018 = vpack.c.b16 %v9578, %v9577
        %v10019 = vpack.c.b16 %v9580, %v9579
        %v10020 = vpack.c.b16 %v9582, %v9581
        %v10021 = vpack.c.b16 %v9584, %v9583
        %v10022 = vpack.c.b16 %v9586, %v9585
        %v10023 = vpack.c.b16 %v9588, %v9587
        %v10024 = vpack.c.b16 %v9590, %v9589
        %v10025 = vpack.c.b16 %v9592, %v9591
        %v10026 = vpack.c.b16 %v9594, %v9593
        %v10027 = vpack.c.b16 %v9596, %v9595
        %v10028 = vpack.c.b16 %v9598, %v9597
        %v10029 = vpack.c.b16 %v9600, %v9599
        %v10030 = vpack.c.b16 %v9602, %v9601
        %v10031 = vpack.c.b16 %v9604, %v9603
        %v10032 = vpack.c.b16 %v9606, %v9605
        %v10033 = vpack.c.b16 %v9608, %v9607
        %v10034 = vpack.c.b16 %v9610, %v9609
        %v10035 = vpack.c.b16 %v9612, %v9611
        %v10036 = vpack.c.b16 %v9614, %v9613
        %v10037 = vpack.c.b16 %v9616, %v9615
        %v10038 = vpack.c.b16 %v9618, %v9617
        %v10039 = vpack.c.b16 %v9620, %v9619
        %v10040 = vpack.c.b16 %v9622, %v9621
        %v10041 = vpack.c.b16 %v9624, %v9623
        %v10042 = vpack.c.b16 %v9626, %v9625
        %v10043 = vpack.c.b16 %v9628, %v9627
        %v10044 = vpack.c.b16 %v9630, %v9629
        %v10045 = vpack.c.b16 %v9632, %v9631
        %v10046 = vpack.c.b16 %v9634, %v9633
        %v10047 = vpack.c.b16 %v9636, %v9635
        %v10048 = vpack.c.b16 %v9638, %v9637
        %v10049 = vpack.c.b16 %v9640, %v9639
        %v10050 = vpack.c.b16 %v9642, %v9641
        %v10051 = vpack.c.b16 %v9644, %v9643
        %v10052 = vpack.c.b16 %v9646, %v9645
        %v10053 = vpack.c.b16 %v9648, %v9647
        %v10054 = vpack.c.b16 %v9650, %v9649
        %v10055 = vpack.c.b16 %v9652, %v9651
        %v10056 = vpack.c.b16 %v9654, %v9653
        %v10057 = vpack.c.b16 %v9656, %v9655
        %v10058 = vpack.c.b16 %v9658, %v9657
        %v10059 = vpack.c.b16 %v9660, %v9659
        %v10060 = vpack.c.b16 %v9662, %v9661
        %v10061 = vpack.c.b16 %v9664, %v9663
        %v10062 = vpack.c.b16 %v9666, %v9665
        %v10063 = vpack.c.b16 %v9668, %v9667
        %v10064 = vpack.c.b16 %v9670, %v9669
        %v10065 = vpack.c.b16 %v9672, %v9671
        %v10066 = vpack.c.b16 %v9674, %v9673
        %v10067 = vpack.c.b16 %v9676, %v9675
        %v10068 = vpack.c.b16 %v9678, %v9677
        %v10069 = vpack.c.b16 %v9680, %v9679
        %v10070 = vpack.c.b16 %v9682, %v9681
        %v10071 = vpack.c.b16 %v9684, %v9683
        %v10072 = vpack.c.b16 %v9686, %v9685
        %v10073 = vpack.c.b16 %v9688, %v9687
        %v10074 = vpack.c.b16 %v9690, %v9689
        %v10075 = vpack.c.b16 %v9692, %v9691
        %v10076 = vpack.c.b16 %v9694, %v9693
        %v10077 = vpack.c.b16 %v9696, %v9695
        %v10078 = vpack.c.b16 %v9698, %v9697
        %v10079 = vpack.c.b16 %v9700, %v9699
        %v10080 = vpack.c.b16 %v9702, %v9701
        %v10081 = vpack.c.b16 %v9704, %v9703
        %v10082 = vpack.c.b16 %v9706, %v9705
        %v10083 = vpack.c.b16 %v9708, %v9707
        %v10084 = vpack.c.b16 %v9710, %v9709
        %v10085 = vpack.c.b16 %v9712, %v9711
        %v10086 = vpack.c.b16 %v9714, %v9713
        %v10087 = vpack.c.b16 %v9716, %v9715
        %v10088 = vpack.c.b16 %v9718, %v9717
        %v10089 = vpack.c.b16 %v9720, %v9719
        %v10090 = vpack.c.b16 %v9722, %v9721
        %v10091 = vpack.c.b16 %v9724, %v9723
        %v10092 = vpack.c.b16 %v9726, %v9725
        %v10093 = vpack.c.b16 %v9728, %v9727
        %v10094 = vpack.c.b16 %v9730, %v9729
        %v10095 = vpack.c.b16 %v9732, %v9731
        %v10096 = vpack.c.b16 %v9734, %v9733
        %v10097 = vpack.c.b16 %v9736, %v9735
        %v10098 = vpack.c.b16 %v9738, %v9737
        %v10099 = vpack.c.b16 %v9740, %v9739
        %v10100 = vpack.c.b16 %v9742, %v9741
        %v10101 = vpack.c.b16 %v9744, %v9743
        %v10102 = vpack.c.b16 %v9746, %v9745
        %v10103 = vpack.c.b16 %v9748, %v9747
        %v10104 = vpack.c.b16 %v9750, %v9749
        %v10105 = vpack.c.b16 %v9752, %v9751
        %v10106 = vpack.c.b16 %v9754, %v9753
        %v10107 = vpack.c.b16 %v9756, %v9755
        %v10108 = vpack.c.b16 %v9758, %v9757
        %v10109 = vpack.c.b16 %v9760, %v9759
        %v10110 = vpack.c.b16 %v9762, %v9761
        %v10111 = vpack.c.b16 %v9764, %v9763
        %v10112 = vpack.c.b16 %v9766, %v9765
        %v10113 = vpack.c.b16 %v9768, %v9767
        %v10114 = vpack.c.b16 %v9770, %v9769
        %v10115 = vpack.c.b16 %v9772, %v9771
        %v10116 = vpack.c.b16 %v9774, %v9773
        %v10117 = vpack.c.b16 %v9776, %v9775
        %v10118 = vpack.c.b16 %v9778, %v9777
        %v10119 = vpack.c.b16 %v9780, %v9779
        %v10120 = vpack.c.b16 %v9782, %v9781
        %v10121 = vpack.c.b16 %v9784, %v9783
        %v10122 = vpack.c.b16 %v9786, %v9785
        %v10123 = vpack.c.b16 %v9788, %v9787
        %v10124 = vpack.c.b16 %v9790, %v9789
        %v10125 = vpack.c.b16 %v9792, %v9791
        %v10126 = vpack.c.b16 %v9794, %v9793
        %v10127 = vpack.c.b16 %v9796, %v9795
        %v10128 = vpack.c.b16 %v9798, %v9797
        %v10129 = vpack.c.b16 %v9800, %v9799
        %v10130 = vpack.c.b16 %v9802, %v9801
        %v10131 = vpack.c.b16 %v9804, %v9803
        %v10132 = vpack.c.b16 %v9806, %v9805
        %v10133 = vpack.c.b16 %v9808, %v9807
        %v10134 = vpack.c.b16 %v9810, %v9809
        %v10135 = vpack.c.b16 %v9812, %v9811
        %v10136 = vpack.c.b16 %v9814, %v9813
        %v10137 = vpack.c.b16 %v9816, %v9815
        %v10138 = vpack.c.b16 %v9818, %v9817
        %v10139 = vpack.c.b16 %v9820, %v9819
        %v10140 = vpack.c.b16 %v9822, %v9821
        %v10141 = vpack.c.b16 %v9824, %v9823
        %v10142 = vpack.c.b16 %v9826, %v9825
        %v10143 = vpack.c.b16 %v9828, %v9827
        %v10144 = vpack.c.b16 %v9830, %v9829
        %v10145 = vpack.c.b16 %v9832, %v9831
        %v10146 = vpack.c.b16 %v9834, %v9833
        %v10147 = vpack.c.b16 %v9836, %v9835
        %v10148 = vpack.c.b16 %v9838, %v9837
        %v10149 = vpack.c.b16 %v9840, %v9839
        %v10150 = vpack.c.b16 %v9842, %v9841
        %v10151 = vpack.c.b16 %v9844, %v9843
        %v10152 = vpack.c.b16 %v9846, %v9845
        %v10153 = vpack.c.b16 %v9848, %v9847
        %v10154 = vpack.c.b16 %v9850, %v9849
        %v10155 = vpack.c.b16 %v9852, %v9851
        %v10156 = vpack.c.b16 %v9854, %v9853
        %v10157 = vpack.c.b16 %v9856, %v9855
        %v10158 = vpack.c.b16 %v9858, %v9857
        %v10159 = vpack.c.b16 %v9860, %v9859
        %v10160 = vpack.c.b16 %v9862, %v9861
        %v10161 = vpack.c.b16 %v9864, %v9863
        %v10162 = vpack.c.b16 %v9866, %v9865
        %v10163 = vpack.c.b16 %v9868, %v9867
        %v10164 = vpack.c.b16 %v9870, %v9869
        %v10165 = vpack.c.b16 %v9872, %v9871
        %v10166 = vpack.c.b16 %v9874, %v9873
        %v10167 = vpack.c.b16 %v9876, %v9875
        %v10168 = vpack.c.b16 %v9878, %v9877
        %v10169 = vpack.c.b16 %v9880, %v9879
        %v10170 = vpack.c.b16 %v9882, %v9881
        %v10171 = vpack.c.b16 %v9884, %v9883
        %v10172 = vpack.c.b16 %v9886, %v9885
        %v10173 = vpack.c.b16 %v9888, %v9887
        %v10174 = vpack.c.b16 %v9890, %v9889
        %v10175 = vpack.c.b16 %v9892, %v9891
        %v10176 = vpack.c.b16 %v9894, %v9893
        %v10177 = vpack.c.b16 %v9896, %v9895
        %v10178 = vpack.c.b16 %v9898, %v9897
        %v10179 = vpack.c.b16 %v9900, %v9899
        %v10180 = vpack.c.b16 %v9902, %v9901
        %v10181 = vpack.c.b16 %v9904, %v9903
        %v10182 = vpack.c.b16 %v9906, %v9905
        %v10183 = vpack.c.b16 %v9908, %v9907
        %v10184 = vpack.c.b16 %v9910, %v9909
        %v10185 = vpack.c.b16 %v9912, %v9911
        %v10186 = vpack.c.b16 %v9914, %v9913
        %v10187 = vpack.c.b16 %v9916, %v9915
        %v10188 = vpack.c.b16 %v9918, %v9917
        %v10189 = vpack.c.b16 %v9920, %v9919
        %v10190 = vpack.c.b16 %v9922, %v9921
        %v10191 = vpack.c.b16 %v9924, %v9923
        %v10192 = vpack.c.b16 %v9926, %v9925
        %v10193 = vpack.c.b16 %v9928, %v9927
        %v10194 = vpack.c.b16 %v9930, %v9929
        %v10195 = vpack.c.b16 %v9932, %v9931
        %v10196 = vpack.c.b16 %v9934, %v9933
        %v10197 = vpack.c.b16 %v9936, %v9935
        %v10198 = vpack.c.b16 %v9938, %v9937
        %v10199 = vpack.c.b16 %v9940, %v9939
        %v10200 = vpack.c.b16 %v9942, %v9941
        %v10201 = vpack.c.b16 %v9944, %v9943
        %v10202 = vpack.c.b16 %v9946, %v9945
        %10459 = vmatprep.subr.bf16.mxu0 0
        %10460 = vmatpush1.bf16.msra.mxu0 %v9954
        %10461 = vmatprep.subr.bf16.mxu0 0
        %10462 = vmatpush1.bf16.msra.mxu0 %v9953
        %10463 = vmatprep.subr.bf16.mxu0 0
        %10464 = vmatpush1.bf16.msra.mxu0 %v9952
        %10465 = vmatprep.subr.bf16.mxu0 0
        %10466 = vmatpush1.bf16.msra.mxu0 %v9951
        %10467 = vmatprep.subr.bf16.mxu0 0
        %10468 = vmatpush1.bf16.msra.mxu0 %v9950
        %10469 = vmatprep.subr.bf16.mxu0 0
        %10470 = vmatpush1.bf16.msra.mxu0 %v9949
        %10471 = vmatprep.subr.bf16.mxu0 0
        %10472 = vmatpush1.bf16.msra.mxu0 %v9948
        %10473 = vmatprep.subr.bf16.mxu0 0
        %10474 = vmatpush1.bf16.msra.mxu0 %v9947
        %10475 = vmatprep.subr.bf16.mxu0 0
        %10476 = vmatpush2.bf16.msra.mxu0 %v9962
        %10477 = vmatprep.subr.bf16.mxu0 0
        %10478 = vmatpush2.bf16.msra.mxu0 %v9961
        %10479 = vmatprep.subr.bf16.mxu0 0
        %10480 = vmatpush2.bf16.msra.mxu0 %v9960
        %10481 = vmatprep.subr.bf16.mxu0 0
        %10482 = vmatpush2.bf16.msra.mxu0 %v9959
        %10483 = vmatprep.subr.bf16.mxu0 0
        %10484 = vmatpush2.bf16.msra.mxu0 %v9958
        %10485 = vmatprep.subr.bf16.mxu0 0
        %10486 = vmatpush2.bf16.msra.mxu0 %v9957
        %10487 = vmatprep.subr.bf16.mxu0 0
        %10488 = vmatpush2.bf16.msra.mxu0 %v9956
        %10489 = vmatprep.subr.bf16.mxu0 0
        %10490 = vmatpush2.bf16.msra.mxu0 %v9955
        %10491 = vmatprep.mubr.bf16.mxu0 %v8379
        %10492 = vmatmul.mubr.bf16.gmra.mxu0 %v8378
        %v10493 = vpop.f32.mrf.mxu0
        %v10494 = vadd.f32 %v8922, %v10493
        %v10495 = vpop.f32.mrf.mxu0
        %v10496 = vpop.f32.mrf.mxu0
        %v10497 = vpop.f32.mrf.mxu0
        %10498 = vdwg.mxu0
        %10499 = vmatprep.subr.bf16.mxu0 0
        %10500 = vmatpush1.bf16.msra.mxu0 %v9970
        %10501 = vmatprep.subr.bf16.mxu0 0
        %10502 = vmatpush1.bf16.msra.mxu0 %v9969
        %10503 = vmatprep.subr.bf16.mxu0 0
        %10504 = vmatpush1.bf16.msra.mxu0 %v9968
        %10505 = vmatprep.subr.bf16.mxu0 0
        %10506 = vmatpush1.bf16.msra.mxu0 %v9967
        %10507 = vmatprep.subr.bf16.mxu0 0
        %10508 = vmatpush1.bf16.msra.mxu0 %v9966
        %10509 = vmatprep.subr.bf16.mxu0 0
        %10510 = vmatpush1.bf16.msra.mxu0 %v9965
        %10511 = vmatprep.subr.bf16.mxu0 0
        %10512 = vmatpush1.bf16.msra.mxu0 %v9964
        %10513 = vmatprep.subr.bf16.mxu0 0
        %10514 = vmatpush1.bf16.msra.mxu0 %v9963
        %10515 = vmatprep.subr.bf16.mxu0 0
        %10516 = vmatpush2.bf16.msra.mxu0 %v9978
        %10517 = vmatprep.subr.bf16.mxu0 0
        %10518 = vmatpush2.bf16.msra.mxu0 %v9977
        %10519 = vmatprep.subr.bf16.mxu0 0
        %10520 = vmatpush2.bf16.msra.mxu0 %v9976
        %10521 = vmatprep.subr.bf16.mxu0 0
        %10522 = vmatpush2.bf16.msra.mxu0 %v9975
        %10523 = vmatprep.subr.bf16.mxu0 0
        %10524 = vmatpush2.bf16.msra.mxu0 %v9974
        %10525 = vmatprep.subr.bf16.mxu0 0
        %10526 = vmatpush2.bf16.msra.mxu0 %v9973
        %10527 = vmatprep.subr.bf16.mxu0 0
        %10528 = vmatpush2.bf16.msra.mxu0 %v9972
        %10529 = vmatprep.subr.bf16.mxu0 0
        %10530 = vmatpush2.bf16.msra.mxu0 %v9971
        %10531 = vmatprep.mubr.bf16.mxu0 %v8381
        %10532 = vmatmul.mubr.bf16.gmra.mxu0 %v8380
        %v10533 = vpop.f32.mrf.mxu0
        %v10534 = vadd.f32 %v10494, %v10533
        %v10535 = vpop.f32.mrf.mxu0
        %v10536 = vpop.f32.mrf.mxu0
        %v10537 = vpop.f32.mrf.mxu0
        %10538 = vdwg.mxu0
        %10539 = vmatprep.subr.bf16.mxu0 0
        %10540 = vmatpush1.bf16.msra.mxu0 %v9986
        %10541 = vmatprep.subr.bf16.mxu0 0
        %10542 = vmatpush1.bf16.msra.mxu0 %v9985
        %10543 = vmatprep.subr.bf16.mxu0 0
        %10544 = vmatpush1.bf16.msra.mxu0 %v9984
        %10545 = vmatprep.subr.bf16.mxu0 0
        %10546 = vmatpush1.bf16.msra.mxu0 %v9983
        %10547 = vmatprep.subr.bf16.mxu0 0
        %10548 = vmatpush1.bf16.msra.mxu0 %v9982
        %10549 = vmatprep.subr.bf16.mxu0 0
        %10550 = vmatpush1.bf16.msra.mxu0 %v9981
        %10551 = vmatprep.subr.bf16.mxu0 0
        %10552 = vmatpush1.bf16.msra.mxu0 %v9980
        %10553 = vmatprep.subr.bf16.mxu0 0
        %10554 = vmatpush1.bf16.msra.mxu0 %v9979
        %10555 = vmatprep.subr.bf16.mxu0 0
        %10556 = vmatpush2.bf16.msra.mxu0 %v9994
        %10557 = vmatprep.subr.bf16.mxu0 0
        %10558 = vmatpush2.bf16.msra.mxu0 %v9993
        %10559 = vmatprep.subr.bf16.mxu0 0
        %10560 = vmatpush2.bf16.msra.mxu0 %v9992
        %10561 = vmatprep.subr.bf16.mxu0 0
        %10562 = vmatpush2.bf16.msra.mxu0 %v9991
        %10563 = vmatprep.subr.bf16.mxu0 0
        %10564 = vmatpush2.bf16.msra.mxu0 %v9990
        %10565 = vmatprep.subr.bf16.mxu0 0
        %10566 = vmatpush2.bf16.msra.mxu0 %v9989
        %10567 = vmatprep.subr.bf16.mxu0 0
        %10568 = vmatpush2.bf16.msra.mxu0 %v9988
        %10569 = vmatprep.subr.bf16.mxu0 0
        %10570 = vmatpush2.bf16.msra.mxu0 %v9987
        %10571 = vmatprep.mubr.bf16.mxu0 %v8383
        %10572 = vmatmul.mubr.bf16.gmra.mxu0 %v8382
        %v10573 = vpop.f32.mrf.mxu0
        %v10574 = vadd.f32 %v10534, %v10573
        %v10575 = vpop.f32.mrf.mxu0
        %v10576 = vpop.f32.mrf.mxu0
        %v10577 = vpop.f32.mrf.mxu0
        %10578 = vdwg.mxu0
        %10579 = vmatprep.subr.bf16.mxu0 0
        %10580 = vmatpush1.bf16.msra.mxu0 %v10002
        %10581 = vmatprep.subr.bf16.mxu0 0
        %10582 = vmatpush1.bf16.msra.mxu0 %v10001
        %10583 = vmatprep.subr.bf16.mxu0 0
        %10584 = vmatpush1.bf16.msra.mxu0 %v10000
        %10585 = vmatprep.subr.bf16.mxu0 0
        %10586 = vmatpush1.bf16.msra.mxu0 %v9999
        %10587 = vmatprep.subr.bf16.mxu0 0
        %10588 = vmatpush1.bf16.msra.mxu0 %v9998
        %10589 = vmatprep.subr.bf16.mxu0 0
        %10590 = vmatpush1.bf16.msra.mxu0 %v9997
        %10591 = vmatprep.subr.bf16.mxu0 0
        %10592 = vmatpush1.bf16.msra.mxu0 %v9996
        %10593 = vmatprep.subr.bf16.mxu0 0
        %10594 = vmatpush1.bf16.msra.mxu0 %v9995
        %10595 = vmatprep.subr.bf16.mxu0 0
        %10596 = vmatpush2.bf16.msra.mxu0 %v10010
        %10597 = vmatprep.subr.bf16.mxu0 0
        %10598 = vmatpush2.bf16.msra.mxu0 %v10009
        %10599 = vmatprep.subr.bf16.mxu0 0
        %10600 = vmatpush2.bf16.msra.mxu0 %v10008
        %10601 = vmatprep.subr.bf16.mxu0 0
        %10602 = vmatpush2.bf16.msra.mxu0 %v10007
        %10603 = vmatprep.subr.bf16.mxu0 0
        %10604 = vmatpush2.bf16.msra.mxu0 %v10006
        %10605 = vmatprep.subr.bf16.mxu0 0
        %10606 = vmatpush2.bf16.msra.mxu0 %v10005
        %10607 = vmatprep.subr.bf16.mxu0 0
        %10608 = vmatpush2.bf16.msra.mxu0 %v10004
        %10609 = vmatprep.subr.bf16.mxu0 0
        %10610 = vmatpush2.bf16.msra.mxu0 %v10003
        %10611 = vmatprep.mubr.bf16.mxu0 %v8385
        %10612 = vmatmul.mubr.bf16.gmra.mxu0 %v8384
        %v10613 = vpop.f32.mrf.mxu0
        %v10614 = vadd.f32 %v10574, %v10613
        %v10615 = vpop.f32.mrf.mxu0
        %v10616 = vpop.f32.mrf.mxu0
        %v10617 = vpop.f32.mrf.mxu0
        %10618 = vdwg.mxu0
        %10619 = vmatprep.subr.bf16.mxu0 0
        %10620 = vmatpush1.bf16.msra.mxu0 %v10018
        %10621 = vmatprep.subr.bf16.mxu0 0
        %10622 = vmatpush1.bf16.msra.mxu0 %v10017
        %10623 = vmatprep.subr.bf16.mxu0 0
        %10624 = vmatpush1.bf16.msra.mxu0 %v10016
        %10625 = vmatprep.subr.bf16.mxu0 0
        %10626 = vmatpush1.bf16.msra.mxu0 %v10015
        %10627 = vmatprep.subr.bf16.mxu0 0
        %10628 = vmatpush1.bf16.msra.mxu0 %v10014
        %10629 = vmatprep.subr.bf16.mxu0 0
        %10630 = vmatpush1.bf16.msra.mxu0 %v10013
        %10631 = vmatprep.subr.bf16.mxu0 0
        %10632 = vmatpush1.bf16.msra.mxu0 %v10012
        %10633 = vmatprep.subr.bf16.mxu0 0
        %10634 = vmatpush1.bf16.msra.mxu0 %v10011
        %10635 = vmatprep.subr.bf16.mxu0 0
        %10636 = vmatpush2.bf16.msra.mxu0 %v10026
        %10637 = vmatprep.subr.bf16.mxu0 0
        %10638 = vmatpush2.bf16.msra.mxu0 %v10025
        %10639 = vmatprep.subr.bf16.mxu0 0
        %10640 = vmatpush2.bf16.msra.mxu0 %v10024
        %10641 = vmatprep.subr.bf16.mxu0 0
        %10642 = vmatpush2.bf16.msra.mxu0 %v10023
        %10643 = vmatprep.subr.bf16.mxu0 0
        %10644 = vmatpush2.bf16.msra.mxu0 %v10022
        %10645 = vmatprep.subr.bf16.mxu0 0
        %10646 = vmatpush2.bf16.msra.mxu0 %v10021
        %10647 = vmatprep.subr.bf16.mxu0 0
        %10648 = vmatpush2.bf16.msra.mxu0 %v10020
        %10649 = vmatprep.subr.bf16.mxu0 0
        %10650 = vmatpush2.bf16.msra.mxu0 %v10019
        %10651 = vmatprep.mubr.bf16.mxu0 %v8387
        %10652 = vmatmul.mubr.bf16.gmra.mxu0 %v8386
        %v10653 = vpop.f32.mrf.mxu0
        %v10654 = vadd.f32 %v10614, %v10653
        %v10655 = vpop.f32.mrf.mxu0
        %v10656 = vpop.f32.mrf.mxu0
        %v10657 = vpop.f32.mrf.mxu0
        %10658 = vdwg.mxu0
        %10659 = vmatprep.subr.bf16.mxu0 0
        %10660 = vmatpush1.bf16.msra.mxu0 %v10034
        %10661 = vmatprep.subr.bf16.mxu0 0
        %10662 = vmatpush1.bf16.msra.mxu0 %v10033
        %10663 = vmatprep.subr.bf16.mxu0 0
        %10664 = vmatpush1.bf16.msra.mxu0 %v10032
        %10665 = vmatprep.subr.bf16.mxu0 0
        %10666 = vmatpush1.bf16.msra.mxu0 %v10031
        %10667 = vmatprep.subr.bf16.mxu0 0
        %10668 = vmatpush1.bf16.msra.mxu0 %v10030
        %10669 = vmatprep.subr.bf16.mxu0 0
        %10670 = vmatpush1.bf16.msra.mxu0 %v10029
        %10671 = vmatprep.subr.bf16.mxu0 0
        %10672 = vmatpush1.bf16.msra.mxu0 %v10028
        %10673 = vmatprep.subr.bf16.mxu0 0
        %10674 = vmatpush1.bf16.msra.mxu0 %v10027
        %10675 = vmatprep.subr.bf16.mxu0 0
        %10676 = vmatpush2.bf16.msra.mxu0 %v10042
        %10677 = vmatprep.subr.bf16.mxu0 0
        %10678 = vmatpush2.bf16.msra.mxu0 %v10041
        %10679 = vmatprep.subr.bf16.mxu0 0
        %10680 = vmatpush2.bf16.msra.mxu0 %v10040
        %10681 = vmatprep.subr.bf16.mxu0 0
        %10682 = vmatpush2.bf16.msra.mxu0 %v10039
        %10683 = vmatprep.subr.bf16.mxu0 0
        %10684 = vmatpush2.bf16.msra.mxu0 %v10038
        %10685 = vmatprep.subr.bf16.mxu0 0
        %10686 = vmatpush2.bf16.msra.mxu0 %v10037
        %10687 = vmatprep.subr.bf16.mxu0 0
        %10688 = vmatpush2.bf16.msra.mxu0 %v10036
        %10689 = vmatprep.subr.bf16.mxu0 0
        %10690 = vmatpush2.bf16.msra.mxu0 %v10035
        %10691 = vmatprep.mubr.bf16.mxu0 %v8389
        %10692 = vmatmul.mubr.bf16.gmra.mxu0 %v8388
        %v10693 = vpop.f32.mrf.mxu0
        %v10694 = vadd.f32 %v10654, %v10693
        %v10695 = vpop.f32.mrf.mxu0
        %v10696 = vpop.f32.mrf.mxu0
        %v10697 = vpop.f32.mrf.mxu0
        %10698 = vdwg.mxu0
        %10699 = vmatprep.subr.bf16.mxu0 0
        %10700 = vmatpush1.bf16.msra.mxu0 %v10050
        %10701 = vmatprep.subr.bf16.mxu0 0
        %10702 = vmatpush1.bf16.msra.mxu0 %v10049
        %10703 = vmatprep.subr.bf16.mxu0 0
        %10704 = vmatpush1.bf16.msra.mxu0 %v10048
        %10705 = vmatprep.subr.bf16.mxu0 0
        %10706 = vmatpush1.bf16.msra.mxu0 %v10047
        %10707 = vmatprep.subr.bf16.mxu0 0
        %10708 = vmatpush1.bf16.msra.mxu0 %v10046
        %10709 = vmatprep.subr.bf16.mxu0 0
        %10710 = vmatpush1.bf16.msra.mxu0 %v10045
        %10711 = vmatprep.subr.bf16.mxu0 0
        %10712 = vmatpush1.bf16.msra.mxu0 %v10044
        %10713 = vmatprep.subr.bf16.mxu0 0
        %10714 = vmatpush1.bf16.msra.mxu0 %v10043
        %10715 = vmatprep.subr.bf16.mxu0 0
        %10716 = vmatpush2.bf16.msra.mxu0 %v10058
        %10717 = vmatprep.subr.bf16.mxu0 0
        %10718 = vmatpush2.bf16.msra.mxu0 %v10057
        %10719 = vmatprep.subr.bf16.mxu0 0
        %10720 = vmatpush2.bf16.msra.mxu0 %v10056
        %10721 = vmatprep.subr.bf16.mxu0 0
        %10722 = vmatpush2.bf16.msra.mxu0 %v10055
        %10723 = vmatprep.subr.bf16.mxu0 0
        %10724 = vmatpush2.bf16.msra.mxu0 %v10054
        %10725 = vmatprep.subr.bf16.mxu0 0
        %10726 = vmatpush2.bf16.msra.mxu0 %v10053
        %10727 = vmatprep.subr.bf16.mxu0 0
        %10728 = vmatpush2.bf16.msra.mxu0 %v10052
        %10729 = vmatprep.subr.bf16.mxu0 0
        %10730 = vmatpush2.bf16.msra.mxu0 %v10051
        %10731 = vmatprep.mubr.bf16.mxu0 %v8391
        %10732 = vmatmul.mubr.bf16.gmra.mxu0 %v8390
        %v10733 = vpop.f32.mrf.mxu0
        %v10734 = vadd.f32 %v10694, %v10733
        %v10735 = vpop.f32.mrf.mxu0
        %v10736 = vpop.f32.mrf.mxu0
        %v10737 = vpop.f32.mrf.mxu0
        %10738 = vdwg.mxu0
        %10739 = vmatprep.subr.bf16.mxu0 0
        %10740 = vmatpush1.bf16.msra.mxu0 %v10066
        %10741 = vmatprep.subr.bf16.mxu0 0
        %10742 = vmatpush1.bf16.msra.mxu0 %v10065
        %10743 = vmatprep.subr.bf16.mxu0 0
        %10744 = vmatpush1.bf16.msra.mxu0 %v10064
        %10745 = vmatprep.subr.bf16.mxu0 0
        %10746 = vmatpush1.bf16.msra.mxu0 %v10063
        %10747 = vmatprep.subr.bf16.mxu0 0
        %10748 = vmatpush1.bf16.msra.mxu0 %v10062
        %10749 = vmatprep.subr.bf16.mxu0 0
        %10750 = vmatpush1.bf16.msra.mxu0 %v10061
        %10751 = vmatprep.subr.bf16.mxu0 0
        %10752 = vmatpush1.bf16.msra.mxu0 %v10060
        %10753 = vmatprep.subr.bf16.mxu0 0
        %10754 = vmatpush1.bf16.msra.mxu0 %v10059
        %10755 = vmatprep.subr.bf16.mxu0 0
        %10756 = vmatpush2.bf16.msra.mxu0 %v10074
        %10757 = vmatprep.subr.bf16.mxu0 0
        %10758 = vmatpush2.bf16.msra.mxu0 %v10073
        %10759 = vmatprep.subr.bf16.mxu0 0
        %10760 = vmatpush2.bf16.msra.mxu0 %v10072
        %10761 = vmatprep.subr.bf16.mxu0 0
        %10762 = vmatpush2.bf16.msra.mxu0 %v10071
        %10763 = vmatprep.subr.bf16.mxu0 0
        %10764 = vmatpush2.bf16.msra.mxu0 %v10070
        %10765 = vmatprep.subr.bf16.mxu0 0
        %10766 = vmatpush2.bf16.msra.mxu0 %v10069
        %10767 = vmatprep.subr.bf16.mxu0 0
        %10768 = vmatpush2.bf16.msra.mxu0 %v10068
        %10769 = vmatprep.subr.bf16.mxu0 0
        %10770 = vmatpush2.bf16.msra.mxu0 %v10067
        %10771 = vmatprep.mubr.bf16.mxu0 %v8393
        %10772 = vmatmul.mubr.bf16.gmra.mxu0 %v8392
        %v10773 = vpop.f32.mrf.mxu0
        %v10774 = vadd.f32 %v10734, %v10773
        %v10775 = vpop.f32.mrf.mxu0
        %v10776 = vpop.f32.mrf.mxu0
        %v10777 = vpop.f32.mrf.mxu0
        %10778 = vdwg.mxu0
        %10779 = vmatprep.subr.bf16.mxu0 0
        %10780 = vmatpush1.bf16.msra.mxu0 %v10082
        %10781 = vmatprep.subr.bf16.mxu0 0
        %10782 = vmatpush1.bf16.msra.mxu0 %v10081
        %10783 = vmatprep.subr.bf16.mxu0 0
        %10784 = vmatpush1.bf16.msra.mxu0 %v10080
        %10785 = vmatprep.subr.bf16.mxu0 0
        %10786 = vmatpush1.bf16.msra.mxu0 %v10079
        %10787 = vmatprep.subr.bf16.mxu0 0
        %10788 = vmatpush1.bf16.msra.mxu0 %v10078
        %10789 = vmatprep.subr.bf16.mxu0 0
        %10790 = vmatpush1.bf16.msra.mxu0 %v10077
        %10791 = vmatprep.subr.bf16.mxu0 0
        %10792 = vmatpush1.bf16.msra.mxu0 %v10076
        %10793 = vmatprep.subr.bf16.mxu0 0
        %10794 = vmatpush1.bf16.msra.mxu0 %v10075
        %10795 = vmatprep.subr.bf16.mxu0 0
        %10796 = vmatpush2.bf16.msra.mxu0 %v10090
        %10797 = vmatprep.subr.bf16.mxu0 0
        %10798 = vmatpush2.bf16.msra.mxu0 %v10089
        %10799 = vmatprep.subr.bf16.mxu0 0
        %10800 = vmatpush2.bf16.msra.mxu0 %v10088
        %10801 = vmatprep.subr.bf16.mxu0 0
        %10802 = vmatpush2.bf16.msra.mxu0 %v10087
        %10803 = vmatprep.subr.bf16.mxu0 0
        %10804 = vmatpush2.bf16.msra.mxu0 %v10086
        %10805 = vmatprep.subr.bf16.mxu0 0
        %10806 = vmatpush2.bf16.msra.mxu0 %v10085
        %10807 = vmatprep.subr.bf16.mxu0 0
        %10808 = vmatpush2.bf16.msra.mxu0 %v10084
        %10809 = vmatprep.subr.bf16.mxu0 0
        %10810 = vmatpush2.bf16.msra.mxu0 %v10083
        %10811 = vmatprep.mubr.bf16.mxu0 %v8395
        %10812 = vmatmul.mubr.bf16.gmra.mxu0 %v8394
        %v10813 = vpop.f32.mrf.mxu0
        %v10814 = vadd.f32 %v10774, %v10813
        %v10815 = vpop.f32.mrf.mxu0
        %v10816 = vpop.f32.mrf.mxu0
        %v10817 = vpop.f32.mrf.mxu0
        %10818 = vdwg.mxu0
        %10819 = vmatprep.subr.bf16.mxu0 0
        %10820 = vmatpush1.bf16.msra.mxu0 %v10098
        %10821 = vmatprep.subr.bf16.mxu0 0
        %10822 = vmatpush1.bf16.msra.mxu0 %v10097
        %10823 = vmatprep.subr.bf16.mxu0 0
        %10824 = vmatpush1.bf16.msra.mxu0 %v10096
        %10825 = vmatprep.subr.bf16.mxu0 0
        %10826 = vmatpush1.bf16.msra.mxu0 %v10095
        %10827 = vmatprep.subr.bf16.mxu0 0
        %10828 = vmatpush1.bf16.msra.mxu0 %v10094
        %10829 = vmatprep.subr.bf16.mxu0 0
        %10830 = vmatpush1.bf16.msra.mxu0 %v10093
        %10831 = vmatprep.subr.bf16.mxu0 0
        %10832 = vmatpush1.bf16.msra.mxu0 %v10092
        %10833 = vmatprep.subr.bf16.mxu0 0
        %10834 = vmatpush1.bf16.msra.mxu0 %v10091
        %10835 = vmatprep.subr.bf16.mxu0 0
        %10836 = vmatpush2.bf16.msra.mxu0 %v10106
        %10837 = vmatprep.subr.bf16.mxu0 0
        %10838 = vmatpush2.bf16.msra.mxu0 %v10105
        %10839 = vmatprep.subr.bf16.mxu0 0
        %10840 = vmatpush2.bf16.msra.mxu0 %v10104
        %10841 = vmatprep.subr.bf16.mxu0 0
        %10842 = vmatpush2.bf16.msra.mxu0 %v10103
        %10843 = vmatprep.subr.bf16.mxu0 0
        %10844 = vmatpush2.bf16.msra.mxu0 %v10102
        %10845 = vmatprep.subr.bf16.mxu0 0
        %10846 = vmatpush2.bf16.msra.mxu0 %v10101
        %10847 = vmatprep.subr.bf16.mxu0 0
        %10848 = vmatpush2.bf16.msra.mxu0 %v10100
        %10849 = vmatprep.subr.bf16.mxu0 0
        %10850 = vmatpush2.bf16.msra.mxu0 %v10099
        %10851 = vmatprep.mubr.bf16.mxu0 %v8397
        %10852 = vmatmul.mubr.bf16.gmra.mxu0 %v8396
        %v10853 = vpop.f32.mrf.mxu0
        %v10854 = vadd.f32 %v10814, %v10853
        %v10855 = vpop.f32.mrf.mxu0
        %v10856 = vpop.f32.mrf.mxu0
        %v10857 = vpop.f32.mrf.mxu0
        %10858 = vdwg.mxu0
        %10859 = vmatprep.subr.bf16.mxu0 0
        %10860 = vmatpush1.bf16.msra.mxu0 %v10114
        %10861 = vmatprep.subr.bf16.mxu0 0
        %10862 = vmatpush1.bf16.msra.mxu0 %v10113
        %10863 = vmatprep.subr.bf16.mxu0 0
        %10864 = vmatpush1.bf16.msra.mxu0 %v10112
        %10865 = vmatprep.subr.bf16.mxu0 0
        %10866 = vmatpush1.bf16.msra.mxu0 %v10111
        %10867 = vmatprep.subr.bf16.mxu0 0
        %10868 = vmatpush1.bf16.msra.mxu0 %v10110
        %10869 = vmatprep.subr.bf16.mxu0 0
        %10870 = vmatpush1.bf16.msra.mxu0 %v10109
        %10871 = vmatprep.subr.bf16.mxu0 0
        %10872 = vmatpush1.bf16.msra.mxu0 %v10108
        %10873 = vmatprep.subr.bf16.mxu0 0
        %10874 = vmatpush1.bf16.msra.mxu0 %v10107
        %10875 = vmatprep.subr.bf16.mxu0 0
        %10876 = vmatpush2.bf16.msra.mxu0 %v10122
        %10877 = vmatprep.subr.bf16.mxu0 0
        %10878 = vmatpush2.bf16.msra.mxu0 %v10121
        %10879 = vmatprep.subr.bf16.mxu0 0
        %10880 = vmatpush2.bf16.msra.mxu0 %v10120
        %10881 = vmatprep.subr.bf16.mxu0 0
        %10882 = vmatpush2.bf16.msra.mxu0 %v10119
        %10883 = vmatprep.subr.bf16.mxu0 0
        %10884 = vmatpush2.bf16.msra.mxu0 %v10118
        %10885 = vmatprep.subr.bf16.mxu0 0
        %10886 = vmatpush2.bf16.msra.mxu0 %v10117
        %10887 = vmatprep.subr.bf16.mxu0 0
        %10888 = vmatpush2.bf16.msra.mxu0 %v10116
        %10889 = vmatprep.subr.bf16.mxu0 0
        %10890 = vmatpush2.bf16.msra.mxu0 %v10115
        %10891 = vmatprep.mubr.bf16.mxu0 %v8399
        %10892 = vmatmul.mubr.bf16.gmra.mxu0 %v8398
        %v10893 = vpop.f32.mrf.mxu0
        %v10894 = vadd.f32 %v10854, %v10893
        %v10895 = vpop.f32.mrf.mxu0
        %v10896 = vpop.f32.mrf.mxu0
        %v10897 = vpop.f32.mrf.mxu0
        %10898 = vdwg.mxu0
        %10899 = vmatprep.subr.bf16.mxu0 0
        %10900 = vmatpush1.bf16.msra.mxu0 %v10130
        %10901 = vmatprep.subr.bf16.mxu0 0
        %10902 = vmatpush1.bf16.msra.mxu0 %v10129
        %10903 = vmatprep.subr.bf16.mxu0 0
        %10904 = vmatpush1.bf16.msra.mxu0 %v10128
        %10905 = vmatprep.subr.bf16.mxu0 0
        %10906 = vmatpush1.bf16.msra.mxu0 %v10127
        %10907 = vmatprep.subr.bf16.mxu0 0
        %10908 = vmatpush1.bf16.msra.mxu0 %v10126
        %10909 = vmatprep.subr.bf16.mxu0 0
        %10910 = vmatpush1.bf16.msra.mxu0 %v10125
        %10911 = vmatprep.subr.bf16.mxu0 0
        %10912 = vmatpush1.bf16.msra.mxu0 %v10124
        %10913 = vmatprep.subr.bf16.mxu0 0
        %10914 = vmatpush1.bf16.msra.mxu0 %v10123
        %10915 = vmatprep.subr.bf16.mxu0 0
        %10916 = vmatpush2.bf16.msra.mxu0 %v10138
        %10917 = vmatprep.subr.bf16.mxu0 0
        %10918 = vmatpush2.bf16.msra.mxu0 %v10137
        %10919 = vmatprep.subr.bf16.mxu0 0
        %10920 = vmatpush2.bf16.msra.mxu0 %v10136
        %10921 = vmatprep.subr.bf16.mxu0 0
        %10922 = vmatpush2.bf16.msra.mxu0 %v10135
        %10923 = vmatprep.subr.bf16.mxu0 0
        %10924 = vmatpush2.bf16.msra.mxu0 %v10134
        %10925 = vmatprep.subr.bf16.mxu0 0
        %10926 = vmatpush2.bf16.msra.mxu0 %v10133
        %10927 = vmatprep.subr.bf16.mxu0 0
        %10928 = vmatpush2.bf16.msra.mxu0 %v10132
        %10929 = vmatprep.subr.bf16.mxu0 0
        %10930 = vmatpush2.bf16.msra.mxu0 %v10131
        %10931 = vmatprep.mubr.bf16.mxu0 %v8401
        %10932 = vmatmul.mubr.bf16.gmra.mxu0 %v8400
        %v10933 = vpop.f32.mrf.mxu0
        %v10934 = vadd.f32 %v10894, %v10933
        %v10935 = vpop.f32.mrf.mxu0
        %v10936 = vpop.f32.mrf.mxu0
        %v10937 = vpop.f32.mrf.mxu0
        %10938 = vdwg.mxu0
        %10939 = vmatprep.subr.bf16.mxu0 0
        %10940 = vmatpush1.bf16.msra.mxu0 %v10146
        %10941 = vmatprep.subr.bf16.mxu0 0
        %10942 = vmatpush1.bf16.msra.mxu0 %v10145
        %10943 = vmatprep.subr.bf16.mxu0 0
        %10944 = vmatpush1.bf16.msra.mxu0 %v10144
        %10945 = vmatprep.subr.bf16.mxu0 0
        %10946 = vmatpush1.bf16.msra.mxu0 %v10143
        %10947 = vmatprep.subr.bf16.mxu0 0
        %10948 = vmatpush1.bf16.msra.mxu0 %v10142
        %10949 = vmatprep.subr.bf16.mxu0 0
        %10950 = vmatpush1.bf16.msra.mxu0 %v10141
        %10951 = vmatprep.subr.bf16.mxu0 0
        %10952 = vmatpush1.bf16.msra.mxu0 %v10140
        %10953 = vmatprep.subr.bf16.mxu0 0
        %10954 = vmatpush1.bf16.msra.mxu0 %v10139
        %10955 = vmatprep.subr.bf16.mxu0 0
        %10956 = vmatpush2.bf16.msra.mxu0 %v10154
        %10957 = vmatprep.subr.bf16.mxu0 0
        %10958 = vmatpush2.bf16.msra.mxu0 %v10153
        %10959 = vmatprep.subr.bf16.mxu0 0
        %10960 = vmatpush2.bf16.msra.mxu0 %v10152
        %10961 = vmatprep.subr.bf16.mxu0 0
        %10962 = vmatpush2.bf16.msra.mxu0 %v10151
        %10963 = vmatprep.subr.bf16.mxu0 0
        %10964 = vmatpush2.bf16.msra.mxu0 %v10150
        %10965 = vmatprep.subr.bf16.mxu0 0
        %10966 = vmatpush2.bf16.msra.mxu0 %v10149
        %10967 = vmatprep.subr.bf16.mxu0 0
        %10968 = vmatpush2.bf16.msra.mxu0 %v10148
        %10969 = vmatprep.subr.bf16.mxu0 0
        %10970 = vmatpush2.bf16.msra.mxu0 %v10147
        %10971 = vmatprep.mubr.bf16.mxu0 %v8403
        %10972 = vmatmul.mubr.bf16.gmra.mxu0 %v8402
        %v10973 = vpop.f32.mrf.mxu0
        %v10974 = vadd.f32 %v10934, %v10973
        %v10975 = vpop.f32.mrf.mxu0
        %v10976 = vpop.f32.mrf.mxu0
        %v10977 = vpop.f32.mrf.mxu0
        %10978 = vdwg.mxu0
        %10979 = vmatprep.subr.bf16.mxu0 0
        %10980 = vmatpush1.bf16.msra.mxu0 %v10162
        %10981 = vmatprep.subr.bf16.mxu0 0
        %10982 = vmatpush1.bf16.msra.mxu0 %v10161
        %10983 = vmatprep.subr.bf16.mxu0 0
        %10984 = vmatpush1.bf16.msra.mxu0 %v10160
        %10985 = vmatprep.subr.bf16.mxu0 0
        %10986 = vmatpush1.bf16.msra.mxu0 %v10159
        %10987 = vmatprep.subr.bf16.mxu0 0
        %10988 = vmatpush1.bf16.msra.mxu0 %v10158
        %10989 = vmatprep.subr.bf16.mxu0 0
        %10990 = vmatpush1.bf16.msra.mxu0 %v10157
        %10991 = vmatprep.subr.bf16.mxu0 0
        %10992 = vmatpush1.bf16.msra.mxu0 %v10156
        %10993 = vmatprep.subr.bf16.mxu0 0
        %10994 = vmatpush1.bf16.msra.mxu0 %v10155
        %10995 = vmatprep.subr.bf16.mxu0 0
        %10996 = vmatpush2.bf16.msra.mxu0 %v10170
        %10997 = vmatprep.subr.bf16.mxu0 0
        %10998 = vmatpush2.bf16.msra.mxu0 %v10169
        %10999 = vmatprep.subr.bf16.mxu0 0
        %11000 = vmatpush2.bf16.msra.mxu0 %v10168
        %11001 = vmatprep.subr.bf16.mxu0 0
        %11002 = vmatpush2.bf16.msra.mxu0 %v10167
        %11003 = vmatprep.subr.bf16.mxu0 0
        %11004 = vmatpush2.bf16.msra.mxu0 %v10166
        %11005 = vmatprep.subr.bf16.mxu0 0
        %11006 = vmatpush2.bf16.msra.mxu0 %v10165
        %11007 = vmatprep.subr.bf16.mxu0 0
        %11008 = vmatpush2.bf16.msra.mxu0 %v10164
        %11009 = vmatprep.subr.bf16.mxu0 0
        %11010 = vmatpush2.bf16.msra.mxu0 %v10163
        %11011 = vmatprep.mubr.bf16.mxu0 %v8405
        %11012 = vmatmul.mubr.bf16.gmra.mxu0 %v8404
        %v11013 = vpop.f32.mrf.mxu0
        %v11014 = vadd.f32 %v10974, %v11013
        %v11015 = vpop.f32.mrf.mxu0
        %v11016 = vpop.f32.mrf.mxu0
        %v11017 = vpop.f32.mrf.mxu0
        %11018 = vdwg.mxu0
        %11019 = vmatprep.subr.bf16.mxu0 0
        %11020 = vmatpush1.bf16.msra.mxu0 %v10178
        %11021 = vmatprep.subr.bf16.mxu0 0
        %11022 = vmatpush1.bf16.msra.mxu0 %v10177
        %11023 = vmatprep.subr.bf16.mxu0 0
        %11024 = vmatpush1.bf16.msra.mxu0 %v10176
        %11025 = vmatprep.subr.bf16.mxu0 0
        %11026 = vmatpush1.bf16.msra.mxu0 %v10175
        %11027 = vmatprep.subr.bf16.mxu0 0
        %11028 = vmatpush1.bf16.msra.mxu0 %v10174
        %11029 = vmatprep.subr.bf16.mxu0 0
        %11030 = vmatpush1.bf16.msra.mxu0 %v10173
        %11031 = vmatprep.subr.bf16.mxu0 0
        %11032 = vmatpush1.bf16.msra.mxu0 %v10172
        %11033 = vmatprep.subr.bf16.mxu0 0
        %11034 = vmatpush1.bf16.msra.mxu0 %v10171
        %11035 = vmatprep.subr.bf16.mxu0 0
        %11036 = vmatpush2.bf16.msra.mxu0 %v10186
        %11037 = vmatprep.subr.bf16.mxu0 0
        %11038 = vmatpush2.bf16.msra.mxu0 %v10185
        %11039 = vmatprep.subr.bf16.mxu0 0
        %11040 = vmatpush2.bf16.msra.mxu0 %v10184
        %11041 = vmatprep.subr.bf16.mxu0 0
        %11042 = vmatpush2.bf16.msra.mxu0 %v10183
        %11043 = vmatprep.subr.bf16.mxu0 0
        %11044 = vmatpush2.bf16.msra.mxu0 %v10182
        %11045 = vmatprep.subr.bf16.mxu0 0
        %11046 = vmatpush2.bf16.msra.mxu0 %v10181
        %11047 = vmatprep.subr.bf16.mxu0 0
        %11048 = vmatpush2.bf16.msra.mxu0 %v10180
        %11049 = vmatprep.subr.bf16.mxu0 0
        %11050 = vmatpush2.bf16.msra.mxu0 %v10179
        %11051 = vmatprep.mubr.bf16.mxu0 %v8407
        %11052 = vmatmul.mubr.bf16.gmra.mxu0 %v8406
        %v11053 = vpop.f32.mrf.mxu0
        %v11054 = vadd.f32 %v11014, %v11053
        %v11055 = vpop.f32.mrf.mxu0
        %v11056 = vpop.f32.mrf.mxu0
        %v11057 = vpop.f32.mrf.mxu0
        %11058 = vdwg.mxu0
        %11059 = vmatprep.subr.bf16.mxu0 0
        %11060 = vmatpush1.bf16.msra.mxu0 %v10194
        %11061 = vmatprep.subr.bf16.mxu0 0
        %11062 = vmatpush1.bf16.msra.mxu0 %v10193
        %11063 = vmatprep.subr.bf16.mxu0 0
        %11064 = vmatpush1.bf16.msra.mxu0 %v10192
        %11065 = vmatprep.subr.bf16.mxu0 0
        %11066 = vmatpush1.bf16.msra.mxu0 %v10191
        %11067 = vmatprep.subr.bf16.mxu0 0
        %11068 = vmatpush1.bf16.msra.mxu0 %v10190
        %11069 = vmatprep.subr.bf16.mxu0 0
        %11070 = vmatpush1.bf16.msra.mxu0 %v10189
        %11071 = vmatprep.subr.bf16.mxu0 0
        %11072 = vmatpush1.bf16.msra.mxu0 %v10188
        %11073 = vmatprep.subr.bf16.mxu0 0
        %11074 = vmatpush1.bf16.msra.mxu0 %v10187
        %11075 = vmatprep.subr.bf16.mxu0 0
        %11076 = vmatpush2.bf16.msra.mxu0 %v10202
        %11077 = vmatprep.subr.bf16.mxu0 0
        %11078 = vmatpush2.bf16.msra.mxu0 %v10201
        %11079 = vmatprep.subr.bf16.mxu0 0
        %11080 = vmatpush2.bf16.msra.mxu0 %v10200
        %11081 = vmatprep.subr.bf16.mxu0 0
        %11082 = vmatpush2.bf16.msra.mxu0 %v10199
        %11083 = vmatprep.subr.bf16.mxu0 0
        %11084 = vmatpush2.bf16.msra.mxu0 %v10198
        %11085 = vmatprep.subr.bf16.mxu0 0
        %11086 = vmatpush2.bf16.msra.mxu0 %v10197
        %11087 = vmatprep.subr.bf16.mxu0 0
        %11088 = vmatpush2.bf16.msra.mxu0 %v10196
        %11089 = vmatprep.subr.bf16.mxu0 0
        %11090 = vmatpush2.bf16.msra.mxu0 %v10195
        %11091 = vmatprep.mubr.bf16.mxu0 %v8409
        %11092 = vmatmul.mubr.bf16.gmra.mxu0 %v8408
        %v11093 = vpop.f32.mrf.mxu0
        %v11094 = vadd.f32 %v11054, %v11093
        %v11095 = vpop.f32.mrf.mxu0
        %v11096 = vpop.f32.mrf.mxu0
        %v11097 = vpop.f32.mrf.mxu0
        %11098 = vdwg.mxu0
        %v11099 = vmax.f32 %v11094, 0.0
        %v11100 = vpack.c.bf16 %v11099, %v11099
        %v11101 = vld [vmem:[%s11] sm:$0xf]
        %v11102 = vld [vmem:[%s11 + $0x4] sm:$0xf]
        %v11103 = vld [vmem:[%s11 + $0x8] sm:$0xf]
        %v11104 = vld [vmem:[%s11 + $0xc] sm:$0xf]
        %v11105 = vld [vmem:[%s11 + $0x10] sm:$0xf]
        %v11106 = vld [vmem:[%s11 + $0x14] sm:$0xf]
        %v11107 = vld [vmem:[%s11 + $0x18] sm:$0xf]
        %v11108 = vld [vmem:[%s11 + $0x1c] sm:$0xf]
        %v11109 = vld [vmem:[%s11 + $0x20] sm:$0xf]
        %v11110 = vld [vmem:[%s11 + $0x24] sm:$0xf]
        %v11111 = vld [vmem:[%s11 + $0x28] sm:$0xf]
        %v11112 = vld [vmem:[%s11 + $0x2c] sm:$0xf]
        %v11113 = vld [vmem:[%s11 + $0x30] sm:$0xf]
        %v11114 = vld [vmem:[%s11 + $0x34] sm:$0xf]
        %v11115 = vld [vmem:[%s11 + $0x38] sm:$0xf]
        %v11116 = vld [vmem:[%s11 + $0x3c] sm:$0xf]
        %v11117 = vld [vmem:[%s12] sm:$0x1]
        %v11134 = vunpack.c.l.b16 %v11101
        %v11135 = vunpack.c.l.b16 %v11102
        %v11136 = vunpack.c.l.b16 %v11103
        %v11137 = vunpack.c.l.b16 %v11104
        %v11138 = vunpack.c.l.b16 %v11105
        %v11139 = vunpack.c.l.b16 %v11106
        %v11140 = vunpack.c.l.b16 %v11107
        %v11141 = vunpack.c.l.b16 %v11108
        %v11142 = vunpack.c.l.b16 %v11109
        %v11143 = vunpack.c.l.b16 %v11110
        %v11144 = vunpack.c.l.b16 %v11111
        %v11145 = vunpack.c.l.b16 %v11112
        %v11146 = vunpack.c.l.b16 %v11113
        %v11147 = vunpack.c.l.b16 %v11114
        %v11148 = vunpack.c.l.b16 %v11115
        %v11149 = vunpack.c.l.b16 %v11116
        %v11150 = vpack.c.b16 %v11135, %v11134
        %v11151 = vpack.c.b16 %v11137, %v11136
        %v11152 = vpack.c.b16 %v11139, %v11138
        %v11153 = vpack.c.b16 %v11141, %v11140
        %v11154 = vpack.c.b16 %v11143, %v11142
        %v11155 = vpack.c.b16 %v11145, %v11144
        %v11156 = vpack.c.b16 %v11147, %v11146
        %v11157 = vpack.c.b16 %v11149, %v11148
        %11166 = vmatprep.subr.bf16.mxu0 0
        %11167 = vmatpush1.bf16.msra.mxu0 %v11157
        %11168 = vmatprep.subr.bf16.mxu0 0
        %11169 = vmatpush1.bf16.msra.mxu0 %v11156
        %11170 = vmatprep.subr.bf16.mxu0 0
        %11171 = vmatpush1.bf16.msra.mxu0 %v11155
        %11172 = vmatprep.subr.bf16.mxu0 0
        %11173 = vmatpush1.bf16.msra.mxu0 %v11154
        %11174 = vmatprep.subr.bf16.mxu0 0
        %11175 = vmatpush1.bf16.msra.mxu0 %v11153
        %11176 = vmatprep.subr.bf16.mxu0 0
        %11177 = vmatpush1.bf16.msra.mxu0 %v11152
        %11178 = vmatprep.subr.bf16.mxu0 0
        %11179 = vmatpush1.bf16.msra.mxu0 %v11151
        %11180 = vmatprep.subr.bf16.mxu0 0
        %11181 = vmatpush1.bf16.msra.mxu0 %v11150
        %11182 = vmatprep.subr.bf16.mxu0 0
        %11183 = vmatpush2.bf16.msra.mxu0 0
        %11184 = vmatprep.subr.bf16.mxu0 0
        %11185 = vmatpush2.bf16.msra.mxu0 0
        %11186 = vmatprep.subr.bf16.mxu0 0
        %11187 = vmatpush2.bf16.msra.mxu0 0
        %11188 = vmatprep.subr.bf16.mxu0 0
        %11189 = vmatpush2.bf16.msra.mxu0 0
        %11190 = vmatprep.subr.bf16.mxu0 0
        %11191 = vmatpush2.bf16.msra.mxu0 0
        %11192 = vmatprep.subr.bf16.mxu0 0
        %11193 = vmatpush2.bf16.msra.mxu0 0
        %11194 = vmatprep.subr.bf16.mxu0 0
        %11195 = vmatpush2.bf16.msra.mxu0 0
        %11196 = vmatprep.subr.bf16.mxu0 0
        %11197 = vmatpush2.bf16.msra.mxu0 0
        %11198 = vmatprep.mubr.bf16.mxu0 0
        %11199 = vmatmul.mubr.bf16.gmra.mxu0 %v11100
        %v11200 = vpop.f32.mrf.mxu0
        %v11201 = vadd.f32 %v11117, %v11200
        %v11202 = vpop.f32.mrf.mxu0
        %v11203 = vpop.f32.mrf.mxu0
        %v11204 = vpop.f32.mrf.mxu0
        %11205 = vdwg.mxu0
        %v11206 = vsel %vm747, %v11201, -inf
        %11207 = vmax.xlane.f32.xlu0 %v11206
        %v11208 = vpop.xlane.xlu0 %11207
        %v11209 = vsub.f32 %v11201, %v11208
        %v11210 = vmul.f32 %v11209, 1.442695
        %v11211 = vpow.pop %v11210
        %v11212 = vsel %vm747, %v11211, 0.0
        %11213 = vadd.xlane.f32.xlu0 %v11212
        %v11214 = vpop.xlane.xlu0 %11213
        %v11215 = vrcp.pop %v11214
        %v11216 = vmul.f32 %v11211, %v11215
        %11217 = vst [vmem:[%s432] sm:$0x1] %v11216
        %s11218 = sand.u32 %s313, 1
        %s11219 = scalar_lea.sflag [#allocation6], %s11218
        %s11220 = sand.u32 %s313, 1
        %s11221 = scalar_lea.vmem [#allocation5], %s11220
        // Predicated region
        $region73: #{net_forward.1} parent=71 // pred_check
          %p11222 = pneg %p323
        $region74: #{net_forward.1} parent=71 // pred_check_branch
          %11224 = sbr.rel (%p11222) target = $region76
        $region75: #{net_forward.1} parent=71 // pred_region
          %s11226 = ssub.s32 16, 16
          %11227 = vsyncadd %s11219, %s11226
          %s11228 = smul.addr %s27, 16
          %s11229 = scalar_lea.hbm %s13, %s11228
          %s11231 = sshll.u32 %s11221, 4
          %s11232 = int_to_ptr.vmem [resolvable:$true] %s11231
          %11234 = dma.vmem_to_hbm [thread:$0]  %s11232, 16, %s11229, %s11219
        $region76: #{net_forward.1} parent=71 // pred_fallthru
          _
      $region72: #{net_forward.1} parent=5 // pred_fallthru
        _
      %p11235 = scmp.le.s32.totalorder 2, %s22
      // Predicated region
      $region77: #{net_forward.1} parent=5 // pred_check
        %p11236 = pneg %p11235
      $region78: #{net_forward.1} parent=5 // pred_check_branch
        %11238 = sbr.rel (%p11236) target = $region80
      $region79: #{net_forward.1} parent=5 // pred_region
        %s11239 = ssub.s32 %s22, 2
        // Predicated region
        $region81: #{net_forward.1} parent=79 // pred_check
          %p11240 = pneg %p329
        $region82: #{net_forward.1} parent=79 // pred_check_branch
          %11242 = sbr.rel (%p11240) target = $region84
        $region83: #{net_forward.1} parent=79 // pred_region
          %s11243 = sand.u32 %s314, 1
          %s11244 = scalar_lea.sflag [#allocation6], %s11243
          %s11245 = sand.u32 %s314, 1
          %s11246 = scalar_lea.vmem [#allocation5], %s11245
          %11247 = dma.done %s11244, 16
        $region84: #{net_forward.1} parent=79 // pred_fallthru
          _
      $region80: #{net_forward.1} parent=5 // pred_fallthru
        _
    $region6: #{net_forward.1} parent=1 // loop_footer
      %s26 = sadd.s32 1, %s22
    $region7: #{net_forward.1} parent=1 // loop_footer_branch
      %21 = sbr.rel target = $region3
    $region8: #{net_forward.1} parent=1 // loop_exit
      _
    %11248 = vsyncpa [#allocation6], 1
    %s11249 = scalar_lea.sflag [#allocation6], 1
    %11250 = vsyncpa %s11249, 1

</llo_original>
